<compile_context>
chip_gen: v6e
topology: v6e:2x2x1
jax: 0.10.0
libtpu: 0.0.40
codegen_flags: <defaults>
</compile_context>

<pallas_src>
import functools

import numpy as np

import jax
import jax.numpy as jnp
from jax.experimental import pallas as pl
from jax.experimental.pallas import tpu as pltpu


# ----------------------------- Pallas kernel ----------------------------------

def _fused_attn_kernel(*refs, num_heads, scale, has_pos):
    """One (window, query-tile) step: kv Linear (once per window), all heads of
    QK^T + rel-pos bias, softmax, @V, (+pos_embed), fused output projection."""
    if has_pos:
        (skip_ref, q_ref, bias_ref, kvw_ref, kvb_ref,
         pw_ref, pb_ref, pos_ref, o_ref, kv_sc) = refs
    else:
        (skip_ref, q_ref, bias_ref, kvw_ref, kvb_ref,
         pw_ref, pb_ref, o_ref, kv_sc) = refs
        pos_ref = None

    C = q_ref.shape[-1]
    hd = C // num_heads
    tq = q_ref.shape[1]
    npad = kv_sc.shape[0]
    t = pl.program_id(1)

    # kv Linear (bias fused), computed once per window (t == 0); the persistent
    # VMEM scratch is reused by every query tile of this window.
    @pl.when(t == 0)
    def _():
        kv_sc[...] = (jnp.dot(skip_ref[0].astype(jnp.float32),
                              kvw_ref[...].astype(jnp.float32),
                              preferred_element_type=jnp.float32)
                      + kvb_ref[...].astype(jnp.float32))

    q_all = q_ref[0].astype(jnp.float32)          # (tq, C)     lane-dense
    kv_all = kv_sc[...]                           # (Npad, 2C)  packed k | v, f32

    head_outs = []
    for h in range(num_heads):                    # static unroll: all heads per step
        qh = q_all[:, h * hd:(h + 1) * hd] * scale            # (tq, hd)
        kh = kv_all[:, h * hd:(h + 1) * hd]                    # (Npad, hd)
        vh = kv_all[:, C + h * hd:C + (h + 1) * hd]            # (Npad, hd)
        # scores = (q*scale) @ k^T   (contraction over head_dim)
        s = jax.lax.dot_general(qh, kh, (((1,), (1,)), ((), ())),
                                preferred_element_type=jnp.float32)   # (tq, Npad)
        # rel-pos bias slab for (head h, query tile t); bias is VMEM-resident.
        row0 = pl.multiple_of(h * npad + t * tq, tq)
        s = s + bias_ref[pl.ds(row0, tq), :]
        m = jnp.max(s, axis=-1, keepdims=True)
        p = jnp.exp(s - m)                         # EUP
        l = jnp.sum(p, axis=-1, keepdims=True)
        oh = jnp.dot(p, vh, preferred_element_type=jnp.float32)       # (tq, hd)
        head_outs.append(oh * pl.reciprocal(l, approx=True))  # normalize post-@V

    x = jnp.concatenate(head_outs, axis=-1)        # (tq, C) lane-dense
    if pos_ref is not None:
        x = x + pos_ref[0].astype(jnp.float32)
    # fused output projection epilogue
    y = jnp.dot(x, pw_ref[...].astype(jnp.float32),
                preferred_element_type=jnp.float32) + pb_ref[...].astype(jnp.float32)
    o_ref[0] = y.astype(o_ref.dtype)


# ----------------------------- Pallas wrapper ----------------------------------

def fused_window_attention(skip_p, q_p, bias2d, kv_w_t, kv_b, proj_w_t, proj_b,
                           *, num_heads, scale, pos=None, tq=128):
    """skip_p, q_p: (B_, Npad, C); bias2d: (H*Npad, Npad) -> out (B_, Npad, C)."""
    B_, Npad, C = q_p.shape
    H = num_heads
    hd = C // H
    tq = min(tq, Npad)
    assert Npad % tq == 0
    n_qt = Npad // tq
    assert bias2d.shape == (H * Npad, Npad)

    kernel = functools.partial(_fused_attn_kernel, num_heads=num_heads,
                               scale=scale, has_pos=pos is not None)

    in_specs = [
        pl.BlockSpec((1, Npad, C), lambda b, t: (b, 0, 0)),       # skip (per window)
        pl.BlockSpec((1, tq, C), lambda b, t: (b, t, 0)),         # q tile
        pl.BlockSpec((H * Npad, Npad), lambda b, t: (0, 0)),      # bias (resident)
        pl.BlockSpec((C, 2 * C), lambda b, t: (0, 0)),            # kv weight (resident)
        pl.BlockSpec((1, 2 * C), lambda b, t: (0, 0)),            # kv bias
        pl.BlockSpec((C, C), lambda b, t: (0, 0)),                # proj weight
        pl.BlockSpec((1, C), lambda b, t: (0, 0)),                # proj bias
    ]
    args = [skip_p, q_p, bias2d, kv_w_t, kv_b.reshape(1, 2 * C),
            proj_w_t, proj_b.reshape(1, C)]
    if pos is not None:
        in_specs.append(pl.BlockSpec((1, tq, C), lambda b, t: (b, t, 0)))
        args.append(pos)

    flops = (B_ * 2 * Npad * C * 2 * C              # kv projection
             + B_ * H * 4 * Npad * Npad * hd        # QK^T and P@V
             + B_ * 2 * Npad * C * C)               # output projection
    bytes_accessed = 4 * (skip_p.size + q_p.size + bias2d.size
                          + B_ * Npad * C + 3 * C * C + 3 * C)

    return pl.pallas_call(
        kernel,
        out_shape=jax.ShapeDtypeStruct((B_, Npad, C), q_p.dtype),
        grid=(B_, n_qt),
        in_specs=in_specs,
        out_specs=pl.BlockSpec((1, tq, C), lambda b, t: (b, t, 0)),
        scratch_shapes=[pltpu.VMEM((Npad, 2 * C), jnp.float32)],
        compiler_params=pltpu.CompilerParams(
            dimension_semantics=("parallel", "arbitrary")),
        cost_estimate=pl.CostEstimate(
            flops=flops,
            transcendentals=B_ * H * Npad * (Npad + 1),
            bytes_accessed=bytes_accessed),
    )(*args)


# ----------------------------- module glue -------------------------------------

def make_relative_position_index(window_size):
    ws0, ws1, ws2 = window_size
    coords = np.stack(np.meshgrid(np.arange(ws0), np.arange(ws1), np.arange(ws2),
                                  indexing="ij"), axis=0)
    cf = coords.reshape(3, -1)
    rel = (cf[:, :, None] - cf[:, None, :]).transpose(1, 2, 0).astype(np.int64)
    rel[:, :, 0] += ws0 - 1
    rel[:, :, 1] += ws1 - 1
    rel[:, :, 2] += ws2 - 1
    rel[:, :, 0] *= 3 * ws1 - 1      # reproduces the reference's multipliers exactly
    rel[:, :, 1] *= 2 * ws1 - 1
    return rel.sum(-1)               # (N, N)


def build_padded_bias(rpb_table, rel_pos_index, num_heads, n_pad):
    """Precompute the (H, Npad, Npad) relative-position bias once at init."""
    n = rel_pos_index.shape[0]
    bias = rpb_table[rel_pos_index.reshape(-1)]
    bias = bias.reshape(n, n, num_heads).transpose(2, 0, 1).astype(jnp.float32)
    # padded key columns get -1e9 -> softmax weight underflows to exactly 0.
    return jnp.pad(bias, ((0, 0), (0, n_pad - n), (0, n_pad - n)),
                   constant_values=-1e9)


@functools.partial(jax.jit, static_argnames=("num_heads",))
def window_attention_kv_forward(skip, x_up, kv_w_t, kv_b, proj_w_t, proj_b,
                                bias_pad, pos_embed=None, *, num_heads):
    """Matches WindowAttention_kv.forward(skip, x_up, pos_embed, mask=None).
    attn_drop / proj_drop are identity (p = 0.0)."""
    # TODO(synk): mask != None path (per-window additive (nW, N, N) mask) is not
    # implemented; fold it into bias_pad per window group if ever needed.
    B_, N, C = skip.shape
    assert C % num_heads == 0
    hd = C // num_heads
    scale = float(hd) ** -0.5
    H, Npad, _ = bias_pad.shape
    padn = Npad - N

    # pad token axis ONCE (lane/sublane friendly); padded keys masked via bias.
    skip_p = jnp.pad(skip, ((0, 0), (0, padn), (0, 0)))
    q_p = jnp.pad(x_up, ((0, 0), (0, padn), (0, 0)))
    pos_p = None
    if pos_embed is not None:
        pos_p = jnp.pad(pos_embed, ((0, 0), (0, padn), (0, 0)))

    bias2d = bias_pad.reshape(H * Npad, Npad)   # free contiguous reshape

    out = fused_window_attention(skip_p, q_p, bias2d, kv_w_t, kv_b,
                                 proj_w_t, proj_b,
                                 num_heads=num_heads, scale=scale, pos=pos_p)
    return out[:, :N, :]


# ----------------------------- pure-JAX reference ------------------------------

def reference_forward(skip, x_up, kv_w, kv_b, proj_w, proj_b, rpb, rpi, num_heads):
    B_, N, C = skip.shape
    hd = C // num_heads
    scale = hd ** -0.5
    hi = jax.lax.Precision.HIGHEST
    kv = jnp.einsum("bnc,oc->bno", skip, kv_w, precision=hi) + kv_b
    kv = kv.reshape(B_, N, 2, num_heads, hd).transpose(2, 0, 3, 1, 4)
    k, v = kv[0], kv[1]
    q = x_up.reshape(B_, N, num_heads, hd).transpose(0, 2, 1, 3) * scale
    attn = jnp.einsum("bhnd,bhmd->bhnm", q, k, precision=hi)
    bias = rpb[rpi.reshape(-1)].reshape(N, N, num_heads).transpose(2, 0, 1)
    attn = jax.nn.softmax(attn + bias[None], axis=-1)
    x = jnp.einsum("bhnm,bhmd->bhnd", attn, v, precision=hi)
    x = x.transpose(0, 2, 1, 3).reshape(B_, N, C)
    return jnp.einsum("bnc,oc->bno", x, proj_w, precision=hi) + proj_b


# ----------------------------- main ---------------------------------------------

if __name__ == "__main__":
    dim, num_heads, window_size = 32, 4, (7, 7, 7)
    n_tokens = window_size[0] * window_size[1] * window_size[2]     # 343
    n_windows = 8                                                   # B_
    n_pad = ((n_tokens + 127) // 128) * 128                         # 384

    key = jax.random.PRNGKey(0)
    ks = jax.random.split(key, 8)
    # parameters (PyTorch Linear layout: weight is (out, in)); std scaled so the
    # numerical self-check below is meaningful.
    kv_w = 0.1 * jax.random.normal(ks[0], (2 * dim, dim), jnp.float32)
    kv_b = 0.1 * jax.random.normal(ks[1], (2 * dim,), jnp.float32)
    proj_w = 0.1 * jax.random.normal(ks[2], (dim, dim), jnp.float32)
    proj_b = 0.1 * jax.random.normal(ks[3], (dim,), jnp.float32)
    tbl = (2 * window_size[0] - 1) * (2 * window_size[1] - 1) * (2 * window_size[2] - 1)
    rpb = 0.02 * jax.random.normal(ks[4], (tbl, num_heads), jnp.float32)
    skip = jax.random.normal(ks[5], (n_windows, n_tokens, dim), jnp.float32)
    x_up = jax.random.normal(ks[6], (n_windows, n_tokens, dim), jnp.float32)

    # one-time precompute (parameter-only): rel-pos index, padded (H,Npad,Npad)
    # bias, transposed weights for the row-major "x @ W" kernel.
    rpi = make_relative_position_index(window_size)
    bias_pad = build_padded_bias(rpb, rpi, num_heads, n_pad)
    kv_w_t = kv_w.T
    proj_w_t = proj_w.T

    out = window_attention_kv_forward(skip, x_up, kv_w_t, kv_b, proj_w_t, proj_b,
                                      bias_pad, num_heads=num_heads)
    out = jax.block_until_ready(out)

    assert out.shape == (n_windows, n_tokens, dim), out.shape
    assert bool(jnp.all(jnp.isfinite(out)))

    ref = reference_forward(skip, x_up, kv_w, kv_b, proj_w, proj_b, rpb,
                            jnp.asarray(rpi), num_heads)
    ref = jax.block_until_ready(ref)
    assert np.allclose(np.asarray(out), np.asarray(ref), rtol=2e-2, atol=2e-2), (
        "max abs err", float(jnp.max(jnp.abs(out - ref))))

    print("KERNEL_OK")
</pallas_src>

<mosaic_0001>
module attributes {stable_mosaic.version = 11 : i64} {
  func.func @_fused_attn_kernel(%arg0: i32, %arg1: i32, %arg2: memref<1x384x32xf32, #tpu.memory_space<vmem>>, %arg3: memref<1x128x32xf32, #tpu.memory_space<vmem>>, %arg4: memref<1536x384xf32, #tpu.memory_space<vmem>>, %arg5: memref<32x64xf32, #tpu.memory_space<vmem>>, %arg6: memref<1x64xf32, #tpu.memory_space<vmem>>, %arg7: memref<32x32xf32, #tpu.memory_space<vmem>>, %arg8: memref<1x32xf32, #tpu.memory_space<vmem>>, %arg9: memref<1x128x32xf32, #tpu.memory_space<vmem>>, %arg10: memref<384x64xf32, #tpu.memory_space<vmem>>) attributes {dimension_semantics = [#tpu.dimension_semantics<parallel>, #tpu.dimension_semantics<arbitrary>], iteration_bounds = array<i64: 8, 3>, scalar_prefetch = 0 : i64, scratch_operands = 1 : i64, tpu.core_type = #tpu.core_type<tc>, window_params = [{transform_indices = @transform_0, window_bounds = array<i64: 1, 384, 32>}, {transform_indices = @transform_1, window_bounds = array<i64: 1, 128, 32>}, {pipeline_mode = #tpu.pipeline_mode<synchronous>, transform_indices = @transform_2, window_bounds = array<i64: 1536, 384>}, {pipeline_mode = #tpu.pipeline_mode<synchronous>, transform_indices = @transform_3, window_bounds = array<i64: 32, 64>}, {pipeline_mode = #tpu.pipeline_mode<synchronous>, transform_indices = @transform_4, window_bounds = array<i64: 1, 64>}, {pipeline_mode = #tpu.pipeline_mode<synchronous>, transform_indices = @transform_5, window_bounds = array<i64: 32, 32>}, {pipeline_mode = #tpu.pipeline_mode<synchronous>, transform_indices = @transform_6, window_bounds = array<i64: 1, 32>}, {transform_indices = @transform_7, window_bounds = array<i64: 1, 128, 32>}]} {
    %c0_i32 = arith.constant 0 : i32
    %0 = arith.cmpi eq, %arg1, %c0_i32 : i32
    %1 = arith.extui %0 : i1 to i32
    %c0_i32_0 = arith.constant 0 : i32
    %2 = arith.cmpi ne, %1, %c0_i32_0 : i32
    scf.if %2 {
      %c0_40 = arith.constant 0 : index
      %c0_41 = arith.constant 0 : index
      %c0_42 = arith.constant 0 : index
      %107 = vector.load %arg2[%c0_40, %c0_41, %c0_42] : memref<1x384x32xf32, #tpu.memory_space<vmem>>, vector<1x384x32xf32>
      %108 = vector.shape_cast %107 : vector<1x384x32xf32> to vector<384x32xf32>
      %c0_43 = arith.constant 0 : index
      %c0_44 = arith.constant 0 : index
      %109 = vector.load %arg5[%c0_43, %c0_44] : memref<32x64xf32, #tpu.memory_space<vmem>>, vector<32x64xf32>
      %cst_45 = arith.constant dense<0.000000e+00> : vector<384x64xf32>
      %110 = tpu.matmul %108, %109, %cst_45 {dimension_numbers = #tpu.dot_dimension_numbers<[1], [0], [0], [1], [0, 0, 1, 1], [], []>} : vector<384x32xf32>, vector<32x64xf32>, vector<384x64xf32> -> vector<384x64xf32>
      %c0_46 = arith.constant 0 : index
      %c0_47 = arith.constant 0 : index
      %111 = vector.load %arg6[%c0_46, %c0_47] : memref<1x64xf32, #tpu.memory_space<vmem>>, vector<1x64xf32>
      %112 = vector.broadcast %111 : vector<1x64xf32> to vector<384x64xf32>
      %113 = arith.addf %110, %112 : vector<384x64xf32>
      %c0_48 = arith.constant 0 : index
      %c0_49 = arith.constant 0 : index
      %114 = vector.load %arg10[%c0_48, %c0_49] : memref<384x64xf32, #tpu.memory_space<vmem>>, vector<384x64xf32>
      tpu.vector_store %arg10[%c0_48, %c0_49], %113 {strides = array<i32>} : memref<384x64xf32, #tpu.memory_space<vmem>>, vector<384x64xf32>,
    } else {
    }
    %c0 = arith.constant 0 : index
    %c0_1 = arith.constant 0 : index
    %c0_2 = arith.constant 0 : index
    %3 = vector.load %arg3[%c0, %c0_1, %c0_2] : memref<1x128x32xf32, #tpu.memory_space<vmem>>, vector<1x128x32xf32>
    %4 = vector.shape_cast %3 : vector<1x128x32xf32> to vector<128x32xf32>
    %c0_3 = arith.constant 0 : index
    %c0_4 = arith.constant 0 : index
    %5 = vector.load %arg10[%c0_3, %c0_4] : memref<384x64xf32, #tpu.memory_space<vmem>>, vector<384x64xf32>
    %6 = vector.extract_strided_slice %4 {offsets = [0, 0], sizes = [128, 8], strides = [1, 1]} : vector<128x32xf32> to vector<128x8xf32>
    %cst = arith.constant 0.353553385 : f32
    %7 = vector.broadcast %cst : f32 to vector<128x8xf32>
    %8 = arith.mulf %6, %7 : vector<128x8xf32>
    %9 = vector.extract_strided_slice %5 {offsets = [0, 0], sizes = [384, 8], strides = [1, 1]} : vector<384x64xf32> to vector<384x8xf32>
    %10 = vector.extract_strided_slice %5 {offsets = [0, 32], sizes = [384, 8], strides = [1, 1]} : vector<384x64xf32> to vector<384x8xf32>
    %cst_5 = arith.constant dense<0.000000e+00> : vector<128x384xf32>
    %11 = tpu.matmul %8, %9, %cst_5 {dimension_numbers = #tpu.dot_dimension_numbers<[1], [1], [0], [0], [0, 0, 1, 0], [], []>} : vector<128x8xf32>, vector<384x8xf32>, vector<128x384xf32> -> vector<128x384xf32>
    %c128_i32 = arith.constant 128 : i32
    %12 = arith.muli %arg1, %c128_i32 : i32
    %c0_i32_6 = arith.constant 0 : i32
    %13 = arith.addi %c0_i32_6, %12 : i32
    %14 = tpu.assume_multiple %13, 128 : i32
    %15 = arith.index_cast %14 : i32 to index
    %c0_7 = arith.constant 0 : index
    %16 = vector.load %arg4[%15, %c0_7] : memref<1536x384xf32, #tpu.memory_space<vmem>>, vector<128x384xf32>
    %17 = arith.addf %11, %16 : vector<128x384xf32>
    %cst_8 = arith.constant dense<0xFF800000> : vector<128xf32>
    %18 = vector.multi_reduction <maximumf>, %17, %cst_8 [1] : vector<128x384xf32> to vector<128xf32>
    %19 = vector.shape_cast %18 : vector<128xf32> to vector<128x1xf32>
    %20 = vector.broadcast %19 : vector<128x1xf32> to vector<128x384xf32>
    %21 = arith.subf %17, %20 : vector<128x384xf32>
    %22 = math.exp %21 : vector<128x384xf32>
    %cst_9 = arith.constant dense<0.000000e+00> : vector<128xf32>
    %23 = vector.multi_reduction <add>, %22, %cst_9 [1] : vector<128x384xf32> to vector<128xf32>
    %24 = vector.shape_cast %23 : vector<128xf32> to vector<128x1xf32>
    %cst_10 = arith.constant dense<0.000000e+00> : vector<128x8xf32>
    %25 = tpu.matmul %22, %10, %cst_10 {dimension_numbers = #tpu.dot_dimension_numbers<[1], [0], [0], [1], [0, 0, 1, 1], [], []>} : vector<128x384xf32>, vector<384x8xf32>, vector<128x8xf32> -> vector<128x8xf32>
    %26 = tpu.reciprocal %24 {approx = true} : vector<128x1xf32> -> vector<128x1xf32>
    %27 = vector.broadcast %26 : vector<128x1xf32> to vector<128x8xf32>
    %28 = arith.mulf %25, %27 : vector<128x8xf32>
    %29 = vector.extract_strided_slice %4 {offsets = [0, 8], sizes = [128, 8], strides = [1, 1]} : vector<128x32xf32> to vector<128x8xf32>
    %cst_11 = arith.constant 0.353553385 : f32
    %30 = vector.broadcast %cst_11 : f32 to vector<128x8xf32>
    %31 = arith.mulf %29, %30 : vector<128x8xf32>
    %32 = vector.extract_strided_slice %5 {offsets = [0, 8], sizes = [384, 8], strides = [1, 1]} : vector<384x64xf32> to vector<384x8xf32>
    %33 = vector.extract_strided_slice %5 {offsets = [0, 40], sizes = [384, 8], strides = [1, 1]} : vector<384x64xf32> to vector<384x8xf32>
    %cst_12 = arith.constant dense<0.000000e+00> : vector<128x384xf32>
    %34 = tpu.matmul %31, %32, %cst_12 {dimension_numbers = #tpu.dot_dimension_numbers<[1], [1], [0], [0], [0, 0, 1, 0], [], []>} : vector<128x8xf32>, vector<384x8xf32>, vector<128x384xf32> -> vector<128x384xf32>
    %c128_i32_13 = arith.constant 128 : i32
    %35 = arith.muli %arg1, %c128_i32_13 : i32
    %c384_i32 = arith.constant 384 : i32
    %36 = arith.addi %c384_i32, %35 : i32
    %37 = tpu.assume_multiple %36, 128 : i32
    %38 = arith.index_cast %37 : i32 to index
    %c0_14 = arith.constant 0 : index
    %39 = vector.load %arg4[%38, %c0_14] : memref<1536x384xf32, #tpu.memory_space<vmem>>, vector<128x384xf32>
    %40 = arith.addf %34, %39 : vector<128x384xf32>
    %cst_15 = arith.constant dense<0xFF800000> : vector<128xf32>
    %41 = vector.multi_reduction <maximumf>, %40, %cst_15 [1] : vector<128x384xf32> to vector<128xf32>
    %42 = vector.shape_cast %41 : vector<128xf32> to vector<128x1xf32>
    %43 = vector.broadcast %42 : vector<128x1xf32> to vector<128x384xf32>
    %44 = arith.subf %40, %43 : vector<128x384xf32>
    %45 = math.exp %44 : vector<128x384xf32>
    %cst_16 = arith.constant dense<0.000000e+00> : vector<128xf32>
    %46 = vector.multi_reduction <add>, %45, %cst_16 [1] : vector<128x384xf32> to vector<128xf32>
    %47 = vector.shape_cast %46 : vector<128xf32> to vector<128x1xf32>
    %cst_17 = arith.constant dense<0.000000e+00> : vector<128x8xf32>
    %48 = tpu.matmul %45, %33, %cst_17 {dimension_numbers = #tpu.dot_dimension_numbers<[1], [0], [0], [1], [0, 0, 1, 1], [], []>} : vector<128x384xf32>, vector<384x8xf32>, vector<128x8xf32> -> vector<128x8xf32>
    %49 = tpu.reciprocal %47 {approx = true} : vector<128x1xf32> -> vector<128x1xf32>
    %50 = vector.broadcast %49 : vector<128x1xf32> to vector<128x8xf32>
    %51 = arith.mulf %48, %50 : vector<128x8xf32>
    %52 = vector.extract_strided_slice %4 {offsets = [0, 16], sizes = [128, 8], strides = [1, 1]} : vector<128x32xf32> to vector<128x8xf32>
    %cst_18 = arith.constant 0.353553385 : f32
    %53 = vector.broadcast %cst_18 : f32 to vector<128x8xf32>
    %54 = arith.mulf %52, %53 : vector<128x8xf32>
    %55 = vector.extract_strided_slice %5 {offsets = [0, 16], sizes = [384, 8], strides = [1, 1]} : vector<384x64xf32> to vector<384x8xf32>
    %56 = vector.extract_strided_slice %5 {offsets = [0, 48], sizes = [384, 8], strides = [1, 1]} : vector<384x64xf32> to vector<384x8xf32>
    %cst_19 = arith.constant dense<0.000000e+00> : vector<128x384xf32>
    %57 = tpu.matmul %54, %55, %cst_19 {dimension_numbers = #tpu.dot_dimension_numbers<[1], [1], [0], [0], [0, 0, 1, 0], [], []>} : vector<128x8xf32>, vector<384x8xf32>, vector<128x384xf32> -> vector<128x384xf32>
    %c128_i32_20 = arith.constant 128 : i32
    %58 = arith.muli %arg1, %c128_i32_20 : i32
    %c768_i32 = arith.constant 768 : i32
    %59 = arith.addi %c768_i32, %58 : i32
    %60 = tpu.assume_multiple %59, 128 : i32
    %61 = arith.index_cast %60 : i32 to index
    %c0_21 = arith.constant 0 : index
    %62 = vector.load %arg4[%61, %c0_21] : memref<1536x384xf32, #tpu.memory_space<vmem>>, vector<128x384xf32>
    %63 = arith.addf %57, %62 : vector<128x384xf32>
    %cst_22 = arith.constant dense<0xFF800000> : vector<128xf32>
    %64 = vector.multi_reduction <maximumf>, %63, %cst_22 [1] : vector<128x384xf32> to vector<128xf32>
    %65 = vector.shape_cast %64 : vector<128xf32> to vector<128x1xf32>
    %66 = vector.broadcast %65 : vector<128x1xf32> to vector<128x384xf32>
    %67 = arith.subf %63, %66 : vector<128x384xf32>
    %68 = math.exp %67 : vector<128x384xf32>
    %cst_23 = arith.constant dense<0.000000e+00> : vector<128xf32>
    %69 = vector.multi_reduction <add>, %68, %cst_23 [1] : vector<128x384xf32> to vector<128xf32>
    %70 = vector.shape_cast %69 : vector<128xf32> to vector<128x1xf32>
    %cst_24 = arith.constant dense<0.000000e+00> : vector<128x8xf32>
    %71 = tpu.matmul %68, %56, %cst_24 {dimension_numbers = #tpu.dot_dimension_numbers<[1], [0], [0], [1], [0, 0, 1, 1], [], []>} : vector<128x384xf32>, vector<384x8xf32>, vector<128x8xf32> -> vector<128x8xf32>
    %72 = tpu.reciprocal %70 {approx = true} : vector<128x1xf32> -> vector<128x1xf32>
    %73 = vector.broadcast %72 : vector<128x1xf32> to vector<128x8xf32>
    %74 = arith.mulf %71, %73 : vector<128x8xf32>
    %75 = vector.extract_strided_slice %4 {offsets = [0, 24], sizes = [128, 8], strides = [1, 1]} : vector<128x32xf32> to vector<128x8xf32>
    %cst_25 = arith.constant 0.353553385 : f32
    %76 = vector.broadcast %cst_25 : f32 to vector<128x8xf32>
    %77 = arith.mulf %75, %76 : vector<128x8xf32>
    %78 = vector.extract_strided_slice %5 {offsets = [0, 24], sizes = [384, 8], strides = [1, 1]} : vector<384x64xf32> to vector<384x8xf32>
    %79 = vector.extract_strided_slice %5 {offsets = [0, 56], sizes = [384, 8], strides = [1, 1]} : vector<384x64xf32> to vector<384x8xf32>
    %cst_26 = arith.constant dense<0.000000e+00> : vector<128x384xf32>
    %80 = tpu.matmul %77, %78, %cst_26 {dimension_numbers = #tpu.dot_dimension_numbers<[1], [1], [0], [0], [0, 0, 1, 0], [], []>} : vector<128x8xf32>, vector<384x8xf32>, vector<128x384xf32> -> vector<128x384xf32>
    %c128_i32_27 = arith.constant 128 : i32
    %81 = arith.muli %arg1, %c128_i32_27 : i32
    %c1152_i32 = arith.constant 1152 : i32
    %82 = arith.addi %c1152_i32, %81 : i32
    %83 = tpu.assume_multiple %82, 128 : i32
    %84 = arith.index_cast %83 : i32 to index
    %c0_28 = arith.constant 0 : index
    %85 = vector.load %arg4[%84, %c0_28] : memref<1536x384xf32, #tpu.memory_space<vmem>>, vector<128x384xf32>
    %86 = arith.addf %80, %85 : vector<128x384xf32>
    %cst_29 = arith.constant dense<0xFF800000> : vector<128xf32>
    %87 = vector.multi_reduction <maximumf>, %86, %cst_29 [1] : vector<128x384xf32> to vector<128xf32>
    %88 = vector.shape_cast %87 : vector<128xf32> to vector<128x1xf32>
    %89 = vector.broadcast %88 : vector<128x1xf32> to vector<128x384xf32>
    %90 = arith.subf %86, %89 : vector<128x384xf32>
    %91 = math.exp %90 : vector<128x384xf32>
    %cst_30 = arith.constant dense<0.000000e+00> : vector<128xf32>
    %92 = vector.multi_reduction <add>, %91, %cst_30 [1] : vector<128x384xf32> to vector<128xf32>
    %93 = vector.shape_cast %92 : vector<128xf32> to vector<128x1xf32>
    %cst_31 = arith.constant dense<0.000000e+00> : vector<128x8xf32>
    %94 = tpu.matmul %91, %79, %cst_31 {dimension_numbers = #tpu.dot_dimension_numbers<[1], [0], [0], [1], [0, 0, 1, 1], [], []>} : vector<128x384xf32>, vector<384x8xf32>, vector<128x8xf32> -> vector<128x8xf32>
    %95 = tpu.reciprocal %93 {approx = true} : vector<128x1xf32> -> vector<128x1xf32>
    %96 = vector.broadcast %95 : vector<128x1xf32> to vector<128x8xf32>
    %97 = arith.mulf %94, %96 : vector<128x8xf32>
    %98 = tpu.concatenate %28, %51, %74, %97 in 1 : vector<128x8xf32>, vector<128x8xf32>, vector<128x8xf32>, vector<128x8xf32> -> vector<128x32xf32>
    %c0_32 = arith.constant 0 : index
    %c0_33 = arith.constant 0 : index
    %99 = vector.load %arg7[%c0_32, %c0_33] : memref<32x32xf32, #tpu.memory_space<vmem>>, vector<32x32xf32>
    %cst_34 = arith.constant dense<0.000000e+00> : vector<128x32xf32>
    %100 = tpu.matmul %98, %99, %cst_34 {dimension_numbers = #tpu.dot_dimension_numbers<[1], [0], [0], [1], [0, 0, 1, 1], [], []>} : vector<128x32xf32>, vector<32x32xf32>, vector<128x32xf32> -> vector<128x32xf32>
    %c0_35 = arith.constant 0 : index
    %c0_36 = arith.constant 0 : index
    %101 = vector.load %arg8[%c0_35, %c0_36] : memref<1x32xf32, #tpu.memory_space<vmem>>, vector<1x32xf32>
    %102 = vector.broadcast %101 : vector<1x32xf32> to vector<128x32xf32>
    %103 = arith.addf %100, %102 : vector<128x32xf32>
    %c0_37 = arith.constant 0 : index
    %c0_38 = arith.constant 0 : index
    %c0_39 = arith.constant 0 : index
    %104 = vector.load %arg9[%c0_37, %c0_38, %c0_39] : memref<1x128x32xf32, #tpu.memory_space<vmem>>, vector<1x128x32xf32>
    %105 = vector.shape_cast %104 : vector<1x128x32xf32> to vector<128x32xf32>
    %106 = vector.shape_cast %103 : vector<128x32xf32> to vector<1x128x32xf32>
    tpu.vector_store %arg9[%c0_37, %c0_38, %c0_39], %106 {strides = array<i32>} : memref<1x128x32xf32, #tpu.memory_space<vmem>>, vector<1x128x32xf32>,
    return
  }
  func.func @transform_0(%arg0: i32, %arg1: i32) -> (i32, i32, i32) {
    %c0_i32 = arith.constant 0 : i32
    %c0_i32_0 = arith.constant 0 : i32
    %c0_i32_1 = arith.constant 0 : i32
    return %arg0, %c0_i32, %c0_i32_0 : i32, i32, i32
  }
  func.func @transform_1(%arg0: i32, %arg1: i32) -> (i32, i32, i32) {
    %c0_i32 = arith.constant 0 : i32
    %c0_i32_0 = arith.constant 0 : i32
    return %arg0, %arg1, %c0_i32 : i32, i32, i32
  }
  func.func @transform_2(%arg0: i32, %arg1: i32) -> (i32, i32) {
    %c0_i32 = arith.constant 0 : i32
    %c0_i32_0 = arith.constant 0 : i32
    %c0_i32_1 = arith.constant 0 : i32
    return %c0_i32, %c0_i32_0 : i32, i32
  }
  func.func @transform_3(%arg0: i32, %arg1: i32) -> (i32, i32) {
    %c0_i32 = arith.constant 0 : i32
    %c0_i32_0 = arith.constant 0 : i32
    %c0_i32_1 = arith.constant 0 : i32
    return %c0_i32, %c0_i32_0 : i32, i32
  }
  func.func @transform_4(%arg0: i32, %arg1: i32) -> (i32, i32) {
    %c0_i32 = arith.constant 0 : i32
    %c0_i32_0 = arith.constant 0 : i32
    %c0_i32_1 = arith.constant 0 : i32
    return %c0_i32, %c0_i32_0 : i32, i32
  }
  func.func @transform_5(%arg0: i32, %arg1: i32) -> (i32, i32) {
    %c0_i32 = arith.constant 0 : i32
    %c0_i32_0 = arith.constant 0 : i32
    %c0_i32_1 = arith.constant 0 : i32
    return %c0_i32, %c0_i32_0 : i32, i32
  }
  func.func @transform_6(%arg0: i32, %arg1: i32) -> (i32, i32) {
    %c0_i32 = arith.constant 0 : i32
    %c0_i32_0 = arith.constant 0 : i32
    %c0_i32_1 = arith.constant 0 : i32
    return %c0_i32, %c0_i32_0 : i32, i32
  }
  func.func @transform_7(%arg0: i32, %arg1: i32) -> (i32, i32, i32) {
    %c0_i32 = arith.constant 0 : i32
    %c0_i32_0 = arith.constant 0 : i32
    return %arg0, %arg1, %c0_i32 : i32, i32, i32
  }
}

</mosaic_0001>

<llo_original>
// kernel: window_attention_kv_forward.1
$region0: #{window_attention_kv_forward.1}
  #allocation0 [shape = 'u32[]', space=smem, size = 0x4, offset = 0x4, fixed_abs, tag = 'smem constant byte address 0x4 - core index']
  #allocation1 [shape = 'u32[144,128]{1,0:T(1,128)}', space=vmem, size = 0x12000, scoped, tag = 'internal scratch']
  #allocation2 [shape = 'f32[384,64]{1,0:T(8,128)}', space=vmem, size = 0x30000, scoped, tag = 'scratch operand']
  %s0 = inlined_call_operand.vmem [shape: f32[8,384,32], index: 0, kind: input, shape index: {}]
  %s1 = inlined_call_operand.vmem [shape: f32[8,384,32], index: 1, kind: input, shape index: {}]
  %s2 = inlined_call_operand.vmem [shape: f32[1536,384], index: 2, kind: input, shape index: {}]
  %s3 = inlined_call_operand.vmem [shape: f32[32,64], index: 3, kind: input, shape index: {}]
  %s4 = inlined_call_operand.vmem [shape: f32[1,64], index: 4, kind: input, shape index: {}]
  %s5 = inlined_call_operand.vmem [shape: f32[32,32], index: 5, kind: input, shape index: {}]
  %s6 = inlined_call_operand.vmem [shape: f32[1,32], index: 6, kind: input, shape index: {}]
  %s7 = inlined_call_operand.vmem [shape: f32[8,384,32], index: 7, kind: output, shape index: {}]
  %s8 = sld [smem:[#allocation0]]
  $region65: #{window_attention_kv_forward.1} parent=0
    _
  %s10 = ssub.s32 1, %s8
  %s11 = scalar_select 0, %s10, %s8
  loop: start=0, step=1, limit=26
  $region2: #{window_attention_kv_forward.1} parent=0 // loop_pre_header
    _
  $region3: #{window_attention_kv_forward.1} parent=0 // loop_header
    %s13 = sphi 0, %s17
    %p14 = scmp.ge.s32.totalorder %s13, 26
    %s20 = sphi 0, %s32
    %s21 = sphi 0, %s28
    %s22 = sphi 0, %s20
    %s23 = sphi 0, %s21
    %s24 = sphi 0, %s22
    %s25 = sphi 0, %s23
    %s35 = sphi 0, %s37
    %s38 = sphi 0, %s35
    %s39 = sphi 0, %s38
    %s55 = sphi 0, %s39
    %s63 = sphi 0, %s65
    %s66 = sphi 0, %s63
    %s67 = sphi 0, %s66
    %s83 = sphi 0, %s67
    %s87 = sphi 0, %s87
    %s89 = sphi 0, %s87
    %s90 = sphi 0, %s89
    %s104 = sphi 0, %s90
    %s108 = sphi 0, %s108
    %s110 = sphi 0, %s108
    %s111 = sphi 0, %s110
    %s125 = sphi 0, %s111
    %s129 = sphi 0, %s129
    %s131 = sphi 0, %s129
    %s132 = sphi 0, %s131
    %s146 = sphi 0, %s132
    %s150 = sphi 0, %s150
    %s152 = sphi 0, %s150
    %s153 = sphi 0, %s152
    %s167 = sphi 0, %s153
    %s171 = sphi 0, %s171
    %s173 = sphi 0, %s171
    %s174 = sphi 0, %s173
    %s188 = sphi 0, %s174
    %s196 = sphi 0, %s198
    %s199 = sphi 0, %s196
    %s200 = sphi 0, %s199
    %s216 = sphi 0, %s200
  $region4: #{window_attention_kv_forward.1} parent=0 // loop_header_branch
    %16 = sbr.rel (%p14) target = $region8
  $region5: #{window_attention_kv_forward.1} parent=0 // loop_body
    %s18 = ssub.s32 %s13, 1
    %s19 = ssub.s32 %s13, 2
    %s26 = sadd.s32 1, %s21
    %p27 = scmp.ge.s32.totalorder %s26, 3
    %s28 = scalar_select %p27, 0, %s26
    %s29 = sadd.s32 1, %s20
    %s30 = scalar_select %p27, %s29, %s20
    %p31 = scmp.ge.s32.totalorder %s30, 8
    %s32 = scalar_select %p31, 0, %s30
    %s33 = ssub.s32 %s20, %s32
    %p34 = scmp.eq.s32.totalorder %s33, 0
    %s36 = sadd.s32 %s35, 1
    %s37 = scalar_select %p34, %s35, %s36
    %p40 = pneg %p34
    %p41 = scmp.eq.s32.totalorder %s13, 23
    %p42 = por %p40, %p41
    %p43 = scmp.ne.s32.totalorder %s35, %s38
    %p44 = scmp.eq.s32.totalorder %s13, 0
    %p45 = por %p43, %p44
    %p46 = scmp.ne.s32.totalorder %s35, %s38
    %p47 = scmp.eq.s32.totalorder %s18, 23
    %p48 = por %p46, %p47
    %p49 = scmp.ne.s32.totalorder %s38, %s39
    %p50 = scmp.eq.s32.totalorder %s18, 0
    %p51 = por %p49, %p50
    %p52 = scmp.ne.s32.totalorder %s38, %s39
    %p53 = scmp.eq.s32.totalorder %s19, 23
    %p54 = por %p52, %p53
    %p56 = scmp.ne.s32.totalorder %s39, %s55
    %p57 = scmp.eq.s32.totalorder %s19, 0
    %p58 = por %p56, %p57
    %s59 = ssub.s32 %s20, %s32
    %s60 = ssub.s32 %s21, %s28
    %s61 = sor.u32 %s59, %s60
    %p62 = scmp.eq.s32.totalorder %s61, 0
    %s64 = sadd.s32 %s63, 1
    %s65 = scalar_select %p62, %s63, %s64
    %p68 = pneg %p62
    %p69 = scmp.eq.s32.totalorder %s13, 23
    %p70 = por %p68, %p69
    %p71 = scmp.ne.s32.totalorder %s63, %s66
    %p72 = scmp.eq.s32.totalorder %s13, 0
    %p73 = por %p71, %p72
    %p74 = scmp.ne.s32.totalorder %s63, %s66
    %p75 = scmp.eq.s32.totalorder %s18, 23
    %p76 = por %p74, %p75
    %p77 = scmp.ne.s32.totalorder %s66, %s67
    %p78 = scmp.eq.s32.totalorder %s18, 0
    %p79 = por %p77, %p78
    %p80 = scmp.ne.s32.totalorder %s66, %s67
    %p81 = scmp.eq.s32.totalorder %s19, 23
    %p82 = por %p80, %p81
    %p84 = scmp.ne.s32.totalorder %s67, %s83
    %p85 = scmp.eq.s32.totalorder %s19, 0
    %p86 = por %p84, %p85
    %s88 = sadd.s32 %s87, 1
    %p91 = scmp.eq.s32.totalorder %s13, 23
    %p92 = scmp.ne.s32.totalorder %s87, %s89
    %p93 = scmp.eq.s32.totalorder %s13, 0
    %p94 = por %p92, %p93
    %p95 = scmp.ne.s32.totalorder %s87, %s89
    %p96 = scmp.eq.s32.totalorder %s18, 23
    %p97 = por %p95, %p96
    %p98 = scmp.ne.s32.totalorder %s89, %s90
    %p99 = scmp.eq.s32.totalorder %s18, 0
    %p100 = por %p98, %p99
    %p101 = scmp.ne.s32.totalorder %s89, %s90
    %p102 = scmp.eq.s32.totalorder %s19, 23
    %p103 = por %p101, %p102
    %p105 = scmp.ne.s32.totalorder %s90, %s104
    %p106 = scmp.eq.s32.totalorder %s19, 0
    %p107 = por %p105, %p106
    %s109 = sadd.s32 %s108, 1
    %p112 = scmp.eq.s32.totalorder %s13, 23
    %p113 = scmp.ne.s32.totalorder %s108, %s110
    %p114 = scmp.eq.s32.totalorder %s13, 0
    %p115 = por %p113, %p114
    %p116 = scmp.ne.s32.totalorder %s108, %s110
    %p117 = scmp.eq.s32.totalorder %s18, 23
    %p118 = por %p116, %p117
    %p119 = scmp.ne.s32.totalorder %s110, %s111
    %p120 = scmp.eq.s32.totalorder %s18, 0
    %p121 = por %p119, %p120
    %p122 = scmp.ne.s32.totalorder %s110, %s111
    %p123 = scmp.eq.s32.totalorder %s19, 23
    %p124 = por %p122, %p123
    %p126 = scmp.ne.s32.totalorder %s111, %s125
    %p127 = scmp.eq.s32.totalorder %s19, 0
    %p128 = por %p126, %p127
    %s130 = sadd.s32 %s129, 1
    %p133 = scmp.eq.s32.totalorder %s13, 23
    %p134 = scmp.ne.s32.totalorder %s129, %s131
    %p135 = scmp.eq.s32.totalorder %s13, 0
    %p136 = por %p134, %p135
    %p137 = scmp.ne.s32.totalorder %s129, %s131
    %p138 = scmp.eq.s32.totalorder %s18, 23
    %p139 = por %p137, %p138
    %p140 = scmp.ne.s32.totalorder %s131, %s132
    %p141 = scmp.eq.s32.totalorder %s18, 0
    %p142 = por %p140, %p141
    %p143 = scmp.ne.s32.totalorder %s131, %s132
    %p144 = scmp.eq.s32.totalorder %s19, 23
    %p145 = por %p143, %p144
    %p147 = scmp.ne.s32.totalorder %s132, %s146
    %p148 = scmp.eq.s32.totalorder %s19, 0
    %p149 = por %p147, %p148
    %s151 = sadd.s32 %s150, 1
    %p154 = scmp.eq.s32.totalorder %s13, 23
    %p155 = scmp.ne.s32.totalorder %s150, %s152
    %p156 = scmp.eq.s32.totalorder %s13, 0
    %p157 = por %p155, %p156
    %p158 = scmp.ne.s32.totalorder %s150, %s152
    %p159 = scmp.eq.s32.totalorder %s18, 23
    %p160 = por %p158, %p159
    %p161 = scmp.ne.s32.totalorder %s152, %s153
    %p162 = scmp.eq.s32.totalorder %s18, 0
    %p163 = por %p161, %p162
    %p164 = scmp.ne.s32.totalorder %s152, %s153
    %p165 = scmp.eq.s32.totalorder %s19, 23
    %p166 = por %p164, %p165
    %p168 = scmp.ne.s32.totalorder %s153, %s167
    %p169 = scmp.eq.s32.totalorder %s19, 0
    %p170 = por %p168, %p169
    %s172 = sadd.s32 %s171, 1
    %p175 = scmp.eq.s32.totalorder %s13, 23
    %p176 = scmp.ne.s32.totalorder %s171, %s173
    %p177 = scmp.eq.s32.totalorder %s13, 0
    %p178 = por %p176, %p177
    %p179 = scmp.ne.s32.totalorder %s171, %s173
    %p180 = scmp.eq.s32.totalorder %s18, 23
    %p181 = por %p179, %p180
    %p182 = scmp.ne.s32.totalorder %s173, %s174
    %p183 = scmp.eq.s32.totalorder %s18, 0
    %p184 = por %p182, %p183
    %p185 = scmp.ne.s32.totalorder %s173, %s174
    %p186 = scmp.eq.s32.totalorder %s19, 23
    %p187 = por %p185, %p186
    %p189 = scmp.ne.s32.totalorder %s174, %s188
    %p190 = scmp.eq.s32.totalorder %s19, 0
    %p191 = por %p189, %p190
    %s192 = ssub.s32 %s20, %s32
    %s193 = ssub.s32 %s21, %s28
    %s194 = sor.u32 %s192, %s193
    %p195 = scmp.eq.s32.totalorder %s194, 0
    %s197 = sadd.s32 %s196, 1
    %s198 = scalar_select %p195, %s196, %s197
    %p201 = pneg %p195
    %p202 = scmp.eq.s32.totalorder %s13, 23
    %p203 = por %p201, %p202
    %p204 = scmp.ne.s32.totalorder %s196, %s199
    %p205 = scmp.eq.s32.totalorder %s13, 0
    %p206 = por %p204, %p205
    %p207 = scmp.ne.s32.totalorder %s196, %s199
    %p208 = scmp.eq.s32.totalorder %s18, 23
    %p209 = por %p207, %p208
    %p210 = scmp.ne.s32.totalorder %s199, %s200
    %p211 = scmp.eq.s32.totalorder %s18, 0
    %p212 = por %p210, %p211
    %p213 = scmp.ne.s32.totalorder %s199, %s200
    %p214 = scmp.eq.s32.totalorder %s19, 23
    %p215 = por %p213, %p214
    %p217 = scmp.ne.s32.totalorder %s200, %s216
    %p218 = scmp.eq.s32.totalorder %s19, 0
    %p219 = por %p217, %p218
    %p220 = scmp.le.s32.totalorder 1, %s13
    %p221 = scmp.lt.s32.totalorder %s13, 25
    %p222 = pnand %p220, %p221
    %p223 = pneg %p222
    // Predicated region
    $region9: #{window_attention_kv_forward.1} parent=5 // pred_check
      _
    $region10: #{window_attention_kv_forward.1} parent=5 // pred_check_branch
      %225 = sbr.rel (%p222) target = $region12
    $region11: #{window_attention_kv_forward.1} parent=5 // pred_region
      %s226 = ssub.s32 %s13, 1
      // Predicated region
      $region13: #{window_attention_kv_forward.1} parent=11 // pred_check
        %p227 = pneg %p100
      $region14: #{window_attention_kv_forward.1} parent=11 // pred_check_branch
        %229 = sbr.rel (%p227) target = $region16
      $region15: #{window_attention_kv_forward.1} parent=11 // pred_region
        _
      $region16: #{window_attention_kv_forward.1} parent=11 // pred_fallthru
        _
      // Predicated region
      $region17: #{window_attention_kv_forward.1} parent=11 // pred_check
        %p230 = pneg %p121
      $region18: #{window_attention_kv_forward.1} parent=11 // pred_check_branch
        %232 = sbr.rel (%p230) target = $region20
      $region19: #{window_attention_kv_forward.1} parent=11 // pred_region
        _
      $region20: #{window_attention_kv_forward.1} parent=11 // pred_fallthru
        _
      // Predicated region
      $region21: #{window_attention_kv_forward.1} parent=11 // pred_check
        %p233 = pneg %p142
      $region22: #{window_attention_kv_forward.1} parent=11 // pred_check_branch
        %235 = sbr.rel (%p233) target = $region24
      $region23: #{window_attention_kv_forward.1} parent=11 // pred_region
        _
      $region24: #{window_attention_kv_forward.1} parent=11 // pred_fallthru
        _
      // Predicated region
      $region25: #{window_attention_kv_forward.1} parent=11 // pred_check
        %p236 = pneg %p163
      $region26: #{window_attention_kv_forward.1} parent=11 // pred_check_branch
        %238 = sbr.rel (%p236) target = $region28
      $region27: #{window_attention_kv_forward.1} parent=11 // pred_region
        _
      $region28: #{window_attention_kv_forward.1} parent=11 // pred_fallthru
        _
      // Predicated region
      $region29: #{window_attention_kv_forward.1} parent=11 // pred_check
        %p239 = pneg %p184
      $region30: #{window_attention_kv_forward.1} parent=11 // pred_check_branch
        %241 = sbr.rel (%p239) target = $region32
      $region31: #{window_attention_kv_forward.1} parent=11 // pred_region
        _
      $region32: #{window_attention_kv_forward.1} parent=11 // pred_fallthru
        _
    $region12: #{window_attention_kv_forward.1} parent=5 // pred_fallthru
      _
    %p242 = scmp.lt.s32.totalorder %s13, 24
    // Predicated region
    $region33: #{window_attention_kv_forward.1} parent=5 // pred_check
      %p243 = pneg %p242
    $region34: #{window_attention_kv_forward.1} parent=5 // pred_check_branch
      %245 = sbr.rel (%p243) target = $region36
    $region35: #{window_attention_kv_forward.1} parent=5 // pred_region
      // Predicated region
      $region37: #{window_attention_kv_forward.1} parent=35 // pred_check
        %p246 = pneg %p45
      $region38: #{window_attention_kv_forward.1} parent=35 // pred_check_branch
        %248 = sbr.rel (%p246) target = $region40
      $region39: #{window_attention_kv_forward.1} parent=35 // pred_region
        %p249 = scmp.lt.s32.totalorder %s20, 7
        %s250 = scalar_select %p249, %s20, 7
        %s251 = smul.addr %s250, 48
        %s252 = smul.addr %s251, 8
        %s253 = scalar_lea.vmem %s0, %s252
      $region40: #{window_attention_kv_forward.1} parent=35 // pred_fallthru
        _
      // Predicated region
      $region41: #{window_attention_kv_forward.1} parent=35 // pred_check
        %p254 = pneg %p73
      $region42: #{window_attention_kv_forward.1} parent=35 // pred_check_branch
        %256 = sbr.rel (%p254) target = $region44
      $region43: #{window_attention_kv_forward.1} parent=35 // pred_region
        %s257 = smul.u32 16, %s21
        %p258 = scmp.lt.s32.totalorder %s20, 7
        %s259 = scalar_select %p258, %s20, 7
        %p260 = scmp.lt.s32.totalorder %s257, 47
        %s261 = scalar_select %p260, %s257, 47
        %s262 = smul.addr %s259, 48
        %s263 = sadd.s32 %s261, %s262
        %s264 = smul.addr %s263, 8
        %s265 = scalar_lea.vmem %s1, %s264
        %s266 = smul.u32 16, %s21
      $region44: #{window_attention_kv_forward.1} parent=35 // pred_fallthru
        _
    $region36: #{window_attention_kv_forward.1} parent=5 // pred_fallthru
      _
    %p267 = scmp.le.s32.totalorder 1, %s13
    %p268 = scmp.lt.s32.totalorder %s13, 25
    %p269 = pnand %p267, %p268
    %p270 = pneg %p269
    // Predicated region
    $region45: #{window_attention_kv_forward.1} parent=5 // pred_check
      _
    $region46: #{window_attention_kv_forward.1} parent=5 // pred_check_branch
      %272 = sbr.rel (%p269) target = $region48
    $region47: #{window_attention_kv_forward.1} parent=5 // pred_region
      %s273 = ssub.s32 %s13, 1
      %p274 = scmp.lt.s32.totalorder %s22, 7
      %s275 = scalar_select %p274, %s22, 7
      %s276 = smul.addr %s275, 48
      %s277 = smul.addr %s276, 8
      %s278 = scalar_lea.vmem %s0, %s277
      %p279 = pneg %p51
      %p280 = pneg %p48
      %s281 = smul.u32 16, %s23
      %p282 = scmp.lt.s32.totalorder %s22, 7
      %s283 = scalar_select %p282, %s22, 7
      %p284 = scmp.lt.s32.totalorder %s281, 47
      %s285 = scalar_select %p284, %s281, 47
      %s286 = smul.addr %s283, 48
      %s287 = sadd.s32 %s285, %s286
      %s288 = smul.addr %s287, 8
      %s289 = scalar_lea.vmem %s1, %s288
      %p290 = pneg %p79
      %p291 = pneg %p76
      %p292 = pneg %p100
      %p293 = pneg %p97
      %p294 = pneg %p121
      %p295 = pneg %p118
      %p296 = pneg %p142
      %p297 = pneg %p139
      %p298 = pneg %p163
      %p299 = pneg %p160
      %p300 = pneg %p184
      %p301 = pneg %p181
      %p302 = pneg %p212
      %p303 = pneg %p209
      %s304 = smul.u32 16, %s23
      %p305 = scmp.lt.s32.totalorder %s22, 7
      %s306 = scalar_select %p305, %s22, 7
      %p307 = scmp.lt.s32.totalorder %s304, 47
      %s308 = scalar_select %p307, %s304, 47
      %s309 = smul.addr %s306, 48
      %s310 = sadd.s32 %s308, %s309
      %s311 = smul.addr %s310, 8
      %s312 = scalar_lea.vmem %s7, %s311
      %p313 = scmp.lt.s32.totalorder %s22, 7
      %s314 = scalar_select %p313, %s22, 7
      %s315 = smul.addr %s314, 48
      %s316 = smul.addr %s315, 8
      %s317 = scalar_lea.vmem %s0, %s316
      %s318 = smul.u32 16, %s23
      %p319 = scmp.lt.s32.totalorder %s22, 7
      %s320 = scalar_select %p319, %s22, 7
      %p321 = scmp.lt.s32.totalorder %s318, 47
      %s322 = scalar_select %p321, %s318, 47
      %s323 = smul.addr %s320, 48
      %s324 = sadd.s32 %s322, %s323
      %s325 = smul.addr %s324, 8
      %s326 = scalar_lea.vmem %s1, %s325
      %s327 = smul.u32 16, %s23
      %s328 = smul.u32 16, %s23
      %p329 = scmp.lt.s32.totalorder %s22, 7
      %s330 = scalar_select %p329, %s22, 7
      %p331 = scmp.lt.s32.totalorder %s328, 47
      %s332 = scalar_select %p331, %s328, 47
      %s333 = smul.addr %s330, 48
      %s334 = sadd.s32 %s332, %s333
      %s335 = smul.addr %s334, 8
      %s336 = scalar_lea.vmem %s7, %s335
      %s337 = smul.u32 16, %s23
      %p338 = scmp.eq.s32.totalorder %s23, 0
      // Predicated region
      $region49: #{window_attention_kv_forward.1} parent=47 // pred_check
        %p339 = pneg %p338
      $region50: #{window_attention_kv_forward.1} parent=47 // pred_check_branch
        %341 = sbr.rel (%p339) target = $region52
      $region51: #{window_attention_kv_forward.1} parent=47 // pred_region
        %v342 = vld [vmem:[%s317] sm:$0xff]
        %v343 = vld [vmem:[%s317 + $0x8] sm:$0xff]
        %v344 = vld [vmem:[%s317 + $0x10] sm:$0xff]
        %v345 = vld [vmem:[%s317 + $0x18] sm:$0xff]
        %v346 = vld [vmem:[%s317 + $0x20] sm:$0xff]
        %v347 = vld [vmem:[%s317 + $0x28] sm:$0xff]
        %v348 = vld [vmem:[%s317 + $0x30] sm:$0xff]
        %v349 = vld [vmem:[%s317 + $0x38] sm:$0xff]
        %v350 = vld [vmem:[%s317 + $0x40] sm:$0xff]
        %v351 = vld [vmem:[%s317 + $0x48] sm:$0xff]
        %v352 = vld [vmem:[%s317 + $0x50] sm:$0xff]
        %v353 = vld [vmem:[%s317 + $0x58] sm:$0xff]
        %v354 = vld [vmem:[%s317 + $0x60] sm:$0xff]
        %v355 = vld [vmem:[%s317 + $0x68] sm:$0xff]
        %v356 = vld [vmem:[%s317 + $0x70] sm:$0xff]
        %v357 = vld [vmem:[%s317 + $0x78] sm:$0xff]
        %v358 = vld [vmem:[%s317 + $0x80] sm:$0xff]
        %v359 = vld [vmem:[%s317 + $0x88] sm:$0xff]
        %v360 = vld [vmem:[%s317 + $0x90] sm:$0xff]
        %v361 = vld [vmem:[%s317 + $0x98] sm:$0xff]
        %v362 = vld [vmem:[%s317 + $0xa0] sm:$0xff]
        %v363 = vld [vmem:[%s317 + $0xa8] sm:$0xff]
        %v364 = vld [vmem:[%s317 + $0xb0] sm:$0xff]
        %v365 = vld [vmem:[%s317 + $0xb8] sm:$0xff]
        %v366 = vld [vmem:[%s317 + $0xc0] sm:$0xff]
        %v367 = vld [vmem:[%s317 + $0xc8] sm:$0xff]
        %v368 = vld [vmem:[%s317 + $0xd0] sm:$0xff]
        %v369 = vld [vmem:[%s317 + $0xd8] sm:$0xff]
        %v370 = vld [vmem:[%s317 + $0xe0] sm:$0xff]
        %v371 = vld [vmem:[%s317 + $0xe8] sm:$0xff]
        %v372 = vld [vmem:[%s317 + $0xf0] sm:$0xff]
        %v373 = vld [vmem:[%s317 + $0xf8] sm:$0xff]
        %v374 = vld [vmem:[%s317 + $0x100] sm:$0xff]
        %v375 = vld [vmem:[%s317 + $0x108] sm:$0xff]
        %v376 = vld [vmem:[%s317 + $0x110] sm:$0xff]
        %v377 = vld [vmem:[%s317 + $0x118] sm:$0xff]
        %v378 = vld [vmem:[%s317 + $0x120] sm:$0xff]
        %v379 = vld [vmem:[%s317 + $0x128] sm:$0xff]
        %v380 = vld [vmem:[%s317 + $0x130] sm:$0xff]
        %v381 = vld [vmem:[%s317 + $0x138] sm:$0xff]
        %v382 = vld [vmem:[%s317 + $0x140] sm:$0xff]
        %v383 = vld [vmem:[%s317 + $0x148] sm:$0xff]
        %v384 = vld [vmem:[%s317 + $0x150] sm:$0xff]
        %v385 = vld [vmem:[%s317 + $0x158] sm:$0xff]
        %v386 = vld [vmem:[%s317 + $0x160] sm:$0xff]
        %v387 = vld [vmem:[%s317 + $0x168] sm:$0xff]
        %v388 = vld [vmem:[%s317 + $0x170] sm:$0xff]
        %v389 = vld [vmem:[%s317 + $0x178] sm:$0xff]
        %v390 = vld [vmem:[%s3] sm:$0xff]
        %v391 = vld [vmem:[%s3 + $0x8] sm:$0xff]
        %v392 = vld [vmem:[%s3 + $0x10] sm:$0xff]
        %v393 = vld [vmem:[%s3 + $0x18] sm:$0xff]
        %v394 = vld [vmem:[%s4] sm:$0x1]
        %v396 = vlaneseq
        %v397 = vshrl.u32 %v396, 7
        %v398 = vsub.s32 0, %v397
        %v399 = vrot.slane %v394, %v398
        %vm401 = vcmask 261120
        %v403 = vsel %vm401, %v342, 0
        %v406 = vsel %vm401, %v343, 0
        %v409 = vsel %vm401, %v344, 0
        %v412 = vsel %vm401, %v345, 0
        %v415 = vsel %vm401, %v346, 0
        %v418 = vsel %vm401, %v347, 0
        %v421 = vsel %vm401, %v348, 0
        %v424 = vsel %vm401, %v349, 0
        %v427 = vsel %vm401, %v350, 0
        %v430 = vsel %vm401, %v351, 0
        %v433 = vsel %vm401, %v352, 0
        %v436 = vsel %vm401, %v353, 0
        %v439 = vsel %vm401, %v354, 0
        %v442 = vsel %vm401, %v355, 0
        %v445 = vsel %vm401, %v356, 0
        %v448 = vsel %vm401, %v357, 0
        %v451 = vsel %vm401, %v358, 0
        %v454 = vsel %vm401, %v359, 0
        %v457 = vsel %vm401, %v360, 0
        %v460 = vsel %vm401, %v361, 0
        %v463 = vsel %vm401, %v362, 0
        %v466 = vsel %vm401, %v363, 0
        %v469 = vsel %vm401, %v364, 0
        %v472 = vsel %vm401, %v365, 0
        %v475 = vsel %vm401, %v366, 0
        %v478 = vsel %vm401, %v367, 0
        %v481 = vsel %vm401, %v368, 0
        %v484 = vsel %vm401, %v369, 0
        %v487 = vsel %vm401, %v370, 0
        %v490 = vsel %vm401, %v371, 0
        %v493 = vsel %vm401, %v372, 0
        %v496 = vsel %vm401, %v373, 0
        %v499 = vsel %vm401, %v374, 0
        %v502 = vsel %vm401, %v375, 0
        %v505 = vsel %vm401, %v376, 0
        %v508 = vsel %vm401, %v377, 0
        %v511 = vsel %vm401, %v378, 0
        %v514 = vsel %vm401, %v379, 0
        %v517 = vsel %vm401, %v380, 0
        %v520 = vsel %vm401, %v381, 0
        %v523 = vsel %vm401, %v382, 0
        %v526 = vsel %vm401, %v383, 0
        %v529 = vsel %vm401, %v384, 0
        %v532 = vsel %vm401, %v385, 0
        %v535 = vsel %vm401, %v386, 0
        %v538 = vsel %vm401, %v387, 0
        %v541 = vsel %vm401, %v388, 0
        %v544 = vsel %vm401, %v389, 0
        %546 = vmatprep.subr.mxu0 0.0
        %547 = vmatpush1.msra.mxu0 0.0
        %548 = vmatprep.subr.mxu0 0.0
        %549 = vmatpush1.msra.mxu0 0.0
        %550 = vmatprep.subr.mxu0 0.0
        %551 = vmatpush1.msra.mxu0 0.0
        %552 = vmatprep.subr.mxu0 0.0
        %553 = vmatpush1.msra.mxu0 0.0
        %554 = vmatprep.subr.mxu0 0.0
        %555 = vmatpush1.msra.mxu0 0.0
        %556 = vmatprep.subr.mxu0 0.0
        %557 = vmatpush1.msra.mxu0 0.0
        %558 = vmatprep.subr.mxu0 0.0
        %559 = vmatpush1.msra.mxu0 0.0
        %560 = vmatprep.subr.mxu0 0.0
        %561 = vmatpush1.msra.mxu0 0.0
        %562 = vmatprep.subr.mxu0 0.0
        %563 = vmatpush1.msra.mxu0 0.0
        %564 = vmatprep.subr.mxu0 0.0
        %565 = vmatpush1.msra.mxu0 0.0
        %566 = vmatprep.subr.mxu0 0.0
        %567 = vmatpush1.msra.mxu0 0.0
        %568 = vmatprep.subr.mxu0 0.0
        %569 = vmatpush1.msra.mxu0 0.0
        %570 = vmatprep.subr.mxu0 0.0
        %571 = vmatpush1.msra.mxu0 %v393
        %572 = vmatprep.subr.mxu0 0.0
        %573 = vmatpush1.msra.mxu0 %v392
        %574 = vmatprep.subr.mxu0 0.0
        %575 = vmatpush1.msra.mxu0 %v391
        %576 = vmatprep.subr.mxu0 0.0
        %577 = vmatpush1.msra.mxu0 %v390
        %578 = vmatprep.subr.mxu0 0.0
        %579 = vmatpush2.msra.mxu0 0.0
        %580 = vmatprep.subr.mxu0 0.0
        %581 = vmatpush2.msra.mxu0 0.0
        %582 = vmatprep.subr.mxu0 0.0
        %583 = vmatpush2.msra.mxu0 0.0
        %584 = vmatprep.subr.mxu0 0.0
        %585 = vmatpush2.msra.mxu0 0.0
        %586 = vmatprep.subr.mxu0 0.0
        %587 = vmatpush2.msra.mxu0 0.0
        %588 = vmatprep.subr.mxu0 0.0
        %589 = vmatpush2.msra.mxu0 0.0
        %590 = vmatprep.subr.mxu0 0.0
        %591 = vmatpush2.msra.mxu0 0.0
        %592 = vmatprep.subr.mxu0 0.0
        %593 = vmatpush2.msra.mxu0 0.0
        %594 = vmatprep.subr.mxu0 0.0
        %595 = vmatpush2.msra.mxu0 0.0
        %596 = vmatprep.subr.mxu0 0.0
        %597 = vmatpush2.msra.mxu0 0.0
        %598 = vmatprep.subr.mxu0 0.0
        %599 = vmatpush2.msra.mxu0 0.0
        %600 = vmatprep.subr.mxu0 0.0
        %601 = vmatpush2.msra.mxu0 0.0
        %602 = vmatprep.subr.mxu0 0.0
        %603 = vmatpush2.msra.mxu0 0.0
        %604 = vmatprep.subr.mxu0 0.0
        %605 = vmatpush2.msra.mxu0 0.0
        %606 = vmatprep.subr.mxu0 0.0
        %607 = vmatpush2.msra.mxu0 0.0
        %608 = vmatprep.subr.mxu0 0.0
        %609 = vmatpush2.msra.mxu0 0.0
        %610 = vmatprep.mubr.f32.mxu0 0.0
        %611 = vmatmul.mubr.f32.gmra.mxu0 %v403
        %v612 = vpop.f32.mrf.mxu0
        %v613 = vadd.f32 %v399, %v612
        %v614 = vpop.f32.mrf.mxu0
        %615 = vmatprep.mubr.f32.mxu0 0.0
        %616 = vmatmul.mubr.f32.gmra.mxu0 %v406
        %v617 = vpop.f32.mrf.mxu0
        %v618 = vadd.f32 %v399, %v617
        %v619 = vpop.f32.mrf.mxu0
        %620 = vmatprep.mubr.f32.mxu0 0.0
        %621 = vmatmul.mubr.f32.gmra.mxu0 %v409
        %v622 = vpop.f32.mrf.mxu0
        %v623 = vadd.f32 %v399, %v622
        %v624 = vpop.f32.mrf.mxu0
        %625 = vmatprep.mubr.f32.mxu0 0.0
        %626 = vmatmul.mubr.f32.gmra.mxu0 %v412
        %v627 = vpop.f32.mrf.mxu0
        %v628 = vadd.f32 %v399, %v627
        %v629 = vpop.f32.mrf.mxu0
        %630 = vmatprep.mubr.f32.mxu0 0.0
        %631 = vmatmul.mubr.f32.gmra.mxu0 %v415
        %v632 = vpop.f32.mrf.mxu0
        %v633 = vadd.f32 %v399, %v632
        %v634 = vpop.f32.mrf.mxu0
        %635 = vmatprep.mubr.f32.mxu0 0.0
        %636 = vmatmul.mubr.f32.gmra.mxu0 %v418
        %v637 = vpop.f32.mrf.mxu0
        %v638 = vadd.f32 %v399, %v637
        %v639 = vpop.f32.mrf.mxu0
        %640 = vmatprep.mubr.f32.mxu0 0.0
        %641 = vmatmul.mubr.f32.gmra.mxu0 %v421
        %v642 = vpop.f32.mrf.mxu0
        %v643 = vadd.f32 %v399, %v642
        %v644 = vpop.f32.mrf.mxu0
        %645 = vmatprep.mubr.f32.mxu0 0.0
        %646 = vmatmul.mubr.f32.gmra.mxu0 %v424
        %v647 = vpop.f32.mrf.mxu0
        %v648 = vadd.f32 %v399, %v647
        %v649 = vpop.f32.mrf.mxu0
        %650 = vmatprep.mubr.f32.mxu0 0.0
        %651 = vmatmul.mubr.f32.gmra.mxu0 %v427
        %v652 = vpop.f32.mrf.mxu0
        %v653 = vadd.f32 %v399, %v652
        %v654 = vpop.f32.mrf.mxu0
        %655 = vmatprep.mubr.f32.mxu0 0.0
        %656 = vmatmul.mubr.f32.gmra.mxu0 %v430
        %v657 = vpop.f32.mrf.mxu0
        %v658 = vadd.f32 %v399, %v657
        %v659 = vpop.f32.mrf.mxu0
        %660 = vmatprep.mubr.f32.mxu0 0.0
        %661 = vmatmul.mubr.f32.gmra.mxu0 %v433
        %v662 = vpop.f32.mrf.mxu0
        %v663 = vadd.f32 %v399, %v662
        %v664 = vpop.f32.mrf.mxu0
        %665 = vmatprep.mubr.f32.mxu0 0.0
        %666 = vmatmul.mubr.f32.gmra.mxu0 %v436
        %v667 = vpop.f32.mrf.mxu0
        %v668 = vadd.f32 %v399, %v667
        %v669 = vpop.f32.mrf.mxu0
        %670 = vmatprep.mubr.f32.mxu0 0.0
        %671 = vmatmul.mubr.f32.gmra.mxu0 %v439
        %v672 = vpop.f32.mrf.mxu0
        %v673 = vadd.f32 %v399, %v672
        %v674 = vpop.f32.mrf.mxu0
        %675 = vmatprep.mubr.f32.mxu0 0.0
        %676 = vmatmul.mubr.f32.gmra.mxu0 %v442
        %v677 = vpop.f32.mrf.mxu0
        %v678 = vadd.f32 %v399, %v677
        %v679 = vpop.f32.mrf.mxu0
        %680 = vmatprep.mubr.f32.mxu0 0.0
        %681 = vmatmul.mubr.f32.gmra.mxu0 %v445
        %v682 = vpop.f32.mrf.mxu0
        %v683 = vadd.f32 %v399, %v682
        %v684 = vpop.f32.mrf.mxu0
        %685 = vmatprep.mubr.f32.mxu0 0.0
        %686 = vmatmul.mubr.f32.gmra.mxu0 %v448
        %v687 = vpop.f32.mrf.mxu0
        %v688 = vadd.f32 %v399, %v687
        %v689 = vpop.f32.mrf.mxu0
        %690 = vmatprep.mubr.f32.mxu0 0.0
        %691 = vmatmul.mubr.f32.gmra.mxu0 %v451
        %v692 = vpop.f32.mrf.mxu0
        %v693 = vadd.f32 %v399, %v692
        %v694 = vpop.f32.mrf.mxu0
        %695 = vmatprep.mubr.f32.mxu0 0.0
        %696 = vmatmul.mubr.f32.gmra.mxu0 %v454
        %v697 = vpop.f32.mrf.mxu0
        %v698 = vadd.f32 %v399, %v697
        %v699 = vpop.f32.mrf.mxu0
        %700 = vmatprep.mubr.f32.mxu0 0.0
        %701 = vmatmul.mubr.f32.gmra.mxu0 %v457
        %v702 = vpop.f32.mrf.mxu0
        %v703 = vadd.f32 %v399, %v702
        %v704 = vpop.f32.mrf.mxu0
        %705 = vmatprep.mubr.f32.mxu0 0.0
        %706 = vmatmul.mubr.f32.gmra.mxu0 %v460
        %v707 = vpop.f32.mrf.mxu0
        %v708 = vadd.f32 %v399, %v707
        %v709 = vpop.f32.mrf.mxu0
        %710 = vmatprep.mubr.f32.mxu0 0.0
        %711 = vmatmul.mubr.f32.gmra.mxu0 %v463
        %v712 = vpop.f32.mrf.mxu0
        %v713 = vadd.f32 %v399, %v712
        %v714 = vpop.f32.mrf.mxu0
        %715 = vmatprep.mubr.f32.mxu0 0.0
        %716 = vmatmul.mubr.f32.gmra.mxu0 %v466
        %v717 = vpop.f32.mrf.mxu0
        %v718 = vadd.f32 %v399, %v717
        %v719 = vpop.f32.mrf.mxu0
        %720 = vmatprep.mubr.f32.mxu0 0.0
        %721 = vmatmul.mubr.f32.gmra.mxu0 %v469
        %v722 = vpop.f32.mrf.mxu0
        %v723 = vadd.f32 %v399, %v722
        %v724 = vpop.f32.mrf.mxu0
        %725 = vmatprep.mubr.f32.mxu0 0.0
        %726 = vmatmul.mubr.f32.gmra.mxu0 %v472
        %v727 = vpop.f32.mrf.mxu0
        %v728 = vadd.f32 %v399, %v727
        %v729 = vpop.f32.mrf.mxu0
        %730 = vmatprep.mubr.f32.mxu0 0.0
        %731 = vmatmul.mubr.f32.gmra.mxu0 %v475
        %v732 = vpop.f32.mrf.mxu0
        %v733 = vadd.f32 %v399, %v732
        %v734 = vpop.f32.mrf.mxu0
        %735 = vmatprep.mubr.f32.mxu0 0.0
        %736 = vmatmul.mubr.f32.gmra.mxu0 %v478
        %v737 = vpop.f32.mrf.mxu0
        %v738 = vadd.f32 %v399, %v737
        %v739 = vpop.f32.mrf.mxu0
        %740 = vmatprep.mubr.f32.mxu0 0.0
        %741 = vmatmul.mubr.f32.gmra.mxu0 %v481
        %v742 = vpop.f32.mrf.mxu0
        %v743 = vadd.f32 %v399, %v742
        %v744 = vpop.f32.mrf.mxu0
        %745 = vmatprep.mubr.f32.mxu0 0.0
        %746 = vmatmul.mubr.f32.gmra.mxu0 %v484
        %v747 = vpop.f32.mrf.mxu0
        %v748 = vadd.f32 %v399, %v747
        %v749 = vpop.f32.mrf.mxu0
        %750 = vmatprep.mubr.f32.mxu0 0.0
        %751 = vmatmul.mubr.f32.gmra.mxu0 %v487
        %v752 = vpop.f32.mrf.mxu0
        %v753 = vadd.f32 %v399, %v752
        %v754 = vpop.f32.mrf.mxu0
        %755 = vmatprep.mubr.f32.mxu0 0.0
        %756 = vmatmul.mubr.f32.gmra.mxu0 %v490
        %v757 = vpop.f32.mrf.mxu0
        %v758 = vadd.f32 %v399, %v757
        %v759 = vpop.f32.mrf.mxu0
        %760 = vmatprep.mubr.f32.mxu0 0.0
        %761 = vmatmul.mubr.f32.gmra.mxu0 %v493
        %v762 = vpop.f32.mrf.mxu0
        %v763 = vadd.f32 %v399, %v762
        %v764 = vpop.f32.mrf.mxu0
        %765 = vmatprep.mubr.f32.mxu0 0.0
        %766 = vmatmul.mubr.f32.gmra.mxu0 %v496
        %v767 = vpop.f32.mrf.mxu0
        %v768 = vadd.f32 %v399, %v767
        %v769 = vpop.f32.mrf.mxu0
        %770 = vmatprep.mubr.f32.mxu0 0.0
        %771 = vmatmul.mubr.f32.gmra.mxu0 %v499
        %v772 = vpop.f32.mrf.mxu0
        %v773 = vadd.f32 %v399, %v772
        %v774 = vpop.f32.mrf.mxu0
        %775 = vmatprep.mubr.f32.mxu0 0.0
        %776 = vmatmul.mubr.f32.gmra.mxu0 %v502
        %v777 = vpop.f32.mrf.mxu0
        %v778 = vadd.f32 %v399, %v777
        %v779 = vpop.f32.mrf.mxu0
        %780 = vmatprep.mubr.f32.mxu0 0.0
        %781 = vmatmul.mubr.f32.gmra.mxu0 %v505
        %v782 = vpop.f32.mrf.mxu0
        %v783 = vadd.f32 %v399, %v782
        %v784 = vpop.f32.mrf.mxu0
        %785 = vmatprep.mubr.f32.mxu0 0.0
        %786 = vmatmul.mubr.f32.gmra.mxu0 %v508
        %v787 = vpop.f32.mrf.mxu0
        %v788 = vadd.f32 %v399, %v787
        %v789 = vpop.f32.mrf.mxu0
        %790 = vmatprep.mubr.f32.mxu0 0.0
        %791 = vmatmul.mubr.f32.gmra.mxu0 %v511
        %v792 = vpop.f32.mrf.mxu0
        %v793 = vadd.f32 %v399, %v792
        %v794 = vpop.f32.mrf.mxu0
        %795 = vmatprep.mubr.f32.mxu0 0.0
        %796 = vmatmul.mubr.f32.gmra.mxu0 %v514
        %v797 = vpop.f32.mrf.mxu0
        %v798 = vadd.f32 %v399, %v797
        %v799 = vpop.f32.mrf.mxu0
        %800 = vmatprep.mubr.f32.mxu0 0.0
        %801 = vmatmul.mubr.f32.gmra.mxu0 %v517
        %v802 = vpop.f32.mrf.mxu0
        %v803 = vadd.f32 %v399, %v802
        %v804 = vpop.f32.mrf.mxu0
        %805 = vmatprep.mubr.f32.mxu0 0.0
        %806 = vmatmul.mubr.f32.gmra.mxu0 %v520
        %v807 = vpop.f32.mrf.mxu0
        %v808 = vadd.f32 %v399, %v807
        %v809 = vpop.f32.mrf.mxu0
        %810 = vmatprep.mubr.f32.mxu0 0.0
        %811 = vmatmul.mubr.f32.gmra.mxu0 %v523
        %v812 = vpop.f32.mrf.mxu0
        %v813 = vadd.f32 %v399, %v812
        %v814 = vpop.f32.mrf.mxu0
        %815 = vmatprep.mubr.f32.mxu0 0.0
        %816 = vmatmul.mubr.f32.gmra.mxu0 %v526
        %v817 = vpop.f32.mrf.mxu0
        %v818 = vadd.f32 %v399, %v817
        %v819 = vpop.f32.mrf.mxu0
        %820 = vmatprep.mubr.f32.mxu0 0.0
        %821 = vmatmul.mubr.f32.gmra.mxu0 %v529
        %v822 = vpop.f32.mrf.mxu0
        %v823 = vadd.f32 %v399, %v822
        %v824 = vpop.f32.mrf.mxu0
        %825 = vmatprep.mubr.f32.mxu0 0.0
        %826 = vmatmul.mubr.f32.gmra.mxu0 %v532
        %v827 = vpop.f32.mrf.mxu0
        %v828 = vadd.f32 %v399, %v827
        %v829 = vpop.f32.mrf.mxu0
        %830 = vmatprep.mubr.f32.mxu0 0.0
        %831 = vmatmul.mubr.f32.gmra.mxu0 %v535
        %v832 = vpop.f32.mrf.mxu0
        %v833 = vadd.f32 %v399, %v832
        %v834 = vpop.f32.mrf.mxu0
        %835 = vmatprep.mubr.f32.mxu0 0.0
        %836 = vmatmul.mubr.f32.gmra.mxu0 %v538
        %v837 = vpop.f32.mrf.mxu0
        %v838 = vadd.f32 %v399, %v837
        %v839 = vpop.f32.mrf.mxu0
        %840 = vmatprep.mubr.f32.mxu0 0.0
        %841 = vmatmul.mubr.f32.gmra.mxu0 %v541
        %v842 = vpop.f32.mrf.mxu0
        %v843 = vadd.f32 %v399, %v842
        %v844 = vpop.f32.mrf.mxu0
        %845 = vmatprep.mubr.f32.mxu0 0.0
        %846 = vmatmul.mubr.f32.gmra.mxu0 %v544
        %v847 = vpop.f32.mrf.mxu0
        %v848 = vadd.f32 %v399, %v847
        %v849 = vpop.f32.mrf.mxu0
        %850 = vdwg.mxu0
        %vm851 = vcmask 523264
        %852 = vst.msk [vmem:[#allocation2] sm:$0xff] %vm851, %v613
        %853 = vst.msk [vmem:[#allocation2 + $0x8] sm:$0xff] %vm851, %v618
        %854 = vst.msk [vmem:[#allocation2 + $0x10] sm:$0xff] %vm851, %v623
        %855 = vst.msk [vmem:[#allocation2 + $0x18] sm:$0xff] %vm851, %v628
        %856 = vst.msk [vmem:[#allocation2 + $0x20] sm:$0xff] %vm851, %v633
        %857 = vst.msk [vmem:[#allocation2 + $0x28] sm:$0xff] %vm851, %v638
        %858 = vst.msk [vmem:[#allocation2 + $0x30] sm:$0xff] %vm851, %v643
        %859 = vst.msk [vmem:[#allocation2 + $0x38] sm:$0xff] %vm851, %v648
        %860 = vst.msk [vmem:[#allocation2 + $0x40] sm:$0xff] %vm851, %v653
        %861 = vst.msk [vmem:[#allocation2 + $0x48] sm:$0xff] %vm851, %v658
        %862 = vst.msk [vmem:[#allocation2 + $0x50] sm:$0xff] %vm851, %v663
        %863 = vst.msk [vmem:[#allocation2 + $0x58] sm:$0xff] %vm851, %v668
        %864 = vst.msk [vmem:[#allocation2 + $0x60] sm:$0xff] %vm851, %v673
        %865 = vst.msk [vmem:[#allocation2 + $0x68] sm:$0xff] %vm851, %v678
        %866 = vst.msk [vmem:[#allocation2 + $0x70] sm:$0xff] %vm851, %v683
        %867 = vst.msk [vmem:[#allocation2 + $0x78] sm:$0xff] %vm851, %v688
        %868 = vst.msk [vmem:[#allocation2 + $0x80] sm:$0xff] %vm851, %v693
        %869 = vst.msk [vmem:[#allocation2 + $0x88] sm:$0xff] %vm851, %v698
        %870 = vst.msk [vmem:[#allocation2 + $0x90] sm:$0xff] %vm851, %v703
        %871 = vst.msk [vmem:[#allocation2 + $0x98] sm:$0xff] %vm851, %v708
        %872 = vst.msk [vmem:[#allocation2 + $0xa0] sm:$0xff] %vm851, %v713
        %873 = vst.msk [vmem:[#allocation2 + $0xa8] sm:$0xff] %vm851, %v718
        %874 = vst.msk [vmem:[#allocation2 + $0xb0] sm:$0xff] %vm851, %v723
        %875 = vst.msk [vmem:[#allocation2 + $0xb8] sm:$0xff] %vm851, %v728
        %876 = vst.msk [vmem:[#allocation2 + $0xc0] sm:$0xff] %vm851, %v733
        %877 = vst.msk [vmem:[#allocation2 + $0xc8] sm:$0xff] %vm851, %v738
        %878 = vst.msk [vmem:[#allocation2 + $0xd0] sm:$0xff] %vm851, %v743
        %879 = vst.msk [vmem:[#allocation2 + $0xd8] sm:$0xff] %vm851, %v748
        %880 = vst.msk [vmem:[#allocation2 + $0xe0] sm:$0xff] %vm851, %v753
        %881 = vst.msk [vmem:[#allocation2 + $0xe8] sm:$0xff] %vm851, %v758
        %882 = vst.msk [vmem:[#allocation2 + $0xf0] sm:$0xff] %vm851, %v763
        %883 = vst.msk [vmem:[#allocation2 + $0xf8] sm:$0xff] %vm851, %v768
        %884 = vst.msk [vmem:[#allocation2 + $0x100] sm:$0xff] %vm851, %v773
        %885 = vst.msk [vmem:[#allocation2 + $0x108] sm:$0xff] %vm851, %v778
        %886 = vst.msk [vmem:[#allocation2 + $0x110] sm:$0xff] %vm851, %v783
        %887 = vst.msk [vmem:[#allocation2 + $0x118] sm:$0xff] %vm851, %v788
        %888 = vst.msk [vmem:[#allocation2 + $0x120] sm:$0xff] %vm851, %v793
        %889 = vst.msk [vmem:[#allocation2 + $0x128] sm:$0xff] %vm851, %v798
        %890 = vst.msk [vmem:[#allocation2 + $0x130] sm:$0xff] %vm851, %v803
        %891 = vst.msk [vmem:[#allocation2 + $0x138] sm:$0xff] %vm851, %v808
        %892 = vst.msk [vmem:[#allocation2 + $0x140] sm:$0xff] %vm851, %v813
        %893 = vst.msk [vmem:[#allocation2 + $0x148] sm:$0xff] %vm851, %v818
        %894 = vst.msk [vmem:[#allocation2 + $0x150] sm:$0xff] %vm851, %v823
        %895 = vst.msk [vmem:[#allocation2 + $0x158] sm:$0xff] %vm851, %v828
        %896 = vst.msk [vmem:[#allocation2 + $0x160] sm:$0xff] %vm851, %v833
        %897 = vst.msk [vmem:[#allocation2 + $0x168] sm:$0xff] %vm851, %v838
        %898 = vst.msk [vmem:[#allocation2 + $0x170] sm:$0xff] %vm851, %v843
        %899 = vst.msk [vmem:[#allocation2 + $0x178] sm:$0xff] %vm851, %v848
      $region52: #{window_attention_kv_forward.1} parent=47 // pred_fallthru
        _
      %v900 = vld [vmem:[%s326] sm:$0xff]
      %v901 = vld [vmem:[%s326 + $0x8] sm:$0xff]
      %v902 = vld [vmem:[%s326 + $0x10] sm:$0xff]
      %v903 = vld [vmem:[%s326 + $0x18] sm:$0xff]
      %v904 = vld [vmem:[%s326 + $0x20] sm:$0xff]
      %v905 = vld [vmem:[%s326 + $0x28] sm:$0xff]
      %v906 = vld [vmem:[%s326 + $0x30] sm:$0xff]
      %v907 = vld [vmem:[%s326 + $0x38] sm:$0xff]
      %v908 = vld [vmem:[%s326 + $0x40] sm:$0xff]
      %v909 = vld [vmem:[%s326 + $0x48] sm:$0xff]
      %v910 = vld [vmem:[%s326 + $0x50] sm:$0xff]
      %v911 = vld [vmem:[%s326 + $0x58] sm:$0xff]
      %v912 = vld [vmem:[%s326 + $0x60] sm:$0xff]
      %v913 = vld [vmem:[%s326 + $0x68] sm:$0xff]
      %v914 = vld [vmem:[%s326 + $0x70] sm:$0xff]
      %v915 = vld [vmem:[%s326 + $0x78] sm:$0xff]
      %v916 = vld [vmem:[#allocation2] sm:$0xff]
      %v917 = vld [vmem:[#allocation2 + $0x8] sm:$0xff]
      %v918 = vld [vmem:[#allocation2 + $0x10] sm:$0xff]
      %v919 = vld [vmem:[#allocation2 + $0x18] sm:$0xff]
      %v920 = vld [vmem:[#allocation2 + $0x20] sm:$0xff]
      %v921 = vld [vmem:[#allocation2 + $0x28] sm:$0xff]
      %v922 = vld [vmem:[#allocation2 + $0x30] sm:$0xff]
      %v923 = vld [vmem:[#allocation2 + $0x38] sm:$0xff]
      %v924 = vld [vmem:[#allocation2 + $0x40] sm:$0xff]
      %v925 = vld [vmem:[#allocation2 + $0x48] sm:$0xff]
      %v926 = vld [vmem:[#allocation2 + $0x50] sm:$0xff]
      %v927 = vld [vmem:[#allocation2 + $0x58] sm:$0xff]
      %v928 = vld [vmem:[#allocation2 + $0x60] sm:$0xff]
      %v929 = vld [vmem:[#allocation2 + $0x68] sm:$0xff]
      %v930 = vld [vmem:[#allocation2 + $0x70] sm:$0xff]
      %v931 = vld [vmem:[#allocation2 + $0x78] sm:$0xff]
      %v932 = vld [vmem:[#allocation2 + $0x80] sm:$0xff]
      %v933 = vld [vmem:[#allocation2 + $0x88] sm:$0xff]
      %v934 = vld [vmem:[#allocation2 + $0x90] sm:$0xff]
      %v935 = vld [vmem:[#allocation2 + $0x98] sm:$0xff]
      %v936 = vld [vmem:[#allocation2 + $0xa0] sm:$0xff]
      %v937 = vld [vmem:[#allocation2 + $0xa8] sm:$0xff]
      %v938 = vld [vmem:[#allocation2 + $0xb0] sm:$0xff]
      %v939 = vld [vmem:[#allocation2 + $0xb8] sm:$0xff]
      %v940 = vld [vmem:[#allocation2 + $0xc0] sm:$0xff]
      %v941 = vld [vmem:[#allocation2 + $0xc8] sm:$0xff]
      %v942 = vld [vmem:[#allocation2 + $0xd0] sm:$0xff]
      %v943 = vld [vmem:[#allocation2 + $0xd8] sm:$0xff]
      %v944 = vld [vmem:[#allocation2 + $0xe0] sm:$0xff]
      %v945 = vld [vmem:[#allocation2 + $0xe8] sm:$0xff]
      %v946 = vld [vmem:[#allocation2 + $0xf0] sm:$0xff]
      %v947 = vld [vmem:[#allocation2 + $0xf8] sm:$0xff]
      %v948 = vld [vmem:[#allocation2 + $0x100] sm:$0xff]
      %v949 = vld [vmem:[#allocation2 + $0x108] sm:$0xff]
      %v950 = vld [vmem:[#allocation2 + $0x110] sm:$0xff]
      %v951 = vld [vmem:[#allocation2 + $0x118] sm:$0xff]
      %v952 = vld [vmem:[#allocation2 + $0x120] sm:$0xff]
      %v953 = vld [vmem:[#allocation2 + $0x128] sm:$0xff]
      %v954 = vld [vmem:[#allocation2 + $0x130] sm:$0xff]
      %v955 = vld [vmem:[#allocation2 + $0x138] sm:$0xff]
      %v956 = vld [vmem:[#allocation2 + $0x140] sm:$0xff]
      %v957 = vld [vmem:[#allocation2 + $0x148] sm:$0xff]
      %v958 = vld [vmem:[#allocation2 + $0x150] sm:$0xff]
      %v959 = vld [vmem:[#allocation2 + $0x158] sm:$0xff]
      %v960 = vld [vmem:[#allocation2 + $0x160] sm:$0xff]
      %v961 = vld [vmem:[#allocation2 + $0x168] sm:$0xff]
      %v962 = vld [vmem:[#allocation2 + $0x170] sm:$0xff]
      %v963 = vld [vmem:[#allocation2 + $0x178] sm:$0xff]
      %v964 = vmul.f32 %v900, 0.35355338
      %v965 = vmul.f32 %v901, 0.35355338
      %v966 = vmul.f32 %v902, 0.35355338
      %v967 = vmul.f32 %v903, 0.35355338
      %v968 = vmul.f32 %v904, 0.35355338
      %v969 = vmul.f32 %v905, 0.35355338
      %v970 = vmul.f32 %v906, 0.35355338
      %v971 = vmul.f32 %v907, 0.35355338
      %v972 = vmul.f32 %v908, 0.35355338
      %v973 = vmul.f32 %v909, 0.35355338
      %v974 = vmul.f32 %v910, 0.35355338
      %v975 = vmul.f32 %v911, 0.35355338
      %v976 = vmul.f32 %v912, 0.35355338
      %v977 = vmul.f32 %v913, 0.35355338
      %v978 = vmul.f32 %v914, 0.35355338
      %v979 = vmul.f32 %v915, 0.35355338
      %s980 = smul.u32 %s23, 128
      %s981 = sshra.s32 %s980, 3
      %s982 = sand.u32 %s980, 7
      %s983 = smul.u32 %s981, 3
      %s984 = smul.addr %s983, 8
      %s985 = scalar_lea.vmem %s2, %s984
      %v986 = vld [vmem:[%s985] sm:$0xff]
      %v987 = vld [vmem:[%s985 + $0x8] sm:$0xff]
      %v988 = vld [vmem:[%s985 + $0x10] sm:$0xff]
      %v989 = vld [vmem:[%s985 + $0x18] sm:$0xff]
      %v990 = vld [vmem:[%s985 + $0x20] sm:$0xff]
      %v991 = vld [vmem:[%s985 + $0x28] sm:$0xff]
      %v992 = vld [vmem:[%s985 + $0x30] sm:$0xff]
      %v993 = vld [vmem:[%s985 + $0x38] sm:$0xff]
      %v994 = vld [vmem:[%s985 + $0x40] sm:$0xff]
      %v995 = vld [vmem:[%s985 + $0x48] sm:$0xff]
      %v996 = vld [vmem:[%s985 + $0x50] sm:$0xff]
      %v997 = vld [vmem:[%s985 + $0x58] sm:$0xff]
      %v998 = vld [vmem:[%s985 + $0x60] sm:$0xff]
      %v999 = vld [vmem:[%s985 + $0x68] sm:$0xff]
      %v1000 = vld [vmem:[%s985 + $0x70] sm:$0xff]
      %v1001 = vld [vmem:[%s985 + $0x78] sm:$0xff]
      %v1002 = vld [vmem:[%s985 + $0x80] sm:$0xff]
      %v1003 = vld [vmem:[%s985 + $0x88] sm:$0xff]
      %v1004 = vld [vmem:[%s985 + $0x90] sm:$0xff]
      %v1005 = vld [vmem:[%s985 + $0x98] sm:$0xff]
      %v1006 = vld [vmem:[%s985 + $0xa0] sm:$0xff]
      %v1007 = vld [vmem:[%s985 + $0xa8] sm:$0xff]
      %v1008 = vld [vmem:[%s985 + $0xb0] sm:$0xff]
      %v1009 = vld [vmem:[%s985 + $0xb8] sm:$0xff]
      %v1010 = vld [vmem:[%s985 + $0xc0] sm:$0xff]
      %v1011 = vld [vmem:[%s985 + $0xc8] sm:$0xff]
      %v1012 = vld [vmem:[%s985 + $0xd0] sm:$0xff]
      %v1013 = vld [vmem:[%s985 + $0xd8] sm:$0xff]
      %v1014 = vld [vmem:[%s985 + $0xe0] sm:$0xff]
      %v1015 = vld [vmem:[%s985 + $0xe8] sm:$0xff]
      %v1016 = vld [vmem:[%s985 + $0xf0] sm:$0xff]
      %v1017 = vld [vmem:[%s985 + $0xf8] sm:$0xff]
      %v1018 = vld [vmem:[%s985 + $0x100] sm:$0xff]
      %v1019 = vld [vmem:[%s985 + $0x108] sm:$0xff]
      %v1020 = vld [vmem:[%s985 + $0x110] sm:$0xff]
      %v1021 = vld [vmem:[%s985 + $0x118] sm:$0xff]
      %v1022 = vld [vmem:[%s985 + $0x120] sm:$0xff]
      %v1023 = vld [vmem:[%s985 + $0x128] sm:$0xff]
      %v1024 = vld [vmem:[%s985 + $0x130] sm:$0xff]
      %v1025 = vld [vmem:[%s985 + $0x138] sm:$0xff]
      %v1026 = vld [vmem:[%s985 + $0x140] sm:$0xff]
      %v1027 = vld [vmem:[%s985 + $0x148] sm:$0xff]
      %v1028 = vld [vmem:[%s985 + $0x150] sm:$0xff]
      %v1029 = vld [vmem:[%s985 + $0x158] sm:$0xff]
      %v1030 = vld [vmem:[%s985 + $0x160] sm:$0xff]
      %v1031 = vld [vmem:[%s985 + $0x168] sm:$0xff]
      %v1032 = vld [vmem:[%s985 + $0x170] sm:$0xff]
      %v1033 = vld [vmem:[%s985 + $0x178] sm:$0xff]
      %vm1034 = vcmask 64512
      %v1036 = vsel %vm1034, %v964, 0
      %v1039 = vsel %vm1034, %v965, 0
      %v1042 = vsel %vm1034, %v966, 0
      %v1045 = vsel %vm1034, %v967, 0
      %v1048 = vsel %vm1034, %v968, 0
      %v1051 = vsel %vm1034, %v969, 0
      %v1054 = vsel %vm1034, %v970, 0
      %v1057 = vsel %vm1034, %v971, 0
      %v1060 = vsel %vm1034, %v972, 0
      %v1063 = vsel %vm1034, %v973, 0
      %v1066 = vsel %vm1034, %v974, 0
      %v1069 = vsel %vm1034, %v975, 0
      %v1072 = vsel %vm1034, %v976, 0
      %v1075 = vsel %vm1034, %v977, 0
      %v1078 = vsel %vm1034, %v978, 0
      %v1081 = vsel %vm1034, %v979, 0
      %v1084 = vsel %vm1034, %v916, 0
      %v1087 = vsel %vm1034, %v917, 0
      %v1090 = vsel %vm1034, %v918, 0
      %v1093 = vsel %vm1034, %v919, 0
      %v1096 = vsel %vm1034, %v920, 0
      %v1099 = vsel %vm1034, %v921, 0
      %v1102 = vsel %vm1034, %v922, 0
      %v1105 = vsel %vm1034, %v923, 0
      %v1108 = vsel %vm1034, %v924, 0
      %v1111 = vsel %vm1034, %v925, 0
      %v1114 = vsel %vm1034, %v926, 0
      %v1117 = vsel %vm1034, %v927, 0
      %v1120 = vsel %vm1034, %v928, 0
      %v1123 = vsel %vm1034, %v929, 0
      %v1126 = vsel %vm1034, %v930, 0
      %v1129 = vsel %vm1034, %v931, 0
      %v1132 = vsel %vm1034, %v932, 0
      %v1135 = vsel %vm1034, %v933, 0
      %v1138 = vsel %vm1034, %v934, 0
      %v1141 = vsel %vm1034, %v935, 0
      %v1144 = vsel %vm1034, %v936, 0
      %v1147 = vsel %vm1034, %v937, 0
      %v1150 = vsel %vm1034, %v938, 0
      %v1153 = vsel %vm1034, %v939, 0
      %v1156 = vsel %vm1034, %v940, 0
      %v1159 = vsel %vm1034, %v941, 0
      %v1162 = vsel %vm1034, %v942, 0
      %v1165 = vsel %vm1034, %v943, 0
      %v1168 = vsel %vm1034, %v944, 0
      %v1171 = vsel %vm1034, %v945, 0
      %v1174 = vsel %vm1034, %v946, 0
      %v1177 = vsel %vm1034, %v947, 0
      %v1180 = vsel %vm1034, %v948, 0
      %v1183 = vsel %vm1034, %v949, 0
      %v1186 = vsel %vm1034, %v950, 0
      %v1189 = vsel %vm1034, %v951, 0
      %v1192 = vsel %vm1034, %v952, 0
      %v1195 = vsel %vm1034, %v953, 0
      %v1198 = vsel %vm1034, %v954, 0
      %v1201 = vsel %vm1034, %v955, 0
      %v1204 = vsel %vm1034, %v956, 0
      %v1207 = vsel %vm1034, %v957, 0
      %v1210 = vsel %vm1034, %v958, 0
      %v1213 = vsel %vm1034, %v959, 0
      %v1216 = vsel %vm1034, %v960, 0
      %v1219 = vsel %vm1034, %v961, 0
      %v1222 = vsel %vm1034, %v962, 0
      %v1225 = vsel %vm1034, %v963, 0
      %1227 = vmatprep.subr.mxu0 0.0
      %1228 = vmatpush1.xpose.msra.mxu0 %v1129
      %1229 = vmatprep.subr.mxu0 0.0
      %1230 = vmatpush1.xpose.msra.mxu0 %v1126
      %1231 = vmatprep.subr.mxu0 0.0
      %1232 = vmatpush1.xpose.msra.mxu0 %v1123
      %1233 = vmatprep.subr.mxu0 0.0
      %1234 = vmatpush1.xpose.msra.mxu0 %v1120
      %1235 = vmatprep.subr.mxu0 0.0
      %1236 = vmatpush1.xpose.msra.mxu0 %v1117
      %1237 = vmatprep.subr.mxu0 0.0
      %1238 = vmatpush1.xpose.msra.mxu0 %v1114
      %1239 = vmatprep.subr.mxu0 0.0
      %1240 = vmatpush1.xpose.msra.mxu0 %v1111
      %1241 = vmatprep.subr.mxu0 0.0
      %1242 = vmatpush1.xpose.msra.mxu0 %v1108
      %1243 = vmatprep.subr.mxu0 0.0
      %1244 = vmatpush1.xpose.msra.mxu0 %v1105
      %1245 = vmatprep.subr.mxu0 0.0
      %1246 = vmatpush1.xpose.msra.mxu0 %v1102
      %1247 = vmatprep.subr.mxu0 0.0
      %1248 = vmatpush1.xpose.msra.mxu0 %v1099
      %1249 = vmatprep.subr.mxu0 0.0
      %1250 = vmatpush1.xpose.msra.mxu0 %v1096
      %1251 = vmatprep.subr.mxu0 0.0
      %1252 = vmatpush1.xpose.msra.mxu0 %v1093
      %1253 = vmatprep.subr.mxu0 0.0
      %1254 = vmatpush1.xpose.msra.mxu0 %v1090
      %1255 = vmatprep.subr.mxu0 0.0
      %1256 = vmatpush1.xpose.msra.mxu0 %v1087
      %1257 = vmatprep.subr.mxu0 0.0
      %1258 = vmatpush1.xpose.msra.mxu0 %v1084
      %1259 = vmatprep.subr.mxu0 0.0
      %1260 = vmatpush2.xpose.msra.mxu0 %v1177
      %1261 = vmatprep.subr.mxu0 0.0
      %1262 = vmatpush2.xpose.msra.mxu0 %v1174
      %1263 = vmatprep.subr.mxu0 0.0
      %1264 = vmatpush2.xpose.msra.mxu0 %v1171
      %1265 = vmatprep.subr.mxu0 0.0
      %1266 = vmatpush2.xpose.msra.mxu0 %v1168
      %1267 = vmatprep.subr.mxu0 0.0
      %1268 = vmatpush2.xpose.msra.mxu0 %v1165
      %1269 = vmatprep.subr.mxu0 0.0
      %1270 = vmatpush2.xpose.msra.mxu0 %v1162
      %1271 = vmatprep.subr.mxu0 0.0
      %1272 = vmatpush2.xpose.msra.mxu0 %v1159
      %1273 = vmatprep.subr.mxu0 0.0
      %1274 = vmatpush2.xpose.msra.mxu0 %v1156
      %1275 = vmatprep.subr.mxu0 0.0
      %1276 = vmatpush2.xpose.msra.mxu0 %v1153
      %1277 = vmatprep.subr.mxu0 0.0
      %1278 = vmatpush2.xpose.msra.mxu0 %v1150
      %1279 = vmatprep.subr.mxu0 0.0
      %1280 = vmatpush2.xpose.msra.mxu0 %v1147
      %1281 = vmatprep.subr.mxu0 0.0
      %1282 = vmatpush2.xpose.msra.mxu0 %v1144
      %1283 = vmatprep.subr.mxu0 0.0
      %1284 = vmatpush2.xpose.msra.mxu0 %v1141
      %1285 = vmatprep.subr.mxu0 0.0
      %1286 = vmatpush2.xpose.msra.mxu0 %v1138
      %1287 = vmatprep.subr.mxu0 0.0
      %1288 = vmatpush2.xpose.msra.mxu0 %v1135
      %1289 = vmatprep.subr.mxu0 0.0
      %1290 = vmatpush2.xpose.msra.mxu0 %v1132
      %1291 = vmatprep.mubr.f32.mxu0 0.0
      %1292 = vmatmul.mubr.f32.gmra.mxu0 %v1036
      %v1293 = vpop.f32.mrf.mxu0
      %v1294 = vadd.f32 %v986, %v1293
      %v1295 = vpop.f32.mrf.mxu0
      %v1296 = vadd.f32 %v987, %v1295
      %1297 = vmatprep.mubr.f32.mxu0 0.0
      %1298 = vmatmul.mubr.f32.gmra.mxu0 %v1039
      %v1299 = vpop.f32.mrf.mxu0
      %v1300 = vadd.f32 %v989, %v1299
      %v1301 = vpop.f32.mrf.mxu0
      %v1302 = vadd.f32 %v990, %v1301
      %1303 = vmatprep.mubr.f32.mxu0 0.0
      %1304 = vmatmul.mubr.f32.gmra.mxu0 %v1042
      %v1305 = vpop.f32.mrf.mxu0
      %v1306 = vadd.f32 %v992, %v1305
      %v1307 = vpop.f32.mrf.mxu0
      %v1308 = vadd.f32 %v993, %v1307
      %1309 = vmatprep.mubr.f32.mxu0 0.0
      %1310 = vmatmul.mubr.f32.gmra.mxu0 %v1045
      %v1311 = vpop.f32.mrf.mxu0
      %v1312 = vadd.f32 %v995, %v1311
      %v1313 = vpop.f32.mrf.mxu0
      %v1314 = vadd.f32 %v996, %v1313
      %1315 = vmatprep.mubr.f32.mxu0 0.0
      %1316 = vmatmul.mubr.f32.gmra.mxu0 %v1048
      %v1317 = vpop.f32.mrf.mxu0
      %v1318 = vadd.f32 %v998, %v1317
      %v1319 = vpop.f32.mrf.mxu0
      %v1320 = vadd.f32 %v999, %v1319
      %1321 = vmatprep.mubr.f32.mxu0 0.0
      %1322 = vmatmul.mubr.f32.gmra.mxu0 %v1051
      %v1323 = vpop.f32.mrf.mxu0
      %v1324 = vadd.f32 %v1001, %v1323
      %v1325 = vpop.f32.mrf.mxu0
      %v1326 = vadd.f32 %v1002, %v1325
      %1327 = vmatprep.mubr.f32.mxu0 0.0
      %1328 = vmatmul.mubr.f32.gmra.mxu0 %v1054
      %v1329 = vpop.f32.mrf.mxu0
      %v1330 = vadd.f32 %v1004, %v1329
      %v1331 = vpop.f32.mrf.mxu0
      %v1332 = vadd.f32 %v1005, %v1331
      %1333 = vmatprep.mubr.f32.mxu0 0.0
      %1334 = vmatmul.mubr.f32.gmra.mxu0 %v1057
      %v1335 = vpop.f32.mrf.mxu0
      %v1336 = vadd.f32 %v1007, %v1335
      %v1337 = vpop.f32.mrf.mxu0
      %v1338 = vadd.f32 %v1008, %v1337
      %1339 = vmatprep.mubr.f32.mxu0 0.0
      %1340 = vmatmul.mubr.f32.gmra.mxu0 %v1060
      %v1341 = vpop.f32.mrf.mxu0
      %v1342 = vadd.f32 %v1010, %v1341
      %v1343 = vpop.f32.mrf.mxu0
      %v1344 = vadd.f32 %v1011, %v1343
      %1345 = vmatprep.mubr.f32.mxu0 0.0
      %1346 = vmatmul.mubr.f32.gmra.mxu0 %v1063
      %v1347 = vpop.f32.mrf.mxu0
      %v1348 = vadd.f32 %v1013, %v1347
      %v1349 = vpop.f32.mrf.mxu0
      %v1350 = vadd.f32 %v1014, %v1349
      %1351 = vmatprep.mubr.f32.mxu0 0.0
      %1352 = vmatmul.mubr.f32.gmra.mxu0 %v1066
      %v1353 = vpop.f32.mrf.mxu0
      %v1354 = vadd.f32 %v1016, %v1353
      %v1355 = vpop.f32.mrf.mxu0
      %v1356 = vadd.f32 %v1017, %v1355
      %1357 = vmatprep.mubr.f32.mxu0 0.0
      %1358 = vmatmul.mubr.f32.gmra.mxu0 %v1069
      %v1359 = vpop.f32.mrf.mxu0
      %v1360 = vadd.f32 %v1019, %v1359
      %v1361 = vpop.f32.mrf.mxu0
      %v1362 = vadd.f32 %v1020, %v1361
      %1363 = vmatprep.mubr.f32.mxu0 0.0
      %1364 = vmatmul.mubr.f32.gmra.mxu0 %v1072
      %v1365 = vpop.f32.mrf.mxu0
      %v1366 = vadd.f32 %v1022, %v1365
      %v1367 = vpop.f32.mrf.mxu0
      %v1368 = vadd.f32 %v1023, %v1367
      %1369 = vmatprep.mubr.f32.mxu0 0.0
      %1370 = vmatmul.mubr.f32.gmra.mxu0 %v1075
      %v1371 = vpop.f32.mrf.mxu0
      %v1372 = vadd.f32 %v1025, %v1371
      %v1373 = vpop.f32.mrf.mxu0
      %v1374 = vadd.f32 %v1026, %v1373
      %1375 = vmatprep.mubr.f32.mxu0 0.0
      %1376 = vmatmul.mubr.f32.gmra.mxu0 %v1078
      %v1377 = vpop.f32.mrf.mxu0
      %v1378 = vadd.f32 %v1028, %v1377
      %v1379 = vpop.f32.mrf.mxu0
      %v1380 = vadd.f32 %v1029, %v1379
      %1381 = vmatprep.mubr.f32.mxu0 0.0
      %1382 = vmatmul.mubr.f32.gmra.mxu0 %v1081
      %v1383 = vpop.f32.mrf.mxu0
      %v1384 = vadd.f32 %v1031, %v1383
      %v1385 = vpop.f32.mrf.mxu0
      %v1386 = vadd.f32 %v1032, %v1385
      %1387 = vdwg.mxu0
      %1388 = vmatprep.subr.mxu0 0.0
      %1389 = vmatpush1.xpose.msra.mxu0 %v1225
      %1390 = vmatprep.subr.mxu0 0.0
      %1391 = vmatpush1.xpose.msra.mxu0 %v1222
      %1392 = vmatprep.subr.mxu0 0.0
      %1393 = vmatpush1.xpose.msra.mxu0 %v1219
      %1394 = vmatprep.subr.mxu0 0.0
      %1395 = vmatpush1.xpose.msra.mxu0 %v1216
      %1396 = vmatprep.subr.mxu0 0.0
      %1397 = vmatpush1.xpose.msra.mxu0 %v1213
      %1398 = vmatprep.subr.mxu0 0.0
      %1399 = vmatpush1.xpose.msra.mxu0 %v1210
      %1400 = vmatprep.subr.mxu0 0.0
      %1401 = vmatpush1.xpose.msra.mxu0 %v1207
      %1402 = vmatprep.subr.mxu0 0.0
      %1403 = vmatpush1.xpose.msra.mxu0 %v1204
      %1404 = vmatprep.subr.mxu0 0.0
      %1405 = vmatpush1.xpose.msra.mxu0 %v1201
      %1406 = vmatprep.subr.mxu0 0.0
      %1407 = vmatpush1.xpose.msra.mxu0 %v1198
      %1408 = vmatprep.subr.mxu0 0.0
      %1409 = vmatpush1.xpose.msra.mxu0 %v1195
      %1410 = vmatprep.subr.mxu0 0.0
      %1411 = vmatpush1.xpose.msra.mxu0 %v1192
      %1412 = vmatprep.subr.mxu0 0.0
      %1413 = vmatpush1.xpose.msra.mxu0 %v1189
      %1414 = vmatprep.subr.mxu0 0.0
      %1415 = vmatpush1.xpose.msra.mxu0 %v1186
      %1416 = vmatprep.subr.mxu0 0.0
      %1417 = vmatpush1.xpose.msra.mxu0 %v1183
      %1418 = vmatprep.subr.mxu0 0.0
      %1419 = vmatpush1.xpose.msra.mxu0 %v1180
      %1420 = vmatprep.subr.mxu0 0.0
      %1421 = vmatpush2.xpose.msra.mxu0 0.0
      %1422 = vmatprep.subr.mxu0 0.0
      %1423 = vmatpush2.xpose.msra.mxu0 0.0
      %1424 = vmatprep.subr.mxu0 0.0
      %1425 = vmatpush2.xpose.msra.mxu0 0.0
      %1426 = vmatprep.subr.mxu0 0.0
      %1427 = vmatpush2.xpose.msra.mxu0 0.0
      %1428 = vmatprep.subr.mxu0 0.0
      %1429 = vmatpush2.xpose.msra.mxu0 0.0
      %1430 = vmatprep.subr.mxu0 0.0
      %1431 = vmatpush2.xpose.msra.mxu0 0.0
      %1432 = vmatprep.subr.mxu0 0.0
      %1433 = vmatpush2.xpose.msra.mxu0 0.0
      %1434 = vmatprep.subr.mxu0 0.0
      %1435 = vmatpush2.xpose.msra.mxu0 0.0
      %1436 = vmatprep.subr.mxu0 0.0
      %1437 = vmatpush2.xpose.msra.mxu0 0.0
      %1438 = vmatprep.subr.mxu0 0.0
      %1439 = vmatpush2.xpose.msra.mxu0 0.0
      %1440 = vmatprep.subr.mxu0 0.0
      %1441 = vmatpush2.xpose.msra.mxu0 0.0
      %1442 = vmatprep.subr.mxu0 0.0
      %1443 = vmatpush2.xpose.msra.mxu0 0.0
      %1444 = vmatprep.subr.mxu0 0.0
      %1445 = vmatpush2.xpose.msra.mxu0 0.0
      %1446 = vmatprep.subr.mxu0 0.0
      %1447 = vmatpush2.xpose.msra.mxu0 0.0
      %1448 = vmatprep.subr.mxu0 0.0
      %1449 = vmatpush2.xpose.msra.mxu0 0.0
      %1450 = vmatprep.subr.mxu0 0.0
      %1451 = vmatpush2.xpose.msra.mxu0 0.0
      %1452 = vmatprep.mubr.f32.mxu0 0.0
      %1453 = vmatmul.mubr.f32.gmra.mxu0 %v1036
      %v1454 = vpop.f32.mrf.mxu0
      %v1455 = vadd.f32 %v988, %v1454
      %v1456 = vpop.f32.mrf.mxu0
      %1457 = vmatprep.mubr.f32.mxu0 0.0
      %1458 = vmatmul.mubr.f32.gmra.mxu0 %v1039
      %v1459 = vpop.f32.mrf.mxu0
      %v1460 = vadd.f32 %v991, %v1459
      %v1461 = vpop.f32.mrf.mxu0
      %1462 = vmatprep.mubr.f32.mxu0 0.0
      %1463 = vmatmul.mubr.f32.gmra.mxu0 %v1042
      %v1464 = vpop.f32.mrf.mxu0
      %v1465 = vadd.f32 %v994, %v1464
      %v1466 = vpop.f32.mrf.mxu0
      %1467 = vmatprep.mubr.f32.mxu0 0.0
      %1468 = vmatmul.mubr.f32.gmra.mxu0 %v1045
      %v1469 = vpop.f32.mrf.mxu0
      %v1470 = vadd.f32 %v997, %v1469
      %v1471 = vpop.f32.mrf.mxu0
      %1472 = vmatprep.mubr.f32.mxu0 0.0
      %1473 = vmatmul.mubr.f32.gmra.mxu0 %v1048
      %v1474 = vpop.f32.mrf.mxu0
      %v1475 = vadd.f32 %v1000, %v1474
      %v1476 = vpop.f32.mrf.mxu0
      %1477 = vmatprep.mubr.f32.mxu0 0.0
      %1478 = vmatmul.mubr.f32.gmra.mxu0 %v1051
      %v1479 = vpop.f32.mrf.mxu0
      %v1480 = vadd.f32 %v1003, %v1479
      %v1481 = vpop.f32.mrf.mxu0
      %1482 = vmatprep.mubr.f32.mxu0 0.0
      %1483 = vmatmul.mubr.f32.gmra.mxu0 %v1054
      %v1484 = vpop.f32.mrf.mxu0
      %v1485 = vadd.f32 %v1006, %v1484
      %v1486 = vpop.f32.mrf.mxu0
      %1487 = vmatprep.mubr.f32.mxu0 0.0
      %1488 = vmatmul.mubr.f32.gmra.mxu0 %v1057
      %v1489 = vpop.f32.mrf.mxu0
      %v1490 = vadd.f32 %v1009, %v1489
      %v1491 = vpop.f32.mrf.mxu0
      %1492 = vmatprep.mubr.f32.mxu0 0.0
      %1493 = vmatmul.mubr.f32.gmra.mxu0 %v1060
      %v1494 = vpop.f32.mrf.mxu0
      %v1495 = vadd.f32 %v1012, %v1494
      %v1496 = vpop.f32.mrf.mxu0
      %1497 = vmatprep.mubr.f32.mxu0 0.0
      %1498 = vmatmul.mubr.f32.gmra.mxu0 %v1063
      %v1499 = vpop.f32.mrf.mxu0
      %v1500 = vadd.f32 %v1015, %v1499
      %v1501 = vpop.f32.mrf.mxu0
      %1502 = vmatprep.mubr.f32.mxu0 0.0
      %1503 = vmatmul.mubr.f32.gmra.mxu0 %v1066
      %v1504 = vpop.f32.mrf.mxu0
      %v1505 = vadd.f32 %v1018, %v1504
      %v1506 = vpop.f32.mrf.mxu0
      %1507 = vmatprep.mubr.f32.mxu0 0.0
      %1508 = vmatmul.mubr.f32.gmra.mxu0 %v1069
      %v1509 = vpop.f32.mrf.mxu0
      %v1510 = vadd.f32 %v1021, %v1509
      %v1511 = vpop.f32.mrf.mxu0
      %1512 = vmatprep.mubr.f32.mxu0 0.0
      %1513 = vmatmul.mubr.f32.gmra.mxu0 %v1072
      %v1514 = vpop.f32.mrf.mxu0
      %v1515 = vadd.f32 %v1024, %v1514
      %v1516 = vpop.f32.mrf.mxu0
      %1517 = vmatprep.mubr.f32.mxu0 0.0
      %1518 = vmatmul.mubr.f32.gmra.mxu0 %v1075
      %v1519 = vpop.f32.mrf.mxu0
      %v1520 = vadd.f32 %v1027, %v1519
      %v1521 = vpop.f32.mrf.mxu0
      %1522 = vmatprep.mubr.f32.mxu0 0.0
      %1523 = vmatmul.mubr.f32.gmra.mxu0 %v1078
      %v1524 = vpop.f32.mrf.mxu0
      %v1525 = vadd.f32 %v1030, %v1524
      %v1526 = vpop.f32.mrf.mxu0
      %1527 = vmatprep.mubr.f32.mxu0 0.0
      %1528 = vmatmul.mubr.f32.gmra.mxu0 %v1081
      %v1529 = vpop.f32.mrf.mxu0
      %v1530 = vadd.f32 %v1033, %v1529
      %v1531 = vpop.f32.mrf.mxu0
      %1532 = vdwg.mxu0
      %v1533 = vmax.f32 %v1294, %v1296
      %v1534 = vmax.f32 %v1533, %v1455
      %1535 = vmax.xlane.f32.xlu0 %v1534
      %v1536 = vpop.xlane.xlu0 %1535
      %v1537 = vmax.f32 %v1300, %v1302
      %v1538 = vmax.f32 %v1537, %v1460
      %1539 = vmax.xlane.f32.xlu0 %v1538
      %v1540 = vpop.xlane.xlu0 %1539
      %v1541 = vmax.f32 %v1306, %v1308
      %v1542 = vmax.f32 %v1541, %v1465
      %1543 = vmax.xlane.f32.xlu0 %v1542
      %v1544 = vpop.xlane.xlu0 %1543
      %v1545 = vmax.f32 %v1312, %v1314
      %v1546 = vmax.f32 %v1545, %v1470
      %1547 = vmax.xlane.f32.xlu0 %v1546
      %v1548 = vpop.xlane.xlu0 %1547
      %v1549 = vmax.f32 %v1318, %v1320
      %v1550 = vmax.f32 %v1549, %v1475
      %1551 = vmax.xlane.f32.xlu0 %v1550
      %v1552 = vpop.xlane.xlu0 %1551
      %v1553 = vmax.f32 %v1324, %v1326
      %v1554 = vmax.f32 %v1553, %v1480
      %1555 = vmax.xlane.f32.xlu0 %v1554
      %v1556 = vpop.xlane.xlu0 %1555
      %v1557 = vmax.f32 %v1330, %v1332
      %v1558 = vmax.f32 %v1557, %v1485
      %1559 = vmax.xlane.f32.xlu0 %v1558
      %v1560 = vpop.xlane.xlu0 %1559
      %v1561 = vmax.f32 %v1336, %v1338
      %v1562 = vmax.f32 %v1561, %v1490
      %1563 = vmax.xlane.f32.xlu0 %v1562
      %v1564 = vpop.xlane.xlu0 %1563
      %v1565 = vmax.f32 %v1342, %v1344
      %v1566 = vmax.f32 %v1565, %v1495
      %1567 = vmax.xlane.f32.xlu0 %v1566
      %v1568 = vpop.xlane.xlu0 %1567
      %v1569 = vmax.f32 %v1348, %v1350
      %v1570 = vmax.f32 %v1569, %v1500
      %1571 = vmax.xlane.f32.xlu0 %v1570
      %v1572 = vpop.xlane.xlu0 %1571
      %v1573 = vmax.f32 %v1354, %v1356
      %v1574 = vmax.f32 %v1573, %v1505
      %1575 = vmax.xlane.f32.xlu0 %v1574
      %v1576 = vpop.xlane.xlu0 %1575
      %v1577 = vmax.f32 %v1360, %v1362
      %v1578 = vmax.f32 %v1577, %v1510
      %1579 = vmax.xlane.f32.xlu0 %v1578
      %v1580 = vpop.xlane.xlu0 %1579
      %v1581 = vmax.f32 %v1366, %v1368
      %v1582 = vmax.f32 %v1581, %v1515
      %1583 = vmax.xlane.f32.xlu0 %v1582
      %v1584 = vpop.xlane.xlu0 %1583
      %v1585 = vmax.f32 %v1372, %v1374
      %v1586 = vmax.f32 %v1585, %v1520
      %1587 = vmax.xlane.f32.xlu0 %v1586
      %v1588 = vpop.xlane.xlu0 %1587
      %v1589 = vmax.f32 %v1378, %v1380
      %v1590 = vmax.f32 %v1589, %v1525
      %1591 = vmax.xlane.f32.xlu0 %v1590
      %v1592 = vpop.xlane.xlu0 %1591
      %v1593 = vmax.f32 %v1384, %v1386
      %v1594 = vmax.f32 %v1593, %v1530
      %1595 = vmax.xlane.f32.xlu0 %v1594
      %v1596 = vpop.xlane.xlu0 %1595
      %v1597 = vsub.f32 %v1294, %v1536
      %v1598 = vsub.f32 %v1296, %v1536
      %v1599 = vsub.f32 %v1455, %v1536
      %v1600 = vsub.f32 %v1300, %v1540
      %v1601 = vsub.f32 %v1302, %v1540
      %v1602 = vsub.f32 %v1460, %v1540
      %v1603 = vsub.f32 %v1306, %v1544
      %v1604 = vsub.f32 %v1308, %v1544
      %v1605 = vsub.f32 %v1465, %v1544
      %v1606 = vsub.f32 %v1312, %v1548
      %v1607 = vsub.f32 %v1314, %v1548
      %v1608 = vsub.f32 %v1470, %v1548
      %v1609 = vsub.f32 %v1318, %v1552
      %v1610 = vsub.f32 %v1320, %v1552
      %v1611 = vsub.f32 %v1475, %v1552
      %v1612 = vsub.f32 %v1324, %v1556
      %v1613 = vsub.f32 %v1326, %v1556
      %v1614 = vsub.f32 %v1480, %v1556
      %v1615 = vsub.f32 %v1330, %v1560
      %v1616 = vsub.f32 %v1332, %v1560
      %v1617 = vsub.f32 %v1485, %v1560
      %v1618 = vsub.f32 %v1336, %v1564
      %v1619 = vsub.f32 %v1338, %v1564
      %v1620 = vsub.f32 %v1490, %v1564
      %v1621 = vsub.f32 %v1342, %v1568
      %v1622 = vsub.f32 %v1344, %v1568
      %v1623 = vsub.f32 %v1495, %v1568
      %v1624 = vsub.f32 %v1348, %v1572
      %v1625 = vsub.f32 %v1350, %v1572
      %v1626 = vsub.f32 %v1500, %v1572
      %v1627 = vsub.f32 %v1354, %v1576
      %v1628 = vsub.f32 %v1356, %v1576
      %v1629 = vsub.f32 %v1505, %v1576
      %v1630 = vsub.f32 %v1360, %v1580
      %v1631 = vsub.f32 %v1362, %v1580
      %v1632 = vsub.f32 %v1510, %v1580
      %v1633 = vsub.f32 %v1366, %v1584
      %v1634 = vsub.f32 %v1368, %v1584
      %v1635 = vsub.f32 %v1515, %v1584
      %v1636 = vsub.f32 %v1372, %v1588
      %v1637 = vsub.f32 %v1374, %v1588
      %v1638 = vsub.f32 %v1520, %v1588
      %v1639 = vsub.f32 %v1378, %v1592
      %v1640 = vsub.f32 %v1380, %v1592
      %v1641 = vsub.f32 %v1525, %v1592
      %v1642 = vsub.f32 %v1384, %v1596
      %v1643 = vsub.f32 %v1386, %v1596
      %v1644 = vsub.f32 %v1530, %v1596
      %v1645 = vmul.f32 %v1597, 1.442695
      %v1646 = vpow.pop %v1645
      %v1647 = vmul.f32 %v1598, 1.442695
      %v1648 = vpow.pop %v1647
      %v1649 = vmul.f32 %v1599, 1.442695
      %v1650 = vpow.pop %v1649
      %v1651 = vmul.f32 %v1600, 1.442695
      %v1652 = vpow.pop %v1651
      %v1653 = vmul.f32 %v1601, 1.442695
      %v1654 = vpow.pop %v1653
      %v1655 = vmul.f32 %v1602, 1.442695
      %v1656 = vpow.pop %v1655
      %v1657 = vmul.f32 %v1603, 1.442695
      %v1658 = vpow.pop %v1657
      %v1659 = vmul.f32 %v1604, 1.442695
      %v1660 = vpow.pop %v1659
      %v1661 = vmul.f32 %v1605, 1.442695
      %v1662 = vpow.pop %v1661
      %v1663 = vmul.f32 %v1606, 1.442695
      %v1664 = vpow.pop %v1663
      %v1665 = vmul.f32 %v1607, 1.442695
      %v1666 = vpow.pop %v1665
      %v1667 = vmul.f32 %v1608, 1.442695
      %v1668 = vpow.pop %v1667
      %v1669 = vmul.f32 %v1609, 1.442695
      %v1670 = vpow.pop %v1669
      %v1671 = vmul.f32 %v1610, 1.442695
      %v1672 = vpow.pop %v1671
      %v1673 = vmul.f32 %v1611, 1.442695
      %v1674 = vpow.pop %v1673
      %v1675 = vmul.f32 %v1612, 1.442695
      %v1676 = vpow.pop %v1675
      %v1677 = vmul.f32 %v1613, 1.442695
      %v1678 = vpow.pop %v1677
      %v1679 = vmul.f32 %v1614, 1.442695
      %v1680 = vpow.pop %v1679
      %v1681 = vmul.f32 %v1615, 1.442695
      %v1682 = vpow.pop %v1681
      %v1683 = vmul.f32 %v1616, 1.442695
      %v1684 = vpow.pop %v1683
      %v1685 = vmul.f32 %v1617, 1.442695
      %v1686 = vpow.pop %v1685
      %v1687 = vmul.f32 %v1618, 1.442695
      %v1688 = vpow.pop %v1687
      %v1689 = vmul.f32 %v1619, 1.442695
      %v1690 = vpow.pop %v1689
      %v1691 = vmul.f32 %v1620, 1.442695
      %v1692 = vpow.pop %v1691
      %v1693 = vmul.f32 %v1621, 1.442695
      %v1694 = vpow.pop %v1693
      %v1695 = vmul.f32 %v1622, 1.442695
      %v1696 = vpow.pop %v1695
      %v1697 = vmul.f32 %v1623, 1.442695
      %v1698 = vpow.pop %v1697
      %v1699 = vmul.f32 %v1624, 1.442695
      %v1700 = vpow.pop %v1699
      %v1701 = vmul.f32 %v1625, 1.442695
      %v1702 = vpow.pop %v1701
      %v1703 = vmul.f32 %v1626, 1.442695
      %v1704 = vpow.pop %v1703
      %v1705 = vmul.f32 %v1627, 1.442695
      %v1706 = vpow.pop %v1705
      %v1707 = vmul.f32 %v1628, 1.442695
      %v1708 = vpow.pop %v1707
      %v1709 = vmul.f32 %v1629, 1.442695
      %v1710 = vpow.pop %v1709
      %v1711 = vmul.f32 %v1630, 1.442695
      %v1712 = vpow.pop %v1711
      %v1713 = vmul.f32 %v1631, 1.442695
      %v1714 = vpow.pop %v1713
      %v1715 = vmul.f32 %v1632, 1.442695
      %v1716 = vpow.pop %v1715
      %v1717 = vmul.f32 %v1633, 1.442695
      %v1718 = vpow.pop %v1717
      %v1719 = vmul.f32 %v1634, 1.442695
      %v1720 = vpow.pop %v1719
      %v1721 = vmul.f32 %v1635, 1.442695
      %v1722 = vpow.pop %v1721
      %v1723 = vmul.f32 %v1636, 1.442695
      %v1724 = vpow.pop %v1723
      %v1725 = vmul.f32 %v1637, 1.442695
      %v1726 = vpow.pop %v1725
      %v1727 = vmul.f32 %v1638, 1.442695
      %v1728 = vpow.pop %v1727
      %v1729 = vmul.f32 %v1639, 1.442695
      %v1730 = vpow.pop %v1729
      %v1731 = vmul.f32 %v1640, 1.442695
      %v1732 = vpow.pop %v1731
      %v1733 = vmul.f32 %v1641, 1.442695
      %v1734 = vpow.pop %v1733
      %v1735 = vmul.f32 %v1642, 1.442695
      %v1736 = vpow.pop %v1735
      %v1737 = vmul.f32 %v1643, 1.442695
      %v1738 = vpow.pop %v1737
      %v1739 = vmul.f32 %v1644, 1.442695
      %v1740 = vpow.pop %v1739
      %v1741 = vadd.f32 %v1646, %v1648
      %v1742 = vadd.f32 %v1741, %v1650
      %1743 = vadd.xlane.f32.xlu0 %v1742
      %v1744 = vpop.xlane.xlu0 %1743
      %v1745 = vadd.f32 %v1652, %v1654
      %v1746 = vadd.f32 %v1745, %v1656
      %1747 = vadd.xlane.f32.xlu0 %v1746
      %v1748 = vpop.xlane.xlu0 %1747
      %v1749 = vadd.f32 %v1658, %v1660
      %v1750 = vadd.f32 %v1749, %v1662
      %1751 = vadd.xlane.f32.xlu0 %v1750
      %v1752 = vpop.xlane.xlu0 %1751
      %v1753 = vadd.f32 %v1664, %v1666
      %v1754 = vadd.f32 %v1753, %v1668
      %1755 = vadd.xlane.f32.xlu0 %v1754
      %v1756 = vpop.xlane.xlu0 %1755
      %v1757 = vadd.f32 %v1670, %v1672
      %v1758 = vadd.f32 %v1757, %v1674
      %1759 = vadd.xlane.f32.xlu0 %v1758
      %v1760 = vpop.xlane.xlu0 %1759
      %v1761 = vadd.f32 %v1676, %v1678
      %v1762 = vadd.f32 %v1761, %v1680
      %1763 = vadd.xlane.f32.xlu0 %v1762
      %v1764 = vpop.xlane.xlu0 %1763
      %v1765 = vadd.f32 %v1682, %v1684
      %v1766 = vadd.f32 %v1765, %v1686
      %1767 = vadd.xlane.f32.xlu0 %v1766
      %v1768 = vpop.xlane.xlu0 %1767
      %v1769 = vadd.f32 %v1688, %v1690
      %v1770 = vadd.f32 %v1769, %v1692
      %1771 = vadd.xlane.f32.xlu0 %v1770
      %v1772 = vpop.xlane.xlu0 %1771
      %v1773 = vadd.f32 %v1694, %v1696
      %v1774 = vadd.f32 %v1773, %v1698
      %1775 = vadd.xlane.f32.xlu0 %v1774
      %v1776 = vpop.xlane.xlu0 %1775
      %v1777 = vadd.f32 %v1700, %v1702
      %v1778 = vadd.f32 %v1777, %v1704
      %1779 = vadd.xlane.f32.xlu0 %v1778
      %v1780 = vpop.xlane.xlu0 %1779
      %v1781 = vadd.f32 %v1706, %v1708
      %v1782 = vadd.f32 %v1781, %v1710
      %1783 = vadd.xlane.f32.xlu0 %v1782
      %v1784 = vpop.xlane.xlu0 %1783
      %v1785 = vadd.f32 %v1712, %v1714
      %v1786 = vadd.f32 %v1785, %v1716
      %1787 = vadd.xlane.f32.xlu0 %v1786
      %v1788 = vpop.xlane.xlu0 %1787
      %v1789 = vadd.f32 %v1718, %v1720
      %v1790 = vadd.f32 %v1789, %v1722
      %1791 = vadd.xlane.f32.xlu0 %v1790
      %v1792 = vpop.xlane.xlu0 %1791
      %v1793 = vadd.f32 %v1724, %v1726
      %v1794 = vadd.f32 %v1793, %v1728
      %1795 = vadd.xlane.f32.xlu0 %v1794
      %v1796 = vpop.xlane.xlu0 %1795
      %v1797 = vadd.f32 %v1730, %v1732
      %v1798 = vadd.f32 %v1797, %v1734
      %1799 = vadd.xlane.f32.xlu0 %v1798
      %v1800 = vpop.xlane.xlu0 %1799
      %v1801 = vadd.f32 %v1736, %v1738
      %v1802 = vadd.f32 %v1801, %v1740
      %1803 = vadd.xlane.f32.xlu0 %v1802
      %v1804 = vpop.xlane.xlu0 %1803
      %1805 = vrot.lane.b32.xlu0 %v916, 96
      %v1806 = vpop.permute.xlu0 %1805
      %1807 = vrot.lane.b32.xlu0 %v917, 96
      %v1808 = vpop.permute.xlu0 %1807
      %1809 = vrot.lane.b32.xlu0 %v918, 96
      %v1810 = vpop.permute.xlu0 %1809
      %1811 = vrot.lane.b32.xlu0 %v919, 96
      %v1812 = vpop.permute.xlu0 %1811
      %1813 = vrot.lane.b32.xlu0 %v920, 96
      %v1814 = vpop.permute.xlu0 %1813
      %1815 = vrot.lane.b32.xlu0 %v921, 96
      %v1816 = vpop.permute.xlu0 %1815
      %1817 = vrot.lane.b32.xlu0 %v922, 96
      %v1818 = vpop.permute.xlu0 %1817
      %1819 = vrot.lane.b32.xlu0 %v923, 96
      %v1820 = vpop.permute.xlu0 %1819
      %1821 = vrot.lane.b32.xlu0 %v924, 96
      %v1822 = vpop.permute.xlu0 %1821
      %1823 = vrot.lane.b32.xlu0 %v925, 96
      %v1824 = vpop.permute.xlu0 %1823
      %1825 = vrot.lane.b32.xlu0 %v926, 96
      %v1826 = vpop.permute.xlu0 %1825
      %1827 = vrot.lane.b32.xlu0 %v927, 96
      %v1828 = vpop.permute.xlu0 %1827
      %1829 = vrot.lane.b32.xlu0 %v928, 96
      %v1830 = vpop.permute.xlu0 %1829
      %1831 = vrot.lane.b32.xlu0 %v929, 96
      %v1832 = vpop.permute.xlu0 %1831
      %1833 = vrot.lane.b32.xlu0 %v930, 96
      %v1834 = vpop.permute.xlu0 %1833
      %1835 = vrot.lane.b32.xlu0 %v931, 96
      %v1836 = vpop.permute.xlu0 %1835
      %1837 = vrot.lane.b32.xlu0 %v932, 96
      %v1838 = vpop.permute.xlu0 %1837
      %1839 = vrot.lane.b32.xlu0 %v933, 96
      %v1840 = vpop.permute.xlu0 %1839
      %1841 = vrot.lane.b32.xlu0 %v934, 96
      %v1842 = vpop.permute.xlu0 %1841
      %1843 = vrot.lane.b32.xlu0 %v935, 96
      %v1844 = vpop.permute.xlu0 %1843
      %1845 = vrot.lane.b32.xlu0 %v936, 96
      %v1846 = vpop.permute.xlu0 %1845
      %1847 = vrot.lane.b32.xlu0 %v937, 96
      %v1848 = vpop.permute.xlu0 %1847
      %1849 = vrot.lane.b32.xlu0 %v938, 96
      %v1850 = vpop.permute.xlu0 %1849
      %1851 = vrot.lane.b32.xlu0 %v939, 96
      %v1852 = vpop.permute.xlu0 %1851
      %1853 = vrot.lane.b32.xlu0 %v940, 96
      %v1854 = vpop.permute.xlu0 %1853
      %1855 = vrot.lane.b32.xlu0 %v941, 96
      %v1856 = vpop.permute.xlu0 %1855
      %1857 = vrot.lane.b32.xlu0 %v942, 96
      %v1858 = vpop.permute.xlu0 %1857
      %1859 = vrot.lane.b32.xlu0 %v943, 96
      %v1860 = vpop.permute.xlu0 %1859
      %1861 = vrot.lane.b32.xlu0 %v944, 96
      %v1862 = vpop.permute.xlu0 %1861
      %1863 = vrot.lane.b32.xlu0 %v945, 96
      %v1864 = vpop.permute.xlu0 %1863
      %1865 = vrot.lane.b32.xlu0 %v946, 96
      %v1866 = vpop.permute.xlu0 %1865
      %1867 = vrot.lane.b32.xlu0 %v947, 96
      %v1868 = vpop.permute.xlu0 %1867
      %1869 = vrot.lane.b32.xlu0 %v948, 96
      %v1870 = vpop.permute.xlu0 %1869
      %1871 = vrot.lane.b32.xlu0 %v949, 96
      %v1872 = vpop.permute.xlu0 %1871
      %1873 = vrot.lane.b32.xlu0 %v950, 96
      %v1874 = vpop.permute.xlu0 %1873
      %1875 = vrot.lane.b32.xlu0 %v951, 96
      %v1876 = vpop.permute.xlu0 %1875
      %1877 = vrot.lane.b32.xlu0 %v952, 96
      %v1878 = vpop.permute.xlu0 %1877
      %1879 = vrot.lane.b32.xlu0 %v953, 96
      %v1880 = vpop.permute.xlu0 %1879
      %1881 = vrot.lane.b32.xlu0 %v954, 96
      %v1882 = vpop.permute.xlu0 %1881
      %1883 = vrot.lane.b32.xlu0 %v955, 96
      %v1884 = vpop.permute.xlu0 %1883
      %1885 = vrot.lane.b32.xlu0 %v956, 96
      %v1886 = vpop.permute.xlu0 %1885
      %1887 = vrot.lane.b32.xlu0 %v957, 96
      %v1888 = vpop.permute.xlu0 %1887
      %1889 = vrot.lane.b32.xlu0 %v958, 96
      %v1890 = vpop.permute.xlu0 %1889
      %1891 = vrot.lane.b32.xlu0 %v959, 96
      %v1892 = vpop.permute.xlu0 %1891
      %1893 = vrot.lane.b32.xlu0 %v960, 96
      %v1894 = vpop.permute.xlu0 %1893
      %1895 = vrot.lane.b32.xlu0 %v961, 96
      %v1896 = vpop.permute.xlu0 %1895
      %1897 = vrot.lane.b32.xlu0 %v962, 96
      %v1898 = vpop.permute.xlu0 %1897
      %1899 = vrot.lane.b32.xlu0 %v963, 96
      %v1900 = vpop.permute.xlu0 %1899
      %1949 = vmatprep.subr.mxu0 0.0
      %1950 = vmatpush1.msra.mxu0 %v1836
      %1951 = vmatprep.subr.mxu0 0.0
      %1952 = vmatpush1.msra.mxu0 %v1834
      %1953 = vmatprep.subr.mxu0 0.0
      %1954 = vmatpush1.msra.mxu0 %v1832
      %1955 = vmatprep.subr.mxu0 0.0
      %1956 = vmatpush1.msra.mxu0 %v1830
      %1957 = vmatprep.subr.mxu0 0.0
      %1958 = vmatpush1.msra.mxu0 %v1828
      %1959 = vmatprep.subr.mxu0 0.0
      %1960 = vmatpush1.msra.mxu0 %v1826
      %1961 = vmatprep.subr.mxu0 0.0
      %1962 = vmatpush1.msra.mxu0 %v1824
      %1963 = vmatprep.subr.mxu0 0.0
      %1964 = vmatpush1.msra.mxu0 %v1822
      %1965 = vmatprep.subr.mxu0 0.0
      %1966 = vmatpush1.msra.mxu0 %v1820
      %1967 = vmatprep.subr.mxu0 0.0
      %1968 = vmatpush1.msra.mxu0 %v1818
      %1969 = vmatprep.subr.mxu0 0.0
      %1970 = vmatpush1.msra.mxu0 %v1816
      %1971 = vmatprep.subr.mxu0 0.0
      %1972 = vmatpush1.msra.mxu0 %v1814
      %1973 = vmatprep.subr.mxu0 0.0
      %1974 = vmatpush1.msra.mxu0 %v1812
      %1975 = vmatprep.subr.mxu0 0.0
      %1976 = vmatpush1.msra.mxu0 %v1810
      %1977 = vmatprep.subr.mxu0 0.0
      %1978 = vmatpush1.msra.mxu0 %v1808
      %1979 = vmatprep.subr.mxu0 0.0
      %1980 = vmatpush1.msra.mxu0 %v1806
      %1981 = vmatprep.subr.mxu0 0.0
      %1982 = vmatpush2.msra.mxu0 %v1868
      %1983 = vmatprep.subr.mxu0 0.0
      %1984 = vmatpush2.msra.mxu0 %v1866
      %1985 = vmatprep.subr.mxu0 0.0
      %1986 = vmatpush2.msra.mxu0 %v1864
      %1987 = vmatprep.subr.mxu0 0.0
      %1988 = vmatpush2.msra.mxu0 %v1862
      %1989 = vmatprep.subr.mxu0 0.0
      %1990 = vmatpush2.msra.mxu0 %v1860
      %1991 = vmatprep.subr.mxu0 0.0
      %1992 = vmatpush2.msra.mxu0 %v1858
      %1993 = vmatprep.subr.mxu0 0.0
      %1994 = vmatpush2.msra.mxu0 %v1856
      %1995 = vmatprep.subr.mxu0 0.0
      %1996 = vmatpush2.msra.mxu0 %v1854
      %1997 = vmatprep.subr.mxu0 0.0
      %1998 = vmatpush2.msra.mxu0 %v1852
      %1999 = vmatprep.subr.mxu0 0.0
      %2000 = vmatpush2.msra.mxu0 %v1850
      %2001 = vmatprep.subr.mxu0 0.0
      %2002 = vmatpush2.msra.mxu0 %v1848
      %2003 = vmatprep.subr.mxu0 0.0
      %2004 = vmatpush2.msra.mxu0 %v1846
      %2005 = vmatprep.subr.mxu0 0.0
      %2006 = vmatpush2.msra.mxu0 %v1844
      %2007 = vmatprep.subr.mxu0 0.0
      %2008 = vmatpush2.msra.mxu0 %v1842
      %2009 = vmatprep.subr.mxu0 0.0
      %2010 = vmatpush2.msra.mxu0 %v1840
      %2011 = vmatprep.subr.mxu0 0.0
      %2012 = vmatpush2.msra.mxu0 %v1838
      %2013 = vmatprep.mubr.f32.mxu0 %v1648
      %2014 = vmatmul.mubr.f32.gmra.mxu0 %v1646
      %v2015 = vpop.f32.mrf.mxu0
      %v2016 = vadd.f32 0.0, %v2015
      %v2017 = vpop.f32.mrf.mxu0
      %2018 = vmatprep.mubr.f32.mxu0 %v1654
      %2019 = vmatmul.mubr.f32.gmra.mxu0 %v1652
      %v2020 = vpop.f32.mrf.mxu0
      %v2021 = vadd.f32 0.0, %v2020
      %v2022 = vpop.f32.mrf.mxu0
      %2023 = vmatprep.mubr.f32.mxu0 %v1660
      %2024 = vmatmul.mubr.f32.gmra.mxu0 %v1658
      %v2025 = vpop.f32.mrf.mxu0
      %v2026 = vadd.f32 0.0, %v2025
      %v2027 = vpop.f32.mrf.mxu0
      %2028 = vmatprep.mubr.f32.mxu0 %v1666
      %2029 = vmatmul.mubr.f32.gmra.mxu0 %v1664
      %v2030 = vpop.f32.mrf.mxu0
      %v2031 = vadd.f32 0.0, %v2030
      %v2032 = vpop.f32.mrf.mxu0
      %2033 = vmatprep.mubr.f32.mxu0 %v1672
      %2034 = vmatmul.mubr.f32.gmra.mxu0 %v1670
      %v2035 = vpop.f32.mrf.mxu0
      %v2036 = vadd.f32 0.0, %v2035
      %v2037 = vpop.f32.mrf.mxu0
      %2038 = vmatprep.mubr.f32.mxu0 %v1678
      %2039 = vmatmul.mubr.f32.gmra.mxu0 %v1676
      %v2040 = vpop.f32.mrf.mxu0
      %v2041 = vadd.f32 0.0, %v2040
      %v2042 = vpop.f32.mrf.mxu0
      %2043 = vmatprep.mubr.f32.mxu0 %v1684
      %2044 = vmatmul.mubr.f32.gmra.mxu0 %v1682
      %v2045 = vpop.f32.mrf.mxu0
      %v2046 = vadd.f32 0.0, %v2045
      %v2047 = vpop.f32.mrf.mxu0
      %2048 = vmatprep.mubr.f32.mxu0 %v1690
      %2049 = vmatmul.mubr.f32.gmra.mxu0 %v1688
      %v2050 = vpop.f32.mrf.mxu0
      %v2051 = vadd.f32 0.0, %v2050
      %v2052 = vpop.f32.mrf.mxu0
      %2053 = vmatprep.mubr.f32.mxu0 %v1696
      %2054 = vmatmul.mubr.f32.gmra.mxu0 %v1694
      %v2055 = vpop.f32.mrf.mxu0
      %v2056 = vadd.f32 0.0, %v2055
      %v2057 = vpop.f32.mrf.mxu0
      %2058 = vmatprep.mubr.f32.mxu0 %v1702
      %2059 = vmatmul.mubr.f32.gmra.mxu0 %v1700
      %v2060 = vpop.f32.mrf.mxu0
      %v2061 = vadd.f32 0.0, %v2060
      %v2062 = vpop.f32.mrf.mxu0
      %2063 = vmatprep.mubr.f32.mxu0 %v1708
      %2064 = vmatmul.mubr.f32.gmra.mxu0 %v1706
      %v2065 = vpop.f32.mrf.mxu0
      %v2066 = vadd.f32 0.0, %v2065
      %v2067 = vpop.f32.mrf.mxu0
      %2068 = vmatprep.mubr.f32.mxu0 %v1714
      %2069 = vmatmul.mubr.f32.gmra.mxu0 %v1712
      %v2070 = vpop.f32.mrf.mxu0
      %v2071 = vadd.f32 0.0, %v2070
      %v2072 = vpop.f32.mrf.mxu0
      %2073 = vmatprep.mubr.f32.mxu0 %v1720
      %2074 = vmatmul.mubr.f32.gmra.mxu0 %v1718
      %v2075 = vpop.f32.mrf.mxu0
      %v2076 = vadd.f32 0.0, %v2075
      %v2077 = vpop.f32.mrf.mxu0
      %2078 = vmatprep.mubr.f32.mxu0 %v1726
      %2079 = vmatmul.mubr.f32.gmra.mxu0 %v1724
      %v2080 = vpop.f32.mrf.mxu0
      %v2081 = vadd.f32 0.0, %v2080
      %v2082 = vpop.f32.mrf.mxu0
      %2083 = vmatprep.mubr.f32.mxu0 %v1732
      %2084 = vmatmul.mubr.f32.gmra.mxu0 %v1730
      %v2085 = vpop.f32.mrf.mxu0
      %v2086 = vadd.f32 0.0, %v2085
      %v2087 = vpop.f32.mrf.mxu0
      %2088 = vmatprep.mubr.f32.mxu0 %v1738
      %2089 = vmatmul.mubr.f32.gmra.mxu0 %v1736
      %v2090 = vpop.f32.mrf.mxu0
      %v2091 = vadd.f32 0.0, %v2090
      %v2092 = vpop.f32.mrf.mxu0
      %2093 = vdwg.mxu0
      %2094 = vmatprep.subr.mxu0 0.0
      %2095 = vmatpush1.msra.mxu0 %v1900
      %2096 = vmatprep.subr.mxu0 0.0
      %2097 = vmatpush1.msra.mxu0 %v1898
      %2098 = vmatprep.subr.mxu0 0.0
      %2099 = vmatpush1.msra.mxu0 %v1896
      %2100 = vmatprep.subr.mxu0 0.0
      %2101 = vmatpush1.msra.mxu0 %v1894
      %2102 = vmatprep.subr.mxu0 0.0
      %2103 = vmatpush1.msra.mxu0 %v1892
      %2104 = vmatprep.subr.mxu0 0.0
      %2105 = vmatpush1.msra.mxu0 %v1890
      %2106 = vmatprep.subr.mxu0 0.0
      %2107 = vmatpush1.msra.mxu0 %v1888
      %2108 = vmatprep.subr.mxu0 0.0
      %2109 = vmatpush1.msra.mxu0 %v1886
      %2110 = vmatprep.subr.mxu0 0.0
      %2111 = vmatpush1.msra.mxu0 %v1884
      %2112 = vmatprep.subr.mxu0 0.0
      %2113 = vmatpush1.msra.mxu0 %v1882
      %2114 = vmatprep.subr.mxu0 0.0
      %2115 = vmatpush1.msra.mxu0 %v1880
      %2116 = vmatprep.subr.mxu0 0.0
      %2117 = vmatpush1.msra.mxu0 %v1878
      %2118 = vmatprep.subr.mxu0 0.0
      %2119 = vmatpush1.msra.mxu0 %v1876
      %2120 = vmatprep.subr.mxu0 0.0
      %2121 = vmatpush1.msra.mxu0 %v1874
      %2122 = vmatprep.subr.mxu0 0.0
      %2123 = vmatpush1.msra.mxu0 %v1872
      %2124 = vmatprep.subr.mxu0 0.0
      %2125 = vmatpush1.msra.mxu0 %v1870
      %2126 = vmatprep.subr.mxu0 0.0
      %2127 = vmatpush2.msra.mxu0 0.0
      %2128 = vmatprep.subr.mxu0 0.0
      %2129 = vmatpush2.msra.mxu0 0.0
      %2130 = vmatprep.subr.mxu0 0.0
      %2131 = vmatpush2.msra.mxu0 0.0
      %2132 = vmatprep.subr.mxu0 0.0
      %2133 = vmatpush2.msra.mxu0 0.0
      %2134 = vmatprep.subr.mxu0 0.0
      %2135 = vmatpush2.msra.mxu0 0.0
      %2136 = vmatprep.subr.mxu0 0.0
      %2137 = vmatpush2.msra.mxu0 0.0
      %2138 = vmatprep.subr.mxu0 0.0
      %2139 = vmatpush2.msra.mxu0 0.0
      %2140 = vmatprep.subr.mxu0 0.0
      %2141 = vmatpush2.msra.mxu0 0.0
      %2142 = vmatprep.subr.mxu0 0.0
      %2143 = vmatpush2.msra.mxu0 0.0
      %2144 = vmatprep.subr.mxu0 0.0
      %2145 = vmatpush2.msra.mxu0 0.0
      %2146 = vmatprep.subr.mxu0 0.0
      %2147 = vmatpush2.msra.mxu0 0.0
      %2148 = vmatprep.subr.mxu0 0.0
      %2149 = vmatpush2.msra.mxu0 0.0
      %2150 = vmatprep.subr.mxu0 0.0
      %2151 = vmatpush2.msra.mxu0 0.0
      %2152 = vmatprep.subr.mxu0 0.0
      %2153 = vmatpush2.msra.mxu0 0.0
      %2154 = vmatprep.subr.mxu0 0.0
      %2155 = vmatpush2.msra.mxu0 0.0
      %2156 = vmatprep.subr.mxu0 0.0
      %2157 = vmatpush2.msra.mxu0 0.0
      %2158 = vmatprep.mubr.f32.mxu0 0.0
      %2159 = vmatmul.mubr.f32.gmra.mxu0 %v1650
      %v2160 = vpop.f32.mrf.mxu0
      %v2161 = vadd.f32 %v2016, %v2160
      %v2162 = vpop.f32.mrf.mxu0
      %2163 = vmatprep.mubr.f32.mxu0 0.0
      %2164 = vmatmul.mubr.f32.gmra.mxu0 %v1656
      %v2165 = vpop.f32.mrf.mxu0
      %v2166 = vadd.f32 %v2021, %v2165
      %v2167 = vpop.f32.mrf.mxu0
      %2168 = vmatprep.mubr.f32.mxu0 0.0
      %2169 = vmatmul.mubr.f32.gmra.mxu0 %v1662
      %v2170 = vpop.f32.mrf.mxu0
      %v2171 = vadd.f32 %v2026, %v2170
      %v2172 = vpop.f32.mrf.mxu0
      %2173 = vmatprep.mubr.f32.mxu0 0.0
      %2174 = vmatmul.mubr.f32.gmra.mxu0 %v1668
      %v2175 = vpop.f32.mrf.mxu0
      %v2176 = vadd.f32 %v2031, %v2175
      %v2177 = vpop.f32.mrf.mxu0
      %2178 = vmatprep.mubr.f32.mxu0 0.0
      %2179 = vmatmul.mubr.f32.gmra.mxu0 %v1674
      %v2180 = vpop.f32.mrf.mxu0
      %v2181 = vadd.f32 %v2036, %v2180
      %v2182 = vpop.f32.mrf.mxu0
      %2183 = vmatprep.mubr.f32.mxu0 0.0
      %2184 = vmatmul.mubr.f32.gmra.mxu0 %v1680
      %v2185 = vpop.f32.mrf.mxu0
      %v2186 = vadd.f32 %v2041, %v2185
      %v2187 = vpop.f32.mrf.mxu0
      %2188 = vmatprep.mubr.f32.mxu0 0.0
      %2189 = vmatmul.mubr.f32.gmra.mxu0 %v1686
      %v2190 = vpop.f32.mrf.mxu0
      %v2191 = vadd.f32 %v2046, %v2190
      %v2192 = vpop.f32.mrf.mxu0
      %2193 = vmatprep.mubr.f32.mxu0 0.0
      %2194 = vmatmul.mubr.f32.gmra.mxu0 %v1692
      %v2195 = vpop.f32.mrf.mxu0
      %v2196 = vadd.f32 %v2051, %v2195
      %v2197 = vpop.f32.mrf.mxu0
      %2198 = vmatprep.mubr.f32.mxu0 0.0
      %2199 = vmatmul.mubr.f32.gmra.mxu0 %v1698
      %v2200 = vpop.f32.mrf.mxu0
      %v2201 = vadd.f32 %v2056, %v2200
      %v2202 = vpop.f32.mrf.mxu0
      %2203 = vmatprep.mubr.f32.mxu0 0.0
      %2204 = vmatmul.mubr.f32.gmra.mxu0 %v1704
      %v2205 = vpop.f32.mrf.mxu0
      %v2206 = vadd.f32 %v2061, %v2205
      %v2207 = vpop.f32.mrf.mxu0
      %2208 = vmatprep.mubr.f32.mxu0 0.0
      %2209 = vmatmul.mubr.f32.gmra.mxu0 %v1710
      %v2210 = vpop.f32.mrf.mxu0
      %v2211 = vadd.f32 %v2066, %v2210
      %v2212 = vpop.f32.mrf.mxu0
      %2213 = vmatprep.mubr.f32.mxu0 0.0
      %2214 = vmatmul.mubr.f32.gmra.mxu0 %v1716
      %v2215 = vpop.f32.mrf.mxu0
      %v2216 = vadd.f32 %v2071, %v2215
      %v2217 = vpop.f32.mrf.mxu0
      %2218 = vmatprep.mubr.f32.mxu0 0.0
      %2219 = vmatmul.mubr.f32.gmra.mxu0 %v1722
      %v2220 = vpop.f32.mrf.mxu0
      %v2221 = vadd.f32 %v2076, %v2220
      %v2222 = vpop.f32.mrf.mxu0
      %2223 = vmatprep.mubr.f32.mxu0 0.0
      %2224 = vmatmul.mubr.f32.gmra.mxu0 %v1728
      %v2225 = vpop.f32.mrf.mxu0
      %v2226 = vadd.f32 %v2081, %v2225
      %v2227 = vpop.f32.mrf.mxu0
      %2228 = vmatprep.mubr.f32.mxu0 0.0
      %2229 = vmatmul.mubr.f32.gmra.mxu0 %v1734
      %v2230 = vpop.f32.mrf.mxu0
      %v2231 = vadd.f32 %v2086, %v2230
      %v2232 = vpop.f32.mrf.mxu0
      %2233 = vmatprep.mubr.f32.mxu0 0.0
      %2234 = vmatmul.mubr.f32.gmra.mxu0 %v1740
      %v2235 = vpop.f32.mrf.mxu0
      %v2236 = vadd.f32 %v2091, %v2235
      %v2237 = vpop.f32.mrf.mxu0
      %2238 = vdwg.mxu0
      %v2239 = vrcp.pop %v1744
      %v2240 = vrcp.pop %v1748
      %v2241 = vrcp.pop %v1752
      %v2242 = vrcp.pop %v1756
      %v2243 = vrcp.pop %v1760
      %v2244 = vrcp.pop %v1764
      %v2245 = vrcp.pop %v1768
      %v2246 = vrcp.pop %v1772
      %v2247 = vrcp.pop %v1776
      %v2248 = vrcp.pop %v1780
      %v2249 = vrcp.pop %v1784
      %v2250 = vrcp.pop %v1788
      %v2251 = vrcp.pop %v1792
      %v2252 = vrcp.pop %v1796
      %v2253 = vrcp.pop %v1800
      %v2254 = vrcp.pop %v1804
      %v2255 = vmul.f32 %v2161, %v2239
      %v2256 = vmul.f32 %v2166, %v2240
      %v2257 = vmul.f32 %v2171, %v2241
      %v2258 = vmul.f32 %v2176, %v2242
      %v2259 = vmul.f32 %v2181, %v2243
      %v2260 = vmul.f32 %v2186, %v2244
      %v2261 = vmul.f32 %v2191, %v2245
      %v2262 = vmul.f32 %v2196, %v2246
      %v2263 = vmul.f32 %v2201, %v2247
      %v2264 = vmul.f32 %v2206, %v2248
      %v2265 = vmul.f32 %v2211, %v2249
      %v2266 = vmul.f32 %v2216, %v2250
      %v2267 = vmul.f32 %v2221, %v2251
      %v2268 = vmul.f32 %v2226, %v2252
      %v2269 = vmul.f32 %v2231, %v2253
      %v2270 = vmul.f32 %v2236, %v2254
      %s2271 = sadd.s32 %s980, 384
      %s2272 = sshra.s32 %s2271, 3
      %s2273 = sand.u32 %s2271, 7
      %s2274 = smul.u32 %s2272, 3
      %s2275 = smul.addr %s2274, 8
      %s2276 = scalar_lea.vmem %s2, %s2275
      %v2277 = vld [vmem:[%s2276] sm:$0xff]
      %v2278 = vld [vmem:[%s2276 + $0x8] sm:$0xff]
      %v2279 = vld [vmem:[%s2276 + $0x10] sm:$0xff]
      %v2280 = vld [vmem:[%s2276 + $0x18] sm:$0xff]
      %v2281 = vld [vmem:[%s2276 + $0x20] sm:$0xff]
      %v2282 = vld [vmem:[%s2276 + $0x28] sm:$0xff]
      %v2283 = vld [vmem:[%s2276 + $0x30] sm:$0xff]
      %v2284 = vld [vmem:[%s2276 + $0x38] sm:$0xff]
      %v2285 = vld [vmem:[%s2276 + $0x40] sm:$0xff]
      %v2286 = vld [vmem:[%s2276 + $0x48] sm:$0xff]
      %v2287 = vld [vmem:[%s2276 + $0x50] sm:$0xff]
      %v2288 = vld [vmem:[%s2276 + $0x58] sm:$0xff]
      %v2289 = vld [vmem:[%s2276 + $0x60] sm:$0xff]
      %v2290 = vld [vmem:[%s2276 + $0x68] sm:$0xff]
      %v2291 = vld [vmem:[%s2276 + $0x70] sm:$0xff]
      %v2292 = vld [vmem:[%s2276 + $0x78] sm:$0xff]
      %v2293 = vld [vmem:[%s2276 + $0x80] sm:$0xff]
      %v2294 = vld [vmem:[%s2276 + $0x88] sm:$0xff]
      %v2295 = vld [vmem:[%s2276 + $0x90] sm:$0xff]
      %v2296 = vld [vmem:[%s2276 + $0x98] sm:$0xff]
      %v2297 = vld [vmem:[%s2276 + $0xa0] sm:$0xff]
      %v2298 = vld [vmem:[%s2276 + $0xa8] sm:$0xff]
      %v2299 = vld [vmem:[%s2276 + $0xb0] sm:$0xff]
      %v2300 = vld [vmem:[%s2276 + $0xb8] sm:$0xff]
      %v2301 = vld [vmem:[%s2276 + $0xc0] sm:$0xff]
      %v2302 = vld [vmem:[%s2276 + $0xc8] sm:$0xff]
      %v2303 = vld [vmem:[%s2276 + $0xd0] sm:$0xff]
      %v2304 = vld [vmem:[%s2276 + $0xd8] sm:$0xff]
      %v2305 = vld [vmem:[%s2276 + $0xe0] sm:$0xff]
      %v2306 = vld [vmem:[%s2276 + $0xe8] sm:$0xff]
      %v2307 = vld [vmem:[%s2276 + $0xf0] sm:$0xff]
      %v2308 = vld [vmem:[%s2276 + $0xf8] sm:$0xff]
      %v2309 = vld [vmem:[%s2276 + $0x100] sm:$0xff]
      %v2310 = vld [vmem:[%s2276 + $0x108] sm:$0xff]
      %v2311 = vld [vmem:[%s2276 + $0x110] sm:$0xff]
      %v2312 = vld [vmem:[%s2276 + $0x118] sm:$0xff]
      %v2313 = vld [vmem:[%s2276 + $0x120] sm:$0xff]
      %v2314 = vld [vmem:[%s2276 + $0x128] sm:$0xff]
      %v2315 = vld [vmem:[%s2276 + $0x130] sm:$0xff]
      %v2316 = vld [vmem:[%s2276 + $0x138] sm:$0xff]
      %v2317 = vld [vmem:[%s2276 + $0x140] sm:$0xff]
      %v2318 = vld [vmem:[%s2276 + $0x148] sm:$0xff]
      %v2319 = vld [vmem:[%s2276 + $0x150] sm:$0xff]
      %v2320 = vld [vmem:[%s2276 + $0x158] sm:$0xff]
      %v2321 = vld [vmem:[%s2276 + $0x160] sm:$0xff]
      %v2322 = vld [vmem:[%s2276 + $0x168] sm:$0xff]
      %v2323 = vld [vmem:[%s2276 + $0x170] sm:$0xff]
      %v2324 = vld [vmem:[%s2276 + $0x178] sm:$0xff]
      %2325 = vrot.lane.b32.xlu0 %v964, 120
      %v2326 = vpop.permute.xlu0 %2325
      %2327 = vrot.lane.b32.xlu0 %v965, 120
      %v2328 = vpop.permute.xlu0 %2327
      %2329 = vrot.lane.b32.xlu0 %v966, 120
      %v2330 = vpop.permute.xlu0 %2329
      %2331 = vrot.lane.b32.xlu0 %v967, 120
      %v2332 = vpop.permute.xlu0 %2331
      %2333 = vrot.lane.b32.xlu0 %v968, 120
      %v2334 = vpop.permute.xlu0 %2333
      %2335 = vrot.lane.b32.xlu0 %v969, 120
      %v2336 = vpop.permute.xlu0 %2335
      %2337 = vrot.lane.b32.xlu0 %v970, 120
      %v2338 = vpop.permute.xlu0 %2337
      %2339 = vrot.lane.b32.xlu0 %v971, 120
      %v2340 = vpop.permute.xlu0 %2339
      %2341 = vrot.lane.b32.xlu0 %v972, 120
      %v2342 = vpop.permute.xlu0 %2341
      %2343 = vrot.lane.b32.xlu0 %v973, 120
      %v2344 = vpop.permute.xlu0 %2343
      %2345 = vrot.lane.b32.xlu0 %v974, 120
      %v2346 = vpop.permute.xlu0 %2345
      %2347 = vrot.lane.b32.xlu0 %v975, 120
      %v2348 = vpop.permute.xlu0 %2347
      %2349 = vrot.lane.b32.xlu0 %v976, 120
      %v2350 = vpop.permute.xlu0 %2349
      %2351 = vrot.lane.b32.xlu0 %v977, 120
      %v2352 = vpop.permute.xlu0 %2351
      %2353 = vrot.lane.b32.xlu0 %v978, 120
      %v2354 = vpop.permute.xlu0 %2353
      %2355 = vrot.lane.b32.xlu0 %v979, 120
      %v2356 = vpop.permute.xlu0 %2355
      %2357 = vrot.lane.b32.xlu0 %v916, 120
      %v2358 = vpop.permute.xlu0 %2357
      %2359 = vrot.lane.b32.xlu0 %v917, 120
      %v2360 = vpop.permute.xlu0 %2359
      %2361 = vrot.lane.b32.xlu0 %v918, 120
      %v2362 = vpop.permute.xlu0 %2361
      %2363 = vrot.lane.b32.xlu0 %v919, 120
      %v2364 = vpop.permute.xlu0 %2363
      %2365 = vrot.lane.b32.xlu0 %v920, 120
      %v2366 = vpop.permute.xlu0 %2365
      %2367 = vrot.lane.b32.xlu0 %v921, 120
      %v2368 = vpop.permute.xlu0 %2367
      %2369 = vrot.lane.b32.xlu0 %v922, 120
      %v2370 = vpop.permute.xlu0 %2369
      %2371 = vrot.lane.b32.xlu0 %v923, 120
      %v2372 = vpop.permute.xlu0 %2371
      %2373 = vrot.lane.b32.xlu0 %v924, 120
      %v2374 = vpop.permute.xlu0 %2373
      %2375 = vrot.lane.b32.xlu0 %v925, 120
      %v2376 = vpop.permute.xlu0 %2375
      %2377 = vrot.lane.b32.xlu0 %v926, 120
      %v2378 = vpop.permute.xlu0 %2377
      %2379 = vrot.lane.b32.xlu0 %v927, 120
      %v2380 = vpop.permute.xlu0 %2379
      %2381 = vrot.lane.b32.xlu0 %v928, 120
      %v2382 = vpop.permute.xlu0 %2381
      %2383 = vrot.lane.b32.xlu0 %v929, 120
      %v2384 = vpop.permute.xlu0 %2383
      %2385 = vrot.lane.b32.xlu0 %v930, 120
      %v2386 = vpop.permute.xlu0 %2385
      %2387 = vrot.lane.b32.xlu0 %v931, 120
      %v2388 = vpop.permute.xlu0 %2387
      %2389 = vrot.lane.b32.xlu0 %v932, 120
      %v2390 = vpop.permute.xlu0 %2389
      %2391 = vrot.lane.b32.xlu0 %v933, 120
      %v2392 = vpop.permute.xlu0 %2391
      %2393 = vrot.lane.b32.xlu0 %v934, 120
      %v2394 = vpop.permute.xlu0 %2393
      %2395 = vrot.lane.b32.xlu0 %v935, 120
      %v2396 = vpop.permute.xlu0 %2395
      %2397 = vrot.lane.b32.xlu0 %v936, 120
      %v2398 = vpop.permute.xlu0 %2397
      %2399 = vrot.lane.b32.xlu0 %v937, 120
      %v2400 = vpop.permute.xlu0 %2399
      %2401 = vrot.lane.b32.xlu0 %v938, 120
      %v2402 = vpop.permute.xlu0 %2401
      %2403 = vrot.lane.b32.xlu0 %v939, 120
      %v2404 = vpop.permute.xlu0 %2403
      %2405 = vrot.lane.b32.xlu0 %v940, 120
      %v2406 = vpop.permute.xlu0 %2405
      %2407 = vrot.lane.b32.xlu0 %v941, 120
      %v2408 = vpop.permute.xlu0 %2407
      %2409 = vrot.lane.b32.xlu0 %v942, 120
      %v2410 = vpop.permute.xlu0 %2409
      %2411 = vrot.lane.b32.xlu0 %v943, 120
      %v2412 = vpop.permute.xlu0 %2411
      %2413 = vrot.lane.b32.xlu0 %v944, 120
      %v2414 = vpop.permute.xlu0 %2413
      %2415 = vrot.lane.b32.xlu0 %v945, 120
      %v2416 = vpop.permute.xlu0 %2415
      %2417 = vrot.lane.b32.xlu0 %v946, 120
      %v2418 = vpop.permute.xlu0 %2417
      %2419 = vrot.lane.b32.xlu0 %v947, 120
      %v2420 = vpop.permute.xlu0 %2419
      %2421 = vrot.lane.b32.xlu0 %v948, 120
      %v2422 = vpop.permute.xlu0 %2421
      %2423 = vrot.lane.b32.xlu0 %v949, 120
      %v2424 = vpop.permute.xlu0 %2423
      %2425 = vrot.lane.b32.xlu0 %v950, 120
      %v2426 = vpop.permute.xlu0 %2425
      %2427 = vrot.lane.b32.xlu0 %v951, 120
      %v2428 = vpop.permute.xlu0 %2427
      %2429 = vrot.lane.b32.xlu0 %v952, 120
      %v2430 = vpop.permute.xlu0 %2429
      %2431 = vrot.lane.b32.xlu0 %v953, 120
      %v2432 = vpop.permute.xlu0 %2431
      %2433 = vrot.lane.b32.xlu0 %v954, 120
      %v2434 = vpop.permute.xlu0 %2433
      %2435 = vrot.lane.b32.xlu0 %v955, 120
      %v2436 = vpop.permute.xlu0 %2435
      %2437 = vrot.lane.b32.xlu0 %v956, 120
      %v2438 = vpop.permute.xlu0 %2437
      %2439 = vrot.lane.b32.xlu0 %v957, 120
      %v2440 = vpop.permute.xlu0 %2439
      %2441 = vrot.lane.b32.xlu0 %v958, 120
      %v2442 = vpop.permute.xlu0 %2441
      %2443 = vrot.lane.b32.xlu0 %v959, 120
      %v2444 = vpop.permute.xlu0 %2443
      %2445 = vrot.lane.b32.xlu0 %v960, 120
      %v2446 = vpop.permute.xlu0 %2445
      %2447 = vrot.lane.b32.xlu0 %v961, 120
      %v2448 = vpop.permute.xlu0 %2447
      %2449 = vrot.lane.b32.xlu0 %v962, 120
      %v2450 = vpop.permute.xlu0 %2449
      %2451 = vrot.lane.b32.xlu0 %v963, 120
      %v2452 = vpop.permute.xlu0 %2451
      %v2453 = vsel %vm1034, %v2326, 0
      %v2455 = vsel %vm1034, %v2328, 0
      %v2457 = vsel %vm1034, %v2330, 0
      %v2459 = vsel %vm1034, %v2332, 0
      %v2461 = vsel %vm1034, %v2334, 0
      %v2463 = vsel %vm1034, %v2336, 0
      %v2465 = vsel %vm1034, %v2338, 0
      %v2467 = vsel %vm1034, %v2340, 0
      %v2469 = vsel %vm1034, %v2342, 0
      %v2471 = vsel %vm1034, %v2344, 0
      %v2473 = vsel %vm1034, %v2346, 0
      %v2475 = vsel %vm1034, %v2348, 0
      %v2477 = vsel %vm1034, %v2350, 0
      %v2479 = vsel %vm1034, %v2352, 0
      %v2481 = vsel %vm1034, %v2354, 0
      %v2483 = vsel %vm1034, %v2356, 0
      %v2485 = vsel %vm1034, %v2358, 0
      %v2487 = vsel %vm1034, %v2360, 0
      %v2489 = vsel %vm1034, %v2362, 0
      %v2491 = vsel %vm1034, %v2364, 0
      %v2493 = vsel %vm1034, %v2366, 0
      %v2495 = vsel %vm1034, %v2368, 0
      %v2497 = vsel %vm1034, %v2370, 0
      %v2499 = vsel %vm1034, %v2372, 0
      %v2501 = vsel %vm1034, %v2374, 0
      %v2503 = vsel %vm1034, %v2376, 0
      %v2505 = vsel %vm1034, %v2378, 0
      %v2507 = vsel %vm1034, %v2380, 0
      %v2509 = vsel %vm1034, %v2382, 0
      %v2511 = vsel %vm1034, %v2384, 0
      %v2513 = vsel %vm1034, %v2386, 0
      %v2515 = vsel %vm1034, %v2388, 0
      %v2517 = vsel %vm1034, %v2390, 0
      %v2519 = vsel %vm1034, %v2392, 0
      %v2521 = vsel %vm1034, %v2394, 0
      %v2523 = vsel %vm1034, %v2396, 0
      %v2525 = vsel %vm1034, %v2398, 0
      %v2527 = vsel %vm1034, %v2400, 0
      %v2529 = vsel %vm1034, %v2402, 0
      %v2531 = vsel %vm1034, %v2404, 0
      %v2533 = vsel %vm1034, %v2406, 0
      %v2535 = vsel %vm1034, %v2408, 0
      %v2537 = vsel %vm1034, %v2410, 0
      %v2539 = vsel %vm1034, %v2412, 0
      %v2541 = vsel %vm1034, %v2414, 0
      %v2543 = vsel %vm1034, %v2416, 0
      %v2545 = vsel %vm1034, %v2418, 0
      %v2547 = vsel %vm1034, %v2420, 0
      %v2549 = vsel %vm1034, %v2422, 0
      %v2551 = vsel %vm1034, %v2424, 0
      %v2553 = vsel %vm1034, %v2426, 0
      %v2555 = vsel %vm1034, %v2428, 0
      %v2557 = vsel %vm1034, %v2430, 0
      %v2559 = vsel %vm1034, %v2432, 0
      %v2561 = vsel %vm1034, %v2434, 0
      %v2563 = vsel %vm1034, %v2436, 0
      %v2565 = vsel %vm1034, %v2438, 0
      %v2567 = vsel %vm1034, %v2440, 0
      %v2569 = vsel %vm1034, %v2442, 0
      %v2571 = vsel %vm1034, %v2444, 0
      %v2573 = vsel %vm1034, %v2446, 0
      %v2575 = vsel %vm1034, %v2448, 0
      %v2577 = vsel %vm1034, %v2450, 0
      %v2579 = vsel %vm1034, %v2452, 0
      %2581 = vmatprep.subr.mxu0 0.0
      %2582 = vmatpush1.xpose.msra.mxu0 %v2515
      %2583 = vmatprep.subr.mxu0 0.0
      %2584 = vmatpush1.xpose.msra.mxu0 %v2513
      %2585 = vmatprep.subr.mxu0 0.0
      %2586 = vmatpush1.xpose.msra.mxu0 %v2511
      %2587 = vmatprep.subr.mxu0 0.0
      %2588 = vmatpush1.xpose.msra.mxu0 %v2509
      %2589 = vmatprep.subr.mxu0 0.0
      %2590 = vmatpush1.xpose.msra.mxu0 %v2507
      %2591 = vmatprep.subr.mxu0 0.0
      %2592 = vmatpush1.xpose.msra.mxu0 %v2505
      %2593 = vmatprep.subr.mxu0 0.0
      %2594 = vmatpush1.xpose.msra.mxu0 %v2503
      %2595 = vmatprep.subr.mxu0 0.0
      %2596 = vmatpush1.xpose.msra.mxu0 %v2501
      %2597 = vmatprep.subr.mxu0 0.0
      %2598 = vmatpush1.xpose.msra.mxu0 %v2499
      %2599 = vmatprep.subr.mxu0 0.0
      %2600 = vmatpush1.xpose.msra.mxu0 %v2497
      %2601 = vmatprep.subr.mxu0 0.0
      %2602 = vmatpush1.xpose.msra.mxu0 %v2495
      %2603 = vmatprep.subr.mxu0 0.0
      %2604 = vmatpush1.xpose.msra.mxu0 %v2493
      %2605 = vmatprep.subr.mxu0 0.0
      %2606 = vmatpush1.xpose.msra.mxu0 %v2491
      %2607 = vmatprep.subr.mxu0 0.0
      %2608 = vmatpush1.xpose.msra.mxu0 %v2489
      %2609 = vmatprep.subr.mxu0 0.0
      %2610 = vmatpush1.xpose.msra.mxu0 %v2487
      %2611 = vmatprep.subr.mxu0 0.0
      %2612 = vmatpush1.xpose.msra.mxu0 %v2485
      %2613 = vmatprep.subr.mxu0 0.0
      %2614 = vmatpush2.xpose.msra.mxu0 %v2547
      %2615 = vmatprep.subr.mxu0 0.0
      %2616 = vmatpush2.xpose.msra.mxu0 %v2545
      %2617 = vmatprep.subr.mxu0 0.0
      %2618 = vmatpush2.xpose.msra.mxu0 %v2543
      %2619 = vmatprep.subr.mxu0 0.0
      %2620 = vmatpush2.xpose.msra.mxu0 %v2541
      %2621 = vmatprep.subr.mxu0 0.0
      %2622 = vmatpush2.xpose.msra.mxu0 %v2539
      %2623 = vmatprep.subr.mxu0 0.0
      %2624 = vmatpush2.xpose.msra.mxu0 %v2537
      %2625 = vmatprep.subr.mxu0 0.0
      %2626 = vmatpush2.xpose.msra.mxu0 %v2535
      %2627 = vmatprep.subr.mxu0 0.0
      %2628 = vmatpush2.xpose.msra.mxu0 %v2533
      %2629 = vmatprep.subr.mxu0 0.0
      %2630 = vmatpush2.xpose.msra.mxu0 %v2531
      %2631 = vmatprep.subr.mxu0 0.0
      %2632 = vmatpush2.xpose.msra.mxu0 %v2529
      %2633 = vmatprep.subr.mxu0 0.0
      %2634 = vmatpush2.xpose.msra.mxu0 %v2527
      %2635 = vmatprep.subr.mxu0 0.0
      %2636 = vmatpush2.xpose.msra.mxu0 %v2525
      %2637 = vmatprep.subr.mxu0 0.0
      %2638 = vmatpush2.xpose.msra.mxu0 %v2523
      %2639 = vmatprep.subr.mxu0 0.0
      %2640 = vmatpush2.xpose.msra.mxu0 %v2521
      %2641 = vmatprep.subr.mxu0 0.0
      %2642 = vmatpush2.xpose.msra.mxu0 %v2519
      %2643 = vmatprep.subr.mxu0 0.0
      %2644 = vmatpush2.xpose.msra.mxu0 %v2517
      %2645 = vmatprep.mubr.f32.mxu0 0.0
      %2646 = vmatmul.mubr.f32.gmra.mxu0 %v2453
      %v2647 = vpop.f32.mrf.mxu0
      %v2648 = vadd.f32 %v2277, %v2647
      %v2649 = vpop.f32.mrf.mxu0
      %v2650 = vadd.f32 %v2278, %v2649
      %2651 = vmatprep.mubr.f32.mxu0 0.0
      %2652 = vmatmul.mubr.f32.gmra.mxu0 %v2455
      %v2653 = vpop.f32.mrf.mxu0
      %v2654 = vadd.f32 %v2280, %v2653
      %v2655 = vpop.f32.mrf.mxu0
      %v2656 = vadd.f32 %v2281, %v2655
      %2657 = vmatprep.mubr.f32.mxu0 0.0
      %2658 = vmatmul.mubr.f32.gmra.mxu0 %v2457
      %v2659 = vpop.f32.mrf.mxu0
      %v2660 = vadd.f32 %v2283, %v2659
      %v2661 = vpop.f32.mrf.mxu0
      %v2662 = vadd.f32 %v2284, %v2661
      %2663 = vmatprep.mubr.f32.mxu0 0.0
      %2664 = vmatmul.mubr.f32.gmra.mxu0 %v2459
      %v2665 = vpop.f32.mrf.mxu0
      %v2666 = vadd.f32 %v2286, %v2665
      %v2667 = vpop.f32.mrf.mxu0
      %v2668 = vadd.f32 %v2287, %v2667
      %2669 = vmatprep.mubr.f32.mxu0 0.0
      %2670 = vmatmul.mubr.f32.gmra.mxu0 %v2461
      %v2671 = vpop.f32.mrf.mxu0
      %v2672 = vadd.f32 %v2289, %v2671
      %v2673 = vpop.f32.mrf.mxu0
      %v2674 = vadd.f32 %v2290, %v2673
      %2675 = vmatprep.mubr.f32.mxu0 0.0
      %2676 = vmatmul.mubr.f32.gmra.mxu0 %v2463
      %v2677 = vpop.f32.mrf.mxu0
      %v2678 = vadd.f32 %v2292, %v2677
      %v2679 = vpop.f32.mrf.mxu0
      %v2680 = vadd.f32 %v2293, %v2679
      %2681 = vmatprep.mubr.f32.mxu0 0.0
      %2682 = vmatmul.mubr.f32.gmra.mxu0 %v2465
      %v2683 = vpop.f32.mrf.mxu0
      %v2684 = vadd.f32 %v2295, %v2683
      %v2685 = vpop.f32.mrf.mxu0
      %v2686 = vadd.f32 %v2296, %v2685
      %2687 = vmatprep.mubr.f32.mxu0 0.0
      %2688 = vmatmul.mubr.f32.gmra.mxu0 %v2467
      %v2689 = vpop.f32.mrf.mxu0
      %v2690 = vadd.f32 %v2298, %v2689
      %v2691 = vpop.f32.mrf.mxu0
      %v2692 = vadd.f32 %v2299, %v2691
      %2693 = vmatprep.mubr.f32.mxu0 0.0
      %2694 = vmatmul.mubr.f32.gmra.mxu0 %v2469
      %v2695 = vpop.f32.mrf.mxu0
      %v2696 = vadd.f32 %v2301, %v2695
      %v2697 = vpop.f32.mrf.mxu0
      %v2698 = vadd.f32 %v2302, %v2697
      %2699 = vmatprep.mubr.f32.mxu0 0.0
      %2700 = vmatmul.mubr.f32.gmra.mxu0 %v2471
      %v2701 = vpop.f32.mrf.mxu0
      %v2702 = vadd.f32 %v2304, %v2701
      %v2703 = vpop.f32.mrf.mxu0
      %v2704 = vadd.f32 %v2305, %v2703
      %2705 = vmatprep.mubr.f32.mxu0 0.0
      %2706 = vmatmul.mubr.f32.gmra.mxu0 %v2473
      %v2707 = vpop.f32.mrf.mxu0
      %v2708 = vadd.f32 %v2307, %v2707
      %v2709 = vpop.f32.mrf.mxu0
      %v2710 = vadd.f32 %v2308, %v2709
      %2711 = vmatprep.mubr.f32.mxu0 0.0
      %2712 = vmatmul.mubr.f32.gmra.mxu0 %v2475
      %v2713 = vpop.f32.mrf.mxu0
      %v2714 = vadd.f32 %v2310, %v2713
      %v2715 = vpop.f32.mrf.mxu0
      %v2716 = vadd.f32 %v2311, %v2715
      %2717 = vmatprep.mubr.f32.mxu0 0.0
      %2718 = vmatmul.mubr.f32.gmra.mxu0 %v2477
      %v2719 = vpop.f32.mrf.mxu0
      %v2720 = vadd.f32 %v2313, %v2719
      %v2721 = vpop.f32.mrf.mxu0
      %v2722 = vadd.f32 %v2314, %v2721
      %2723 = vmatprep.mubr.f32.mxu0 0.0
      %2724 = vmatmul.mubr.f32.gmra.mxu0 %v2479
      %v2725 = vpop.f32.mrf.mxu0
      %v2726 = vadd.f32 %v2316, %v2725
      %v2727 = vpop.f32.mrf.mxu0
      %v2728 = vadd.f32 %v2317, %v2727
      %2729 = vmatprep.mubr.f32.mxu0 0.0
      %2730 = vmatmul.mubr.f32.gmra.mxu0 %v2481
      %v2731 = vpop.f32.mrf.mxu0
      %v2732 = vadd.f32 %v2319, %v2731
      %v2733 = vpop.f32.mrf.mxu0
      %v2734 = vadd.f32 %v2320, %v2733
      %2735 = vmatprep.mubr.f32.mxu0 0.0
      %2736 = vmatmul.mubr.f32.gmra.mxu0 %v2483
      %v2737 = vpop.f32.mrf.mxu0
      %v2738 = vadd.f32 %v2322, %v2737
      %v2739 = vpop.f32.mrf.mxu0
      %v2740 = vadd.f32 %v2323, %v2739
      %2741 = vdwg.mxu0
      %2742 = vmatprep.subr.mxu0 0.0
      %2743 = vmatpush1.xpose.msra.mxu0 %v2579
      %2744 = vmatprep.subr.mxu0 0.0
      %2745 = vmatpush1.xpose.msra.mxu0 %v2577
      %2746 = vmatprep.subr.mxu0 0.0
      %2747 = vmatpush1.xpose.msra.mxu0 %v2575
      %2748 = vmatprep.subr.mxu0 0.0
      %2749 = vmatpush1.xpose.msra.mxu0 %v2573
      %2750 = vmatprep.subr.mxu0 0.0
      %2751 = vmatpush1.xpose.msra.mxu0 %v2571
      %2752 = vmatprep.subr.mxu0 0.0
      %2753 = vmatpush1.xpose.msra.mxu0 %v2569
      %2754 = vmatprep.subr.mxu0 0.0
      %2755 = vmatpush1.xpose.msra.mxu0 %v2567
      %2756 = vmatprep.subr.mxu0 0.0
      %2757 = vmatpush1.xpose.msra.mxu0 %v2565
      %2758 = vmatprep.subr.mxu0 0.0
      %2759 = vmatpush1.xpose.msra.mxu0 %v2563
      %2760 = vmatprep.subr.mxu0 0.0
      %2761 = vmatpush1.xpose.msra.mxu0 %v2561
      %2762 = vmatprep.subr.mxu0 0.0
      %2763 = vmatpush1.xpose.msra.mxu0 %v2559
      %2764 = vmatprep.subr.mxu0 0.0
      %2765 = vmatpush1.xpose.msra.mxu0 %v2557
      %2766 = vmatprep.subr.mxu0 0.0
      %2767 = vmatpush1.xpose.msra.mxu0 %v2555
      %2768 = vmatprep.subr.mxu0 0.0
      %2769 = vmatpush1.xpose.msra.mxu0 %v2553
      %2770 = vmatprep.subr.mxu0 0.0
      %2771 = vmatpush1.xpose.msra.mxu0 %v2551
      %2772 = vmatprep.subr.mxu0 0.0
      %2773 = vmatpush1.xpose.msra.mxu0 %v2549
      %2774 = vmatprep.subr.mxu0 0.0
      %2775 = vmatpush2.xpose.msra.mxu0 0.0
      %2776 = vmatprep.subr.mxu0 0.0
      %2777 = vmatpush2.xpose.msra.mxu0 0.0
      %2778 = vmatprep.subr.mxu0 0.0
      %2779 = vmatpush2.xpose.msra.mxu0 0.0
      %2780 = vmatprep.subr.mxu0 0.0
      %2781 = vmatpush2.xpose.msra.mxu0 0.0
      %2782 = vmatprep.subr.mxu0 0.0
      %2783 = vmatpush2.xpose.msra.mxu0 0.0
      %2784 = vmatprep.subr.mxu0 0.0
      %2785 = vmatpush2.xpose.msra.mxu0 0.0
      %2786 = vmatprep.subr.mxu0 0.0
      %2787 = vmatpush2.xpose.msra.mxu0 0.0
      %2788 = vmatprep.subr.mxu0 0.0
      %2789 = vmatpush2.xpose.msra.mxu0 0.0
      %2790 = vmatprep.subr.mxu0 0.0
      %2791 = vmatpush2.xpose.msra.mxu0 0.0
      %2792 = vmatprep.subr.mxu0 0.0
      %2793 = vmatpush2.xpose.msra.mxu0 0.0
      %2794 = vmatprep.subr.mxu0 0.0
      %2795 = vmatpush2.xpose.msra.mxu0 0.0
      %2796 = vmatprep.subr.mxu0 0.0
      %2797 = vmatpush2.xpose.msra.mxu0 0.0
      %2798 = vmatprep.subr.mxu0 0.0
      %2799 = vmatpush2.xpose.msra.mxu0 0.0
      %2800 = vmatprep.subr.mxu0 0.0
      %2801 = vmatpush2.xpose.msra.mxu0 0.0
      %2802 = vmatprep.subr.mxu0 0.0
      %2803 = vmatpush2.xpose.msra.mxu0 0.0
      %2804 = vmatprep.subr.mxu0 0.0
      %2805 = vmatpush2.xpose.msra.mxu0 0.0
      %2806 = vmatprep.mubr.f32.mxu0 0.0
      %2807 = vmatmul.mubr.f32.gmra.mxu0 %v2453
      %v2808 = vpop.f32.mrf.mxu0
      %v2809 = vadd.f32 %v2279, %v2808
      %v2810 = vpop.f32.mrf.mxu0
      %2811 = vmatprep.mubr.f32.mxu0 0.0
      %2812 = vmatmul.mubr.f32.gmra.mxu0 %v2455
      %v2813 = vpop.f32.mrf.mxu0
      %v2814 = vadd.f32 %v2282, %v2813
      %v2815 = vpop.f32.mrf.mxu0
      %2816 = vmatprep.mubr.f32.mxu0 0.0
      %2817 = vmatmul.mubr.f32.gmra.mxu0 %v2457
      %v2818 = vpop.f32.mrf.mxu0
      %v2819 = vadd.f32 %v2285, %v2818
      %v2820 = vpop.f32.mrf.mxu0
      %2821 = vmatprep.mubr.f32.mxu0 0.0
      %2822 = vmatmul.mubr.f32.gmra.mxu0 %v2459
      %v2823 = vpop.f32.mrf.mxu0
      %v2824 = vadd.f32 %v2288, %v2823
      %v2825 = vpop.f32.mrf.mxu0
      %2826 = vmatprep.mubr.f32.mxu0 0.0
      %2827 = vmatmul.mubr.f32.gmra.mxu0 %v2461
      %v2828 = vpop.f32.mrf.mxu0
      %v2829 = vadd.f32 %v2291, %v2828
      %v2830 = vpop.f32.mrf.mxu0
      %2831 = vmatprep.mubr.f32.mxu0 0.0
      %2832 = vmatmul.mubr.f32.gmra.mxu0 %v2463
      %v2833 = vpop.f32.mrf.mxu0
      %v2834 = vadd.f32 %v2294, %v2833
      %v2835 = vpop.f32.mrf.mxu0
      %2836 = vmatprep.mubr.f32.mxu0 0.0
      %2837 = vmatmul.mubr.f32.gmra.mxu0 %v2465
      %v2838 = vpop.f32.mrf.mxu0
      %v2839 = vadd.f32 %v2297, %v2838
      %v2840 = vpop.f32.mrf.mxu0
      %2841 = vmatprep.mubr.f32.mxu0 0.0
      %2842 = vmatmul.mubr.f32.gmra.mxu0 %v2467
      %v2843 = vpop.f32.mrf.mxu0
      %v2844 = vadd.f32 %v2300, %v2843
      %v2845 = vpop.f32.mrf.mxu0
      %2846 = vmatprep.mubr.f32.mxu0 0.0
      %2847 = vmatmul.mubr.f32.gmra.mxu0 %v2469
      %v2848 = vpop.f32.mrf.mxu0
      %v2849 = vadd.f32 %v2303, %v2848
      %v2850 = vpop.f32.mrf.mxu0
      %2851 = vmatprep.mubr.f32.mxu0 0.0
      %2852 = vmatmul.mubr.f32.gmra.mxu0 %v2471
      %v2853 = vpop.f32.mrf.mxu0
      %v2854 = vadd.f32 %v2306, %v2853
      %v2855 = vpop.f32.mrf.mxu0
      %2856 = vmatprep.mubr.f32.mxu0 0.0
      %2857 = vmatmul.mubr.f32.gmra.mxu0 %v2473
      %v2858 = vpop.f32.mrf.mxu0
      %v2859 = vadd.f32 %v2309, %v2858
      %v2860 = vpop.f32.mrf.mxu0
      %2861 = vmatprep.mubr.f32.mxu0 0.0
      %2862 = vmatmul.mubr.f32.gmra.mxu0 %v2475
      %v2863 = vpop.f32.mrf.mxu0
      %v2864 = vadd.f32 %v2312, %v2863
      %v2865 = vpop.f32.mrf.mxu0
      %2866 = vmatprep.mubr.f32.mxu0 0.0
      %2867 = vmatmul.mubr.f32.gmra.mxu0 %v2477
      %v2868 = vpop.f32.mrf.mxu0
      %v2869 = vadd.f32 %v2315, %v2868
      %v2870 = vpop.f32.mrf.mxu0
      %2871 = vmatprep.mubr.f32.mxu0 0.0
      %2872 = vmatmul.mubr.f32.gmra.mxu0 %v2479
      %v2873 = vpop.f32.mrf.mxu0
      %v2874 = vadd.f32 %v2318, %v2873
      %v2875 = vpop.f32.mrf.mxu0
      %2876 = vmatprep.mubr.f32.mxu0 0.0
      %2877 = vmatmul.mubr.f32.gmra.mxu0 %v2481
      %v2878 = vpop.f32.mrf.mxu0
      %v2879 = vadd.f32 %v2321, %v2878
      %v2880 = vpop.f32.mrf.mxu0
      %2881 = vmatprep.mubr.f32.mxu0 0.0
      %2882 = vmatmul.mubr.f32.gmra.mxu0 %v2483
      %v2883 = vpop.f32.mrf.mxu0
      %v2884 = vadd.f32 %v2324, %v2883
      %v2885 = vpop.f32.mrf.mxu0
      %2886 = vdwg.mxu0
      %v2887 = vmax.f32 %v2648, %v2650
      %v2888 = vmax.f32 %v2887, %v2809
      %2889 = vmax.xlane.f32.xlu0 %v2888
      %v2890 = vpop.xlane.xlu0 %2889
      %v2891 = vmax.f32 %v2654, %v2656
      %v2892 = vmax.f32 %v2891, %v2814
      %2893 = vmax.xlane.f32.xlu0 %v2892
      %v2894 = vpop.xlane.xlu0 %2893
      %v2895 = vmax.f32 %v2660, %v2662
      %v2896 = vmax.f32 %v2895, %v2819
      %2897 = vmax.xlane.f32.xlu0 %v2896
      %v2898 = vpop.xlane.xlu0 %2897
      %v2899 = vmax.f32 %v2666, %v2668
      %v2900 = vmax.f32 %v2899, %v2824
      %2901 = vmax.xlane.f32.xlu0 %v2900
      %v2902 = vpop.xlane.xlu0 %2901
      %v2903 = vmax.f32 %v2672, %v2674
      %v2904 = vmax.f32 %v2903, %v2829
      %2905 = vmax.xlane.f32.xlu0 %v2904
      %v2906 = vpop.xlane.xlu0 %2905
      %v2907 = vmax.f32 %v2678, %v2680
      %v2908 = vmax.f32 %v2907, %v2834
      %2909 = vmax.xlane.f32.xlu0 %v2908
      %v2910 = vpop.xlane.xlu0 %2909
      %v2911 = vmax.f32 %v2684, %v2686
      %v2912 = vmax.f32 %v2911, %v2839
      %2913 = vmax.xlane.f32.xlu0 %v2912
      %v2914 = vpop.xlane.xlu0 %2913
      %v2915 = vmax.f32 %v2690, %v2692
      %v2916 = vmax.f32 %v2915, %v2844
      %2917 = vmax.xlane.f32.xlu0 %v2916
      %v2918 = vpop.xlane.xlu0 %2917
      %v2919 = vmax.f32 %v2696, %v2698
      %v2920 = vmax.f32 %v2919, %v2849
      %2921 = vmax.xlane.f32.xlu0 %v2920
      %v2922 = vpop.xlane.xlu0 %2921
      %v2923 = vmax.f32 %v2702, %v2704
      %v2924 = vmax.f32 %v2923, %v2854
      %2925 = vmax.xlane.f32.xlu0 %v2924
      %v2926 = vpop.xlane.xlu0 %2925
      %v2927 = vmax.f32 %v2708, %v2710
      %v2928 = vmax.f32 %v2927, %v2859
      %2929 = vmax.xlane.f32.xlu0 %v2928
      %v2930 = vpop.xlane.xlu0 %2929
      %v2931 = vmax.f32 %v2714, %v2716
      %v2932 = vmax.f32 %v2931, %v2864
      %2933 = vmax.xlane.f32.xlu0 %v2932
      %v2934 = vpop.xlane.xlu0 %2933
      %v2935 = vmax.f32 %v2720, %v2722
      %v2936 = vmax.f32 %v2935, %v2869
      %2937 = vmax.xlane.f32.xlu0 %v2936
      %v2938 = vpop.xlane.xlu0 %2937
      %v2939 = vmax.f32 %v2726, %v2728
      %v2940 = vmax.f32 %v2939, %v2874
      %2941 = vmax.xlane.f32.xlu0 %v2940
      %v2942 = vpop.xlane.xlu0 %2941
      %v2943 = vmax.f32 %v2732, %v2734
      %v2944 = vmax.f32 %v2943, %v2879
      %2945 = vmax.xlane.f32.xlu0 %v2944
      %v2946 = vpop.xlane.xlu0 %2945
      %v2947 = vmax.f32 %v2738, %v2740
      %v2948 = vmax.f32 %v2947, %v2884
      %2949 = vmax.xlane.f32.xlu0 %v2948
      %v2950 = vpop.xlane.xlu0 %2949
      %v2951 = vsub.f32 %v2648, %v2890
      %v2952 = vsub.f32 %v2650, %v2890
      %v2953 = vsub.f32 %v2809, %v2890
      %v2954 = vsub.f32 %v2654, %v2894
      %v2955 = vsub.f32 %v2656, %v2894
      %v2956 = vsub.f32 %v2814, %v2894
      %v2957 = vsub.f32 %v2660, %v2898
      %v2958 = vsub.f32 %v2662, %v2898
      %v2959 = vsub.f32 %v2819, %v2898
      %v2960 = vsub.f32 %v2666, %v2902
      %v2961 = vsub.f32 %v2668, %v2902
      %v2962 = vsub.f32 %v2824, %v2902
      %v2963 = vsub.f32 %v2672, %v2906
      %v2964 = vsub.f32 %v2674, %v2906
      %v2965 = vsub.f32 %v2829, %v2906
      %v2966 = vsub.f32 %v2678, %v2910
      %v2967 = vsub.f32 %v2680, %v2910
      %v2968 = vsub.f32 %v2834, %v2910
      %v2969 = vsub.f32 %v2684, %v2914
      %v2970 = vsub.f32 %v2686, %v2914
      %v2971 = vsub.f32 %v2839, %v2914
      %v2972 = vsub.f32 %v2690, %v2918
      %v2973 = vsub.f32 %v2692, %v2918
      %v2974 = vsub.f32 %v2844, %v2918
      %v2975 = vsub.f32 %v2696, %v2922
      %v2976 = vsub.f32 %v2698, %v2922
      %v2977 = vsub.f32 %v2849, %v2922
      %v2978 = vsub.f32 %v2702, %v2926
      %v2979 = vsub.f32 %v2704, %v2926
      %v2980 = vsub.f32 %v2854, %v2926
      %v2981 = vsub.f32 %v2708, %v2930
      %v2982 = vsub.f32 %v2710, %v2930
      %v2983 = vsub.f32 %v2859, %v2930
      %v2984 = vsub.f32 %v2714, %v2934
      %v2985 = vsub.f32 %v2716, %v2934
      %v2986 = vsub.f32 %v2864, %v2934
      %v2987 = vsub.f32 %v2720, %v2938
      %v2988 = vsub.f32 %v2722, %v2938
      %v2989 = vsub.f32 %v2869, %v2938
      %v2990 = vsub.f32 %v2726, %v2942
      %v2991 = vsub.f32 %v2728, %v2942
      %v2992 = vsub.f32 %v2874, %v2942
      %v2993 = vsub.f32 %v2732, %v2946
      %v2994 = vsub.f32 %v2734, %v2946
      %v2995 = vsub.f32 %v2879, %v2946
      %v2996 = vsub.f32 %v2738, %v2950
      %v2997 = vsub.f32 %v2740, %v2950
      %v2998 = vsub.f32 %v2884, %v2950
      %v2999 = vmul.f32 %v2951, 1.442695
      %v3000 = vpow.pop %v2999
      %v3001 = vmul.f32 %v2952, 1.442695
      %v3002 = vpow.pop %v3001
      %v3003 = vmul.f32 %v2953, 1.442695
      %v3004 = vpow.pop %v3003
      %v3005 = vmul.f32 %v2954, 1.442695
      %v3006 = vpow.pop %v3005
      %v3007 = vmul.f32 %v2955, 1.442695
      %v3008 = vpow.pop %v3007
      %v3009 = vmul.f32 %v2956, 1.442695
      %v3010 = vpow.pop %v3009
      %v3011 = vmul.f32 %v2957, 1.442695
      %v3012 = vpow.pop %v3011
      %v3013 = vmul.f32 %v2958, 1.442695
      %v3014 = vpow.pop %v3013
      %v3015 = vmul.f32 %v2959, 1.442695
      %v3016 = vpow.pop %v3015
      %v3017 = vmul.f32 %v2960, 1.442695
      %v3018 = vpow.pop %v3017
      %v3019 = vmul.f32 %v2961, 1.442695
      %v3020 = vpow.pop %v3019
      %v3021 = vmul.f32 %v2962, 1.442695
      %v3022 = vpow.pop %v3021
      %v3023 = vmul.f32 %v2963, 1.442695
      %v3024 = vpow.pop %v3023
      %v3025 = vmul.f32 %v2964, 1.442695
      %v3026 = vpow.pop %v3025
      %v3027 = vmul.f32 %v2965, 1.442695
      %v3028 = vpow.pop %v3027
      %v3029 = vmul.f32 %v2966, 1.442695
      %v3030 = vpow.pop %v3029
      %v3031 = vmul.f32 %v2967, 1.442695
      %v3032 = vpow.pop %v3031
      %v3033 = vmul.f32 %v2968, 1.442695
      %v3034 = vpow.pop %v3033
      %v3035 = vmul.f32 %v2969, 1.442695
      %v3036 = vpow.pop %v3035
      %v3037 = vmul.f32 %v2970, 1.442695
      %v3038 = vpow.pop %v3037
      %v3039 = vmul.f32 %v2971, 1.442695
      %v3040 = vpow.pop %v3039
      %v3041 = vmul.f32 %v2972, 1.442695
      %v3042 = vpow.pop %v3041
      %v3043 = vmul.f32 %v2973, 1.442695
      %v3044 = vpow.pop %v3043
      %v3045 = vmul.f32 %v2974, 1.442695
      %v3046 = vpow.pop %v3045
      %v3047 = vmul.f32 %v2975, 1.442695
      %v3048 = vpow.pop %v3047
      %v3049 = vmul.f32 %v2976, 1.442695
      %v3050 = vpow.pop %v3049
      %v3051 = vmul.f32 %v2977, 1.442695
      %v3052 = vpow.pop %v3051
      %v3053 = vmul.f32 %v2978, 1.442695
      %v3054 = vpow.pop %v3053
      %v3055 = vmul.f32 %v2979, 1.442695
      %v3056 = vpow.pop %v3055
      %v3057 = vmul.f32 %v2980, 1.442695
      %v3058 = vpow.pop %v3057
      %v3059 = vmul.f32 %v2981, 1.442695
      %v3060 = vpow.pop %v3059
      %v3061 = vmul.f32 %v2982, 1.442695
      %v3062 = vpow.pop %v3061
      %v3063 = vmul.f32 %v2983, 1.442695
      %v3064 = vpow.pop %v3063
      %v3065 = vmul.f32 %v2984, 1.442695
      %v3066 = vpow.pop %v3065
      %v3067 = vmul.f32 %v2985, 1.442695
      %v3068 = vpow.pop %v3067
      %v3069 = vmul.f32 %v2986, 1.442695
      %v3070 = vpow.pop %v3069
      %v3071 = vmul.f32 %v2987, 1.442695
      %v3072 = vpow.pop %v3071
      %v3073 = vmul.f32 %v2988, 1.442695
      %v3074 = vpow.pop %v3073
      %v3075 = vmul.f32 %v2989, 1.442695
      %v3076 = vpow.pop %v3075
      %v3077 = vmul.f32 %v2990, 1.442695
      %v3078 = vpow.pop %v3077
      %v3079 = vmul.f32 %v2991, 1.442695
      %v3080 = vpow.pop %v3079
      %v3081 = vmul.f32 %v2992, 1.442695
      %v3082 = vpow.pop %v3081
      %v3083 = vmul.f32 %v2993, 1.442695
      %v3084 = vpow.pop %v3083
      %v3085 = vmul.f32 %v2994, 1.442695
      %v3086 = vpow.pop %v3085
      %v3087 = vmul.f32 %v2995, 1.442695
      %v3088 = vpow.pop %v3087
      %v3089 = vmul.f32 %v2996, 1.442695
      %v3090 = vpow.pop %v3089
      %v3091 = vmul.f32 %v2997, 1.442695
      %v3092 = vpow.pop %v3091
      %v3093 = vmul.f32 %v2998, 1.442695
      %v3094 = vpow.pop %v3093
      %v3095 = vadd.f32 %v3000, %v3002
      %v3096 = vadd.f32 %v3095, %v3004
      %3097 = vadd.xlane.f32.xlu0 %v3096
      %v3098 = vpop.xlane.xlu0 %3097
      %v3099 = vadd.f32 %v3006, %v3008
      %v3100 = vadd.f32 %v3099, %v3010
      %3101 = vadd.xlane.f32.xlu0 %v3100
      %v3102 = vpop.xlane.xlu0 %3101
      %v3103 = vadd.f32 %v3012, %v3014
      %v3104 = vadd.f32 %v3103, %v3016
      %3105 = vadd.xlane.f32.xlu0 %v3104
      %v3106 = vpop.xlane.xlu0 %3105
      %v3107 = vadd.f32 %v3018, %v3020
      %v3108 = vadd.f32 %v3107, %v3022
      %3109 = vadd.xlane.f32.xlu0 %v3108
      %v3110 = vpop.xlane.xlu0 %3109
      %v3111 = vadd.f32 %v3024, %v3026
      %v3112 = vadd.f32 %v3111, %v3028
      %3113 = vadd.xlane.f32.xlu0 %v3112
      %v3114 = vpop.xlane.xlu0 %3113
      %v3115 = vadd.f32 %v3030, %v3032
      %v3116 = vadd.f32 %v3115, %v3034
      %3117 = vadd.xlane.f32.xlu0 %v3116
      %v3118 = vpop.xlane.xlu0 %3117
      %v3119 = vadd.f32 %v3036, %v3038
      %v3120 = vadd.f32 %v3119, %v3040
      %3121 = vadd.xlane.f32.xlu0 %v3120
      %v3122 = vpop.xlane.xlu0 %3121
      %v3123 = vadd.f32 %v3042, %v3044
      %v3124 = vadd.f32 %v3123, %v3046
      %3125 = vadd.xlane.f32.xlu0 %v3124
      %v3126 = vpop.xlane.xlu0 %3125
      %v3127 = vadd.f32 %v3048, %v3050
      %v3128 = vadd.f32 %v3127, %v3052
      %3129 = vadd.xlane.f32.xlu0 %v3128
      %v3130 = vpop.xlane.xlu0 %3129
      %v3131 = vadd.f32 %v3054, %v3056
      %v3132 = vadd.f32 %v3131, %v3058
      %3133 = vadd.xlane.f32.xlu0 %v3132
      %v3134 = vpop.xlane.xlu0 %3133
      %v3135 = vadd.f32 %v3060, %v3062
      %v3136 = vadd.f32 %v3135, %v3064
      %3137 = vadd.xlane.f32.xlu0 %v3136
      %v3138 = vpop.xlane.xlu0 %3137
      %v3139 = vadd.f32 %v3066, %v3068
      %v3140 = vadd.f32 %v3139, %v3070
      %3141 = vadd.xlane.f32.xlu0 %v3140
      %v3142 = vpop.xlane.xlu0 %3141
      %v3143 = vadd.f32 %v3072, %v3074
      %v3144 = vadd.f32 %v3143, %v3076
      %3145 = vadd.xlane.f32.xlu0 %v3144
      %v3146 = vpop.xlane.xlu0 %3145
      %v3147 = vadd.f32 %v3078, %v3080
      %v3148 = vadd.f32 %v3147, %v3082
      %3149 = vadd.xlane.f32.xlu0 %v3148
      %v3150 = vpop.xlane.xlu0 %3149
      %v3151 = vadd.f32 %v3084, %v3086
      %v3152 = vadd.f32 %v3151, %v3088
      %3153 = vadd.xlane.f32.xlu0 %v3152
      %v3154 = vpop.xlane.xlu0 %3153
      %v3155 = vadd.f32 %v3090, %v3092
      %v3156 = vadd.f32 %v3155, %v3094
      %3157 = vadd.xlane.f32.xlu0 %v3156
      %v3158 = vpop.xlane.xlu0 %3157
      %3159 = vrot.lane.b32.xlu0 %v916, 88
      %v3160 = vpop.permute.xlu0 %3159
      %3161 = vrot.lane.b32.xlu0 %v917, 88
      %v3162 = vpop.permute.xlu0 %3161
      %3163 = vrot.lane.b32.xlu0 %v918, 88
      %v3164 = vpop.permute.xlu0 %3163
      %3165 = vrot.lane.b32.xlu0 %v919, 88
      %v3166 = vpop.permute.xlu0 %3165
      %3167 = vrot.lane.b32.xlu0 %v920, 88
      %v3168 = vpop.permute.xlu0 %3167
      %3169 = vrot.lane.b32.xlu0 %v921, 88
      %v3170 = vpop.permute.xlu0 %3169
      %3171 = vrot.lane.b32.xlu0 %v922, 88
      %v3172 = vpop.permute.xlu0 %3171
      %3173 = vrot.lane.b32.xlu0 %v923, 88
      %v3174 = vpop.permute.xlu0 %3173
      %3175 = vrot.lane.b32.xlu0 %v924, 88
      %v3176 = vpop.permute.xlu0 %3175
      %3177 = vrot.lane.b32.xlu0 %v925, 88
      %v3178 = vpop.permute.xlu0 %3177
      %3179 = vrot.lane.b32.xlu0 %v926, 88
      %v3180 = vpop.permute.xlu0 %3179
      %3181 = vrot.lane.b32.xlu0 %v927, 88
      %v3182 = vpop.permute.xlu0 %3181
      %3183 = vrot.lane.b32.xlu0 %v928, 88
      %v3184 = vpop.permute.xlu0 %3183
      %3185 = vrot.lane.b32.xlu0 %v929, 88
      %v3186 = vpop.permute.xlu0 %3185
      %3187 = vrot.lane.b32.xlu0 %v930, 88
      %v3188 = vpop.permute.xlu0 %3187
      %3189 = vrot.lane.b32.xlu0 %v931, 88
      %v3190 = vpop.permute.xlu0 %3189
      %3191 = vrot.lane.b32.xlu0 %v932, 88
      %v3192 = vpop.permute.xlu0 %3191
      %3193 = vrot.lane.b32.xlu0 %v933, 88
      %v3194 = vpop.permute.xlu0 %3193
      %3195 = vrot.lane.b32.xlu0 %v934, 88
      %v3196 = vpop.permute.xlu0 %3195
      %3197 = vrot.lane.b32.xlu0 %v935, 88
      %v3198 = vpop.permute.xlu0 %3197
      %3199 = vrot.lane.b32.xlu0 %v936, 88
      %v3200 = vpop.permute.xlu0 %3199
      %3201 = vrot.lane.b32.xlu0 %v937, 88
      %v3202 = vpop.permute.xlu0 %3201
      %3203 = vrot.lane.b32.xlu0 %v938, 88
      %v3204 = vpop.permute.xlu0 %3203
      %3205 = vrot.lane.b32.xlu0 %v939, 88
      %v3206 = vpop.permute.xlu0 %3205
      %3207 = vrot.lane.b32.xlu0 %v940, 88
      %v3208 = vpop.permute.xlu0 %3207
      %3209 = vrot.lane.b32.xlu0 %v941, 88
      %v3210 = vpop.permute.xlu0 %3209
      %3211 = vrot.lane.b32.xlu0 %v942, 88
      %v3212 = vpop.permute.xlu0 %3211
      %3213 = vrot.lane.b32.xlu0 %v943, 88
      %v3214 = vpop.permute.xlu0 %3213
      %3215 = vrot.lane.b32.xlu0 %v944, 88
      %v3216 = vpop.permute.xlu0 %3215
      %3217 = vrot.lane.b32.xlu0 %v945, 88
      %v3218 = vpop.permute.xlu0 %3217
      %3219 = vrot.lane.b32.xlu0 %v946, 88
      %v3220 = vpop.permute.xlu0 %3219
      %3221 = vrot.lane.b32.xlu0 %v947, 88
      %v3222 = vpop.permute.xlu0 %3221
      %3223 = vrot.lane.b32.xlu0 %v948, 88
      %v3224 = vpop.permute.xlu0 %3223
      %3225 = vrot.lane.b32.xlu0 %v949, 88
      %v3226 = vpop.permute.xlu0 %3225
      %3227 = vrot.lane.b32.xlu0 %v950, 88
      %v3228 = vpop.permute.xlu0 %3227
      %3229 = vrot.lane.b32.xlu0 %v951, 88
      %v3230 = vpop.permute.xlu0 %3229
      %3231 = vrot.lane.b32.xlu0 %v952, 88
      %v3232 = vpop.permute.xlu0 %3231
      %3233 = vrot.lane.b32.xlu0 %v953, 88
      %v3234 = vpop.permute.xlu0 %3233
      %3235 = vrot.lane.b32.xlu0 %v954, 88
      %v3236 = vpop.permute.xlu0 %3235
      %3237 = vrot.lane.b32.xlu0 %v955, 88
      %v3238 = vpop.permute.xlu0 %3237
      %3239 = vrot.lane.b32.xlu0 %v956, 88
      %v3240 = vpop.permute.xlu0 %3239
      %3241 = vrot.lane.b32.xlu0 %v957, 88
      %v3242 = vpop.permute.xlu0 %3241
      %3243 = vrot.lane.b32.xlu0 %v958, 88
      %v3244 = vpop.permute.xlu0 %3243
      %3245 = vrot.lane.b32.xlu0 %v959, 88
      %v3246 = vpop.permute.xlu0 %3245
      %3247 = vrot.lane.b32.xlu0 %v960, 88
      %v3248 = vpop.permute.xlu0 %3247
      %3249 = vrot.lane.b32.xlu0 %v961, 88
      %v3250 = vpop.permute.xlu0 %3249
      %3251 = vrot.lane.b32.xlu0 %v962, 88
      %v3252 = vpop.permute.xlu0 %3251
      %3253 = vrot.lane.b32.xlu0 %v963, 88
      %v3254 = vpop.permute.xlu0 %3253
      %3303 = vmatprep.subr.mxu0 0.0
      %3304 = vmatpush1.msra.mxu0 %v3190
      %3305 = vmatprep.subr.mxu0 0.0
      %3306 = vmatpush1.msra.mxu0 %v3188
      %3307 = vmatprep.subr.mxu0 0.0
      %3308 = vmatpush1.msra.mxu0 %v3186
      %3309 = vmatprep.subr.mxu0 0.0
      %3310 = vmatpush1.msra.mxu0 %v3184
      %3311 = vmatprep.subr.mxu0 0.0
      %3312 = vmatpush1.msra.mxu0 %v3182
      %3313 = vmatprep.subr.mxu0 0.0
      %3314 = vmatpush1.msra.mxu0 %v3180
      %3315 = vmatprep.subr.mxu0 0.0
      %3316 = vmatpush1.msra.mxu0 %v3178
      %3317 = vmatprep.subr.mxu0 0.0
      %3318 = vmatpush1.msra.mxu0 %v3176
      %3319 = vmatprep.subr.mxu0 0.0
      %3320 = vmatpush1.msra.mxu0 %v3174
      %3321 = vmatprep.subr.mxu0 0.0
      %3322 = vmatpush1.msra.mxu0 %v3172
      %3323 = vmatprep.subr.mxu0 0.0
      %3324 = vmatpush1.msra.mxu0 %v3170
      %3325 = vmatprep.subr.mxu0 0.0
      %3326 = vmatpush1.msra.mxu0 %v3168
      %3327 = vmatprep.subr.mxu0 0.0
      %3328 = vmatpush1.msra.mxu0 %v3166
      %3329 = vmatprep.subr.mxu0 0.0
      %3330 = vmatpush1.msra.mxu0 %v3164
      %3331 = vmatprep.subr.mxu0 0.0
      %3332 = vmatpush1.msra.mxu0 %v3162
      %3333 = vmatprep.subr.mxu0 0.0
      %3334 = vmatpush1.msra.mxu0 %v3160
      %3335 = vmatprep.subr.mxu0 0.0
      %3336 = vmatpush2.msra.mxu0 %v3222
      %3337 = vmatprep.subr.mxu0 0.0
      %3338 = vmatpush2.msra.mxu0 %v3220
      %3339 = vmatprep.subr.mxu0 0.0
      %3340 = vmatpush2.msra.mxu0 %v3218
      %3341 = vmatprep.subr.mxu0 0.0
      %3342 = vmatpush2.msra.mxu0 %v3216
      %3343 = vmatprep.subr.mxu0 0.0
      %3344 = vmatpush2.msra.mxu0 %v3214
      %3345 = vmatprep.subr.mxu0 0.0
      %3346 = vmatpush2.msra.mxu0 %v3212
      %3347 = vmatprep.subr.mxu0 0.0
      %3348 = vmatpush2.msra.mxu0 %v3210
      %3349 = vmatprep.subr.mxu0 0.0
      %3350 = vmatpush2.msra.mxu0 %v3208
      %3351 = vmatprep.subr.mxu0 0.0
      %3352 = vmatpush2.msra.mxu0 %v3206
      %3353 = vmatprep.subr.mxu0 0.0
      %3354 = vmatpush2.msra.mxu0 %v3204
      %3355 = vmatprep.subr.mxu0 0.0
      %3356 = vmatpush2.msra.mxu0 %v3202
      %3357 = vmatprep.subr.mxu0 0.0
      %3358 = vmatpush2.msra.mxu0 %v3200
      %3359 = vmatprep.subr.mxu0 0.0
      %3360 = vmatpush2.msra.mxu0 %v3198
      %3361 = vmatprep.subr.mxu0 0.0
      %3362 = vmatpush2.msra.mxu0 %v3196
      %3363 = vmatprep.subr.mxu0 0.0
      %3364 = vmatpush2.msra.mxu0 %v3194
      %3365 = vmatprep.subr.mxu0 0.0
      %3366 = vmatpush2.msra.mxu0 %v3192
      %3367 = vmatprep.mubr.f32.mxu0 %v3002
      %3368 = vmatmul.mubr.f32.gmra.mxu0 %v3000
      %v3369 = vpop.f32.mrf.mxu0
      %v3370 = vadd.f32 0.0, %v3369
      %v3371 = vpop.f32.mrf.mxu0
      %3372 = vmatprep.mubr.f32.mxu0 %v3008
      %3373 = vmatmul.mubr.f32.gmra.mxu0 %v3006
      %v3374 = vpop.f32.mrf.mxu0
      %v3375 = vadd.f32 0.0, %v3374
      %v3376 = vpop.f32.mrf.mxu0
      %3377 = vmatprep.mubr.f32.mxu0 %v3014
      %3378 = vmatmul.mubr.f32.gmra.mxu0 %v3012
      %v3379 = vpop.f32.mrf.mxu0
      %v3380 = vadd.f32 0.0, %v3379
      %v3381 = vpop.f32.mrf.mxu0
      %3382 = vmatprep.mubr.f32.mxu0 %v3020
      %3383 = vmatmul.mubr.f32.gmra.mxu0 %v3018
      %v3384 = vpop.f32.mrf.mxu0
      %v3385 = vadd.f32 0.0, %v3384
      %v3386 = vpop.f32.mrf.mxu0
      %3387 = vmatprep.mubr.f32.mxu0 %v3026
      %3388 = vmatmul.mubr.f32.gmra.mxu0 %v3024
      %v3389 = vpop.f32.mrf.mxu0
      %v3390 = vadd.f32 0.0, %v3389
      %v3391 = vpop.f32.mrf.mxu0
      %3392 = vmatprep.mubr.f32.mxu0 %v3032
      %3393 = vmatmul.mubr.f32.gmra.mxu0 %v3030
      %v3394 = vpop.f32.mrf.mxu0
      %v3395 = vadd.f32 0.0, %v3394
      %v3396 = vpop.f32.mrf.mxu0
      %3397 = vmatprep.mubr.f32.mxu0 %v3038
      %3398 = vmatmul.mubr.f32.gmra.mxu0 %v3036
      %v3399 = vpop.f32.mrf.mxu0
      %v3400 = vadd.f32 0.0, %v3399
      %v3401 = vpop.f32.mrf.mxu0
      %3402 = vmatprep.mubr.f32.mxu0 %v3044
      %3403 = vmatmul.mubr.f32.gmra.mxu0 %v3042
      %v3404 = vpop.f32.mrf.mxu0
      %v3405 = vadd.f32 0.0, %v3404
      %v3406 = vpop.f32.mrf.mxu0
      %3407 = vmatprep.mubr.f32.mxu0 %v3050
      %3408 = vmatmul.mubr.f32.gmra.mxu0 %v3048
      %v3409 = vpop.f32.mrf.mxu0
      %v3410 = vadd.f32 0.0, %v3409
      %v3411 = vpop.f32.mrf.mxu0
      %3412 = vmatprep.mubr.f32.mxu0 %v3056
      %3413 = vmatmul.mubr.f32.gmra.mxu0 %v3054
      %v3414 = vpop.f32.mrf.mxu0
      %v3415 = vadd.f32 0.0, %v3414
      %v3416 = vpop.f32.mrf.mxu0
      %3417 = vmatprep.mubr.f32.mxu0 %v3062
      %3418 = vmatmul.mubr.f32.gmra.mxu0 %v3060
      %v3419 = vpop.f32.mrf.mxu0
      %v3420 = vadd.f32 0.0, %v3419
      %v3421 = vpop.f32.mrf.mxu0
      %3422 = vmatprep.mubr.f32.mxu0 %v3068
      %3423 = vmatmul.mubr.f32.gmra.mxu0 %v3066
      %v3424 = vpop.f32.mrf.mxu0
      %v3425 = vadd.f32 0.0, %v3424
      %v3426 = vpop.f32.mrf.mxu0
      %3427 = vmatprep.mubr.f32.mxu0 %v3074
      %3428 = vmatmul.mubr.f32.gmra.mxu0 %v3072
      %v3429 = vpop.f32.mrf.mxu0
      %v3430 = vadd.f32 0.0, %v3429
      %v3431 = vpop.f32.mrf.mxu0
      %3432 = vmatprep.mubr.f32.mxu0 %v3080
      %3433 = vmatmul.mubr.f32.gmra.mxu0 %v3078
      %v3434 = vpop.f32.mrf.mxu0
      %v3435 = vadd.f32 0.0, %v3434
      %v3436 = vpop.f32.mrf.mxu0
      %3437 = vmatprep.mubr.f32.mxu0 %v3086
      %3438 = vmatmul.mubr.f32.gmra.mxu0 %v3084
      %v3439 = vpop.f32.mrf.mxu0
      %v3440 = vadd.f32 0.0, %v3439
      %v3441 = vpop.f32.mrf.mxu0
      %3442 = vmatprep.mubr.f32.mxu0 %v3092
      %3443 = vmatmul.mubr.f32.gmra.mxu0 %v3090
      %v3444 = vpop.f32.mrf.mxu0
      %v3445 = vadd.f32 0.0, %v3444
      %v3446 = vpop.f32.mrf.mxu0
      %3447 = vdwg.mxu0
      %3448 = vmatprep.subr.mxu0 0.0
      %3449 = vmatpush1.msra.mxu0 %v3254
      %3450 = vmatprep.subr.mxu0 0.0
      %3451 = vmatpush1.msra.mxu0 %v3252
      %3452 = vmatprep.subr.mxu0 0.0
      %3453 = vmatpush1.msra.mxu0 %v3250
      %3454 = vmatprep.subr.mxu0 0.0
      %3455 = vmatpush1.msra.mxu0 %v3248
      %3456 = vmatprep.subr.mxu0 0.0
      %3457 = vmatpush1.msra.mxu0 %v3246
      %3458 = vmatprep.subr.mxu0 0.0
      %3459 = vmatpush1.msra.mxu0 %v3244
      %3460 = vmatprep.subr.mxu0 0.0
      %3461 = vmatpush1.msra.mxu0 %v3242
      %3462 = vmatprep.subr.mxu0 0.0
      %3463 = vmatpush1.msra.mxu0 %v3240
      %3464 = vmatprep.subr.mxu0 0.0
      %3465 = vmatpush1.msra.mxu0 %v3238
      %3466 = vmatprep.subr.mxu0 0.0
      %3467 = vmatpush1.msra.mxu0 %v3236
      %3468 = vmatprep.subr.mxu0 0.0
      %3469 = vmatpush1.msra.mxu0 %v3234
      %3470 = vmatprep.subr.mxu0 0.0
      %3471 = vmatpush1.msra.mxu0 %v3232
      %3472 = vmatprep.subr.mxu0 0.0
      %3473 = vmatpush1.msra.mxu0 %v3230
      %3474 = vmatprep.subr.mxu0 0.0
      %3475 = vmatpush1.msra.mxu0 %v3228
      %3476 = vmatprep.subr.mxu0 0.0
      %3477 = vmatpush1.msra.mxu0 %v3226
      %3478 = vmatprep.subr.mxu0 0.0
      %3479 = vmatpush1.msra.mxu0 %v3224
      %3480 = vmatprep.subr.mxu0 0.0
      %3481 = vmatpush2.msra.mxu0 0.0
      %3482 = vmatprep.subr.mxu0 0.0
      %3483 = vmatpush2.msra.mxu0 0.0
      %3484 = vmatprep.subr.mxu0 0.0
      %3485 = vmatpush2.msra.mxu0 0.0
      %3486 = vmatprep.subr.mxu0 0.0
      %3487 = vmatpush2.msra.mxu0 0.0
      %3488 = vmatprep.subr.mxu0 0.0
      %3489 = vmatpush2.msra.mxu0 0.0
      %3490 = vmatprep.subr.mxu0 0.0
      %3491 = vmatpush2.msra.mxu0 0.0
      %3492 = vmatprep.subr.mxu0 0.0
      %3493 = vmatpush2.msra.mxu0 0.0
      %3494 = vmatprep.subr.mxu0 0.0
      %3495 = vmatpush2.msra.mxu0 0.0
      %3496 = vmatprep.subr.mxu0 0.0
      %3497 = vmatpush2.msra.mxu0 0.0
      %3498 = vmatprep.subr.mxu0 0.0
      %3499 = vmatpush2.msra.mxu0 0.0
      %3500 = vmatprep.subr.mxu0 0.0
      %3501 = vmatpush2.msra.mxu0 0.0
      %3502 = vmatprep.subr.mxu0 0.0
      %3503 = vmatpush2.msra.mxu0 0.0
      %3504 = vmatprep.subr.mxu0 0.0
      %3505 = vmatpush2.msra.mxu0 0.0
      %3506 = vmatprep.subr.mxu0 0.0
      %3507 = vmatpush2.msra.mxu0 0.0
      %3508 = vmatprep.subr.mxu0 0.0
      %3509 = vmatpush2.msra.mxu0 0.0
      %3510 = vmatprep.subr.mxu0 0.0
      %3511 = vmatpush2.msra.mxu0 0.0
      %3512 = vmatprep.mubr.f32.mxu0 0.0
      %3513 = vmatmul.mubr.f32.gmra.mxu0 %v3004
      %v3514 = vpop.f32.mrf.mxu0
      %v3515 = vadd.f32 %v3370, %v3514
      %v3516 = vpop.f32.mrf.mxu0
      %3517 = vmatprep.mubr.f32.mxu0 0.0
      %3518 = vmatmul.mubr.f32.gmra.mxu0 %v3010
      %v3519 = vpop.f32.mrf.mxu0
      %v3520 = vadd.f32 %v3375, %v3519
      %v3521 = vpop.f32.mrf.mxu0
      %3522 = vmatprep.mubr.f32.mxu0 0.0
      %3523 = vmatmul.mubr.f32.gmra.mxu0 %v3016
      %v3524 = vpop.f32.mrf.mxu0
      %v3525 = vadd.f32 %v3380, %v3524
      %v3526 = vpop.f32.mrf.mxu0
      %3527 = vmatprep.mubr.f32.mxu0 0.0
      %3528 = vmatmul.mubr.f32.gmra.mxu0 %v3022
      %v3529 = vpop.f32.mrf.mxu0
      %v3530 = vadd.f32 %v3385, %v3529
      %v3531 = vpop.f32.mrf.mxu0
      %3532 = vmatprep.mubr.f32.mxu0 0.0
      %3533 = vmatmul.mubr.f32.gmra.mxu0 %v3028
      %v3534 = vpop.f32.mrf.mxu0
      %v3535 = vadd.f32 %v3390, %v3534
      %v3536 = vpop.f32.mrf.mxu0
      %3537 = vmatprep.mubr.f32.mxu0 0.0
      %3538 = vmatmul.mubr.f32.gmra.mxu0 %v3034
      %v3539 = vpop.f32.mrf.mxu0
      %v3540 = vadd.f32 %v3395, %v3539
      %v3541 = vpop.f32.mrf.mxu0
      %3542 = vmatprep.mubr.f32.mxu0 0.0
      %3543 = vmatmul.mubr.f32.gmra.mxu0 %v3040
      %v3544 = vpop.f32.mrf.mxu0
      %v3545 = vadd.f32 %v3400, %v3544
      %v3546 = vpop.f32.mrf.mxu0
      %3547 = vmatprep.mubr.f32.mxu0 0.0
      %3548 = vmatmul.mubr.f32.gmra.mxu0 %v3046
      %v3549 = vpop.f32.mrf.mxu0
      %v3550 = vadd.f32 %v3405, %v3549
      %v3551 = vpop.f32.mrf.mxu0
      %3552 = vmatprep.mubr.f32.mxu0 0.0
      %3553 = vmatmul.mubr.f32.gmra.mxu0 %v3052
      %v3554 = vpop.f32.mrf.mxu0
      %v3555 = vadd.f32 %v3410, %v3554
      %v3556 = vpop.f32.mrf.mxu0
      %3557 = vmatprep.mubr.f32.mxu0 0.0
      %3558 = vmatmul.mubr.f32.gmra.mxu0 %v3058
      %v3559 = vpop.f32.mrf.mxu0
      %v3560 = vadd.f32 %v3415, %v3559
      %v3561 = vpop.f32.mrf.mxu0
      %3562 = vmatprep.mubr.f32.mxu0 0.0
      %3563 = vmatmul.mubr.f32.gmra.mxu0 %v3064
      %v3564 = vpop.f32.mrf.mxu0
      %v3565 = vadd.f32 %v3420, %v3564
      %v3566 = vpop.f32.mrf.mxu0
      %3567 = vmatprep.mubr.f32.mxu0 0.0
      %3568 = vmatmul.mubr.f32.gmra.mxu0 %v3070
      %v3569 = vpop.f32.mrf.mxu0
      %v3570 = vadd.f32 %v3425, %v3569
      %v3571 = vpop.f32.mrf.mxu0
      %3572 = vmatprep.mubr.f32.mxu0 0.0
      %3573 = vmatmul.mubr.f32.gmra.mxu0 %v3076
      %v3574 = vpop.f32.mrf.mxu0
      %v3575 = vadd.f32 %v3430, %v3574
      %v3576 = vpop.f32.mrf.mxu0
      %3577 = vmatprep.mubr.f32.mxu0 0.0
      %3578 = vmatmul.mubr.f32.gmra.mxu0 %v3082
      %v3579 = vpop.f32.mrf.mxu0
      %v3580 = vadd.f32 %v3435, %v3579
      %v3581 = vpop.f32.mrf.mxu0
      %3582 = vmatprep.mubr.f32.mxu0 0.0
      %3583 = vmatmul.mubr.f32.gmra.mxu0 %v3088
      %v3584 = vpop.f32.mrf.mxu0
      %v3585 = vadd.f32 %v3440, %v3584
      %v3586 = vpop.f32.mrf.mxu0
      %3587 = vmatprep.mubr.f32.mxu0 0.0
      %3588 = vmatmul.mubr.f32.gmra.mxu0 %v3094
      %v3589 = vpop.f32.mrf.mxu0
      %v3590 = vadd.f32 %v3445, %v3589
      %v3591 = vpop.f32.mrf.mxu0
      %3592 = vdwg.mxu0
      %v3593 = vrcp.pop %v3098
      %v3594 = vrcp.pop %v3102
      %v3595 = vrcp.pop %v3106
      %v3596 = vrcp.pop %v3110
      %v3597 = vrcp.pop %v3114
      %v3598 = vrcp.pop %v3118
      %v3599 = vrcp.pop %v3122
      %v3600 = vrcp.pop %v3126
      %v3601 = vrcp.pop %v3130
      %v3602 = vrcp.pop %v3134
      %v3603 = vrcp.pop %v3138
      %v3604 = vrcp.pop %v3142
      %v3605 = vrcp.pop %v3146
      %v3606 = vrcp.pop %v3150
      %v3607 = vrcp.pop %v3154
      %v3608 = vrcp.pop %v3158
      %v3609 = vmul.f32 %v3515, %v3593
      %v3610 = vmul.f32 %v3520, %v3594
      %v3611 = vmul.f32 %v3525, %v3595
      %v3612 = vmul.f32 %v3530, %v3596
      %v3613 = vmul.f32 %v3535, %v3597
      %v3614 = vmul.f32 %v3540, %v3598
      %v3615 = vmul.f32 %v3545, %v3599
      %v3616 = vmul.f32 %v3550, %v3600
      %v3617 = vmul.f32 %v3555, %v3601
      %v3618 = vmul.f32 %v3560, %v3602
      %v3619 = vmul.f32 %v3565, %v3603
      %v3620 = vmul.f32 %v3570, %v3604
      %v3621 = vmul.f32 %v3575, %v3605
      %v3622 = vmul.f32 %v3580, %v3606
      %v3623 = vmul.f32 %v3585, %v3607
      %v3624 = vmul.f32 %v3590, %v3608
      %s3625 = sadd.s32 %s980, 768
      %s3626 = sshra.s32 %s3625, 3
      %s3627 = sand.u32 %s3625, 7
      %s3628 = smul.u32 %s3626, 3
      %s3629 = smul.addr %s3628, 8
      %s3630 = scalar_lea.vmem %s2, %s3629
      %v3631 = vld [vmem:[%s3630] sm:$0xff]
      %v3632 = vld [vmem:[%s3630 + $0x8] sm:$0xff]
      %v3633 = vld [vmem:[%s3630 + $0x10] sm:$0xff]
      %v3634 = vld [vmem:[%s3630 + $0x18] sm:$0xff]
      %v3635 = vld [vmem:[%s3630 + $0x20] sm:$0xff]
      %v3636 = vld [vmem:[%s3630 + $0x28] sm:$0xff]
      %v3637 = vld [vmem:[%s3630 + $0x30] sm:$0xff]
      %v3638 = vld [vmem:[%s3630 + $0x38] sm:$0xff]
      %v3639 = vld [vmem:[%s3630 + $0x40] sm:$0xff]
      %v3640 = vld [vmem:[%s3630 + $0x48] sm:$0xff]
      %v3641 = vld [vmem:[%s3630 + $0x50] sm:$0xff]
      %v3642 = vld [vmem:[%s3630 + $0x58] sm:$0xff]
      %v3643 = vld [vmem:[%s3630 + $0x60] sm:$0xff]
      %v3644 = vld [vmem:[%s3630 + $0x68] sm:$0xff]
      %v3645 = vld [vmem:[%s3630 + $0x70] sm:$0xff]
      %v3646 = vld [vmem:[%s3630 + $0x78] sm:$0xff]
      %v3647 = vld [vmem:[%s3630 + $0x80] sm:$0xff]
      %v3648 = vld [vmem:[%s3630 + $0x88] sm:$0xff]
      %v3649 = vld [vmem:[%s3630 + $0x90] sm:$0xff]
      %v3650 = vld [vmem:[%s3630 + $0x98] sm:$0xff]
      %v3651 = vld [vmem:[%s3630 + $0xa0] sm:$0xff]
      %v3652 = vld [vmem:[%s3630 + $0xa8] sm:$0xff]
      %v3653 = vld [vmem:[%s3630 + $0xb0] sm:$0xff]
      %v3654 = vld [vmem:[%s3630 + $0xb8] sm:$0xff]
      %v3655 = vld [vmem:[%s3630 + $0xc0] sm:$0xff]
      %v3656 = vld [vmem:[%s3630 + $0xc8] sm:$0xff]
      %v3657 = vld [vmem:[%s3630 + $0xd0] sm:$0xff]
      %v3658 = vld [vmem:[%s3630 + $0xd8] sm:$0xff]
      %v3659 = vld [vmem:[%s3630 + $0xe0] sm:$0xff]
      %v3660 = vld [vmem:[%s3630 + $0xe8] sm:$0xff]
      %v3661 = vld [vmem:[%s3630 + $0xf0] sm:$0xff]
      %v3662 = vld [vmem:[%s3630 + $0xf8] sm:$0xff]
      %v3663 = vld [vmem:[%s3630 + $0x100] sm:$0xff]
      %v3664 = vld [vmem:[%s3630 + $0x108] sm:$0xff]
      %v3665 = vld [vmem:[%s3630 + $0x110] sm:$0xff]
      %v3666 = vld [vmem:[%s3630 + $0x118] sm:$0xff]
      %v3667 = vld [vmem:[%s3630 + $0x120] sm:$0xff]
      %v3668 = vld [vmem:[%s3630 + $0x128] sm:$0xff]
      %v3669 = vld [vmem:[%s3630 + $0x130] sm:$0xff]
      %v3670 = vld [vmem:[%s3630 + $0x138] sm:$0xff]
      %v3671 = vld [vmem:[%s3630 + $0x140] sm:$0xff]
      %v3672 = vld [vmem:[%s3630 + $0x148] sm:$0xff]
      %v3673 = vld [vmem:[%s3630 + $0x150] sm:$0xff]
      %v3674 = vld [vmem:[%s3630 + $0x158] sm:$0xff]
      %v3675 = vld [vmem:[%s3630 + $0x160] sm:$0xff]
      %v3676 = vld [vmem:[%s3630 + $0x168] sm:$0xff]
      %v3677 = vld [vmem:[%s3630 + $0x170] sm:$0xff]
      %v3678 = vld [vmem:[%s3630 + $0x178] sm:$0xff]
      %3679 = vrot.lane.b32.xlu0 %v964, 112
      %v3680 = vpop.permute.xlu0 %3679
      %3681 = vrot.lane.b32.xlu0 %v965, 112
      %v3682 = vpop.permute.xlu0 %3681
      %3683 = vrot.lane.b32.xlu0 %v966, 112
      %v3684 = vpop.permute.xlu0 %3683
      %3685 = vrot.lane.b32.xlu0 %v967, 112
      %v3686 = vpop.permute.xlu0 %3685
      %3687 = vrot.lane.b32.xlu0 %v968, 112
      %v3688 = vpop.permute.xlu0 %3687
      %3689 = vrot.lane.b32.xlu0 %v969, 112
      %v3690 = vpop.permute.xlu0 %3689
      %3691 = vrot.lane.b32.xlu0 %v970, 112
      %v3692 = vpop.permute.xlu0 %3691
      %3693 = vrot.lane.b32.xlu0 %v971, 112
      %v3694 = vpop.permute.xlu0 %3693
      %3695 = vrot.lane.b32.xlu0 %v972, 112
      %v3696 = vpop.permute.xlu0 %3695
      %3697 = vrot.lane.b32.xlu0 %v973, 112
      %v3698 = vpop.permute.xlu0 %3697
      %3699 = vrot.lane.b32.xlu0 %v974, 112
      %v3700 = vpop.permute.xlu0 %3699
      %3701 = vrot.lane.b32.xlu0 %v975, 112
      %v3702 = vpop.permute.xlu0 %3701
      %3703 = vrot.lane.b32.xlu0 %v976, 112
      %v3704 = vpop.permute.xlu0 %3703
      %3705 = vrot.lane.b32.xlu0 %v977, 112
      %v3706 = vpop.permute.xlu0 %3705
      %3707 = vrot.lane.b32.xlu0 %v978, 112
      %v3708 = vpop.permute.xlu0 %3707
      %3709 = vrot.lane.b32.xlu0 %v979, 112
      %v3710 = vpop.permute.xlu0 %3709
      %3711 = vrot.lane.b32.xlu0 %v916, 112
      %v3712 = vpop.permute.xlu0 %3711
      %3713 = vrot.lane.b32.xlu0 %v917, 112
      %v3714 = vpop.permute.xlu0 %3713
      %3715 = vrot.lane.b32.xlu0 %v918, 112
      %v3716 = vpop.permute.xlu0 %3715
      %3717 = vrot.lane.b32.xlu0 %v919, 112
      %v3718 = vpop.permute.xlu0 %3717
      %3719 = vrot.lane.b32.xlu0 %v920, 112
      %v3720 = vpop.permute.xlu0 %3719
      %3721 = vrot.lane.b32.xlu0 %v921, 112
      %v3722 = vpop.permute.xlu0 %3721
      %3723 = vrot.lane.b32.xlu0 %v922, 112
      %v3724 = vpop.permute.xlu0 %3723
      %3725 = vrot.lane.b32.xlu0 %v923, 112
      %v3726 = vpop.permute.xlu0 %3725
      %3727 = vrot.lane.b32.xlu0 %v924, 112
      %v3728 = vpop.permute.xlu0 %3727
      %3729 = vrot.lane.b32.xlu0 %v925, 112
      %v3730 = vpop.permute.xlu0 %3729
      %3731 = vrot.lane.b32.xlu0 %v926, 112
      %v3732 = vpop.permute.xlu0 %3731
      %3733 = vrot.lane.b32.xlu0 %v927, 112
      %v3734 = vpop.permute.xlu0 %3733
      %3735 = vrot.lane.b32.xlu0 %v928, 112
      %v3736 = vpop.permute.xlu0 %3735
      %3737 = vrot.lane.b32.xlu0 %v929, 112
      %v3738 = vpop.permute.xlu0 %3737
      %3739 = vrot.lane.b32.xlu0 %v930, 112
      %v3740 = vpop.permute.xlu0 %3739
      %3741 = vrot.lane.b32.xlu0 %v931, 112
      %v3742 = vpop.permute.xlu0 %3741
      %3743 = vrot.lane.b32.xlu0 %v932, 112
      %v3744 = vpop.permute.xlu0 %3743
      %3745 = vrot.lane.b32.xlu0 %v933, 112
      %v3746 = vpop.permute.xlu0 %3745
      %3747 = vrot.lane.b32.xlu0 %v934, 112
      %v3748 = vpop.permute.xlu0 %3747
      %3749 = vrot.lane.b32.xlu0 %v935, 112
      %v3750 = vpop.permute.xlu0 %3749
      %3751 = vrot.lane.b32.xlu0 %v936, 112
      %v3752 = vpop.permute.xlu0 %3751
      %3753 = vrot.lane.b32.xlu0 %v937, 112
      %v3754 = vpop.permute.xlu0 %3753
      %3755 = vrot.lane.b32.xlu0 %v938, 112
      %v3756 = vpop.permute.xlu0 %3755
      %3757 = vrot.lane.b32.xlu0 %v939, 112
      %v3758 = vpop.permute.xlu0 %3757
      %3759 = vrot.lane.b32.xlu0 %v940, 112
      %v3760 = vpop.permute.xlu0 %3759
      %3761 = vrot.lane.b32.xlu0 %v941, 112
      %v3762 = vpop.permute.xlu0 %3761
      %3763 = vrot.lane.b32.xlu0 %v942, 112
      %v3764 = vpop.permute.xlu0 %3763
      %3765 = vrot.lane.b32.xlu0 %v943, 112
      %v3766 = vpop.permute.xlu0 %3765
      %3767 = vrot.lane.b32.xlu0 %v944, 112
      %v3768 = vpop.permute.xlu0 %3767
      %3769 = vrot.lane.b32.xlu0 %v945, 112
      %v3770 = vpop.permute.xlu0 %3769
      %3771 = vrot.lane.b32.xlu0 %v946, 112
      %v3772 = vpop.permute.xlu0 %3771
      %3773 = vrot.lane.b32.xlu0 %v947, 112
      %v3774 = vpop.permute.xlu0 %3773
      %3775 = vrot.lane.b32.xlu0 %v948, 112
      %v3776 = vpop.permute.xlu0 %3775
      %3777 = vrot.lane.b32.xlu0 %v949, 112
      %v3778 = vpop.permute.xlu0 %3777
      %3779 = vrot.lane.b32.xlu0 %v950, 112
      %v3780 = vpop.permute.xlu0 %3779
      %3781 = vrot.lane.b32.xlu0 %v951, 112
      %v3782 = vpop.permute.xlu0 %3781
      %3783 = vrot.lane.b32.xlu0 %v952, 112
      %v3784 = vpop.permute.xlu0 %3783
      %3785 = vrot.lane.b32.xlu0 %v953, 112
      %v3786 = vpop.permute.xlu0 %3785
      %3787 = vrot.lane.b32.xlu0 %v954, 112
      %v3788 = vpop.permute.xlu0 %3787
      %3789 = vrot.lane.b32.xlu0 %v955, 112
      %v3790 = vpop.permute.xlu0 %3789
      %3791 = vrot.lane.b32.xlu0 %v956, 112
      %v3792 = vpop.permute.xlu0 %3791
      %3793 = vrot.lane.b32.xlu0 %v957, 112
      %v3794 = vpop.permute.xlu0 %3793
      %3795 = vrot.lane.b32.xlu0 %v958, 112
      %v3796 = vpop.permute.xlu0 %3795
      %3797 = vrot.lane.b32.xlu0 %v959, 112
      %v3798 = vpop.permute.xlu0 %3797
      %3799 = vrot.lane.b32.xlu0 %v960, 112
      %v3800 = vpop.permute.xlu0 %3799
      %3801 = vrot.lane.b32.xlu0 %v961, 112
      %v3802 = vpop.permute.xlu0 %3801
      %3803 = vrot.lane.b32.xlu0 %v962, 112
      %v3804 = vpop.permute.xlu0 %3803
      %3805 = vrot.lane.b32.xlu0 %v963, 112
      %v3806 = vpop.permute.xlu0 %3805
      %v3807 = vsel %vm1034, %v3680, 0
      %v3809 = vsel %vm1034, %v3682, 0
      %v3811 = vsel %vm1034, %v3684, 0
      %v3813 = vsel %vm1034, %v3686, 0
      %v3815 = vsel %vm1034, %v3688, 0
      %v3817 = vsel %vm1034, %v3690, 0
      %v3819 = vsel %vm1034, %v3692, 0
      %v3821 = vsel %vm1034, %v3694, 0
      %v3823 = vsel %vm1034, %v3696, 0
      %v3825 = vsel %vm1034, %v3698, 0
      %v3827 = vsel %vm1034, %v3700, 0
      %v3829 = vsel %vm1034, %v3702, 0
      %v3831 = vsel %vm1034, %v3704, 0
      %v3833 = vsel %vm1034, %v3706, 0
      %v3835 = vsel %vm1034, %v3708, 0
      %v3837 = vsel %vm1034, %v3710, 0
      %v3839 = vsel %vm1034, %v3712, 0
      %v3841 = vsel %vm1034, %v3714, 0
      %v3843 = vsel %vm1034, %v3716, 0
      %v3845 = vsel %vm1034, %v3718, 0
      %v3847 = vsel %vm1034, %v3720, 0
      %v3849 = vsel %vm1034, %v3722, 0
      %v3851 = vsel %vm1034, %v3724, 0
      %v3853 = vsel %vm1034, %v3726, 0
      %v3855 = vsel %vm1034, %v3728, 0
      %v3857 = vsel %vm1034, %v3730, 0
      %v3859 = vsel %vm1034, %v3732, 0
      %v3861 = vsel %vm1034, %v3734, 0
      %v3863 = vsel %vm1034, %v3736, 0
      %v3865 = vsel %vm1034, %v3738, 0
      %v3867 = vsel %vm1034, %v3740, 0
      %v3869 = vsel %vm1034, %v3742, 0
      %v3871 = vsel %vm1034, %v3744, 0
      %v3873 = vsel %vm1034, %v3746, 0
      %v3875 = vsel %vm1034, %v3748, 0
      %v3877 = vsel %vm1034, %v3750, 0
      %v3879 = vsel %vm1034, %v3752, 0
      %v3881 = vsel %vm1034, %v3754, 0
      %v3883 = vsel %vm1034, %v3756, 0
      %v3885 = vsel %vm1034, %v3758, 0
      %v3887 = vsel %vm1034, %v3760, 0
      %v3889 = vsel %vm1034, %v3762, 0
      %v3891 = vsel %vm1034, %v3764, 0
      %v3893 = vsel %vm1034, %v3766, 0
      %v3895 = vsel %vm1034, %v3768, 0
      %v3897 = vsel %vm1034, %v3770, 0
      %v3899 = vsel %vm1034, %v3772, 0
      %v3901 = vsel %vm1034, %v3774, 0
      %v3903 = vsel %vm1034, %v3776, 0
      %v3905 = vsel %vm1034, %v3778, 0
      %v3907 = vsel %vm1034, %v3780, 0
      %v3909 = vsel %vm1034, %v3782, 0
      %v3911 = vsel %vm1034, %v3784, 0
      %v3913 = vsel %vm1034, %v3786, 0
      %v3915 = vsel %vm1034, %v3788, 0
      %v3917 = vsel %vm1034, %v3790, 0
      %v3919 = vsel %vm1034, %v3792, 0
      %v3921 = vsel %vm1034, %v3794, 0
      %v3923 = vsel %vm1034, %v3796, 0
      %v3925 = vsel %vm1034, %v3798, 0
      %v3927 = vsel %vm1034, %v3800, 0
      %v3929 = vsel %vm1034, %v3802, 0
      %v3931 = vsel %vm1034, %v3804, 0
      %v3933 = vsel %vm1034, %v3806, 0
      %3935 = vmatprep.subr.mxu0 0.0
      %3936 = vmatpush1.xpose.msra.mxu0 %v3869
      %3937 = vmatprep.subr.mxu0 0.0
      %3938 = vmatpush1.xpose.msra.mxu0 %v3867
      %3939 = vmatprep.subr.mxu0 0.0
      %3940 = vmatpush1.xpose.msra.mxu0 %v3865
      %3941 = vmatprep.subr.mxu0 0.0
      %3942 = vmatpush1.xpose.msra.mxu0 %v3863
      %3943 = vmatprep.subr.mxu0 0.0
      %3944 = vmatpush1.xpose.msra.mxu0 %v3861
      %3945 = vmatprep.subr.mxu0 0.0
      %3946 = vmatpush1.xpose.msra.mxu0 %v3859
      %3947 = vmatprep.subr.mxu0 0.0
      %3948 = vmatpush1.xpose.msra.mxu0 %v3857
      %3949 = vmatprep.subr.mxu0 0.0
      %3950 = vmatpush1.xpose.msra.mxu0 %v3855
      %3951 = vmatprep.subr.mxu0 0.0
      %3952 = vmatpush1.xpose.msra.mxu0 %v3853
      %3953 = vmatprep.subr.mxu0 0.0
      %3954 = vmatpush1.xpose.msra.mxu0 %v3851
      %3955 = vmatprep.subr.mxu0 0.0
      %3956 = vmatpush1.xpose.msra.mxu0 %v3849
      %3957 = vmatprep.subr.mxu0 0.0
      %3958 = vmatpush1.xpose.msra.mxu0 %v3847
      %3959 = vmatprep.subr.mxu0 0.0
      %3960 = vmatpush1.xpose.msra.mxu0 %v3845
      %3961 = vmatprep.subr.mxu0 0.0
      %3962 = vmatpush1.xpose.msra.mxu0 %v3843
      %3963 = vmatprep.subr.mxu0 0.0
      %3964 = vmatpush1.xpose.msra.mxu0 %v3841
      %3965 = vmatprep.subr.mxu0 0.0
      %3966 = vmatpush1.xpose.msra.mxu0 %v3839
      %3967 = vmatprep.subr.mxu0 0.0
      %3968 = vmatpush2.xpose.msra.mxu0 %v3901
      %3969 = vmatprep.subr.mxu0 0.0
      %3970 = vmatpush2.xpose.msra.mxu0 %v3899
      %3971 = vmatprep.subr.mxu0 0.0
      %3972 = vmatpush2.xpose.msra.mxu0 %v3897
      %3973 = vmatprep.subr.mxu0 0.0
      %3974 = vmatpush2.xpose.msra.mxu0 %v3895
      %3975 = vmatprep.subr.mxu0 0.0
      %3976 = vmatpush2.xpose.msra.mxu0 %v3893
      %3977 = vmatprep.subr.mxu0 0.0
      %3978 = vmatpush2.xpose.msra.mxu0 %v3891
      %3979 = vmatprep.subr.mxu0 0.0
      %3980 = vmatpush2.xpose.msra.mxu0 %v3889
      %3981 = vmatprep.subr.mxu0 0.0
      %3982 = vmatpush2.xpose.msra.mxu0 %v3887
      %3983 = vmatprep.subr.mxu0 0.0
      %3984 = vmatpush2.xpose.msra.mxu0 %v3885
      %3985 = vmatprep.subr.mxu0 0.0
      %3986 = vmatpush2.xpose.msra.mxu0 %v3883
      %3987 = vmatprep.subr.mxu0 0.0
      %3988 = vmatpush2.xpose.msra.mxu0 %v3881
      %3989 = vmatprep.subr.mxu0 0.0
      %3990 = vmatpush2.xpose.msra.mxu0 %v3879
      %3991 = vmatprep.subr.mxu0 0.0
      %3992 = vmatpush2.xpose.msra.mxu0 %v3877
      %3993 = vmatprep.subr.mxu0 0.0
      %3994 = vmatpush2.xpose.msra.mxu0 %v3875
      %3995 = vmatprep.subr.mxu0 0.0
      %3996 = vmatpush2.xpose.msra.mxu0 %v3873
      %3997 = vmatprep.subr.mxu0 0.0
      %3998 = vmatpush2.xpose.msra.mxu0 %v3871
      %3999 = vmatprep.mubr.f32.mxu0 0.0
      %4000 = vmatmul.mubr.f32.gmra.mxu0 %v3807
      %v4001 = vpop.f32.mrf.mxu0
      %v4002 = vadd.f32 %v3631, %v4001
      %v4003 = vpop.f32.mrf.mxu0
      %v4004 = vadd.f32 %v3632, %v4003
      %4005 = vmatprep.mubr.f32.mxu0 0.0
      %4006 = vmatmul.mubr.f32.gmra.mxu0 %v3809
      %v4007 = vpop.f32.mrf.mxu0
      %v4008 = vadd.f32 %v3634, %v4007
      %v4009 = vpop.f32.mrf.mxu0
      %v4010 = vadd.f32 %v3635, %v4009
      %4011 = vmatprep.mubr.f32.mxu0 0.0
      %4012 = vmatmul.mubr.f32.gmra.mxu0 %v3811
      %v4013 = vpop.f32.mrf.mxu0
      %v4014 = vadd.f32 %v3637, %v4013
      %v4015 = vpop.f32.mrf.mxu0
      %v4016 = vadd.f32 %v3638, %v4015
      %4017 = vmatprep.mubr.f32.mxu0 0.0
      %4018 = vmatmul.mubr.f32.gmra.mxu0 %v3813
      %v4019 = vpop.f32.mrf.mxu0
      %v4020 = vadd.f32 %v3640, %v4019
      %v4021 = vpop.f32.mrf.mxu0
      %v4022 = vadd.f32 %v3641, %v4021
      %4023 = vmatprep.mubr.f32.mxu0 0.0
      %4024 = vmatmul.mubr.f32.gmra.mxu0 %v3815
      %v4025 = vpop.f32.mrf.mxu0
      %v4026 = vadd.f32 %v3643, %v4025
      %v4027 = vpop.f32.mrf.mxu0
      %v4028 = vadd.f32 %v3644, %v4027
      %4029 = vmatprep.mubr.f32.mxu0 0.0
      %4030 = vmatmul.mubr.f32.gmra.mxu0 %v3817
      %v4031 = vpop.f32.mrf.mxu0
      %v4032 = vadd.f32 %v3646, %v4031
      %v4033 = vpop.f32.mrf.mxu0
      %v4034 = vadd.f32 %v3647, %v4033
      %4035 = vmatprep.mubr.f32.mxu0 0.0
      %4036 = vmatmul.mubr.f32.gmra.mxu0 %v3819
      %v4037 = vpop.f32.mrf.mxu0
      %v4038 = vadd.f32 %v3649, %v4037
      %v4039 = vpop.f32.mrf.mxu0
      %v4040 = vadd.f32 %v3650, %v4039
      %4041 = vmatprep.mubr.f32.mxu0 0.0
      %4042 = vmatmul.mubr.f32.gmra.mxu0 %v3821
      %v4043 = vpop.f32.mrf.mxu0
      %v4044 = vadd.f32 %v3652, %v4043
      %v4045 = vpop.f32.mrf.mxu0
      %v4046 = vadd.f32 %v3653, %v4045
      %4047 = vmatprep.mubr.f32.mxu0 0.0
      %4048 = vmatmul.mubr.f32.gmra.mxu0 %v3823
      %v4049 = vpop.f32.mrf.mxu0
      %v4050 = vadd.f32 %v3655, %v4049
      %v4051 = vpop.f32.mrf.mxu0
      %v4052 = vadd.f32 %v3656, %v4051
      %4053 = vmatprep.mubr.f32.mxu0 0.0
      %4054 = vmatmul.mubr.f32.gmra.mxu0 %v3825
      %v4055 = vpop.f32.mrf.mxu0
      %v4056 = vadd.f32 %v3658, %v4055
      %v4057 = vpop.f32.mrf.mxu0
      %v4058 = vadd.f32 %v3659, %v4057
      %4059 = vmatprep.mubr.f32.mxu0 0.0
      %4060 = vmatmul.mubr.f32.gmra.mxu0 %v3827
      %v4061 = vpop.f32.mrf.mxu0
      %v4062 = vadd.f32 %v3661, %v4061
      %v4063 = vpop.f32.mrf.mxu0
      %v4064 = vadd.f32 %v3662, %v4063
      %4065 = vmatprep.mubr.f32.mxu0 0.0
      %4066 = vmatmul.mubr.f32.gmra.mxu0 %v3829
      %v4067 = vpop.f32.mrf.mxu0
      %v4068 = vadd.f32 %v3664, %v4067
      %v4069 = vpop.f32.mrf.mxu0
      %v4070 = vadd.f32 %v3665, %v4069
      %4071 = vmatprep.mubr.f32.mxu0 0.0
      %4072 = vmatmul.mubr.f32.gmra.mxu0 %v3831
      %v4073 = vpop.f32.mrf.mxu0
      %v4074 = vadd.f32 %v3667, %v4073
      %v4075 = vpop.f32.mrf.mxu0
      %v4076 = vadd.f32 %v3668, %v4075
      %4077 = vmatprep.mubr.f32.mxu0 0.0
      %4078 = vmatmul.mubr.f32.gmra.mxu0 %v3833
      %v4079 = vpop.f32.mrf.mxu0
      %v4080 = vadd.f32 %v3670, %v4079
      %v4081 = vpop.f32.mrf.mxu0
      %v4082 = vadd.f32 %v3671, %v4081
      %4083 = vmatprep.mubr.f32.mxu0 0.0
      %4084 = vmatmul.mubr.f32.gmra.mxu0 %v3835
      %v4085 = vpop.f32.mrf.mxu0
      %v4086 = vadd.f32 %v3673, %v4085
      %v4087 = vpop.f32.mrf.mxu0
      %v4088 = vadd.f32 %v3674, %v4087
      %4089 = vmatprep.mubr.f32.mxu0 0.0
      %4090 = vmatmul.mubr.f32.gmra.mxu0 %v3837
      %v4091 = vpop.f32.mrf.mxu0
      %v4092 = vadd.f32 %v3676, %v4091
      %v4093 = vpop.f32.mrf.mxu0
      %v4094 = vadd.f32 %v3677, %v4093
      %4095 = vdwg.mxu0
      %4096 = vmatprep.subr.mxu0 0.0
      %4097 = vmatpush1.xpose.msra.mxu0 %v3933
      %4098 = vmatprep.subr.mxu0 0.0
      %4099 = vmatpush1.xpose.msra.mxu0 %v3931
      %4100 = vmatprep.subr.mxu0 0.0
      %4101 = vmatpush1.xpose.msra.mxu0 %v3929
      %4102 = vmatprep.subr.mxu0 0.0
      %4103 = vmatpush1.xpose.msra.mxu0 %v3927
      %4104 = vmatprep.subr.mxu0 0.0
      %4105 = vmatpush1.xpose.msra.mxu0 %v3925
      %4106 = vmatprep.subr.mxu0 0.0
      %4107 = vmatpush1.xpose.msra.mxu0 %v3923
      %4108 = vmatprep.subr.mxu0 0.0
      %4109 = vmatpush1.xpose.msra.mxu0 %v3921
      %4110 = vmatprep.subr.mxu0 0.0
      %4111 = vmatpush1.xpose.msra.mxu0 %v3919
      %4112 = vmatprep.subr.mxu0 0.0
      %4113 = vmatpush1.xpose.msra.mxu0 %v3917
      %4114 = vmatprep.subr.mxu0 0.0
      %4115 = vmatpush1.xpose.msra.mxu0 %v3915
      %4116 = vmatprep.subr.mxu0 0.0
      %4117 = vmatpush1.xpose.msra.mxu0 %v3913
      %4118 = vmatprep.subr.mxu0 0.0
      %4119 = vmatpush1.xpose.msra.mxu0 %v3911
      %4120 = vmatprep.subr.mxu0 0.0
      %4121 = vmatpush1.xpose.msra.mxu0 %v3909
      %4122 = vmatprep.subr.mxu0 0.0
      %4123 = vmatpush1.xpose.msra.mxu0 %v3907
      %4124 = vmatprep.subr.mxu0 0.0
      %4125 = vmatpush1.xpose.msra.mxu0 %v3905
      %4126 = vmatprep.subr.mxu0 0.0
      %4127 = vmatpush1.xpose.msra.mxu0 %v3903
      %4128 = vmatprep.subr.mxu0 0.0
      %4129 = vmatpush2.xpose.msra.mxu0 0.0
      %4130 = vmatprep.subr.mxu0 0.0
      %4131 = vmatpush2.xpose.msra.mxu0 0.0
      %4132 = vmatprep.subr.mxu0 0.0
      %4133 = vmatpush2.xpose.msra.mxu0 0.0
      %4134 = vmatprep.subr.mxu0 0.0
      %4135 = vmatpush2.xpose.msra.mxu0 0.0
      %4136 = vmatprep.subr.mxu0 0.0
      %4137 = vmatpush2.xpose.msra.mxu0 0.0
      %4138 = vmatprep.subr.mxu0 0.0
      %4139 = vmatpush2.xpose.msra.mxu0 0.0
      %4140 = vmatprep.subr.mxu0 0.0
      %4141 = vmatpush2.xpose.msra.mxu0 0.0
      %4142 = vmatprep.subr.mxu0 0.0
      %4143 = vmatpush2.xpose.msra.mxu0 0.0
      %4144 = vmatprep.subr.mxu0 0.0
      %4145 = vmatpush2.xpose.msra.mxu0 0.0
      %4146 = vmatprep.subr.mxu0 0.0
      %4147 = vmatpush2.xpose.msra.mxu0 0.0
      %4148 = vmatprep.subr.mxu0 0.0
      %4149 = vmatpush2.xpose.msra.mxu0 0.0
      %4150 = vmatprep.subr.mxu0 0.0
      %4151 = vmatpush2.xpose.msra.mxu0 0.0
      %4152 = vmatprep.subr.mxu0 0.0
      %4153 = vmatpush2.xpose.msra.mxu0 0.0
      %4154 = vmatprep.subr.mxu0 0.0
      %4155 = vmatpush2.xpose.msra.mxu0 0.0
      %4156 = vmatprep.subr.mxu0 0.0
      %4157 = vmatpush2.xpose.msra.mxu0 0.0
      %4158 = vmatprep.subr.mxu0 0.0
      %4159 = vmatpush2.xpose.msra.mxu0 0.0
      %4160 = vmatprep.mubr.f32.mxu0 0.0
      %4161 = vmatmul.mubr.f32.gmra.mxu0 %v3807
      %v4162 = vpop.f32.mrf.mxu0
      %v4163 = vadd.f32 %v3633, %v4162
      %v4164 = vpop.f32.mrf.mxu0
      %4165 = vmatprep.mubr.f32.mxu0 0.0
      %4166 = vmatmul.mubr.f32.gmra.mxu0 %v3809
      %v4167 = vpop.f32.mrf.mxu0
      %v4168 = vadd.f32 %v3636, %v4167
      %v4169 = vpop.f32.mrf.mxu0
      %4170 = vmatprep.mubr.f32.mxu0 0.0
      %4171 = vmatmul.mubr.f32.gmra.mxu0 %v3811
      %v4172 = vpop.f32.mrf.mxu0
      %v4173 = vadd.f32 %v3639, %v4172
      %v4174 = vpop.f32.mrf.mxu0
      %4175 = vmatprep.mubr.f32.mxu0 0.0
      %4176 = vmatmul.mubr.f32.gmra.mxu0 %v3813
      %v4177 = vpop.f32.mrf.mxu0
      %v4178 = vadd.f32 %v3642, %v4177
      %v4179 = vpop.f32.mrf.mxu0
      %4180 = vmatprep.mubr.f32.mxu0 0.0
      %4181 = vmatmul.mubr.f32.gmra.mxu0 %v3815
      %v4182 = vpop.f32.mrf.mxu0
      %v4183 = vadd.f32 %v3645, %v4182
      %v4184 = vpop.f32.mrf.mxu0
      %4185 = vmatprep.mubr.f32.mxu0 0.0
      %4186 = vmatmul.mubr.f32.gmra.mxu0 %v3817
      %v4187 = vpop.f32.mrf.mxu0
      %v4188 = vadd.f32 %v3648, %v4187
      %v4189 = vpop.f32.mrf.mxu0
      %4190 = vmatprep.mubr.f32.mxu0 0.0
      %4191 = vmatmul.mubr.f32.gmra.mxu0 %v3819
      %v4192 = vpop.f32.mrf.mxu0
      %v4193 = vadd.f32 %v3651, %v4192
      %v4194 = vpop.f32.mrf.mxu0
      %4195 = vmatprep.mubr.f32.mxu0 0.0
      %4196 = vmatmul.mubr.f32.gmra.mxu0 %v3821
      %v4197 = vpop.f32.mrf.mxu0
      %v4198 = vadd.f32 %v3654, %v4197
      %v4199 = vpop.f32.mrf.mxu0
      %4200 = vmatprep.mubr.f32.mxu0 0.0
      %4201 = vmatmul.mubr.f32.gmra.mxu0 %v3823
      %v4202 = vpop.f32.mrf.mxu0
      %v4203 = vadd.f32 %v3657, %v4202
      %v4204 = vpop.f32.mrf.mxu0
      %4205 = vmatprep.mubr.f32.mxu0 0.0
      %4206 = vmatmul.mubr.f32.gmra.mxu0 %v3825
      %v4207 = vpop.f32.mrf.mxu0
      %v4208 = vadd.f32 %v3660, %v4207
      %v4209 = vpop.f32.mrf.mxu0
      %4210 = vmatprep.mubr.f32.mxu0 0.0
      %4211 = vmatmul.mubr.f32.gmra.mxu0 %v3827
      %v4212 = vpop.f32.mrf.mxu0
      %v4213 = vadd.f32 %v3663, %v4212
      %v4214 = vpop.f32.mrf.mxu0
      %4215 = vmatprep.mubr.f32.mxu0 0.0
      %4216 = vmatmul.mubr.f32.gmra.mxu0 %v3829
      %v4217 = vpop.f32.mrf.mxu0
      %v4218 = vadd.f32 %v3666, %v4217
      %v4219 = vpop.f32.mrf.mxu0
      %4220 = vmatprep.mubr.f32.mxu0 0.0
      %4221 = vmatmul.mubr.f32.gmra.mxu0 %v3831
      %v4222 = vpop.f32.mrf.mxu0
      %v4223 = vadd.f32 %v3669, %v4222
      %v4224 = vpop.f32.mrf.mxu0
      %4225 = vmatprep.mubr.f32.mxu0 0.0
      %4226 = vmatmul.mubr.f32.gmra.mxu0 %v3833
      %v4227 = vpop.f32.mrf.mxu0
      %v4228 = vadd.f32 %v3672, %v4227
      %v4229 = vpop.f32.mrf.mxu0
      %4230 = vmatprep.mubr.f32.mxu0 0.0
      %4231 = vmatmul.mubr.f32.gmra.mxu0 %v3835
      %v4232 = vpop.f32.mrf.mxu0
      %v4233 = vadd.f32 %v3675, %v4232
      %v4234 = vpop.f32.mrf.mxu0
      %4235 = vmatprep.mubr.f32.mxu0 0.0
      %4236 = vmatmul.mubr.f32.gmra.mxu0 %v3837
      %v4237 = vpop.f32.mrf.mxu0
      %v4238 = vadd.f32 %v3678, %v4237
      %v4239 = vpop.f32.mrf.mxu0
      %4240 = vdwg.mxu0
      %v4241 = vmax.f32 %v4002, %v4004
      %v4242 = vmax.f32 %v4241, %v4163
      %4243 = vmax.xlane.f32.xlu0 %v4242
      %v4244 = vpop.xlane.xlu0 %4243
      %v4245 = vmax.f32 %v4008, %v4010
      %v4246 = vmax.f32 %v4245, %v4168
      %4247 = vmax.xlane.f32.xlu0 %v4246
      %v4248 = vpop.xlane.xlu0 %4247
      %v4249 = vmax.f32 %v4014, %v4016
      %v4250 = vmax.f32 %v4249, %v4173
      %4251 = vmax.xlane.f32.xlu0 %v4250
      %v4252 = vpop.xlane.xlu0 %4251
      %v4253 = vmax.f32 %v4020, %v4022
      %v4254 = vmax.f32 %v4253, %v4178
      %4255 = vmax.xlane.f32.xlu0 %v4254
      %v4256 = vpop.xlane.xlu0 %4255
      %v4257 = vmax.f32 %v4026, %v4028
      %v4258 = vmax.f32 %v4257, %v4183
      %4259 = vmax.xlane.f32.xlu0 %v4258
      %v4260 = vpop.xlane.xlu0 %4259
      %v4261 = vmax.f32 %v4032, %v4034
      %v4262 = vmax.f32 %v4261, %v4188
      %4263 = vmax.xlane.f32.xlu0 %v4262
      %v4264 = vpop.xlane.xlu0 %4263
      %v4265 = vmax.f32 %v4038, %v4040
      %v4266 = vmax.f32 %v4265, %v4193
      %4267 = vmax.xlane.f32.xlu0 %v4266
      %v4268 = vpop.xlane.xlu0 %4267
      %v4269 = vmax.f32 %v4044, %v4046
      %v4270 = vmax.f32 %v4269, %v4198
      %4271 = vmax.xlane.f32.xlu0 %v4270
      %v4272 = vpop.xlane.xlu0 %4271
      %v4273 = vmax.f32 %v4050, %v4052
      %v4274 = vmax.f32 %v4273, %v4203
      %4275 = vmax.xlane.f32.xlu0 %v4274
      %v4276 = vpop.xlane.xlu0 %4275
      %v4277 = vmax.f32 %v4056, %v4058
      %v4278 = vmax.f32 %v4277, %v4208
      %4279 = vmax.xlane.f32.xlu0 %v4278
      %v4280 = vpop.xlane.xlu0 %4279
      %v4281 = vmax.f32 %v4062, %v4064
      %v4282 = vmax.f32 %v4281, %v4213
      %4283 = vmax.xlane.f32.xlu0 %v4282
      %v4284 = vpop.xlane.xlu0 %4283
      %v4285 = vmax.f32 %v4068, %v4070
      %v4286 = vmax.f32 %v4285, %v4218
      %4287 = vmax.xlane.f32.xlu0 %v4286
      %v4288 = vpop.xlane.xlu0 %4287
      %v4289 = vmax.f32 %v4074, %v4076
      %v4290 = vmax.f32 %v4289, %v4223
      %4291 = vmax.xlane.f32.xlu0 %v4290
      %v4292 = vpop.xlane.xlu0 %4291
      %v4293 = vmax.f32 %v4080, %v4082
      %v4294 = vmax.f32 %v4293, %v4228
      %4295 = vmax.xlane.f32.xlu0 %v4294
      %v4296 = vpop.xlane.xlu0 %4295
      %v4297 = vmax.f32 %v4086, %v4088
      %v4298 = vmax.f32 %v4297, %v4233
      %4299 = vmax.xlane.f32.xlu0 %v4298
      %v4300 = vpop.xlane.xlu0 %4299
      %v4301 = vmax.f32 %v4092, %v4094
      %v4302 = vmax.f32 %v4301, %v4238
      %4303 = vmax.xlane.f32.xlu0 %v4302
      %v4304 = vpop.xlane.xlu0 %4303
      %v4305 = vsub.f32 %v4002, %v4244
      %v4306 = vsub.f32 %v4004, %v4244
      %v4307 = vsub.f32 %v4163, %v4244
      %v4308 = vsub.f32 %v4008, %v4248
      %v4309 = vsub.f32 %v4010, %v4248
      %v4310 = vsub.f32 %v4168, %v4248
      %v4311 = vsub.f32 %v4014, %v4252
      %v4312 = vsub.f32 %v4016, %v4252
      %v4313 = vsub.f32 %v4173, %v4252
      %v4314 = vsub.f32 %v4020, %v4256
      %v4315 = vsub.f32 %v4022, %v4256
      %v4316 = vsub.f32 %v4178, %v4256
      %v4317 = vsub.f32 %v4026, %v4260
      %v4318 = vsub.f32 %v4028, %v4260
      %v4319 = vsub.f32 %v4183, %v4260
      %v4320 = vsub.f32 %v4032, %v4264
      %v4321 = vsub.f32 %v4034, %v4264
      %v4322 = vsub.f32 %v4188, %v4264
      %v4323 = vsub.f32 %v4038, %v4268
      %v4324 = vsub.f32 %v4040, %v4268
      %v4325 = vsub.f32 %v4193, %v4268
      %v4326 = vsub.f32 %v4044, %v4272
      %v4327 = vsub.f32 %v4046, %v4272
      %v4328 = vsub.f32 %v4198, %v4272
      %v4329 = vsub.f32 %v4050, %v4276
      %v4330 = vsub.f32 %v4052, %v4276
      %v4331 = vsub.f32 %v4203, %v4276
      %v4332 = vsub.f32 %v4056, %v4280
      %v4333 = vsub.f32 %v4058, %v4280
      %v4334 = vsub.f32 %v4208, %v4280
      %v4335 = vsub.f32 %v4062, %v4284
      %v4336 = vsub.f32 %v4064, %v4284
      %v4337 = vsub.f32 %v4213, %v4284
      %v4338 = vsub.f32 %v4068, %v4288
      %v4339 = vsub.f32 %v4070, %v4288
      %v4340 = vsub.f32 %v4218, %v4288
      %v4341 = vsub.f32 %v4074, %v4292
      %v4342 = vsub.f32 %v4076, %v4292
      %v4343 = vsub.f32 %v4223, %v4292
      %v4344 = vsub.f32 %v4080, %v4296
      %v4345 = vsub.f32 %v4082, %v4296
      %v4346 = vsub.f32 %v4228, %v4296
      %v4347 = vsub.f32 %v4086, %v4300
      %v4348 = vsub.f32 %v4088, %v4300
      %v4349 = vsub.f32 %v4233, %v4300
      %v4350 = vsub.f32 %v4092, %v4304
      %v4351 = vsub.f32 %v4094, %v4304
      %v4352 = vsub.f32 %v4238, %v4304
      %v4353 = vmul.f32 %v4305, 1.442695
      %v4354 = vpow.pop %v4353
      %v4355 = vmul.f32 %v4306, 1.442695
      %v4356 = vpow.pop %v4355
      %v4357 = vmul.f32 %v4307, 1.442695
      %v4358 = vpow.pop %v4357
      %v4359 = vmul.f32 %v4308, 1.442695
      %v4360 = vpow.pop %v4359
      %v4361 = vmul.f32 %v4309, 1.442695
      %v4362 = vpow.pop %v4361
      %v4363 = vmul.f32 %v4310, 1.442695
      %v4364 = vpow.pop %v4363
      %v4365 = vmul.f32 %v4311, 1.442695
      %v4366 = vpow.pop %v4365
      %v4367 = vmul.f32 %v4312, 1.442695
      %v4368 = vpow.pop %v4367
      %v4369 = vmul.f32 %v4313, 1.442695
      %v4370 = vpow.pop %v4369
      %v4371 = vmul.f32 %v4314, 1.442695
      %v4372 = vpow.pop %v4371
      %v4373 = vmul.f32 %v4315, 1.442695
      %v4374 = vpow.pop %v4373
      %v4375 = vmul.f32 %v4316, 1.442695
      %v4376 = vpow.pop %v4375
      %v4377 = vmul.f32 %v4317, 1.442695
      %v4378 = vpow.pop %v4377
      %v4379 = vmul.f32 %v4318, 1.442695
      %v4380 = vpow.pop %v4379
      %v4381 = vmul.f32 %v4319, 1.442695
      %v4382 = vpow.pop %v4381
      %v4383 = vmul.f32 %v4320, 1.442695
      %v4384 = vpow.pop %v4383
      %v4385 = vmul.f32 %v4321, 1.442695
      %v4386 = vpow.pop %v4385
      %v4387 = vmul.f32 %v4322, 1.442695
      %v4388 = vpow.pop %v4387
      %v4389 = vmul.f32 %v4323, 1.442695
      %v4390 = vpow.pop %v4389
      %v4391 = vmul.f32 %v4324, 1.442695
      %v4392 = vpow.pop %v4391
      %v4393 = vmul.f32 %v4325, 1.442695
      %v4394 = vpow.pop %v4393
      %v4395 = vmul.f32 %v4326, 1.442695
      %v4396 = vpow.pop %v4395
      %v4397 = vmul.f32 %v4327, 1.442695
      %v4398 = vpow.pop %v4397
      %v4399 = vmul.f32 %v4328, 1.442695
      %v4400 = vpow.pop %v4399
      %v4401 = vmul.f32 %v4329, 1.442695
      %v4402 = vpow.pop %v4401
      %v4403 = vmul.f32 %v4330, 1.442695
      %v4404 = vpow.pop %v4403
      %v4405 = vmul.f32 %v4331, 1.442695
      %v4406 = vpow.pop %v4405
      %v4407 = vmul.f32 %v4332, 1.442695
      %v4408 = vpow.pop %v4407
      %v4409 = vmul.f32 %v4333, 1.442695
      %v4410 = vpow.pop %v4409
      %v4411 = vmul.f32 %v4334, 1.442695
      %v4412 = vpow.pop %v4411
      %v4413 = vmul.f32 %v4335, 1.442695
      %v4414 = vpow.pop %v4413
      %v4415 = vmul.f32 %v4336, 1.442695
      %v4416 = vpow.pop %v4415
      %v4417 = vmul.f32 %v4337, 1.442695
      %v4418 = vpow.pop %v4417
      %v4419 = vmul.f32 %v4338, 1.442695
      %v4420 = vpow.pop %v4419
      %v4421 = vmul.f32 %v4339, 1.442695
      %v4422 = vpow.pop %v4421
      %v4423 = vmul.f32 %v4340, 1.442695
      %v4424 = vpow.pop %v4423
      %v4425 = vmul.f32 %v4341, 1.442695
      %v4426 = vpow.pop %v4425
      %v4427 = vmul.f32 %v4342, 1.442695
      %v4428 = vpow.pop %v4427
      %v4429 = vmul.f32 %v4343, 1.442695
      %v4430 = vpow.pop %v4429
      %v4431 = vmul.f32 %v4344, 1.442695
      %v4432 = vpow.pop %v4431
      %v4433 = vmul.f32 %v4345, 1.442695
      %v4434 = vpow.pop %v4433
      %v4435 = vmul.f32 %v4346, 1.442695
      %v4436 = vpow.pop %v4435
      %v4437 = vmul.f32 %v4347, 1.442695
      %v4438 = vpow.pop %v4437
      %v4439 = vmul.f32 %v4348, 1.442695
      %v4440 = vpow.pop %v4439
      %v4441 = vmul.f32 %v4349, 1.442695
      %v4442 = vpow.pop %v4441
      %v4443 = vmul.f32 %v4350, 1.442695
      %v4444 = vpow.pop %v4443
      %v4445 = vmul.f32 %v4351, 1.442695
      %v4446 = vpow.pop %v4445
      %v4447 = vmul.f32 %v4352, 1.442695
      %v4448 = vpow.pop %v4447
      %v4449 = vadd.f32 %v4354, %v4356
      %v4450 = vadd.f32 %v4449, %v4358
      %4451 = vadd.xlane.f32.xlu0 %v4450
      %v4452 = vpop.xlane.xlu0 %4451
      %v4453 = vadd.f32 %v4360, %v4362
      %v4454 = vadd.f32 %v4453, %v4364
      %4455 = vadd.xlane.f32.xlu0 %v4454
      %v4456 = vpop.xlane.xlu0 %4455
      %v4457 = vadd.f32 %v4366, %v4368
      %v4458 = vadd.f32 %v4457, %v4370
      %4459 = vadd.xlane.f32.xlu0 %v4458
      %v4460 = vpop.xlane.xlu0 %4459
      %v4461 = vadd.f32 %v4372, %v4374
      %v4462 = vadd.f32 %v4461, %v4376
      %4463 = vadd.xlane.f32.xlu0 %v4462
      %v4464 = vpop.xlane.xlu0 %4463
      %v4465 = vadd.f32 %v4378, %v4380
      %v4466 = vadd.f32 %v4465, %v4382
      %4467 = vadd.xlane.f32.xlu0 %v4466
      %v4468 = vpop.xlane.xlu0 %4467
      %v4469 = vadd.f32 %v4384, %v4386
      %v4470 = vadd.f32 %v4469, %v4388
      %4471 = vadd.xlane.f32.xlu0 %v4470
      %v4472 = vpop.xlane.xlu0 %4471
      %v4473 = vadd.f32 %v4390, %v4392
      %v4474 = vadd.f32 %v4473, %v4394
      %4475 = vadd.xlane.f32.xlu0 %v4474
      %v4476 = vpop.xlane.xlu0 %4475
      %v4477 = vadd.f32 %v4396, %v4398
      %v4478 = vadd.f32 %v4477, %v4400
      %4479 = vadd.xlane.f32.xlu0 %v4478
      %v4480 = vpop.xlane.xlu0 %4479
      %v4481 = vadd.f32 %v4402, %v4404
      %v4482 = vadd.f32 %v4481, %v4406
      %4483 = vadd.xlane.f32.xlu0 %v4482
      %v4484 = vpop.xlane.xlu0 %4483
      %v4485 = vadd.f32 %v4408, %v4410
      %v4486 = vadd.f32 %v4485, %v4412
      %4487 = vadd.xlane.f32.xlu0 %v4486
      %v4488 = vpop.xlane.xlu0 %4487
      %v4489 = vadd.f32 %v4414, %v4416
      %v4490 = vadd.f32 %v4489, %v4418
      %4491 = vadd.xlane.f32.xlu0 %v4490
      %v4492 = vpop.xlane.xlu0 %4491
      %v4493 = vadd.f32 %v4420, %v4422
      %v4494 = vadd.f32 %v4493, %v4424
      %4495 = vadd.xlane.f32.xlu0 %v4494
      %v4496 = vpop.xlane.xlu0 %4495
      %v4497 = vadd.f32 %v4426, %v4428
      %v4498 = vadd.f32 %v4497, %v4430
      %4499 = vadd.xlane.f32.xlu0 %v4498
      %v4500 = vpop.xlane.xlu0 %4499
      %v4501 = vadd.f32 %v4432, %v4434
      %v4502 = vadd.f32 %v4501, %v4436
      %4503 = vadd.xlane.f32.xlu0 %v4502
      %v4504 = vpop.xlane.xlu0 %4503
      %v4505 = vadd.f32 %v4438, %v4440
      %v4506 = vadd.f32 %v4505, %v4442
      %4507 = vadd.xlane.f32.xlu0 %v4506
      %v4508 = vpop.xlane.xlu0 %4507
      %v4509 = vadd.f32 %v4444, %v4446
      %v4510 = vadd.f32 %v4509, %v4448
      %4511 = vadd.xlane.f32.xlu0 %v4510
      %v4512 = vpop.xlane.xlu0 %4511
      %4513 = vrot.lane.b32.xlu0 %v916, 80
      %v4514 = vpop.permute.xlu0 %4513
      %4515 = vrot.lane.b32.xlu0 %v917, 80
      %v4516 = vpop.permute.xlu0 %4515
      %4517 = vrot.lane.b32.xlu0 %v918, 80
      %v4518 = vpop.permute.xlu0 %4517
      %4519 = vrot.lane.b32.xlu0 %v919, 80
      %v4520 = vpop.permute.xlu0 %4519
      %4521 = vrot.lane.b32.xlu0 %v920, 80
      %v4522 = vpop.permute.xlu0 %4521
      %4523 = vrot.lane.b32.xlu0 %v921, 80
      %v4524 = vpop.permute.xlu0 %4523
      %4525 = vrot.lane.b32.xlu0 %v922, 80
      %v4526 = vpop.permute.xlu0 %4525
      %4527 = vrot.lane.b32.xlu0 %v923, 80
      %v4528 = vpop.permute.xlu0 %4527
      %4529 = vrot.lane.b32.xlu0 %v924, 80
      %v4530 = vpop.permute.xlu0 %4529
      %4531 = vrot.lane.b32.xlu0 %v925, 80
      %v4532 = vpop.permute.xlu0 %4531
      %4533 = vrot.lane.b32.xlu0 %v926, 80
      %v4534 = vpop.permute.xlu0 %4533
      %4535 = vrot.lane.b32.xlu0 %v927, 80
      %v4536 = vpop.permute.xlu0 %4535
      %4537 = vrot.lane.b32.xlu0 %v928, 80
      %v4538 = vpop.permute.xlu0 %4537
      %4539 = vrot.lane.b32.xlu0 %v929, 80
      %v4540 = vpop.permute.xlu0 %4539
      %4541 = vrot.lane.b32.xlu0 %v930, 80
      %v4542 = vpop.permute.xlu0 %4541
      %4543 = vrot.lane.b32.xlu0 %v931, 80
      %v4544 = vpop.permute.xlu0 %4543
      %4545 = vrot.lane.b32.xlu0 %v932, 80
      %v4546 = vpop.permute.xlu0 %4545
      %4547 = vrot.lane.b32.xlu0 %v933, 80
      %v4548 = vpop.permute.xlu0 %4547
      %4549 = vrot.lane.b32.xlu0 %v934, 80
      %v4550 = vpop.permute.xlu0 %4549
      %4551 = vrot.lane.b32.xlu0 %v935, 80
      %v4552 = vpop.permute.xlu0 %4551
      %4553 = vrot.lane.b32.xlu0 %v936, 80
      %v4554 = vpop.permute.xlu0 %4553
      %4555 = vrot.lane.b32.xlu0 %v937, 80
      %v4556 = vpop.permute.xlu0 %4555
      %4557 = vrot.lane.b32.xlu0 %v938, 80
      %v4558 = vpop.permute.xlu0 %4557
      %4559 = vrot.lane.b32.xlu0 %v939, 80
      %v4560 = vpop.permute.xlu0 %4559
      %4561 = vrot.lane.b32.xlu0 %v940, 80
      %v4562 = vpop.permute.xlu0 %4561
      %4563 = vrot.lane.b32.xlu0 %v941, 80
      %v4564 = vpop.permute.xlu0 %4563
      %4565 = vrot.lane.b32.xlu0 %v942, 80
      %v4566 = vpop.permute.xlu0 %4565
      %4567 = vrot.lane.b32.xlu0 %v943, 80
      %v4568 = vpop.permute.xlu0 %4567
      %4569 = vrot.lane.b32.xlu0 %v944, 80
      %v4570 = vpop.permute.xlu0 %4569
      %4571 = vrot.lane.b32.xlu0 %v945, 80
      %v4572 = vpop.permute.xlu0 %4571
      %4573 = vrot.lane.b32.xlu0 %v946, 80
      %v4574 = vpop.permute.xlu0 %4573
      %4575 = vrot.lane.b32.xlu0 %v947, 80
      %v4576 = vpop.permute.xlu0 %4575
      %4577 = vrot.lane.b32.xlu0 %v948, 80
      %v4578 = vpop.permute.xlu0 %4577
      %4579 = vrot.lane.b32.xlu0 %v949, 80
      %v4580 = vpop.permute.xlu0 %4579
      %4581 = vrot.lane.b32.xlu0 %v950, 80
      %v4582 = vpop.permute.xlu0 %4581
      %4583 = vrot.lane.b32.xlu0 %v951, 80
      %v4584 = vpop.permute.xlu0 %4583
      %4585 = vrot.lane.b32.xlu0 %v952, 80
      %v4586 = vpop.permute.xlu0 %4585
      %4587 = vrot.lane.b32.xlu0 %v953, 80
      %v4588 = vpop.permute.xlu0 %4587
      %4589 = vrot.lane.b32.xlu0 %v954, 80
      %v4590 = vpop.permute.xlu0 %4589
      %4591 = vrot.lane.b32.xlu0 %v955, 80
      %v4592 = vpop.permute.xlu0 %4591
      %4593 = vrot.lane.b32.xlu0 %v956, 80
      %v4594 = vpop.permute.xlu0 %4593
      %4595 = vrot.lane.b32.xlu0 %v957, 80
      %v4596 = vpop.permute.xlu0 %4595
      %4597 = vrot.lane.b32.xlu0 %v958, 80
      %v4598 = vpop.permute.xlu0 %4597
      %4599 = vrot.lane.b32.xlu0 %v959, 80
      %v4600 = vpop.permute.xlu0 %4599
      %4601 = vrot.lane.b32.xlu0 %v960, 80
      %v4602 = vpop.permute.xlu0 %4601
      %4603 = vrot.lane.b32.xlu0 %v961, 80
      %v4604 = vpop.permute.xlu0 %4603
      %4605 = vrot.lane.b32.xlu0 %v962, 80
      %v4606 = vpop.permute.xlu0 %4605
      %4607 = vrot.lane.b32.xlu0 %v963, 80
      %v4608 = vpop.permute.xlu0 %4607
      %4657 = vmatprep.subr.mxu0 0.0
      %4658 = vmatpush1.msra.mxu0 %v4544
      %4659 = vmatprep.subr.mxu0 0.0
      %4660 = vmatpush1.msra.mxu0 %v4542
      %4661 = vmatprep.subr.mxu0 0.0
      %4662 = vmatpush1.msra.mxu0 %v4540
      %4663 = vmatprep.subr.mxu0 0.0
      %4664 = vmatpush1.msra.mxu0 %v4538
      %4665 = vmatprep.subr.mxu0 0.0
      %4666 = vmatpush1.msra.mxu0 %v4536
      %4667 = vmatprep.subr.mxu0 0.0
      %4668 = vmatpush1.msra.mxu0 %v4534
      %4669 = vmatprep.subr.mxu0 0.0
      %4670 = vmatpush1.msra.mxu0 %v4532
      %4671 = vmatprep.subr.mxu0 0.0
      %4672 = vmatpush1.msra.mxu0 %v4530
      %4673 = vmatprep.subr.mxu0 0.0
      %4674 = vmatpush1.msra.mxu0 %v4528
      %4675 = vmatprep.subr.mxu0 0.0
      %4676 = vmatpush1.msra.mxu0 %v4526
      %4677 = vmatprep.subr.mxu0 0.0
      %4678 = vmatpush1.msra.mxu0 %v4524
      %4679 = vmatprep.subr.mxu0 0.0
      %4680 = vmatpush1.msra.mxu0 %v4522
      %4681 = vmatprep.subr.mxu0 0.0
      %4682 = vmatpush1.msra.mxu0 %v4520
      %4683 = vmatprep.subr.mxu0 0.0
      %4684 = vmatpush1.msra.mxu0 %v4518
      %4685 = vmatprep.subr.mxu0 0.0
      %4686 = vmatpush1.msra.mxu0 %v4516
      %4687 = vmatprep.subr.mxu0 0.0
      %4688 = vmatpush1.msra.mxu0 %v4514
      %4689 = vmatprep.subr.mxu0 0.0
      %4690 = vmatpush2.msra.mxu0 %v4576
      %4691 = vmatprep.subr.mxu0 0.0
      %4692 = vmatpush2.msra.mxu0 %v4574
      %4693 = vmatprep.subr.mxu0 0.0
      %4694 = vmatpush2.msra.mxu0 %v4572
      %4695 = vmatprep.subr.mxu0 0.0
      %4696 = vmatpush2.msra.mxu0 %v4570
      %4697 = vmatprep.subr.mxu0 0.0
      %4698 = vmatpush2.msra.mxu0 %v4568
      %4699 = vmatprep.subr.mxu0 0.0
      %4700 = vmatpush2.msra.mxu0 %v4566
      %4701 = vmatprep.subr.mxu0 0.0
      %4702 = vmatpush2.msra.mxu0 %v4564
      %4703 = vmatprep.subr.mxu0 0.0
      %4704 = vmatpush2.msra.mxu0 %v4562
      %4705 = vmatprep.subr.mxu0 0.0
      %4706 = vmatpush2.msra.mxu0 %v4560
      %4707 = vmatprep.subr.mxu0 0.0
      %4708 = vmatpush2.msra.mxu0 %v4558
      %4709 = vmatprep.subr.mxu0 0.0
      %4710 = vmatpush2.msra.mxu0 %v4556
      %4711 = vmatprep.subr.mxu0 0.0
      %4712 = vmatpush2.msra.mxu0 %v4554
      %4713 = vmatprep.subr.mxu0 0.0
      %4714 = vmatpush2.msra.mxu0 %v4552
      %4715 = vmatprep.subr.mxu0 0.0
      %4716 = vmatpush2.msra.mxu0 %v4550
      %4717 = vmatprep.subr.mxu0 0.0
      %4718 = vmatpush2.msra.mxu0 %v4548
      %4719 = vmatprep.subr.mxu0 0.0
      %4720 = vmatpush2.msra.mxu0 %v4546
      %4721 = vmatprep.mubr.f32.mxu0 %v4356
      %4722 = vmatmul.mubr.f32.gmra.mxu0 %v4354
      %v4723 = vpop.f32.mrf.mxu0
      %v4724 = vadd.f32 0.0, %v4723
      %v4725 = vpop.f32.mrf.mxu0
      %4726 = vmatprep.mubr.f32.mxu0 %v4362
      %4727 = vmatmul.mubr.f32.gmra.mxu0 %v4360
      %v4728 = vpop.f32.mrf.mxu0
      %v4729 = vadd.f32 0.0, %v4728
      %v4730 = vpop.f32.mrf.mxu0
      %4731 = vmatprep.mubr.f32.mxu0 %v4368
      %4732 = vmatmul.mubr.f32.gmra.mxu0 %v4366
      %v4733 = vpop.f32.mrf.mxu0
      %v4734 = vadd.f32 0.0, %v4733
      %v4735 = vpop.f32.mrf.mxu0
      %4736 = vmatprep.mubr.f32.mxu0 %v4374
      %4737 = vmatmul.mubr.f32.gmra.mxu0 %v4372
      %v4738 = vpop.f32.mrf.mxu0
      %v4739 = vadd.f32 0.0, %v4738
      %v4740 = vpop.f32.mrf.mxu0
      %4741 = vmatprep.mubr.f32.mxu0 %v4380
      %4742 = vmatmul.mubr.f32.gmra.mxu0 %v4378
      %v4743 = vpop.f32.mrf.mxu0
      %v4744 = vadd.f32 0.0, %v4743
      %v4745 = vpop.f32.mrf.mxu0
      %4746 = vmatprep.mubr.f32.mxu0 %v4386
      %4747 = vmatmul.mubr.f32.gmra.mxu0 %v4384
      %v4748 = vpop.f32.mrf.mxu0
      %v4749 = vadd.f32 0.0, %v4748
      %v4750 = vpop.f32.mrf.mxu0
      %4751 = vmatprep.mubr.f32.mxu0 %v4392
      %4752 = vmatmul.mubr.f32.gmra.mxu0 %v4390
      %v4753 = vpop.f32.mrf.mxu0
      %v4754 = vadd.f32 0.0, %v4753
      %v4755 = vpop.f32.mrf.mxu0
      %4756 = vmatprep.mubr.f32.mxu0 %v4398
      %4757 = vmatmul.mubr.f32.gmra.mxu0 %v4396
      %v4758 = vpop.f32.mrf.mxu0
      %v4759 = vadd.f32 0.0, %v4758
      %v4760 = vpop.f32.mrf.mxu0
      %4761 = vmatprep.mubr.f32.mxu0 %v4404
      %4762 = vmatmul.mubr.f32.gmra.mxu0 %v4402
      %v4763 = vpop.f32.mrf.mxu0
      %v4764 = vadd.f32 0.0, %v4763
      %v4765 = vpop.f32.mrf.mxu0
      %4766 = vmatprep.mubr.f32.mxu0 %v4410
      %4767 = vmatmul.mubr.f32.gmra.mxu0 %v4408
      %v4768 = vpop.f32.mrf.mxu0
      %v4769 = vadd.f32 0.0, %v4768
      %v4770 = vpop.f32.mrf.mxu0
      %4771 = vmatprep.mubr.f32.mxu0 %v4416
      %4772 = vmatmul.mubr.f32.gmra.mxu0 %v4414
      %v4773 = vpop.f32.mrf.mxu0
      %v4774 = vadd.f32 0.0, %v4773
      %v4775 = vpop.f32.mrf.mxu0
      %4776 = vmatprep.mubr.f32.mxu0 %v4422
      %4777 = vmatmul.mubr.f32.gmra.mxu0 %v4420
      %v4778 = vpop.f32.mrf.mxu0
      %v4779 = vadd.f32 0.0, %v4778
      %v4780 = vpop.f32.mrf.mxu0
      %4781 = vmatprep.mubr.f32.mxu0 %v4428
      %4782 = vmatmul.mubr.f32.gmra.mxu0 %v4426
      %v4783 = vpop.f32.mrf.mxu0
      %v4784 = vadd.f32 0.0, %v4783
      %v4785 = vpop.f32.mrf.mxu0
      %4786 = vmatprep.mubr.f32.mxu0 %v4434
      %4787 = vmatmul.mubr.f32.gmra.mxu0 %v4432
      %v4788 = vpop.f32.mrf.mxu0
      %v4789 = vadd.f32 0.0, %v4788
      %v4790 = vpop.f32.mrf.mxu0
      %4791 = vmatprep.mubr.f32.mxu0 %v4440
      %4792 = vmatmul.mubr.f32.gmra.mxu0 %v4438
      %v4793 = vpop.f32.mrf.mxu0
      %v4794 = vadd.f32 0.0, %v4793
      %v4795 = vpop.f32.mrf.mxu0
      %4796 = vmatprep.mubr.f32.mxu0 %v4446
      %4797 = vmatmul.mubr.f32.gmra.mxu0 %v4444
      %v4798 = vpop.f32.mrf.mxu0
      %v4799 = vadd.f32 0.0, %v4798
      %v4800 = vpop.f32.mrf.mxu0
      %4801 = vdwg.mxu0
      %4802 = vmatprep.subr.mxu0 0.0
      %4803 = vmatpush1.msra.mxu0 %v4608
      %4804 = vmatprep.subr.mxu0 0.0
      %4805 = vmatpush1.msra.mxu0 %v4606
      %4806 = vmatprep.subr.mxu0 0.0
      %4807 = vmatpush1.msra.mxu0 %v4604
      %4808 = vmatprep.subr.mxu0 0.0
      %4809 = vmatpush1.msra.mxu0 %v4602
      %4810 = vmatprep.subr.mxu0 0.0
      %4811 = vmatpush1.msra.mxu0 %v4600
      %4812 = vmatprep.subr.mxu0 0.0
      %4813 = vmatpush1.msra.mxu0 %v4598
      %4814 = vmatprep.subr.mxu0 0.0
      %4815 = vmatpush1.msra.mxu0 %v4596
      %4816 = vmatprep.subr.mxu0 0.0
      %4817 = vmatpush1.msra.mxu0 %v4594
      %4818 = vmatprep.subr.mxu0 0.0
      %4819 = vmatpush1.msra.mxu0 %v4592
      %4820 = vmatprep.subr.mxu0 0.0
      %4821 = vmatpush1.msra.mxu0 %v4590
      %4822 = vmatprep.subr.mxu0 0.0
      %4823 = vmatpush1.msra.mxu0 %v4588
      %4824 = vmatprep.subr.mxu0 0.0
      %4825 = vmatpush1.msra.mxu0 %v4586
      %4826 = vmatprep.subr.mxu0 0.0
      %4827 = vmatpush1.msra.mxu0 %v4584
      %4828 = vmatprep.subr.mxu0 0.0
      %4829 = vmatpush1.msra.mxu0 %v4582
      %4830 = vmatprep.subr.mxu0 0.0
      %4831 = vmatpush1.msra.mxu0 %v4580
      %4832 = vmatprep.subr.mxu0 0.0
      %4833 = vmatpush1.msra.mxu0 %v4578
      %4834 = vmatprep.subr.mxu0 0.0
      %4835 = vmatpush2.msra.mxu0 0.0
      %4836 = vmatprep.subr.mxu0 0.0
      %4837 = vmatpush2.msra.mxu0 0.0
      %4838 = vmatprep.subr.mxu0 0.0
      %4839 = vmatpush2.msra.mxu0 0.0
      %4840 = vmatprep.subr.mxu0 0.0
      %4841 = vmatpush2.msra.mxu0 0.0
      %4842 = vmatprep.subr.mxu0 0.0
      %4843 = vmatpush2.msra.mxu0 0.0
      %4844 = vmatprep.subr.mxu0 0.0
      %4845 = vmatpush2.msra.mxu0 0.0
      %4846 = vmatprep.subr.mxu0 0.0
      %4847 = vmatpush2.msra.mxu0 0.0
      %4848 = vmatprep.subr.mxu0 0.0
      %4849 = vmatpush2.msra.mxu0 0.0
      %4850 = vmatprep.subr.mxu0 0.0
      %4851 = vmatpush2.msra.mxu0 0.0
      %4852 = vmatprep.subr.mxu0 0.0
      %4853 = vmatpush2.msra.mxu0 0.0
      %4854 = vmatprep.subr.mxu0 0.0
      %4855 = vmatpush2.msra.mxu0 0.0
      %4856 = vmatprep.subr.mxu0 0.0
      %4857 = vmatpush2.msra.mxu0 0.0
      %4858 = vmatprep.subr.mxu0 0.0
      %4859 = vmatpush2.msra.mxu0 0.0
      %4860 = vmatprep.subr.mxu0 0.0
      %4861 = vmatpush2.msra.mxu0 0.0
      %4862 = vmatprep.subr.mxu0 0.0
      %4863 = vmatpush2.msra.mxu0 0.0
      %4864 = vmatprep.subr.mxu0 0.0
      %4865 = vmatpush2.msra.mxu0 0.0
      %4866 = vmatprep.mubr.f32.mxu0 0.0
      %4867 = vmatmul.mubr.f32.gmra.mxu0 %v4358
      %v4868 = vpop.f32.mrf.mxu0
      %v4869 = vadd.f32 %v4724, %v4868
      %v4870 = vpop.f32.mrf.mxu0
      %4871 = vmatprep.mubr.f32.mxu0 0.0
      %4872 = vmatmul.mubr.f32.gmra.mxu0 %v4364
      %v4873 = vpop.f32.mrf.mxu0
      %v4874 = vadd.f32 %v4729, %v4873
      %v4875 = vpop.f32.mrf.mxu0
      %4876 = vmatprep.mubr.f32.mxu0 0.0
      %4877 = vmatmul.mubr.f32.gmra.mxu0 %v4370
      %v4878 = vpop.f32.mrf.mxu0
      %v4879 = vadd.f32 %v4734, %v4878
      %v4880 = vpop.f32.mrf.mxu0
      %4881 = vmatprep.mubr.f32.mxu0 0.0
      %4882 = vmatmul.mubr.f32.gmra.mxu0 %v4376
      %v4883 = vpop.f32.mrf.mxu0
      %v4884 = vadd.f32 %v4739, %v4883
      %v4885 = vpop.f32.mrf.mxu0
      %4886 = vmatprep.mubr.f32.mxu0 0.0
      %4887 = vmatmul.mubr.f32.gmra.mxu0 %v4382
      %v4888 = vpop.f32.mrf.mxu0
      %v4889 = vadd.f32 %v4744, %v4888
      %v4890 = vpop.f32.mrf.mxu0
      %4891 = vmatprep.mubr.f32.mxu0 0.0
      %4892 = vmatmul.mubr.f32.gmra.mxu0 %v4388
      %v4893 = vpop.f32.mrf.mxu0
      %v4894 = vadd.f32 %v4749, %v4893
      %v4895 = vpop.f32.mrf.mxu0
      %4896 = vmatprep.mubr.f32.mxu0 0.0
      %4897 = vmatmul.mubr.f32.gmra.mxu0 %v4394
      %v4898 = vpop.f32.mrf.mxu0
      %v4899 = vadd.f32 %v4754, %v4898
      %v4900 = vpop.f32.mrf.mxu0
      %4901 = vmatprep.mubr.f32.mxu0 0.0
      %4902 = vmatmul.mubr.f32.gmra.mxu0 %v4400
      %v4903 = vpop.f32.mrf.mxu0
      %v4904 = vadd.f32 %v4759, %v4903
      %v4905 = vpop.f32.mrf.mxu0
      %4906 = vmatprep.mubr.f32.mxu0 0.0
      %4907 = vmatmul.mubr.f32.gmra.mxu0 %v4406
      %v4908 = vpop.f32.mrf.mxu0
      %v4909 = vadd.f32 %v4764, %v4908
      %v4910 = vpop.f32.mrf.mxu0
      %4911 = vmatprep.mubr.f32.mxu0 0.0
      %4912 = vmatmul.mubr.f32.gmra.mxu0 %v4412
      %v4913 = vpop.f32.mrf.mxu0
      %v4914 = vadd.f32 %v4769, %v4913
      %v4915 = vpop.f32.mrf.mxu0
      %4916 = vmatprep.mubr.f32.mxu0 0.0
      %4917 = vmatmul.mubr.f32.gmra.mxu0 %v4418
      %v4918 = vpop.f32.mrf.mxu0
      %v4919 = vadd.f32 %v4774, %v4918
      %v4920 = vpop.f32.mrf.mxu0
      %4921 = vmatprep.mubr.f32.mxu0 0.0
      %4922 = vmatmul.mubr.f32.gmra.mxu0 %v4424
      %v4923 = vpop.f32.mrf.mxu0
      %v4924 = vadd.f32 %v4779, %v4923
      %v4925 = vpop.f32.mrf.mxu0
      %4926 = vmatprep.mubr.f32.mxu0 0.0
      %4927 = vmatmul.mubr.f32.gmra.mxu0 %v4430
      %v4928 = vpop.f32.mrf.mxu0
      %v4929 = vadd.f32 %v4784, %v4928
      %v4930 = vpop.f32.mrf.mxu0
      %4931 = vmatprep.mubr.f32.mxu0 0.0
      %4932 = vmatmul.mubr.f32.gmra.mxu0 %v4436
      %v4933 = vpop.f32.mrf.mxu0
      %v4934 = vadd.f32 %v4789, %v4933
      %v4935 = vpop.f32.mrf.mxu0
      %4936 = vmatprep.mubr.f32.mxu0 0.0
      %4937 = vmatmul.mubr.f32.gmra.mxu0 %v4442
      %v4938 = vpop.f32.mrf.mxu0
      %v4939 = vadd.f32 %v4794, %v4938
      %v4940 = vpop.f32.mrf.mxu0
      %4941 = vmatprep.mubr.f32.mxu0 0.0
      %4942 = vmatmul.mubr.f32.gmra.mxu0 %v4448
      %v4943 = vpop.f32.mrf.mxu0
      %v4944 = vadd.f32 %v4799, %v4943
      %v4945 = vpop.f32.mrf.mxu0
      %4946 = vdwg.mxu0
      %v4947 = vrcp.pop %v4452
      %v4948 = vrcp.pop %v4456
      %v4949 = vrcp.pop %v4460
      %v4950 = vrcp.pop %v4464
      %v4951 = vrcp.pop %v4468
      %v4952 = vrcp.pop %v4472
      %v4953 = vrcp.pop %v4476
      %v4954 = vrcp.pop %v4480
      %v4955 = vrcp.pop %v4484
      %v4956 = vrcp.pop %v4488
      %v4957 = vrcp.pop %v4492
      %v4958 = vrcp.pop %v4496
      %v4959 = vrcp.pop %v4500
      %v4960 = vrcp.pop %v4504
      %v4961 = vrcp.pop %v4508
      %v4962 = vrcp.pop %v4512
      %v4963 = vmul.f32 %v4869, %v4947
      %v4964 = vmul.f32 %v4874, %v4948
      %v4965 = vmul.f32 %v4879, %v4949
      %v4966 = vmul.f32 %v4884, %v4950
      %v4967 = vmul.f32 %v4889, %v4951
      %v4968 = vmul.f32 %v4894, %v4952
      %v4969 = vmul.f32 %v4899, %v4953
      %v4970 = vmul.f32 %v4904, %v4954
      %v4971 = vmul.f32 %v4909, %v4955
      %v4972 = vmul.f32 %v4914, %v4956
      %v4973 = vmul.f32 %v4919, %v4957
      %v4974 = vmul.f32 %v4924, %v4958
      %v4975 = vmul.f32 %v4929, %v4959
      %v4976 = vmul.f32 %v4934, %v4960
      %v4977 = vmul.f32 %v4939, %v4961
      %v4978 = vmul.f32 %v4944, %v4962
      %s4979 = sadd.s32 %s980, 1152
      %s4980 = sshra.s32 %s4979, 3
      %s4981 = sand.u32 %s4979, 7
      %s4982 = smul.u32 %s4980, 3
      %s4983 = smul.addr %s4982, 8
      %s4984 = scalar_lea.vmem %s2, %s4983
      %v4985 = vld [vmem:[%s4984] sm:$0xff]
      %v4986 = vld [vmem:[%s4984 + $0x8] sm:$0xff]
      %v4987 = vld [vmem:[%s4984 + $0x10] sm:$0xff]
      %v4988 = vld [vmem:[%s4984 + $0x18] sm:$0xff]
      %v4989 = vld [vmem:[%s4984 + $0x20] sm:$0xff]
      %v4990 = vld [vmem:[%s4984 + $0x28] sm:$0xff]
      %v4991 = vld [vmem:[%s4984 + $0x30] sm:$0xff]
      %v4992 = vld [vmem:[%s4984 + $0x38] sm:$0xff]
      %v4993 = vld [vmem:[%s4984 + $0x40] sm:$0xff]
      %v4994 = vld [vmem:[%s4984 + $0x48] sm:$0xff]
      %v4995 = vld [vmem:[%s4984 + $0x50] sm:$0xff]
      %v4996 = vld [vmem:[%s4984 + $0x58] sm:$0xff]
      %v4997 = vld [vmem:[%s4984 + $0x60] sm:$0xff]
      %v4998 = vld [vmem:[%s4984 + $0x68] sm:$0xff]
      %v4999 = vld [vmem:[%s4984 + $0x70] sm:$0xff]
      %v5000 = vld [vmem:[%s4984 + $0x78] sm:$0xff]
      %v5001 = vld [vmem:[%s4984 + $0x80] sm:$0xff]
      %v5002 = vld [vmem:[%s4984 + $0x88] sm:$0xff]
      %v5003 = vld [vmem:[%s4984 + $0x90] sm:$0xff]
      %v5004 = vld [vmem:[%s4984 + $0x98] sm:$0xff]
      %v5005 = vld [vmem:[%s4984 + $0xa0] sm:$0xff]
      %v5006 = vld [vmem:[%s4984 + $0xa8] sm:$0xff]
      %v5007 = vld [vmem:[%s4984 + $0xb0] sm:$0xff]
      %v5008 = vld [vmem:[%s4984 + $0xb8] sm:$0xff]
      %v5009 = vld [vmem:[%s4984 + $0xc0] sm:$0xff]
      %v5010 = vld [vmem:[%s4984 + $0xc8] sm:$0xff]
      %v5011 = vld [vmem:[%s4984 + $0xd0] sm:$0xff]
      %v5012 = vld [vmem:[%s4984 + $0xd8] sm:$0xff]
      %v5013 = vld [vmem:[%s4984 + $0xe0] sm:$0xff]
      %v5014 = vld [vmem:[%s4984 + $0xe8] sm:$0xff]
      %v5015 = vld [vmem:[%s4984 + $0xf0] sm:$0xff]
      %v5016 = vld [vmem:[%s4984 + $0xf8] sm:$0xff]
      %v5017 = vld [vmem:[%s4984 + $0x100] sm:$0xff]
      %v5018 = vld [vmem:[%s4984 + $0x108] sm:$0xff]
      %v5019 = vld [vmem:[%s4984 + $0x110] sm:$0xff]
      %v5020 = vld [vmem:[%s4984 + $0x118] sm:$0xff]
      %v5021 = vld [vmem:[%s4984 + $0x120] sm:$0xff]
      %v5022 = vld [vmem:[%s4984 + $0x128] sm:$0xff]
      %v5023 = vld [vmem:[%s4984 + $0x130] sm:$0xff]
      %v5024 = vld [vmem:[%s4984 + $0x138] sm:$0xff]
      %v5025 = vld [vmem:[%s4984 + $0x140] sm:$0xff]
      %v5026 = vld [vmem:[%s4984 + $0x148] sm:$0xff]
      %v5027 = vld [vmem:[%s4984 + $0x150] sm:$0xff]
      %v5028 = vld [vmem:[%s4984 + $0x158] sm:$0xff]
      %v5029 = vld [vmem:[%s4984 + $0x160] sm:$0xff]
      %v5030 = vld [vmem:[%s4984 + $0x168] sm:$0xff]
      %v5031 = vld [vmem:[%s4984 + $0x170] sm:$0xff]
      %v5032 = vld [vmem:[%s4984 + $0x178] sm:$0xff]
      %5033 = vrot.lane.b32.xlu0 %v964, 104
      %v5034 = vpop.permute.xlu0 %5033
      %5035 = vrot.lane.b32.xlu0 %v965, 104
      %v5036 = vpop.permute.xlu0 %5035
      %5037 = vrot.lane.b32.xlu0 %v966, 104
      %v5038 = vpop.permute.xlu0 %5037
      %5039 = vrot.lane.b32.xlu0 %v967, 104
      %v5040 = vpop.permute.xlu0 %5039
      %5041 = vrot.lane.b32.xlu0 %v968, 104
      %v5042 = vpop.permute.xlu0 %5041
      %5043 = vrot.lane.b32.xlu0 %v969, 104
      %v5044 = vpop.permute.xlu0 %5043
      %5045 = vrot.lane.b32.xlu0 %v970, 104
      %v5046 = vpop.permute.xlu0 %5045
      %5047 = vrot.lane.b32.xlu0 %v971, 104
      %v5048 = vpop.permute.xlu0 %5047
      %5049 = vrot.lane.b32.xlu0 %v972, 104
      %v5050 = vpop.permute.xlu0 %5049
      %5051 = vrot.lane.b32.xlu0 %v973, 104
      %v5052 = vpop.permute.xlu0 %5051
      %5053 = vrot.lane.b32.xlu0 %v974, 104
      %v5054 = vpop.permute.xlu0 %5053
      %5055 = vrot.lane.b32.xlu0 %v975, 104
      %v5056 = vpop.permute.xlu0 %5055
      %5057 = vrot.lane.b32.xlu0 %v976, 104
      %v5058 = vpop.permute.xlu0 %5057
      %5059 = vrot.lane.b32.xlu0 %v977, 104
      %v5060 = vpop.permute.xlu0 %5059
      %5061 = vrot.lane.b32.xlu0 %v978, 104
      %v5062 = vpop.permute.xlu0 %5061
      %5063 = vrot.lane.b32.xlu0 %v979, 104
      %v5064 = vpop.permute.xlu0 %5063
      %5065 = vrot.lane.b32.xlu0 %v916, 104
      %v5066 = vpop.permute.xlu0 %5065
      %5067 = vrot.lane.b32.xlu0 %v917, 104
      %v5068 = vpop.permute.xlu0 %5067
      %5069 = vrot.lane.b32.xlu0 %v918, 104
      %v5070 = vpop.permute.xlu0 %5069
      %5071 = vrot.lane.b32.xlu0 %v919, 104
      %v5072 = vpop.permute.xlu0 %5071
      %5073 = vrot.lane.b32.xlu0 %v920, 104
      %v5074 = vpop.permute.xlu0 %5073
      %5075 = vrot.lane.b32.xlu0 %v921, 104
      %v5076 = vpop.permute.xlu0 %5075
      %5077 = vrot.lane.b32.xlu0 %v922, 104
      %v5078 = vpop.permute.xlu0 %5077
      %5079 = vrot.lane.b32.xlu0 %v923, 104
      %v5080 = vpop.permute.xlu0 %5079
      %5081 = vrot.lane.b32.xlu0 %v924, 104
      %v5082 = vpop.permute.xlu0 %5081
      %5083 = vrot.lane.b32.xlu0 %v925, 104
      %v5084 = vpop.permute.xlu0 %5083
      %5085 = vrot.lane.b32.xlu0 %v926, 104
      %v5086 = vpop.permute.xlu0 %5085
      %5087 = vrot.lane.b32.xlu0 %v927, 104
      %v5088 = vpop.permute.xlu0 %5087
      %5089 = vrot.lane.b32.xlu0 %v928, 104
      %v5090 = vpop.permute.xlu0 %5089
      %5091 = vrot.lane.b32.xlu0 %v929, 104
      %v5092 = vpop.permute.xlu0 %5091
      %5093 = vrot.lane.b32.xlu0 %v930, 104
      %v5094 = vpop.permute.xlu0 %5093
      %5095 = vrot.lane.b32.xlu0 %v931, 104
      %v5096 = vpop.permute.xlu0 %5095
      %5097 = vrot.lane.b32.xlu0 %v932, 104
      %v5098 = vpop.permute.xlu0 %5097
      %5099 = vrot.lane.b32.xlu0 %v933, 104
      %v5100 = vpop.permute.xlu0 %5099
      %5101 = vrot.lane.b32.xlu0 %v934, 104
      %v5102 = vpop.permute.xlu0 %5101
      %5103 = vrot.lane.b32.xlu0 %v935, 104
      %v5104 = vpop.permute.xlu0 %5103
      %5105 = vrot.lane.b32.xlu0 %v936, 104
      %v5106 = vpop.permute.xlu0 %5105
      %5107 = vrot.lane.b32.xlu0 %v937, 104
      %v5108 = vpop.permute.xlu0 %5107
      %5109 = vrot.lane.b32.xlu0 %v938, 104
      %v5110 = vpop.permute.xlu0 %5109
      %5111 = vrot.lane.b32.xlu0 %v939, 104
      %v5112 = vpop.permute.xlu0 %5111
      %5113 = vrot.lane.b32.xlu0 %v940, 104
      %v5114 = vpop.permute.xlu0 %5113
      %5115 = vrot.lane.b32.xlu0 %v941, 104
      %v5116 = vpop.permute.xlu0 %5115
      %5117 = vrot.lane.b32.xlu0 %v942, 104
      %v5118 = vpop.permute.xlu0 %5117
      %5119 = vrot.lane.b32.xlu0 %v943, 104
      %v5120 = vpop.permute.xlu0 %5119
      %5121 = vrot.lane.b32.xlu0 %v944, 104
      %v5122 = vpop.permute.xlu0 %5121
      %5123 = vrot.lane.b32.xlu0 %v945, 104
      %v5124 = vpop.permute.xlu0 %5123
      %5125 = vrot.lane.b32.xlu0 %v946, 104
      %v5126 = vpop.permute.xlu0 %5125
      %5127 = vrot.lane.b32.xlu0 %v947, 104
      %v5128 = vpop.permute.xlu0 %5127
      %5129 = vrot.lane.b32.xlu0 %v948, 104
      %v5130 = vpop.permute.xlu0 %5129
      %5131 = vrot.lane.b32.xlu0 %v949, 104
      %v5132 = vpop.permute.xlu0 %5131
      %5133 = vrot.lane.b32.xlu0 %v950, 104
      %v5134 = vpop.permute.xlu0 %5133
      %5135 = vrot.lane.b32.xlu0 %v951, 104
      %v5136 = vpop.permute.xlu0 %5135
      %5137 = vrot.lane.b32.xlu0 %v952, 104
      %v5138 = vpop.permute.xlu0 %5137
      %5139 = vrot.lane.b32.xlu0 %v953, 104
      %v5140 = vpop.permute.xlu0 %5139
      %5141 = vrot.lane.b32.xlu0 %v954, 104
      %v5142 = vpop.permute.xlu0 %5141
      %5143 = vrot.lane.b32.xlu0 %v955, 104
      %v5144 = vpop.permute.xlu0 %5143
      %5145 = vrot.lane.b32.xlu0 %v956, 104
      %v5146 = vpop.permute.xlu0 %5145
      %5147 = vrot.lane.b32.xlu0 %v957, 104
      %v5148 = vpop.permute.xlu0 %5147
      %5149 = vrot.lane.b32.xlu0 %v958, 104
      %v5150 = vpop.permute.xlu0 %5149
      %5151 = vrot.lane.b32.xlu0 %v959, 104
      %v5152 = vpop.permute.xlu0 %5151
      %5153 = vrot.lane.b32.xlu0 %v960, 104
      %v5154 = vpop.permute.xlu0 %5153
      %5155 = vrot.lane.b32.xlu0 %v961, 104
      %v5156 = vpop.permute.xlu0 %5155
      %5157 = vrot.lane.b32.xlu0 %v962, 104
      %v5158 = vpop.permute.xlu0 %5157
      %5159 = vrot.lane.b32.xlu0 %v963, 104
      %v5160 = vpop.permute.xlu0 %5159
      %v5161 = vsel %vm1034, %v5034, 0
      %v5163 = vsel %vm1034, %v5036, 0
      %v5165 = vsel %vm1034, %v5038, 0
      %v5167 = vsel %vm1034, %v5040, 0
      %v5169 = vsel %vm1034, %v5042, 0
      %v5171 = vsel %vm1034, %v5044, 0
      %v5173 = vsel %vm1034, %v5046, 0
      %v5175 = vsel %vm1034, %v5048, 0
      %v5177 = vsel %vm1034, %v5050, 0
      %v5179 = vsel %vm1034, %v5052, 0
      %v5181 = vsel %vm1034, %v5054, 0
      %v5183 = vsel %vm1034, %v5056, 0
      %v5185 = vsel %vm1034, %v5058, 0
      %v5187 = vsel %vm1034, %v5060, 0
      %v5189 = vsel %vm1034, %v5062, 0
      %v5191 = vsel %vm1034, %v5064, 0
      %v5193 = vsel %vm1034, %v5066, 0
      %v5195 = vsel %vm1034, %v5068, 0
      %v5197 = vsel %vm1034, %v5070, 0
      %v5199 = vsel %vm1034, %v5072, 0
      %v5201 = vsel %vm1034, %v5074, 0
      %v5203 = vsel %vm1034, %v5076, 0
      %v5205 = vsel %vm1034, %v5078, 0
      %v5207 = vsel %vm1034, %v5080, 0
      %v5209 = vsel %vm1034, %v5082, 0
      %v5211 = vsel %vm1034, %v5084, 0
      %v5213 = vsel %vm1034, %v5086, 0
      %v5215 = vsel %vm1034, %v5088, 0
      %v5217 = vsel %vm1034, %v5090, 0
      %v5219 = vsel %vm1034, %v5092, 0
      %v5221 = vsel %vm1034, %v5094, 0
      %v5223 = vsel %vm1034, %v5096, 0
      %v5225 = vsel %vm1034, %v5098, 0
      %v5227 = vsel %vm1034, %v5100, 0
      %v5229 = vsel %vm1034, %v5102, 0
      %v5231 = vsel %vm1034, %v5104, 0
      %v5233 = vsel %vm1034, %v5106, 0
      %v5235 = vsel %vm1034, %v5108, 0
      %v5237 = vsel %vm1034, %v5110, 0
      %v5239 = vsel %vm1034, %v5112, 0
      %v5241 = vsel %vm1034, %v5114, 0
      %v5243 = vsel %vm1034, %v5116, 0
      %v5245 = vsel %vm1034, %v5118, 0
      %v5247 = vsel %vm1034, %v5120, 0
      %v5249 = vsel %vm1034, %v5122, 0
      %v5251 = vsel %vm1034, %v5124, 0
      %v5253 = vsel %vm1034, %v5126, 0
      %v5255 = vsel %vm1034, %v5128, 0
      %v5257 = vsel %vm1034, %v5130, 0
      %v5259 = vsel %vm1034, %v5132, 0
      %v5261 = vsel %vm1034, %v5134, 0
      %v5263 = vsel %vm1034, %v5136, 0
      %v5265 = vsel %vm1034, %v5138, 0
      %v5267 = vsel %vm1034, %v5140, 0
      %v5269 = vsel %vm1034, %v5142, 0
      %v5271 = vsel %vm1034, %v5144, 0
      %v5273 = vsel %vm1034, %v5146, 0
      %v5275 = vsel %vm1034, %v5148, 0
      %v5277 = vsel %vm1034, %v5150, 0
      %v5279 = vsel %vm1034, %v5152, 0
      %v5281 = vsel %vm1034, %v5154, 0
      %v5283 = vsel %vm1034, %v5156, 0
      %v5285 = vsel %vm1034, %v5158, 0
      %v5287 = vsel %vm1034, %v5160, 0
      %5289 = vmatprep.subr.mxu0 0.0
      %5290 = vmatpush1.xpose.msra.mxu0 %v5223
      %5291 = vmatprep.subr.mxu0 0.0
      %5292 = vmatpush1.xpose.msra.mxu0 %v5221
      %5293 = vmatprep.subr.mxu0 0.0
      %5294 = vmatpush1.xpose.msra.mxu0 %v5219
      %5295 = vmatprep.subr.mxu0 0.0
      %5296 = vmatpush1.xpose.msra.mxu0 %v5217
      %5297 = vmatprep.subr.mxu0 0.0
      %5298 = vmatpush1.xpose.msra.mxu0 %v5215
      %5299 = vmatprep.subr.mxu0 0.0
      %5300 = vmatpush1.xpose.msra.mxu0 %v5213
      %5301 = vmatprep.subr.mxu0 0.0
      %5302 = vmatpush1.xpose.msra.mxu0 %v5211
      %5303 = vmatprep.subr.mxu0 0.0
      %5304 = vmatpush1.xpose.msra.mxu0 %v5209
      %5305 = vmatprep.subr.mxu0 0.0
      %5306 = vmatpush1.xpose.msra.mxu0 %v5207
      %5307 = vmatprep.subr.mxu0 0.0
      %5308 = vmatpush1.xpose.msra.mxu0 %v5205
      %5309 = vmatprep.subr.mxu0 0.0
      %5310 = vmatpush1.xpose.msra.mxu0 %v5203
      %5311 = vmatprep.subr.mxu0 0.0
      %5312 = vmatpush1.xpose.msra.mxu0 %v5201
      %5313 = vmatprep.subr.mxu0 0.0
      %5314 = vmatpush1.xpose.msra.mxu0 %v5199
      %5315 = vmatprep.subr.mxu0 0.0
      %5316 = vmatpush1.xpose.msra.mxu0 %v5197
      %5317 = vmatprep.subr.mxu0 0.0
      %5318 = vmatpush1.xpose.msra.mxu0 %v5195
      %5319 = vmatprep.subr.mxu0 0.0
      %5320 = vmatpush1.xpose.msra.mxu0 %v5193
      %5321 = vmatprep.subr.mxu0 0.0
      %5322 = vmatpush2.xpose.msra.mxu0 %v5255
      %5323 = vmatprep.subr.mxu0 0.0
      %5324 = vmatpush2.xpose.msra.mxu0 %v5253
      %5325 = vmatprep.subr.mxu0 0.0
      %5326 = vmatpush2.xpose.msra.mxu0 %v5251
      %5327 = vmatprep.subr.mxu0 0.0
      %5328 = vmatpush2.xpose.msra.mxu0 %v5249
      %5329 = vmatprep.subr.mxu0 0.0
      %5330 = vmatpush2.xpose.msra.mxu0 %v5247
      %5331 = vmatprep.subr.mxu0 0.0
      %5332 = vmatpush2.xpose.msra.mxu0 %v5245
      %5333 = vmatprep.subr.mxu0 0.0
      %5334 = vmatpush2.xpose.msra.mxu0 %v5243
      %5335 = vmatprep.subr.mxu0 0.0
      %5336 = vmatpush2.xpose.msra.mxu0 %v5241
      %5337 = vmatprep.subr.mxu0 0.0
      %5338 = vmatpush2.xpose.msra.mxu0 %v5239
      %5339 = vmatprep.subr.mxu0 0.0
      %5340 = vmatpush2.xpose.msra.mxu0 %v5237
      %5341 = vmatprep.subr.mxu0 0.0
      %5342 = vmatpush2.xpose.msra.mxu0 %v5235
      %5343 = vmatprep.subr.mxu0 0.0
      %5344 = vmatpush2.xpose.msra.mxu0 %v5233
      %5345 = vmatprep.subr.mxu0 0.0
      %5346 = vmatpush2.xpose.msra.mxu0 %v5231
      %5347 = vmatprep.subr.mxu0 0.0
      %5348 = vmatpush2.xpose.msra.mxu0 %v5229
      %5349 = vmatprep.subr.mxu0 0.0
      %5350 = vmatpush2.xpose.msra.mxu0 %v5227
      %5351 = vmatprep.subr.mxu0 0.0
      %5352 = vmatpush2.xpose.msra.mxu0 %v5225
      %5353 = vmatprep.mubr.f32.mxu0 0.0
      %5354 = vmatmul.mubr.f32.gmra.mxu0 %v5161
      %v5355 = vpop.f32.mrf.mxu0
      %v5356 = vadd.f32 %v4985, %v5355
      %v5357 = vpop.f32.mrf.mxu0
      %v5358 = vadd.f32 %v4986, %v5357
      %5359 = vmatprep.mubr.f32.mxu0 0.0
      %5360 = vmatmul.mubr.f32.gmra.mxu0 %v5163
      %v5361 = vpop.f32.mrf.mxu0
      %v5362 = vadd.f32 %v4988, %v5361
      %v5363 = vpop.f32.mrf.mxu0
      %v5364 = vadd.f32 %v4989, %v5363
      %5365 = vmatprep.mubr.f32.mxu0 0.0
      %5366 = vmatmul.mubr.f32.gmra.mxu0 %v5165
      %v5367 = vpop.f32.mrf.mxu0
      %v5368 = vadd.f32 %v4991, %v5367
      %v5369 = vpop.f32.mrf.mxu0
      %v5370 = vadd.f32 %v4992, %v5369
      %5371 = vmatprep.mubr.f32.mxu0 0.0
      %5372 = vmatmul.mubr.f32.gmra.mxu0 %v5167
      %v5373 = vpop.f32.mrf.mxu0
      %v5374 = vadd.f32 %v4994, %v5373
      %v5375 = vpop.f32.mrf.mxu0
      %v5376 = vadd.f32 %v4995, %v5375
      %5377 = vmatprep.mubr.f32.mxu0 0.0
      %5378 = vmatmul.mubr.f32.gmra.mxu0 %v5169
      %v5379 = vpop.f32.mrf.mxu0
      %v5380 = vadd.f32 %v4997, %v5379
      %v5381 = vpop.f32.mrf.mxu0
      %v5382 = vadd.f32 %v4998, %v5381
      %5383 = vmatprep.mubr.f32.mxu0 0.0
      %5384 = vmatmul.mubr.f32.gmra.mxu0 %v5171
      %v5385 = vpop.f32.mrf.mxu0
      %v5386 = vadd.f32 %v5000, %v5385
      %v5387 = vpop.f32.mrf.mxu0
      %v5388 = vadd.f32 %v5001, %v5387
      %5389 = vmatprep.mubr.f32.mxu0 0.0
      %5390 = vmatmul.mubr.f32.gmra.mxu0 %v5173
      %v5391 = vpop.f32.mrf.mxu0
      %v5392 = vadd.f32 %v5003, %v5391
      %v5393 = vpop.f32.mrf.mxu0
      %v5394 = vadd.f32 %v5004, %v5393
      %5395 = vmatprep.mubr.f32.mxu0 0.0
      %5396 = vmatmul.mubr.f32.gmra.mxu0 %v5175
      %v5397 = vpop.f32.mrf.mxu0
      %v5398 = vadd.f32 %v5006, %v5397
      %v5399 = vpop.f32.mrf.mxu0
      %v5400 = vadd.f32 %v5007, %v5399
      %5401 = vmatprep.mubr.f32.mxu0 0.0
      %5402 = vmatmul.mubr.f32.gmra.mxu0 %v5177
      %v5403 = vpop.f32.mrf.mxu0
      %v5404 = vadd.f32 %v5009, %v5403
      %v5405 = vpop.f32.mrf.mxu0
      %v5406 = vadd.f32 %v5010, %v5405
      %5407 = vmatprep.mubr.f32.mxu0 0.0
      %5408 = vmatmul.mubr.f32.gmra.mxu0 %v5179
      %v5409 = vpop.f32.mrf.mxu0
      %v5410 = vadd.f32 %v5012, %v5409
      %v5411 = vpop.f32.mrf.mxu0
      %v5412 = vadd.f32 %v5013, %v5411
      %5413 = vmatprep.mubr.f32.mxu0 0.0
      %5414 = vmatmul.mubr.f32.gmra.mxu0 %v5181
      %v5415 = vpop.f32.mrf.mxu0
      %v5416 = vadd.f32 %v5015, %v5415
      %v5417 = vpop.f32.mrf.mxu0
      %v5418 = vadd.f32 %v5016, %v5417
      %5419 = vmatprep.mubr.f32.mxu0 0.0
      %5420 = vmatmul.mubr.f32.gmra.mxu0 %v5183
      %v5421 = vpop.f32.mrf.mxu0
      %v5422 = vadd.f32 %v5018, %v5421
      %v5423 = vpop.f32.mrf.mxu0
      %v5424 = vadd.f32 %v5019, %v5423
      %5425 = vmatprep.mubr.f32.mxu0 0.0
      %5426 = vmatmul.mubr.f32.gmra.mxu0 %v5185
      %v5427 = vpop.f32.mrf.mxu0
      %v5428 = vadd.f32 %v5021, %v5427
      %v5429 = vpop.f32.mrf.mxu0
      %v5430 = vadd.f32 %v5022, %v5429
      %5431 = vmatprep.mubr.f32.mxu0 0.0
      %5432 = vmatmul.mubr.f32.gmra.mxu0 %v5187
      %v5433 = vpop.f32.mrf.mxu0
      %v5434 = vadd.f32 %v5024, %v5433
      %v5435 = vpop.f32.mrf.mxu0
      %v5436 = vadd.f32 %v5025, %v5435
      %5437 = vmatprep.mubr.f32.mxu0 0.0
      %5438 = vmatmul.mubr.f32.gmra.mxu0 %v5189
      %v5439 = vpop.f32.mrf.mxu0
      %v5440 = vadd.f32 %v5027, %v5439
      %v5441 = vpop.f32.mrf.mxu0
      %v5442 = vadd.f32 %v5028, %v5441
      %5443 = vmatprep.mubr.f32.mxu0 0.0
      %5444 = vmatmul.mubr.f32.gmra.mxu0 %v5191
      %v5445 = vpop.f32.mrf.mxu0
      %v5446 = vadd.f32 %v5030, %v5445
      %v5447 = vpop.f32.mrf.mxu0
      %v5448 = vadd.f32 %v5031, %v5447
      %5449 = vdwg.mxu0
      %5450 = vmatprep.subr.mxu0 0.0
      %5451 = vmatpush1.xpose.msra.mxu0 %v5287
      %5452 = vmatprep.subr.mxu0 0.0
      %5453 = vmatpush1.xpose.msra.mxu0 %v5285
      %5454 = vmatprep.subr.mxu0 0.0
      %5455 = vmatpush1.xpose.msra.mxu0 %v5283
      %5456 = vmatprep.subr.mxu0 0.0
      %5457 = vmatpush1.xpose.msra.mxu0 %v5281
      %5458 = vmatprep.subr.mxu0 0.0
      %5459 = vmatpush1.xpose.msra.mxu0 %v5279
      %5460 = vmatprep.subr.mxu0 0.0
      %5461 = vmatpush1.xpose.msra.mxu0 %v5277
      %5462 = vmatprep.subr.mxu0 0.0
      %5463 = vmatpush1.xpose.msra.mxu0 %v5275
      %5464 = vmatprep.subr.mxu0 0.0
      %5465 = vmatpush1.xpose.msra.mxu0 %v5273
      %5466 = vmatprep.subr.mxu0 0.0
      %5467 = vmatpush1.xpose.msra.mxu0 %v5271
      %5468 = vmatprep.subr.mxu0 0.0
      %5469 = vmatpush1.xpose.msra.mxu0 %v5269
      %5470 = vmatprep.subr.mxu0 0.0
      %5471 = vmatpush1.xpose.msra.mxu0 %v5267
      %5472 = vmatprep.subr.mxu0 0.0
      %5473 = vmatpush1.xpose.msra.mxu0 %v5265
      %5474 = vmatprep.subr.mxu0 0.0
      %5475 = vmatpush1.xpose.msra.mxu0 %v5263
      %5476 = vmatprep.subr.mxu0 0.0
      %5477 = vmatpush1.xpose.msra.mxu0 %v5261
      %5478 = vmatprep.subr.mxu0 0.0
      %5479 = vmatpush1.xpose.msra.mxu0 %v5259
      %5480 = vmatprep.subr.mxu0 0.0
      %5481 = vmatpush1.xpose.msra.mxu0 %v5257
      %5482 = vmatprep.subr.mxu0 0.0
      %5483 = vmatpush2.xpose.msra.mxu0 0.0
      %5484 = vmatprep.subr.mxu0 0.0
      %5485 = vmatpush2.xpose.msra.mxu0 0.0
      %5486 = vmatprep.subr.mxu0 0.0
      %5487 = vmatpush2.xpose.msra.mxu0 0.0
      %5488 = vmatprep.subr.mxu0 0.0
      %5489 = vmatpush2.xpose.msra.mxu0 0.0
      %5490 = vmatprep.subr.mxu0 0.0
      %5491 = vmatpush2.xpose.msra.mxu0 0.0
      %5492 = vmatprep.subr.mxu0 0.0
      %5493 = vmatpush2.xpose.msra.mxu0 0.0
      %5494 = vmatprep.subr.mxu0 0.0
      %5495 = vmatpush2.xpose.msra.mxu0 0.0
      %5496 = vmatprep.subr.mxu0 0.0
      %5497 = vmatpush2.xpose.msra.mxu0 0.0
      %5498 = vmatprep.subr.mxu0 0.0
      %5499 = vmatpush2.xpose.msra.mxu0 0.0
      %5500 = vmatprep.subr.mxu0 0.0
      %5501 = vmatpush2.xpose.msra.mxu0 0.0
      %5502 = vmatprep.subr.mxu0 0.0
      %5503 = vmatpush2.xpose.msra.mxu0 0.0
      %5504 = vmatprep.subr.mxu0 0.0
      %5505 = vmatpush2.xpose.msra.mxu0 0.0
      %5506 = vmatprep.subr.mxu0 0.0
      %5507 = vmatpush2.xpose.msra.mxu0 0.0
      %5508 = vmatprep.subr.mxu0 0.0
      %5509 = vmatpush2.xpose.msra.mxu0 0.0
      %5510 = vmatprep.subr.mxu0 0.0
      %5511 = vmatpush2.xpose.msra.mxu0 0.0
      %5512 = vmatprep.subr.mxu0 0.0
      %5513 = vmatpush2.xpose.msra.mxu0 0.0
      %5514 = vmatprep.mubr.f32.mxu0 0.0
      %5515 = vmatmul.mubr.f32.gmra.mxu0 %v5161
      %v5516 = vpop.f32.mrf.mxu0
      %v5517 = vadd.f32 %v4987, %v5516
      %v5518 = vpop.f32.mrf.mxu0
      %5519 = vmatprep.mubr.f32.mxu0 0.0
      %5520 = vmatmul.mubr.f32.gmra.mxu0 %v5163
      %v5521 = vpop.f32.mrf.mxu0
      %v5522 = vadd.f32 %v4990, %v5521
      %v5523 = vpop.f32.mrf.mxu0
      %5524 = vmatprep.mubr.f32.mxu0 0.0
      %5525 = vmatmul.mubr.f32.gmra.mxu0 %v5165
      %v5526 = vpop.f32.mrf.mxu0
      %v5527 = vadd.f32 %v4993, %v5526
      %v5528 = vpop.f32.mrf.mxu0
      %5529 = vmatprep.mubr.f32.mxu0 0.0
      %5530 = vmatmul.mubr.f32.gmra.mxu0 %v5167
      %v5531 = vpop.f32.mrf.mxu0
      %v5532 = vadd.f32 %v4996, %v5531
      %v5533 = vpop.f32.mrf.mxu0
      %5534 = vmatprep.mubr.f32.mxu0 0.0
      %5535 = vmatmul.mubr.f32.gmra.mxu0 %v5169
      %v5536 = vpop.f32.mrf.mxu0
      %v5537 = vadd.f32 %v4999, %v5536
      %v5538 = vpop.f32.mrf.mxu0
      %5539 = vmatprep.mubr.f32.mxu0 0.0
      %5540 = vmatmul.mubr.f32.gmra.mxu0 %v5171
      %v5541 = vpop.f32.mrf.mxu0
      %v5542 = vadd.f32 %v5002, %v5541
      %v5543 = vpop.f32.mrf.mxu0
      %5544 = vmatprep.mubr.f32.mxu0 0.0
      %5545 = vmatmul.mubr.f32.gmra.mxu0 %v5173
      %v5546 = vpop.f32.mrf.mxu0
      %v5547 = vadd.f32 %v5005, %v5546
      %v5548 = vpop.f32.mrf.mxu0
      %5549 = vmatprep.mubr.f32.mxu0 0.0
      %5550 = vmatmul.mubr.f32.gmra.mxu0 %v5175
      %v5551 = vpop.f32.mrf.mxu0
      %v5552 = vadd.f32 %v5008, %v5551
      %v5553 = vpop.f32.mrf.mxu0
      %5554 = vmatprep.mubr.f32.mxu0 0.0
      %5555 = vmatmul.mubr.f32.gmra.mxu0 %v5177
      %v5556 = vpop.f32.mrf.mxu0
      %v5557 = vadd.f32 %v5011, %v5556
      %v5558 = vpop.f32.mrf.mxu0
      %5559 = vmatprep.mubr.f32.mxu0 0.0
      %5560 = vmatmul.mubr.f32.gmra.mxu0 %v5179
      %v5561 = vpop.f32.mrf.mxu0
      %v5562 = vadd.f32 %v5014, %v5561
      %v5563 = vpop.f32.mrf.mxu0
      %5564 = vmatprep.mubr.f32.mxu0 0.0
      %5565 = vmatmul.mubr.f32.gmra.mxu0 %v5181
      %v5566 = vpop.f32.mrf.mxu0
      %v5567 = vadd.f32 %v5017, %v5566
      %v5568 = vpop.f32.mrf.mxu0
      %5569 = vmatprep.mubr.f32.mxu0 0.0
      %5570 = vmatmul.mubr.f32.gmra.mxu0 %v5183
      %v5571 = vpop.f32.mrf.mxu0
      %v5572 = vadd.f32 %v5020, %v5571
      %v5573 = vpop.f32.mrf.mxu0
      %5574 = vmatprep.mubr.f32.mxu0 0.0
      %5575 = vmatmul.mubr.f32.gmra.mxu0 %v5185
      %v5576 = vpop.f32.mrf.mxu0
      %v5577 = vadd.f32 %v5023, %v5576
      %v5578 = vpop.f32.mrf.mxu0
      %5579 = vmatprep.mubr.f32.mxu0 0.0
      %5580 = vmatmul.mubr.f32.gmra.mxu0 %v5187
      %v5581 = vpop.f32.mrf.mxu0
      %v5582 = vadd.f32 %v5026, %v5581
      %v5583 = vpop.f32.mrf.mxu0
      %5584 = vmatprep.mubr.f32.mxu0 0.0
      %5585 = vmatmul.mubr.f32.gmra.mxu0 %v5189
      %v5586 = vpop.f32.mrf.mxu0
      %v5587 = vadd.f32 %v5029, %v5586
      %v5588 = vpop.f32.mrf.mxu0
      %5589 = vmatprep.mubr.f32.mxu0 0.0
      %5590 = vmatmul.mubr.f32.gmra.mxu0 %v5191
      %v5591 = vpop.f32.mrf.mxu0
      %v5592 = vadd.f32 %v5032, %v5591
      %v5593 = vpop.f32.mrf.mxu0
      %5594 = vdwg.mxu0
      %v5595 = vmax.f32 %v5356, %v5358
      %v5596 = vmax.f32 %v5595, %v5517
      %5597 = vmax.xlane.f32.xlu0 %v5596
      %v5598 = vpop.xlane.xlu0 %5597
      %v5599 = vmax.f32 %v5362, %v5364
      %v5600 = vmax.f32 %v5599, %v5522
      %5601 = vmax.xlane.f32.xlu0 %v5600
      %v5602 = vpop.xlane.xlu0 %5601
      %v5603 = vmax.f32 %v5368, %v5370
      %v5604 = vmax.f32 %v5603, %v5527
      %5605 = vmax.xlane.f32.xlu0 %v5604
      %v5606 = vpop.xlane.xlu0 %5605
      %v5607 = vmax.f32 %v5374, %v5376
      %v5608 = vmax.f32 %v5607, %v5532
      %5609 = vmax.xlane.f32.xlu0 %v5608
      %v5610 = vpop.xlane.xlu0 %5609
      %v5611 = vmax.f32 %v5380, %v5382
      %v5612 = vmax.f32 %v5611, %v5537
      %5613 = vmax.xlane.f32.xlu0 %v5612
      %v5614 = vpop.xlane.xlu0 %5613
      %v5615 = vmax.f32 %v5386, %v5388
      %v5616 = vmax.f32 %v5615, %v5542
      %5617 = vmax.xlane.f32.xlu0 %v5616
      %v5618 = vpop.xlane.xlu0 %5617
      %v5619 = vmax.f32 %v5392, %v5394
      %v5620 = vmax.f32 %v5619, %v5547
      %5621 = vmax.xlane.f32.xlu0 %v5620
      %v5622 = vpop.xlane.xlu0 %5621
      %v5623 = vmax.f32 %v5398, %v5400
      %v5624 = vmax.f32 %v5623, %v5552
      %5625 = vmax.xlane.f32.xlu0 %v5624
      %v5626 = vpop.xlane.xlu0 %5625
      %v5627 = vmax.f32 %v5404, %v5406
      %v5628 = vmax.f32 %v5627, %v5557
      %5629 = vmax.xlane.f32.xlu0 %v5628
      %v5630 = vpop.xlane.xlu0 %5629
      %v5631 = vmax.f32 %v5410, %v5412
      %v5632 = vmax.f32 %v5631, %v5562
      %5633 = vmax.xlane.f32.xlu0 %v5632
      %v5634 = vpop.xlane.xlu0 %5633
      %v5635 = vmax.f32 %v5416, %v5418
      %v5636 = vmax.f32 %v5635, %v5567
      %5637 = vmax.xlane.f32.xlu0 %v5636
      %v5638 = vpop.xlane.xlu0 %5637
      %v5639 = vmax.f32 %v5422, %v5424
      %v5640 = vmax.f32 %v5639, %v5572
      %5641 = vmax.xlane.f32.xlu0 %v5640
      %v5642 = vpop.xlane.xlu0 %5641
      %v5643 = vmax.f32 %v5428, %v5430
      %v5644 = vmax.f32 %v5643, %v5577
      %5645 = vmax.xlane.f32.xlu0 %v5644
      %v5646 = vpop.xlane.xlu0 %5645
      %v5647 = vmax.f32 %v5434, %v5436
      %v5648 = vmax.f32 %v5647, %v5582
      %5649 = vmax.xlane.f32.xlu0 %v5648
      %v5650 = vpop.xlane.xlu0 %5649
      %v5651 = vmax.f32 %v5440, %v5442
      %v5652 = vmax.f32 %v5651, %v5587
      %5653 = vmax.xlane.f32.xlu0 %v5652
      %v5654 = vpop.xlane.xlu0 %5653
      %v5655 = vmax.f32 %v5446, %v5448
      %v5656 = vmax.f32 %v5655, %v5592
      %5657 = vmax.xlane.f32.xlu0 %v5656
      %v5658 = vpop.xlane.xlu0 %5657
      %v5659 = vsub.f32 %v5356, %v5598
      %v5660 = vsub.f32 %v5358, %v5598
      %v5661 = vsub.f32 %v5517, %v5598
      %v5662 = vsub.f32 %v5362, %v5602
      %v5663 = vsub.f32 %v5364, %v5602
      %v5664 = vsub.f32 %v5522, %v5602
      %v5665 = vsub.f32 %v5368, %v5606
      %v5666 = vsub.f32 %v5370, %v5606
      %v5667 = vsub.f32 %v5527, %v5606
      %v5668 = vsub.f32 %v5374, %v5610
      %v5669 = vsub.f32 %v5376, %v5610
      %v5670 = vsub.f32 %v5532, %v5610
      %v5671 = vsub.f32 %v5380, %v5614
      %v5672 = vsub.f32 %v5382, %v5614
      %v5673 = vsub.f32 %v5537, %v5614
      %v5674 = vsub.f32 %v5386, %v5618
      %v5675 = vsub.f32 %v5388, %v5618
      %v5676 = vsub.f32 %v5542, %v5618
      %v5677 = vsub.f32 %v5392, %v5622
      %v5678 = vsub.f32 %v5394, %v5622
      %v5679 = vsub.f32 %v5547, %v5622
      %v5680 = vsub.f32 %v5398, %v5626
      %v5681 = vsub.f32 %v5400, %v5626
      %v5682 = vsub.f32 %v5552, %v5626
      %v5683 = vsub.f32 %v5404, %v5630
      %v5684 = vsub.f32 %v5406, %v5630
      %v5685 = vsub.f32 %v5557, %v5630
      %v5686 = vsub.f32 %v5410, %v5634
      %v5687 = vsub.f32 %v5412, %v5634
      %v5688 = vsub.f32 %v5562, %v5634
      %v5689 = vsub.f32 %v5416, %v5638
      %v5690 = vsub.f32 %v5418, %v5638
      %v5691 = vsub.f32 %v5567, %v5638
      %v5692 = vsub.f32 %v5422, %v5642
      %v5693 = vsub.f32 %v5424, %v5642
      %v5694 = vsub.f32 %v5572, %v5642
      %v5695 = vsub.f32 %v5428, %v5646
      %v5696 = vsub.f32 %v5430, %v5646
      %v5697 = vsub.f32 %v5577, %v5646
      %v5698 = vsub.f32 %v5434, %v5650
      %v5699 = vsub.f32 %v5436, %v5650
      %v5700 = vsub.f32 %v5582, %v5650
      %v5701 = vsub.f32 %v5440, %v5654
      %v5702 = vsub.f32 %v5442, %v5654
      %v5703 = vsub.f32 %v5587, %v5654
      %v5704 = vsub.f32 %v5446, %v5658
      %v5705 = vsub.f32 %v5448, %v5658
      %v5706 = vsub.f32 %v5592, %v5658
      %v5707 = vmul.f32 %v5659, 1.442695
      %v5708 = vpow.pop %v5707
      %v5709 = vmul.f32 %v5660, 1.442695
      %v5710 = vpow.pop %v5709
      %v5711 = vmul.f32 %v5661, 1.442695
      %v5712 = vpow.pop %v5711
      %v5713 = vmul.f32 %v5662, 1.442695
      %v5714 = vpow.pop %v5713
      %v5715 = vmul.f32 %v5663, 1.442695
      %v5716 = vpow.pop %v5715
      %v5717 = vmul.f32 %v5664, 1.442695
      %v5718 = vpow.pop %v5717
      %v5719 = vmul.f32 %v5665, 1.442695
      %v5720 = vpow.pop %v5719
      %v5721 = vmul.f32 %v5666, 1.442695
      %v5722 = vpow.pop %v5721
      %v5723 = vmul.f32 %v5667, 1.442695
      %v5724 = vpow.pop %v5723
      %v5725 = vmul.f32 %v5668, 1.442695
      %v5726 = vpow.pop %v5725
      %v5727 = vmul.f32 %v5669, 1.442695
      %v5728 = vpow.pop %v5727
      %v5729 = vmul.f32 %v5670, 1.442695
      %v5730 = vpow.pop %v5729
      %v5731 = vmul.f32 %v5671, 1.442695
      %v5732 = vpow.pop %v5731
      %v5733 = vmul.f32 %v5672, 1.442695
      %v5734 = vpow.pop %v5733
      %v5735 = vmul.f32 %v5673, 1.442695
      %v5736 = vpow.pop %v5735
      %v5737 = vmul.f32 %v5674, 1.442695
      %v5738 = vpow.pop %v5737
      %v5739 = vmul.f32 %v5675, 1.442695
      %v5740 = vpow.pop %v5739
      %v5741 = vmul.f32 %v5676, 1.442695
      %v5742 = vpow.pop %v5741
      %v5743 = vmul.f32 %v5677, 1.442695
      %v5744 = vpow.pop %v5743
      %v5745 = vmul.f32 %v5678, 1.442695
      %v5746 = vpow.pop %v5745
      %v5747 = vmul.f32 %v5679, 1.442695
      %v5748 = vpow.pop %v5747
      %v5749 = vmul.f32 %v5680, 1.442695
      %v5750 = vpow.pop %v5749
      %v5751 = vmul.f32 %v5681, 1.442695
      %v5752 = vpow.pop %v5751
      %v5753 = vmul.f32 %v5682, 1.442695
      %v5754 = vpow.pop %v5753
      %v5755 = vmul.f32 %v5683, 1.442695
      %v5756 = vpow.pop %v5755
      %v5757 = vmul.f32 %v5684, 1.442695
      %v5758 = vpow.pop %v5757
      %v5759 = vmul.f32 %v5685, 1.442695
      %v5760 = vpow.pop %v5759
      %v5761 = vmul.f32 %v5686, 1.442695
      %v5762 = vpow.pop %v5761
      %v5763 = vmul.f32 %v5687, 1.442695
      %v5764 = vpow.pop %v5763
      %v5765 = vmul.f32 %v5688, 1.442695
      %v5766 = vpow.pop %v5765
      %v5767 = vmul.f32 %v5689, 1.442695
      %v5768 = vpow.pop %v5767
      %v5769 = vmul.f32 %v5690, 1.442695
      %v5770 = vpow.pop %v5769
      %v5771 = vmul.f32 %v5691, 1.442695
      %v5772 = vpow.pop %v5771
      %v5773 = vmul.f32 %v5692, 1.442695
      %v5774 = vpow.pop %v5773
      %v5775 = vmul.f32 %v5693, 1.442695
      %v5776 = vpow.pop %v5775
      %v5777 = vmul.f32 %v5694, 1.442695
      %v5778 = vpow.pop %v5777
      %v5779 = vmul.f32 %v5695, 1.442695
      %v5780 = vpow.pop %v5779
      %v5781 = vmul.f32 %v5696, 1.442695
      %v5782 = vpow.pop %v5781
      %v5783 = vmul.f32 %v5697, 1.442695
      %v5784 = vpow.pop %v5783
      %v5785 = vmul.f32 %v5698, 1.442695
      %v5786 = vpow.pop %v5785
      %v5787 = vmul.f32 %v5699, 1.442695
      %v5788 = vpow.pop %v5787
      %v5789 = vmul.f32 %v5700, 1.442695
      %v5790 = vpow.pop %v5789
      %v5791 = vmul.f32 %v5701, 1.442695
      %v5792 = vpow.pop %v5791
      %v5793 = vmul.f32 %v5702, 1.442695
      %v5794 = vpow.pop %v5793
      %v5795 = vmul.f32 %v5703, 1.442695
      %v5796 = vpow.pop %v5795
      %v5797 = vmul.f32 %v5704, 1.442695
      %v5798 = vpow.pop %v5797
      %v5799 = vmul.f32 %v5705, 1.442695
      %v5800 = vpow.pop %v5799
      %v5801 = vmul.f32 %v5706, 1.442695
      %v5802 = vpow.pop %v5801
      %v5803 = vadd.f32 %v5708, %v5710
      %v5804 = vadd.f32 %v5803, %v5712
      %5805 = vadd.xlane.f32.xlu0 %v5804
      %v5806 = vpop.xlane.xlu0 %5805
      %v5807 = vadd.f32 %v5714, %v5716
      %v5808 = vadd.f32 %v5807, %v5718
      %5809 = vadd.xlane.f32.xlu0 %v5808
      %v5810 = vpop.xlane.xlu0 %5809
      %v5811 = vadd.f32 %v5720, %v5722
      %v5812 = vadd.f32 %v5811, %v5724
      %5813 = vadd.xlane.f32.xlu0 %v5812
      %v5814 = vpop.xlane.xlu0 %5813
      %v5815 = vadd.f32 %v5726, %v5728
      %v5816 = vadd.f32 %v5815, %v5730
      %5817 = vadd.xlane.f32.xlu0 %v5816
      %v5818 = vpop.xlane.xlu0 %5817
      %v5819 = vadd.f32 %v5732, %v5734
      %v5820 = vadd.f32 %v5819, %v5736
      %5821 = vadd.xlane.f32.xlu0 %v5820
      %v5822 = vpop.xlane.xlu0 %5821
      %v5823 = vadd.f32 %v5738, %v5740
      %v5824 = vadd.f32 %v5823, %v5742
      %5825 = vadd.xlane.f32.xlu0 %v5824
      %v5826 = vpop.xlane.xlu0 %5825
      %v5827 = vadd.f32 %v5744, %v5746
      %v5828 = vadd.f32 %v5827, %v5748
      %5829 = vadd.xlane.f32.xlu0 %v5828
      %v5830 = vpop.xlane.xlu0 %5829
      %v5831 = vadd.f32 %v5750, %v5752
      %v5832 = vadd.f32 %v5831, %v5754
      %5833 = vadd.xlane.f32.xlu0 %v5832
      %v5834 = vpop.xlane.xlu0 %5833
      %v5835 = vadd.f32 %v5756, %v5758
      %v5836 = vadd.f32 %v5835, %v5760
      %5837 = vadd.xlane.f32.xlu0 %v5836
      %v5838 = vpop.xlane.xlu0 %5837
      %v5839 = vadd.f32 %v5762, %v5764
      %v5840 = vadd.f32 %v5839, %v5766
      %5841 = vadd.xlane.f32.xlu0 %v5840
      %v5842 = vpop.xlane.xlu0 %5841
      %v5843 = vadd.f32 %v5768, %v5770
      %v5844 = vadd.f32 %v5843, %v5772
      %5845 = vadd.xlane.f32.xlu0 %v5844
      %v5846 = vpop.xlane.xlu0 %5845
      %v5847 = vadd.f32 %v5774, %v5776
      %v5848 = vadd.f32 %v5847, %v5778
      %5849 = vadd.xlane.f32.xlu0 %v5848
      %v5850 = vpop.xlane.xlu0 %5849
      %v5851 = vadd.f32 %v5780, %v5782
      %v5852 = vadd.f32 %v5851, %v5784
      %5853 = vadd.xlane.f32.xlu0 %v5852
      %v5854 = vpop.xlane.xlu0 %5853
      %v5855 = vadd.f32 %v5786, %v5788
      %v5856 = vadd.f32 %v5855, %v5790
      %5857 = vadd.xlane.f32.xlu0 %v5856
      %v5858 = vpop.xlane.xlu0 %5857
      %v5859 = vadd.f32 %v5792, %v5794
      %v5860 = vadd.f32 %v5859, %v5796
      %5861 = vadd.xlane.f32.xlu0 %v5860
      %v5862 = vpop.xlane.xlu0 %5861
      %v5863 = vadd.f32 %v5798, %v5800
      %v5864 = vadd.f32 %v5863, %v5802
      %5865 = vadd.xlane.f32.xlu0 %v5864
      %v5866 = vpop.xlane.xlu0 %5865
      %5867 = vrot.lane.b32.xlu0 %v916, 72
      %v5868 = vpop.permute.xlu0 %5867
      %5869 = vrot.lane.b32.xlu0 %v917, 72
      %v5870 = vpop.permute.xlu0 %5869
      %5871 = vrot.lane.b32.xlu0 %v918, 72
      %v5872 = vpop.permute.xlu0 %5871
      %5873 = vrot.lane.b32.xlu0 %v919, 72
      %v5874 = vpop.permute.xlu0 %5873
      %5875 = vrot.lane.b32.xlu0 %v920, 72
      %v5876 = vpop.permute.xlu0 %5875
      %5877 = vrot.lane.b32.xlu0 %v921, 72
      %v5878 = vpop.permute.xlu0 %5877
      %5879 = vrot.lane.b32.xlu0 %v922, 72
      %v5880 = vpop.permute.xlu0 %5879
      %5881 = vrot.lane.b32.xlu0 %v923, 72
      %v5882 = vpop.permute.xlu0 %5881
      %5883 = vrot.lane.b32.xlu0 %v924, 72
      %v5884 = vpop.permute.xlu0 %5883
      %5885 = vrot.lane.b32.xlu0 %v925, 72
      %v5886 = vpop.permute.xlu0 %5885
      %5887 = vrot.lane.b32.xlu0 %v926, 72
      %v5888 = vpop.permute.xlu0 %5887
      %5889 = vrot.lane.b32.xlu0 %v927, 72
      %v5890 = vpop.permute.xlu0 %5889
      %5891 = vrot.lane.b32.xlu0 %v928, 72
      %v5892 = vpop.permute.xlu0 %5891
      %5893 = vrot.lane.b32.xlu0 %v929, 72
      %v5894 = vpop.permute.xlu0 %5893
      %5895 = vrot.lane.b32.xlu0 %v930, 72
      %v5896 = vpop.permute.xlu0 %5895
      %5897 = vrot.lane.b32.xlu0 %v931, 72
      %v5898 = vpop.permute.xlu0 %5897
      %5899 = vrot.lane.b32.xlu0 %v932, 72
      %v5900 = vpop.permute.xlu0 %5899
      %5901 = vrot.lane.b32.xlu0 %v933, 72
      %v5902 = vpop.permute.xlu0 %5901
      %5903 = vrot.lane.b32.xlu0 %v934, 72
      %v5904 = vpop.permute.xlu0 %5903
      %5905 = vrot.lane.b32.xlu0 %v935, 72
      %v5906 = vpop.permute.xlu0 %5905
      %5907 = vrot.lane.b32.xlu0 %v936, 72
      %v5908 = vpop.permute.xlu0 %5907
      %5909 = vrot.lane.b32.xlu0 %v937, 72
      %v5910 = vpop.permute.xlu0 %5909
      %5911 = vrot.lane.b32.xlu0 %v938, 72
      %v5912 = vpop.permute.xlu0 %5911
      %5913 = vrot.lane.b32.xlu0 %v939, 72
      %v5914 = vpop.permute.xlu0 %5913
      %5915 = vrot.lane.b32.xlu0 %v940, 72
      %v5916 = vpop.permute.xlu0 %5915
      %5917 = vrot.lane.b32.xlu0 %v941, 72
      %v5918 = vpop.permute.xlu0 %5917
      %5919 = vrot.lane.b32.xlu0 %v942, 72
      %v5920 = vpop.permute.xlu0 %5919
      %5921 = vrot.lane.b32.xlu0 %v943, 72
      %v5922 = vpop.permute.xlu0 %5921
      %5923 = vrot.lane.b32.xlu0 %v944, 72
      %v5924 = vpop.permute.xlu0 %5923
      %5925 = vrot.lane.b32.xlu0 %v945, 72
      %v5926 = vpop.permute.xlu0 %5925
      %5927 = vrot.lane.b32.xlu0 %v946, 72
      %v5928 = vpop.permute.xlu0 %5927
      %5929 = vrot.lane.b32.xlu0 %v947, 72
      %v5930 = vpop.permute.xlu0 %5929
      %5931 = vrot.lane.b32.xlu0 %v948, 72
      %v5932 = vpop.permute.xlu0 %5931
      %5933 = vrot.lane.b32.xlu0 %v949, 72
      %v5934 = vpop.permute.xlu0 %5933
      %5935 = vrot.lane.b32.xlu0 %v950, 72
      %v5936 = vpop.permute.xlu0 %5935
      %5937 = vrot.lane.b32.xlu0 %v951, 72
      %v5938 = vpop.permute.xlu0 %5937
      %5939 = vrot.lane.b32.xlu0 %v952, 72
      %v5940 = vpop.permute.xlu0 %5939
      %5941 = vrot.lane.b32.xlu0 %v953, 72
      %v5942 = vpop.permute.xlu0 %5941
      %5943 = vrot.lane.b32.xlu0 %v954, 72
      %v5944 = vpop.permute.xlu0 %5943
      %5945 = vrot.lane.b32.xlu0 %v955, 72
      %v5946 = vpop.permute.xlu0 %5945
      %5947 = vrot.lane.b32.xlu0 %v956, 72
      %v5948 = vpop.permute.xlu0 %5947
      %5949 = vrot.lane.b32.xlu0 %v957, 72
      %v5950 = vpop.permute.xlu0 %5949
      %5951 = vrot.lane.b32.xlu0 %v958, 72
      %v5952 = vpop.permute.xlu0 %5951
      %5953 = vrot.lane.b32.xlu0 %v959, 72
      %v5954 = vpop.permute.xlu0 %5953
      %5955 = vrot.lane.b32.xlu0 %v960, 72
      %v5956 = vpop.permute.xlu0 %5955
      %5957 = vrot.lane.b32.xlu0 %v961, 72
      %v5958 = vpop.permute.xlu0 %5957
      %5959 = vrot.lane.b32.xlu0 %v962, 72
      %v5960 = vpop.permute.xlu0 %5959
      %5961 = vrot.lane.b32.xlu0 %v963, 72
      %v5962 = vpop.permute.xlu0 %5961
      %6011 = vmatprep.subr.mxu0 0.0
      %6012 = vmatpush1.msra.mxu0 %v5898
      %6013 = vmatprep.subr.mxu0 0.0
      %6014 = vmatpush1.msra.mxu0 %v5896
      %6015 = vmatprep.subr.mxu0 0.0
      %6016 = vmatpush1.msra.mxu0 %v5894
      %6017 = vmatprep.subr.mxu0 0.0
      %6018 = vmatpush1.msra.mxu0 %v5892
      %6019 = vmatprep.subr.mxu0 0.0
      %6020 = vmatpush1.msra.mxu0 %v5890
      %6021 = vmatprep.subr.mxu0 0.0
      %6022 = vmatpush1.msra.mxu0 %v5888
      %6023 = vmatprep.subr.mxu0 0.0
      %6024 = vmatpush1.msra.mxu0 %v5886
      %6025 = vmatprep.subr.mxu0 0.0
      %6026 = vmatpush1.msra.mxu0 %v5884
      %6027 = vmatprep.subr.mxu0 0.0
      %6028 = vmatpush1.msra.mxu0 %v5882
      %6029 = vmatprep.subr.mxu0 0.0
      %6030 = vmatpush1.msra.mxu0 %v5880
      %6031 = vmatprep.subr.mxu0 0.0
      %6032 = vmatpush1.msra.mxu0 %v5878
      %6033 = vmatprep.subr.mxu0 0.0
      %6034 = vmatpush1.msra.mxu0 %v5876
      %6035 = vmatprep.subr.mxu0 0.0
      %6036 = vmatpush1.msra.mxu0 %v5874
      %6037 = vmatprep.subr.mxu0 0.0
      %6038 = vmatpush1.msra.mxu0 %v5872
      %6039 = vmatprep.subr.mxu0 0.0
      %6040 = vmatpush1.msra.mxu0 %v5870
      %6041 = vmatprep.subr.mxu0 0.0
      %6042 = vmatpush1.msra.mxu0 %v5868
      %6043 = vmatprep.subr.mxu0 0.0
      %6044 = vmatpush2.msra.mxu0 %v5930
      %6045 = vmatprep.subr.mxu0 0.0
      %6046 = vmatpush2.msra.mxu0 %v5928
      %6047 = vmatprep.subr.mxu0 0.0
      %6048 = vmatpush2.msra.mxu0 %v5926
      %6049 = vmatprep.subr.mxu0 0.0
      %6050 = vmatpush2.msra.mxu0 %v5924
      %6051 = vmatprep.subr.mxu0 0.0
      %6052 = vmatpush2.msra.mxu0 %v5922
      %6053 = vmatprep.subr.mxu0 0.0
      %6054 = vmatpush2.msra.mxu0 %v5920
      %6055 = vmatprep.subr.mxu0 0.0
      %6056 = vmatpush2.msra.mxu0 %v5918
      %6057 = vmatprep.subr.mxu0 0.0
      %6058 = vmatpush2.msra.mxu0 %v5916
      %6059 = vmatprep.subr.mxu0 0.0
      %6060 = vmatpush2.msra.mxu0 %v5914
      %6061 = vmatprep.subr.mxu0 0.0
      %6062 = vmatpush2.msra.mxu0 %v5912
      %6063 = vmatprep.subr.mxu0 0.0
      %6064 = vmatpush2.msra.mxu0 %v5910
      %6065 = vmatprep.subr.mxu0 0.0
      %6066 = vmatpush2.msra.mxu0 %v5908
      %6067 = vmatprep.subr.mxu0 0.0
      %6068 = vmatpush2.msra.mxu0 %v5906
      %6069 = vmatprep.subr.mxu0 0.0
      %6070 = vmatpush2.msra.mxu0 %v5904
      %6071 = vmatprep.subr.mxu0 0.0
      %6072 = vmatpush2.msra.mxu0 %v5902
      %6073 = vmatprep.subr.mxu0 0.0
      %6074 = vmatpush2.msra.mxu0 %v5900
      %6075 = vmatprep.mubr.f32.mxu0 %v5710
      %6076 = vmatmul.mubr.f32.gmra.mxu0 %v5708
      %v6077 = vpop.f32.mrf.mxu0
      %v6078 = vadd.f32 0.0, %v6077
      %v6079 = vpop.f32.mrf.mxu0
      %6080 = vmatprep.mubr.f32.mxu0 %v5716
      %6081 = vmatmul.mubr.f32.gmra.mxu0 %v5714
      %v6082 = vpop.f32.mrf.mxu0
      %v6083 = vadd.f32 0.0, %v6082
      %v6084 = vpop.f32.mrf.mxu0
      %6085 = vmatprep.mubr.f32.mxu0 %v5722
      %6086 = vmatmul.mubr.f32.gmra.mxu0 %v5720
      %v6087 = vpop.f32.mrf.mxu0
      %v6088 = vadd.f32 0.0, %v6087
      %v6089 = vpop.f32.mrf.mxu0
      %6090 = vmatprep.mubr.f32.mxu0 %v5728
      %6091 = vmatmul.mubr.f32.gmra.mxu0 %v5726
      %v6092 = vpop.f32.mrf.mxu0
      %v6093 = vadd.f32 0.0, %v6092
      %v6094 = vpop.f32.mrf.mxu0
      %6095 = vmatprep.mubr.f32.mxu0 %v5734
      %6096 = vmatmul.mubr.f32.gmra.mxu0 %v5732
      %v6097 = vpop.f32.mrf.mxu0
      %v6098 = vadd.f32 0.0, %v6097
      %v6099 = vpop.f32.mrf.mxu0
      %6100 = vmatprep.mubr.f32.mxu0 %v5740
      %6101 = vmatmul.mubr.f32.gmra.mxu0 %v5738
      %v6102 = vpop.f32.mrf.mxu0
      %v6103 = vadd.f32 0.0, %v6102
      %v6104 = vpop.f32.mrf.mxu0
      %6105 = vmatprep.mubr.f32.mxu0 %v5746
      %6106 = vmatmul.mubr.f32.gmra.mxu0 %v5744
      %v6107 = vpop.f32.mrf.mxu0
      %v6108 = vadd.f32 0.0, %v6107
      %v6109 = vpop.f32.mrf.mxu0
      %6110 = vmatprep.mubr.f32.mxu0 %v5752
      %6111 = vmatmul.mubr.f32.gmra.mxu0 %v5750
      %v6112 = vpop.f32.mrf.mxu0
      %v6113 = vadd.f32 0.0, %v6112
      %v6114 = vpop.f32.mrf.mxu0
      %6115 = vmatprep.mubr.f32.mxu0 %v5758
      %6116 = vmatmul.mubr.f32.gmra.mxu0 %v5756
      %v6117 = vpop.f32.mrf.mxu0
      %v6118 = vadd.f32 0.0, %v6117
      %v6119 = vpop.f32.mrf.mxu0
      %6120 = vmatprep.mubr.f32.mxu0 %v5764
      %6121 = vmatmul.mubr.f32.gmra.mxu0 %v5762
      %v6122 = vpop.f32.mrf.mxu0
      %v6123 = vadd.f32 0.0, %v6122
      %v6124 = vpop.f32.mrf.mxu0
      %6125 = vmatprep.mubr.f32.mxu0 %v5770
      %6126 = vmatmul.mubr.f32.gmra.mxu0 %v5768
      %v6127 = vpop.f32.mrf.mxu0
      %v6128 = vadd.f32 0.0, %v6127
      %v6129 = vpop.f32.mrf.mxu0
      %6130 = vmatprep.mubr.f32.mxu0 %v5776
      %6131 = vmatmul.mubr.f32.gmra.mxu0 %v5774
      %v6132 = vpop.f32.mrf.mxu0
      %v6133 = vadd.f32 0.0, %v6132
      %v6134 = vpop.f32.mrf.mxu0
      %6135 = vmatprep.mubr.f32.mxu0 %v5782
      %6136 = vmatmul.mubr.f32.gmra.mxu0 %v5780
      %v6137 = vpop.f32.mrf.mxu0
      %v6138 = vadd.f32 0.0, %v6137
      %v6139 = vpop.f32.mrf.mxu0
      %6140 = vmatprep.mubr.f32.mxu0 %v5788
      %6141 = vmatmul.mubr.f32.gmra.mxu0 %v5786
      %v6142 = vpop.f32.mrf.mxu0
      %v6143 = vadd.f32 0.0, %v6142
      %v6144 = vpop.f32.mrf.mxu0
      %6145 = vmatprep.mubr.f32.mxu0 %v5794
      %6146 = vmatmul.mubr.f32.gmra.mxu0 %v5792
      %v6147 = vpop.f32.mrf.mxu0
      %v6148 = vadd.f32 0.0, %v6147
      %v6149 = vpop.f32.mrf.mxu0
      %6150 = vmatprep.mubr.f32.mxu0 %v5800
      %6151 = vmatmul.mubr.f32.gmra.mxu0 %v5798
      %v6152 = vpop.f32.mrf.mxu0
      %v6153 = vadd.f32 0.0, %v6152
      %v6154 = vpop.f32.mrf.mxu0
      %6155 = vdwg.mxu0
      %6156 = vmatprep.subr.mxu0 0.0
      %6157 = vmatpush1.msra.mxu0 %v5962
      %6158 = vmatprep.subr.mxu0 0.0
      %6159 = vmatpush1.msra.mxu0 %v5960
      %6160 = vmatprep.subr.mxu0 0.0
      %6161 = vmatpush1.msra.mxu0 %v5958
      %6162 = vmatprep.subr.mxu0 0.0
      %6163 = vmatpush1.msra.mxu0 %v5956
      %6164 = vmatprep.subr.mxu0 0.0
      %6165 = vmatpush1.msra.mxu0 %v5954
      %6166 = vmatprep.subr.mxu0 0.0
      %6167 = vmatpush1.msra.mxu0 %v5952
      %6168 = vmatprep.subr.mxu0 0.0
      %6169 = vmatpush1.msra.mxu0 %v5950
      %6170 = vmatprep.subr.mxu0 0.0
      %6171 = vmatpush1.msra.mxu0 %v5948
      %6172 = vmatprep.subr.mxu0 0.0
      %6173 = vmatpush1.msra.mxu0 %v5946
      %6174 = vmatprep.subr.mxu0 0.0
      %6175 = vmatpush1.msra.mxu0 %v5944
      %6176 = vmatprep.subr.mxu0 0.0
      %6177 = vmatpush1.msra.mxu0 %v5942
      %6178 = vmatprep.subr.mxu0 0.0
      %6179 = vmatpush1.msra.mxu0 %v5940
      %6180 = vmatprep.subr.mxu0 0.0
      %6181 = vmatpush1.msra.mxu0 %v5938
      %6182 = vmatprep.subr.mxu0 0.0
      %6183 = vmatpush1.msra.mxu0 %v5936
      %6184 = vmatprep.subr.mxu0 0.0
      %6185 = vmatpush1.msra.mxu0 %v5934
      %6186 = vmatprep.subr.mxu0 0.0
      %6187 = vmatpush1.msra.mxu0 %v5932
      %6188 = vmatprep.subr.mxu0 0.0
      %6189 = vmatpush2.msra.mxu0 0.0
      %6190 = vmatprep.subr.mxu0 0.0
      %6191 = vmatpush2.msra.mxu0 0.0
      %6192 = vmatprep.subr.mxu0 0.0
      %6193 = vmatpush2.msra.mxu0 0.0
      %6194 = vmatprep.subr.mxu0 0.0
      %6195 = vmatpush2.msra.mxu0 0.0
      %6196 = vmatprep.subr.mxu0 0.0
      %6197 = vmatpush2.msra.mxu0 0.0
      %6198 = vmatprep.subr.mxu0 0.0
      %6199 = vmatpush2.msra.mxu0 0.0
      %6200 = vmatprep.subr.mxu0 0.0
      %6201 = vmatpush2.msra.mxu0 0.0
      %6202 = vmatprep.subr.mxu0 0.0
      %6203 = vmatpush2.msra.mxu0 0.0
      %6204 = vmatprep.subr.mxu0 0.0
      %6205 = vmatpush2.msra.mxu0 0.0
      %6206 = vmatprep.subr.mxu0 0.0
      %6207 = vmatpush2.msra.mxu0 0.0
      %6208 = vmatprep.subr.mxu0 0.0
      %6209 = vmatpush2.msra.mxu0 0.0
      %6210 = vmatprep.subr.mxu0 0.0
      %6211 = vmatpush2.msra.mxu0 0.0
      %6212 = vmatprep.subr.mxu0 0.0
      %6213 = vmatpush2.msra.mxu0 0.0
      %6214 = vmatprep.subr.mxu0 0.0
      %6215 = vmatpush2.msra.mxu0 0.0
      %6216 = vmatprep.subr.mxu0 0.0
      %6217 = vmatpush2.msra.mxu0 0.0
      %6218 = vmatprep.subr.mxu0 0.0
      %6219 = vmatpush2.msra.mxu0 0.0
      %6220 = vmatprep.mubr.f32.mxu0 0.0
      %6221 = vmatmul.mubr.f32.gmra.mxu0 %v5712
      %v6222 = vpop.f32.mrf.mxu0
      %v6223 = vadd.f32 %v6078, %v6222
      %v6224 = vpop.f32.mrf.mxu0
      %6225 = vmatprep.mubr.f32.mxu0 0.0
      %6226 = vmatmul.mubr.f32.gmra.mxu0 %v5718
      %v6227 = vpop.f32.mrf.mxu0
      %v6228 = vadd.f32 %v6083, %v6227
      %v6229 = vpop.f32.mrf.mxu0
      %6230 = vmatprep.mubr.f32.mxu0 0.0
      %6231 = vmatmul.mubr.f32.gmra.mxu0 %v5724
      %v6232 = vpop.f32.mrf.mxu0
      %v6233 = vadd.f32 %v6088, %v6232
      %v6234 = vpop.f32.mrf.mxu0
      %6235 = vmatprep.mubr.f32.mxu0 0.0
      %6236 = vmatmul.mubr.f32.gmra.mxu0 %v5730
      %v6237 = vpop.f32.mrf.mxu0
      %v6238 = vadd.f32 %v6093, %v6237
      %v6239 = vpop.f32.mrf.mxu0
      %6240 = vmatprep.mubr.f32.mxu0 0.0
      %6241 = vmatmul.mubr.f32.gmra.mxu0 %v5736
      %v6242 = vpop.f32.mrf.mxu0
      %v6243 = vadd.f32 %v6098, %v6242
      %v6244 = vpop.f32.mrf.mxu0
      %6245 = vmatprep.mubr.f32.mxu0 0.0
      %6246 = vmatmul.mubr.f32.gmra.mxu0 %v5742
      %v6247 = vpop.f32.mrf.mxu0
      %v6248 = vadd.f32 %v6103, %v6247
      %v6249 = vpop.f32.mrf.mxu0
      %6250 = vmatprep.mubr.f32.mxu0 0.0
      %6251 = vmatmul.mubr.f32.gmra.mxu0 %v5748
      %v6252 = vpop.f32.mrf.mxu0
      %v6253 = vadd.f32 %v6108, %v6252
      %v6254 = vpop.f32.mrf.mxu0
      %6255 = vmatprep.mubr.f32.mxu0 0.0
      %6256 = vmatmul.mubr.f32.gmra.mxu0 %v5754
      %v6257 = vpop.f32.mrf.mxu0
      %v6258 = vadd.f32 %v6113, %v6257
      %v6259 = vpop.f32.mrf.mxu0
      %6260 = vmatprep.mubr.f32.mxu0 0.0
      %6261 = vmatmul.mubr.f32.gmra.mxu0 %v5760
      %v6262 = vpop.f32.mrf.mxu0
      %v6263 = vadd.f32 %v6118, %v6262
      %v6264 = vpop.f32.mrf.mxu0
      %6265 = vmatprep.mubr.f32.mxu0 0.0
      %6266 = vmatmul.mubr.f32.gmra.mxu0 %v5766
      %v6267 = vpop.f32.mrf.mxu0
      %v6268 = vadd.f32 %v6123, %v6267
      %v6269 = vpop.f32.mrf.mxu0
      %6270 = vmatprep.mubr.f32.mxu0 0.0
      %6271 = vmatmul.mubr.f32.gmra.mxu0 %v5772
      %v6272 = vpop.f32.mrf.mxu0
      %v6273 = vadd.f32 %v6128, %v6272
      %v6274 = vpop.f32.mrf.mxu0
      %6275 = vmatprep.mubr.f32.mxu0 0.0
      %6276 = vmatmul.mubr.f32.gmra.mxu0 %v5778
      %v6277 = vpop.f32.mrf.mxu0
      %v6278 = vadd.f32 %v6133, %v6277
      %v6279 = vpop.f32.mrf.mxu0
      %6280 = vmatprep.mubr.f32.mxu0 0.0
      %6281 = vmatmul.mubr.f32.gmra.mxu0 %v5784
      %v6282 = vpop.f32.mrf.mxu0
      %v6283 = vadd.f32 %v6138, %v6282
      %v6284 = vpop.f32.mrf.mxu0
      %6285 = vmatprep.mubr.f32.mxu0 0.0
      %6286 = vmatmul.mubr.f32.gmra.mxu0 %v5790
      %v6287 = vpop.f32.mrf.mxu0
      %v6288 = vadd.f32 %v6143, %v6287
      %v6289 = vpop.f32.mrf.mxu0
      %6290 = vmatprep.mubr.f32.mxu0 0.0
      %6291 = vmatmul.mubr.f32.gmra.mxu0 %v5796
      %v6292 = vpop.f32.mrf.mxu0
      %v6293 = vadd.f32 %v6148, %v6292
      %v6294 = vpop.f32.mrf.mxu0
      %6295 = vmatprep.mubr.f32.mxu0 0.0
      %6296 = vmatmul.mubr.f32.gmra.mxu0 %v5802
      %v6297 = vpop.f32.mrf.mxu0
      %v6298 = vadd.f32 %v6153, %v6297
      %v6299 = vpop.f32.mrf.mxu0
      %6300 = vdwg.mxu0
      %v6301 = vrcp.pop %v5806
      %v6302 = vrcp.pop %v5810
      %v6303 = vrcp.pop %v5814
      %v6304 = vrcp.pop %v5818
      %v6305 = vrcp.pop %v5822
      %v6306 = vrcp.pop %v5826
      %v6307 = vrcp.pop %v5830
      %v6308 = vrcp.pop %v5834
      %v6309 = vrcp.pop %v5838
      %v6310 = vrcp.pop %v5842
      %v6311 = vrcp.pop %v5846
      %v6312 = vrcp.pop %v5850
      %v6313 = vrcp.pop %v5854
      %v6314 = vrcp.pop %v5858
      %v6315 = vrcp.pop %v5862
      %v6316 = vrcp.pop %v5866
      %v6317 = vmul.f32 %v6223, %v6301
      %v6318 = vmul.f32 %v6228, %v6302
      %v6319 = vmul.f32 %v6233, %v6303
      %v6320 = vmul.f32 %v6238, %v6304
      %v6321 = vmul.f32 %v6243, %v6305
      %v6322 = vmul.f32 %v6248, %v6306
      %v6323 = vmul.f32 %v6253, %v6307
      %v6324 = vmul.f32 %v6258, %v6308
      %v6325 = vmul.f32 %v6263, %v6309
      %v6326 = vmul.f32 %v6268, %v6310
      %v6327 = vmul.f32 %v6273, %v6311
      %v6328 = vmul.f32 %v6278, %v6312
      %v6329 = vmul.f32 %v6283, %v6313
      %v6330 = vmul.f32 %v6288, %v6314
      %v6331 = vmul.f32 %v6293, %v6315
      %v6332 = vmul.f32 %v6298, %v6316
      %6349 = vrot.lane.b32.xlu0 %v3609, 8
      %v6350 = vpop.permute.xlu0 %6349
      %6351 = vrot.lane.b32.xlu0 %v3610, 8
      %v6352 = vpop.permute.xlu0 %6351
      %6353 = vrot.lane.b32.xlu0 %v3611, 8
      %v6354 = vpop.permute.xlu0 %6353
      %6355 = vrot.lane.b32.xlu0 %v3612, 8
      %v6356 = vpop.permute.xlu0 %6355
      %6357 = vrot.lane.b32.xlu0 %v3613, 8
      %v6358 = vpop.permute.xlu0 %6357
      %6359 = vrot.lane.b32.xlu0 %v3614, 8
      %v6360 = vpop.permute.xlu0 %6359
      %6361 = vrot.lane.b32.xlu0 %v3615, 8
      %v6362 = vpop.permute.xlu0 %6361
      %6363 = vrot.lane.b32.xlu0 %v3616, 8
      %v6364 = vpop.permute.xlu0 %6363
      %6365 = vrot.lane.b32.xlu0 %v3617, 8
      %v6366 = vpop.permute.xlu0 %6365
      %6367 = vrot.lane.b32.xlu0 %v3618, 8
      %v6368 = vpop.permute.xlu0 %6367
      %6369 = vrot.lane.b32.xlu0 %v3619, 8
      %v6370 = vpop.permute.xlu0 %6369
      %6371 = vrot.lane.b32.xlu0 %v3620, 8
      %v6372 = vpop.permute.xlu0 %6371
      %6373 = vrot.lane.b32.xlu0 %v3621, 8
      %v6374 = vpop.permute.xlu0 %6373
      %6375 = vrot.lane.b32.xlu0 %v3622, 8
      %v6376 = vpop.permute.xlu0 %6375
      %6377 = vrot.lane.b32.xlu0 %v3623, 8
      %v6378 = vpop.permute.xlu0 %6377
      %6379 = vrot.lane.b32.xlu0 %v3624, 8
      %v6380 = vpop.permute.xlu0 %6379
      %6413 = vrot.lane.b32.xlu0 %v4963, 16
      %v6414 = vpop.permute.xlu0 %6413
      %6415 = vrot.lane.b32.xlu0 %v4964, 16
      %v6416 = vpop.permute.xlu0 %6415
      %6417 = vrot.lane.b32.xlu0 %v4965, 16
      %v6418 = vpop.permute.xlu0 %6417
      %6419 = vrot.lane.b32.xlu0 %v4966, 16
      %v6420 = vpop.permute.xlu0 %6419
      %6421 = vrot.lane.b32.xlu0 %v4967, 16
      %v6422 = vpop.permute.xlu0 %6421
      %6423 = vrot.lane.b32.xlu0 %v4968, 16
      %v6424 = vpop.permute.xlu0 %6423
      %6425 = vrot.lane.b32.xlu0 %v4969, 16
      %v6426 = vpop.permute.xlu0 %6425
      %6427 = vrot.lane.b32.xlu0 %v4970, 16
      %v6428 = vpop.permute.xlu0 %6427
      %6429 = vrot.lane.b32.xlu0 %v4971, 16
      %v6430 = vpop.permute.xlu0 %6429
      %6431 = vrot.lane.b32.xlu0 %v4972, 16
      %v6432 = vpop.permute.xlu0 %6431
      %6433 = vrot.lane.b32.xlu0 %v4973, 16
      %v6434 = vpop.permute.xlu0 %6433
      %6435 = vrot.lane.b32.xlu0 %v4974, 16
      %v6436 = vpop.permute.xlu0 %6435
      %6437 = vrot.lane.b32.xlu0 %v4975, 16
      %v6438 = vpop.permute.xlu0 %6437
      %6439 = vrot.lane.b32.xlu0 %v4976, 16
      %v6440 = vpop.permute.xlu0 %6439
      %6441 = vrot.lane.b32.xlu0 %v4977, 16
      %v6442 = vpop.permute.xlu0 %6441
      %6443 = vrot.lane.b32.xlu0 %v4978, 16
      %v6444 = vpop.permute.xlu0 %6443
      %6477 = vrot.lane.b32.xlu0 %v6317, 24
      %v6478 = vpop.permute.xlu0 %6477
      %6479 = vrot.lane.b32.xlu0 %v6318, 24
      %v6480 = vpop.permute.xlu0 %6479
      %6481 = vrot.lane.b32.xlu0 %v6319, 24
      %v6482 = vpop.permute.xlu0 %6481
      %6483 = vrot.lane.b32.xlu0 %v6320, 24
      %v6484 = vpop.permute.xlu0 %6483
      %6485 = vrot.lane.b32.xlu0 %v6321, 24
      %v6486 = vpop.permute.xlu0 %6485
      %6487 = vrot.lane.b32.xlu0 %v6322, 24
      %v6488 = vpop.permute.xlu0 %6487
      %6489 = vrot.lane.b32.xlu0 %v6323, 24
      %v6490 = vpop.permute.xlu0 %6489
      %6491 = vrot.lane.b32.xlu0 %v6324, 24
      %v6492 = vpop.permute.xlu0 %6491
      %6493 = vrot.lane.b32.xlu0 %v6325, 24
      %v6494 = vpop.permute.xlu0 %6493
      %6495 = vrot.lane.b32.xlu0 %v6326, 24
      %v6496 = vpop.permute.xlu0 %6495
      %6497 = vrot.lane.b32.xlu0 %v6327, 24
      %v6498 = vpop.permute.xlu0 %6497
      %6499 = vrot.lane.b32.xlu0 %v6328, 24
      %v6500 = vpop.permute.xlu0 %6499
      %6501 = vrot.lane.b32.xlu0 %v6329, 24
      %v6502 = vpop.permute.xlu0 %6501
      %6503 = vrot.lane.b32.xlu0 %v6330, 24
      %v6504 = vpop.permute.xlu0 %6503
      %6505 = vrot.lane.b32.xlu0 %v6331, 24
      %v6506 = vpop.permute.xlu0 %6505
      %6507 = vrot.lane.b32.xlu0 %v6332, 24
      %v6508 = vpop.permute.xlu0 %6507
      %v6525 = vsel %vm1034, %v2255, %v6350
      %v6526 = vsel %vm1034, %v2256, %v6352
      %v6527 = vsel %vm1034, %v2257, %v6354
      %v6528 = vsel %vm1034, %v2258, %v6356
      %v6529 = vsel %vm1034, %v2259, %v6358
      %v6530 = vsel %vm1034, %v2260, %v6360
      %v6531 = vsel %vm1034, %v2261, %v6362
      %v6532 = vsel %vm1034, %v2262, %v6364
      %v6533 = vsel %vm1034, %v2263, %v6366
      %v6534 = vsel %vm1034, %v2264, %v6368
      %v6535 = vsel %vm1034, %v2265, %v6370
      %v6536 = vsel %vm1034, %v2266, %v6372
      %v6537 = vsel %vm1034, %v2267, %v6374
      %v6538 = vsel %vm1034, %v2268, %v6376
      %v6539 = vsel %vm1034, %v2269, %v6378
      %v6540 = vsel %vm1034, %v2270, %v6380
      %vm6541 = vcmask 130048
      %v6542 = vsel %vm6541, %v6525, %v6414
      %v6543 = vsel %vm6541, %v6526, %v6416
      %v6544 = vsel %vm6541, %v6527, %v6418
      %v6545 = vsel %vm6541, %v6528, %v6420
      %v6546 = vsel %vm6541, %v6529, %v6422
      %v6547 = vsel %vm6541, %v6530, %v6424
      %v6548 = vsel %vm6541, %v6531, %v6426
      %v6549 = vsel %vm6541, %v6532, %v6428
      %v6550 = vsel %vm6541, %v6533, %v6430
      %v6551 = vsel %vm6541, %v6534, %v6432
      %v6552 = vsel %vm6541, %v6535, %v6434
      %v6553 = vsel %vm6541, %v6536, %v6436
      %v6554 = vsel %vm6541, %v6537, %v6438
      %v6555 = vsel %vm6541, %v6538, %v6440
      %v6556 = vsel %vm6541, %v6539, %v6442
      %v6557 = vsel %vm6541, %v6540, %v6444
      %vm6558 = vcmask 195584
      %v6559 = vsel %vm6558, %v6542, %v6478
      %v6560 = vsel %vm6558, %v6543, %v6480
      %v6561 = vsel %vm6558, %v6544, %v6482
      %v6562 = vsel %vm6558, %v6545, %v6484
      %v6563 = vsel %vm6558, %v6546, %v6486
      %v6564 = vsel %vm6558, %v6547, %v6488
      %v6565 = vsel %vm6558, %v6548, %v6490
      %v6566 = vsel %vm6558, %v6549, %v6492
      %v6567 = vsel %vm6558, %v6550, %v6494
      %v6568 = vsel %vm6558, %v6551, %v6496
      %v6569 = vsel %vm6558, %v6552, %v6498
      %v6570 = vsel %vm6558, %v6553, %v6500
      %v6571 = vsel %vm6558, %v6554, %v6502
      %v6572 = vsel %vm6558, %v6555, %v6504
      %v6573 = vsel %vm6558, %v6556, %v6506
      %v6574 = vsel %vm6558, %v6557, %v6508
      %v6575 = vld [vmem:[%s5] sm:$0xff]
      %v6576 = vld [vmem:[%s5 + $0x8] sm:$0xff]
      %v6577 = vld [vmem:[%s5 + $0x10] sm:$0xff]
      %v6578 = vld [vmem:[%s5 + $0x18] sm:$0xff]
      %v6579 = vld [vmem:[%s6] sm:$0x1]
      %v6581 = vlaneseq
      %v6582 = vshrl.u32 %v6581, 7
      %v6583 = vsub.s32 0, %v6582
      %v6584 = vrot.slane %v6579, %v6583
      %vm6586 = vcmask 261120
      %v6588 = vsel %vm6586, %v6559, 0
      %v6591 = vsel %vm6586, %v6560, 0
      %v6594 = vsel %vm6586, %v6561, 0
      %v6597 = vsel %vm6586, %v6562, 0
      %v6600 = vsel %vm6586, %v6563, 0
      %v6603 = vsel %vm6586, %v6564, 0
      %v6606 = vsel %vm6586, %v6565, 0
      %v6609 = vsel %vm6586, %v6566, 0
      %v6612 = vsel %vm6586, %v6567, 0
      %v6615 = vsel %vm6586, %v6568, 0
      %v6618 = vsel %vm6586, %v6569, 0
      %v6621 = vsel %vm6586, %v6570, 0
      %v6624 = vsel %vm6586, %v6571, 0
      %v6627 = vsel %vm6586, %v6572, 0
      %v6630 = vsel %vm6586, %v6573, 0
      %v6633 = vsel %vm6586, %v6574, 0
      %6635 = vmatprep.subr.mxu0 0.0
      %6636 = vmatpush1.msra.mxu0 0.0
      %6637 = vmatprep.subr.mxu0 0.0
      %6638 = vmatpush1.msra.mxu0 0.0
      %6639 = vmatprep.subr.mxu0 0.0
      %6640 = vmatpush1.msra.mxu0 0.0
      %6641 = vmatprep.subr.mxu0 0.0
      %6642 = vmatpush1.msra.mxu0 0.0
      %6643 = vmatprep.subr.mxu0 0.0
      %6644 = vmatpush1.msra.mxu0 0.0
      %6645 = vmatprep.subr.mxu0 0.0
      %6646 = vmatpush1.msra.mxu0 0.0
      %6647 = vmatprep.subr.mxu0 0.0
      %6648 = vmatpush1.msra.mxu0 0.0
      %6649 = vmatprep.subr.mxu0 0.0
      %6650 = vmatpush1.msra.mxu0 0.0
      %6651 = vmatprep.subr.mxu0 0.0
      %6652 = vmatpush1.msra.mxu0 0.0
      %6653 = vmatprep.subr.mxu0 0.0
      %6654 = vmatpush1.msra.mxu0 0.0
      %6655 = vmatprep.subr.mxu0 0.0
      %6656 = vmatpush1.msra.mxu0 0.0
      %6657 = vmatprep.subr.mxu0 0.0
      %6658 = vmatpush1.msra.mxu0 0.0
      %6659 = vmatprep.subr.mxu0 0.0
      %6660 = vmatpush1.msra.mxu0 %v6578
      %6661 = vmatprep.subr.mxu0 0.0
      %6662 = vmatpush1.msra.mxu0 %v6577
      %6663 = vmatprep.subr.mxu0 0.0
      %6664 = vmatpush1.msra.mxu0 %v6576
      %6665 = vmatprep.subr.mxu0 0.0
      %6666 = vmatpush1.msra.mxu0 %v6575
      %6667 = vmatprep.subr.mxu0 0.0
      %6668 = vmatpush2.msra.mxu0 0.0
      %6669 = vmatprep.subr.mxu0 0.0
      %6670 = vmatpush2.msra.mxu0 0.0
      %6671 = vmatprep.subr.mxu0 0.0
      %6672 = vmatpush2.msra.mxu0 0.0
      %6673 = vmatprep.subr.mxu0 0.0
      %6674 = vmatpush2.msra.mxu0 0.0
      %6675 = vmatprep.subr.mxu0 0.0
      %6676 = vmatpush2.msra.mxu0 0.0
      %6677 = vmatprep.subr.mxu0 0.0
      %6678 = vmatpush2.msra.mxu0 0.0
      %6679 = vmatprep.subr.mxu0 0.0
      %6680 = vmatpush2.msra.mxu0 0.0
      %6681 = vmatprep.subr.mxu0 0.0
      %6682 = vmatpush2.msra.mxu0 0.0
      %6683 = vmatprep.subr.mxu0 0.0
      %6684 = vmatpush2.msra.mxu0 0.0
      %6685 = vmatprep.subr.mxu0 0.0
      %6686 = vmatpush2.msra.mxu0 0.0
      %6687 = vmatprep.subr.mxu0 0.0
      %6688 = vmatpush2.msra.mxu0 0.0
      %6689 = vmatprep.subr.mxu0 0.0
      %6690 = vmatpush2.msra.mxu0 0.0
      %6691 = vmatprep.subr.mxu0 0.0
      %6692 = vmatpush2.msra.mxu0 0.0
      %6693 = vmatprep.subr.mxu0 0.0
      %6694 = vmatpush2.msra.mxu0 0.0
      %6695 = vmatprep.subr.mxu0 0.0
      %6696 = vmatpush2.msra.mxu0 0.0
      %6697 = vmatprep.subr.mxu0 0.0
      %6698 = vmatpush2.msra.mxu0 0.0
      %6699 = vmatprep.mubr.f32.mxu0 0.0
      %6700 = vmatmul.mubr.f32.gmra.mxu0 %v6588
      %v6701 = vpop.f32.mrf.mxu0
      %v6702 = vadd.f32 %v6584, %v6701
      %v6703 = vpop.f32.mrf.mxu0
      %6704 = vmatprep.mubr.f32.mxu0 0.0
      %6705 = vmatmul.mubr.f32.gmra.mxu0 %v6591
      %v6706 = vpop.f32.mrf.mxu0
      %v6707 = vadd.f32 %v6584, %v6706
      %v6708 = vpop.f32.mrf.mxu0
      %6709 = vmatprep.mubr.f32.mxu0 0.0
      %6710 = vmatmul.mubr.f32.gmra.mxu0 %v6594
      %v6711 = vpop.f32.mrf.mxu0
      %v6712 = vadd.f32 %v6584, %v6711
      %v6713 = vpop.f32.mrf.mxu0
      %6714 = vmatprep.mubr.f32.mxu0 0.0
      %6715 = vmatmul.mubr.f32.gmra.mxu0 %v6597
      %v6716 = vpop.f32.mrf.mxu0
      %v6717 = vadd.f32 %v6584, %v6716
      %v6718 = vpop.f32.mrf.mxu0
      %6719 = vmatprep.mubr.f32.mxu0 0.0
      %6720 = vmatmul.mubr.f32.gmra.mxu0 %v6600
      %v6721 = vpop.f32.mrf.mxu0
      %v6722 = vadd.f32 %v6584, %v6721
      %v6723 = vpop.f32.mrf.mxu0
      %6724 = vmatprep.mubr.f32.mxu0 0.0
      %6725 = vmatmul.mubr.f32.gmra.mxu0 %v6603
      %v6726 = vpop.f32.mrf.mxu0
      %v6727 = vadd.f32 %v6584, %v6726
      %v6728 = vpop.f32.mrf.mxu0
      %6729 = vmatprep.mubr.f32.mxu0 0.0
      %6730 = vmatmul.mubr.f32.gmra.mxu0 %v6606
      %v6731 = vpop.f32.mrf.mxu0
      %v6732 = vadd.f32 %v6584, %v6731
      %v6733 = vpop.f32.mrf.mxu0
      %6734 = vmatprep.mubr.f32.mxu0 0.0
      %6735 = vmatmul.mubr.f32.gmra.mxu0 %v6609
      %v6736 = vpop.f32.mrf.mxu0
      %v6737 = vadd.f32 %v6584, %v6736
      %v6738 = vpop.f32.mrf.mxu0
      %6739 = vmatprep.mubr.f32.mxu0 0.0
      %6740 = vmatmul.mubr.f32.gmra.mxu0 %v6612
      %v6741 = vpop.f32.mrf.mxu0
      %v6742 = vadd.f32 %v6584, %v6741
      %v6743 = vpop.f32.mrf.mxu0
      %6744 = vmatprep.mubr.f32.mxu0 0.0
      %6745 = vmatmul.mubr.f32.gmra.mxu0 %v6615
      %v6746 = vpop.f32.mrf.mxu0
      %v6747 = vadd.f32 %v6584, %v6746
      %v6748 = vpop.f32.mrf.mxu0
      %6749 = vmatprep.mubr.f32.mxu0 0.0
      %6750 = vmatmul.mubr.f32.gmra.mxu0 %v6618
      %v6751 = vpop.f32.mrf.mxu0
      %v6752 = vadd.f32 %v6584, %v6751
      %v6753 = vpop.f32.mrf.mxu0
      %6754 = vmatprep.mubr.f32.mxu0 0.0
      %6755 = vmatmul.mubr.f32.gmra.mxu0 %v6621
      %v6756 = vpop.f32.mrf.mxu0
      %v6757 = vadd.f32 %v6584, %v6756
      %v6758 = vpop.f32.mrf.mxu0
      %6759 = vmatprep.mubr.f32.mxu0 0.0
      %6760 = vmatmul.mubr.f32.gmra.mxu0 %v6624
      %v6761 = vpop.f32.mrf.mxu0
      %v6762 = vadd.f32 %v6584, %v6761
      %v6763 = vpop.f32.mrf.mxu0
      %6764 = vmatprep.mubr.f32.mxu0 0.0
      %6765 = vmatmul.mubr.f32.gmra.mxu0 %v6627
      %v6766 = vpop.f32.mrf.mxu0
      %v6767 = vadd.f32 %v6584, %v6766
      %v6768 = vpop.f32.mrf.mxu0
      %6769 = vmatprep.mubr.f32.mxu0 0.0
      %6770 = vmatmul.mubr.f32.gmra.mxu0 %v6630
      %v6771 = vpop.f32.mrf.mxu0
      %v6772 = vadd.f32 %v6584, %v6771
      %v6773 = vpop.f32.mrf.mxu0
      %6774 = vmatprep.mubr.f32.mxu0 0.0
      %6775 = vmatmul.mubr.f32.gmra.mxu0 %v6633
      %v6776 = vpop.f32.mrf.mxu0
      %v6777 = vadd.f32 %v6584, %v6776
      %v6778 = vpop.f32.mrf.mxu0
      %6779 = vdwg.mxu0
      %6780 = vst.msk [vmem:[%s336] sm:$0xff] %vm6586, %v6702
      %6781 = vst.msk [vmem:[%s336 + $0x8] sm:$0xff] %vm6586, %v6707
      %6782 = vst.msk [vmem:[%s336 + $0x10] sm:$0xff] %vm6586, %v6712
      %6783 = vst.msk [vmem:[%s336 + $0x18] sm:$0xff] %vm6586, %v6717
      %6784 = vst.msk [vmem:[%s336 + $0x20] sm:$0xff] %vm6586, %v6722
      %6785 = vst.msk [vmem:[%s336 + $0x28] sm:$0xff] %vm6586, %v6727
      %6786 = vst.msk [vmem:[%s336 + $0x30] sm:$0xff] %vm6586, %v6732
      %6787 = vst.msk [vmem:[%s336 + $0x38] sm:$0xff] %vm6586, %v6737
      %6788 = vst.msk [vmem:[%s336 + $0x40] sm:$0xff] %vm6586, %v6742
      %6789 = vst.msk [vmem:[%s336 + $0x48] sm:$0xff] %vm6586, %v6747
      %6790 = vst.msk [vmem:[%s336 + $0x50] sm:$0xff] %vm6586, %v6752
      %6791 = vst.msk [vmem:[%s336 + $0x58] sm:$0xff] %vm6586, %v6757
      %6792 = vst.msk [vmem:[%s336 + $0x60] sm:$0xff] %vm6586, %v6762
      %6793 = vst.msk [vmem:[%s336 + $0x68] sm:$0xff] %vm6586, %v6767
      %6794 = vst.msk [vmem:[%s336 + $0x70] sm:$0xff] %vm6586, %v6772
      %6795 = vst.msk [vmem:[%s336 + $0x78] sm:$0xff] %vm6586, %v6777
      %s6796 = smul.u32 16, %s23
      %p6797 = scmp.lt.s32.totalorder %s22, 7
      %s6798 = scalar_select %p6797, %s22, 7
      %p6799 = scmp.lt.s32.totalorder %s6796, 47
      %s6800 = scalar_select %p6799, %s6796, 47
      %s6801 = smul.addr %s6798, 48
      %s6802 = sadd.s32 %s6800, %s6801
      %s6803 = smul.addr %s6802, 8
      %s6804 = scalar_lea.vmem %s7, %s6803
      // Predicated region
      $region53: #{window_attention_kv_forward.1} parent=47 // pred_check
        %p6805 = pneg %p209
      $region54: #{window_attention_kv_forward.1} parent=47 // pred_check_branch
        %6807 = sbr.rel (%p6805) target = $region56
      $region55: #{window_attention_kv_forward.1} parent=47 // pred_region
        %s6808 = smul.u32 16, %s23
      $region56: #{window_attention_kv_forward.1} parent=47 // pred_fallthru
        _
    $region48: #{window_attention_kv_forward.1} parent=5 // pred_fallthru
      _
    %p6809 = scmp.le.s32.totalorder 2, %s13
    // Predicated region
    $region57: #{window_attention_kv_forward.1} parent=5 // pred_check
      %p6810 = pneg %p6809
    $region58: #{window_attention_kv_forward.1} parent=5 // pred_check_branch
      %6812 = sbr.rel (%p6810) target = $region60
    $region59: #{window_attention_kv_forward.1} parent=5 // pred_region
      %s6813 = ssub.s32 %s13, 2
      // Predicated region
      $region61: #{window_attention_kv_forward.1} parent=59 // pred_check
        %p6814 = pneg %p215
      $region62: #{window_attention_kv_forward.1} parent=59 // pred_check_branch
        %6816 = sbr.rel (%p6814) target = $region64
      $region63: #{window_attention_kv_forward.1} parent=59 // pred_region
        %s6817 = smul.u32 16, %s25
        %p6818 = scmp.lt.s32.totalorder %s24, 7
        %s6819 = scalar_select %p6818, %s24, 7
        %p6820 = scmp.lt.s32.totalorder %s6817, 47
        %s6821 = scalar_select %p6820, %s6817, 47
        %s6822 = smul.addr %s6819, 48
        %s6823 = sadd.s32 %s6821, %s6822
        %s6824 = smul.addr %s6823, 8
        %s6825 = scalar_lea.vmem %s7, %s6824
      $region64: #{window_attention_kv_forward.1} parent=59 // pred_fallthru
        _
    $region60: #{window_attention_kv_forward.1} parent=5 // pred_fallthru
      _
  $region6: #{window_attention_kv_forward.1} parent=0 // loop_footer
    %s17 = sadd.s32 1, %s13
  $region7: #{window_attention_kv_forward.1} parent=0 // loop_footer_branch
    %12 = sbr.rel target = $region3
  $region8: #{window_attention_kv_forward.1} parent=0 // loop_exit
    _

</llo_original>
